<compile_context>
chip_gen: v6e
topology: v6e:2x2x1
jax: 0.10.0
libtpu: 0.0.40
codegen_flags: <defaults>
</compile_context>

<pallas_src>
import functools

import jax
import jax.numpy as jnp
from jax.experimental import pallas as pl
from jax.experimental.pallas import tpu as pltpu

BN_EPS = 1e-5
KH = KW = 4          # DCGAN kernel size
LANE = 128
MAX_BM = 1024


def _round_up(x, m):
    return ((x + m - 1) // m) * m


@functools.lru_cache(maxsize=None)
def _mem_profile():
    """Generation-aware sizing: v7x has only 64 MiB VMEM/TC -> tighter caps."""
    try:
        vmem = int(pltpu.get_tpu_info().vmem_capacity_bytes)
    except Exception:
        vmem = 64 << 20                              # conservative, v7x-safe fallback
    if vmem <= (64 << 20):                           # v7x-class
        return {"a_cap": 4 << 20, "apply_cap": 8 << 20, "vmem_limit": 48 << 20}
    return {"a_cap": 8 << 20, "apply_cap": 16 << 20, "vmem_limit": 64 << 20}


def _pick_bm(m, kp):
    """Row block for the matmuls: as big as possible (<= MAX_BM) with the bf16
    A tile under the generation-specific byte cap (double-buffered VMEM)."""
    cap = _mem_profile()["a_cap"]
    bm = min(MAX_BM, _round_up(m, LANE))
    while bm > LANE and bm * kp * 2 > cap:
        bm -= LANE
    return bm


def _pick_apply_bm(total_rows, cp, bm):
    """Bigger streaming row block for the BN+ReLU apply pass (pure HBM stream)."""
    cap = _mem_profile()["apply_cap"]
    for k in (16, 8, 4, 2):
        cand = k * bm
        if total_rows % cand == 0 and 8 * cand * cp <= cap:
            return cand
    return bm


# ---------- fused matmul + bf16 store + BN column-statistics kernel ----------
def _mm_stats_kernel(a_ref, b_ref, y_ref, sum_ref, ssq_ref):
    acc = jnp.dot(a_ref[...], b_ref[...], preferred_element_type=jnp.float32)
    y_ref[...] = acc.astype(jnp.bfloat16)            # pre-BN activation in bf16

    @pl.when(pl.program_id(1) == 0)                  # first row-block of this phase
    def _():
        sum_ref[...] = jnp.zeros_like(sum_ref)
        ssq_ref[...] = jnp.zeros_like(ssq_ref)

    sum_ref[...] += jnp.sum(acc, axis=0, keepdims=True)
    ssq_ref[...] += jnp.sum(acc * acc, axis=0, keepdims=True)


def pallas_matmul_stats(a, b, bm):
    nph, mp, kp = a.shape
    _, _, cp = b.shape
    ni = mp // bm
    return pl.pallas_call(
        _mm_stats_kernel,
        out_shape=(jax.ShapeDtypeStruct((nph, mp, cp), jnp.bfloat16),
                   jax.ShapeDtypeStruct((nph, 1, cp), jnp.float32),
                   jax.ShapeDtypeStruct((nph, 1, cp), jnp.float32)),
        grid_spec=pltpu.PrefetchScalarGridSpec(
            num_scalar_prefetch=0,
            grid=(nph, ni),                           # stats reduce over rows -> i last
            in_specs=[pl.BlockSpec((None, bm, kp), lambda p, i: (p, i, 0)),
                      pl.BlockSpec((None, kp, cp), lambda p, i: (p, 0, 0))],
            out_specs=(pl.BlockSpec((None, bm, cp), lambda p, i: (p, i, 0)),
                       pl.BlockSpec((None, 1, cp), lambda p, i: (p, 0, 0)),
                       pl.BlockSpec((None, 1, cp), lambda p, i: (p, 0, 0)))),
        compiler_params=pltpu.CompilerParams(
            dimension_semantics=("parallel", "arbitrary"),
            vmem_limit_bytes=_mem_profile()["vmem_limit"]),
    )(a, b)


# ---------------------- fused matmul + tanh (last layer) ---------------------
def _mm_tanh_kernel(a_ref, b_ref, o_ref):
    acc = jnp.dot(a_ref[...], b_ref[...], preferred_element_type=jnp.float32)
    o_ref[...] = jnp.tanh(acc)


def pallas_matmul_tanh(a, b, bm):
    nph, mp, kp = a.shape
    _, _, cp = b.shape
    return pl.pallas_call(
        _mm_tanh_kernel,
        out_shape=jax.ShapeDtypeStruct((nph, mp, cp), jnp.float32),
        grid_spec=pltpu.PrefetchScalarGridSpec(
            num_scalar_prefetch=0,
            grid=(nph, mp // bm),
            in_specs=[pl.BlockSpec((None, bm, kp), lambda p, i: (p, i, 0)),
                      pl.BlockSpec((None, kp, cp), lambda p, i: (p, 0, 0))],
            out_specs=pl.BlockSpec((None, bm, cp), lambda p, i: (p, i, 0))),
        compiler_params=pltpu.CompilerParams(
            dimension_semantics=("parallel", "parallel"),
            vmem_limit_bytes=_mem_profile()["vmem_limit"]),
    )(a, b)


# --------------------- fused BN normalize + ReLU apply pass ------------------
def _bn_relu_kernel(y_ref, scale_ref, shift_ref, o_ref):
    x = y_ref[...].astype(jnp.float32)
    o_ref[...] = jnp.maximum(x * scale_ref[...] + shift_ref[...],
                             0.0).astype(jnp.bfloat16)


def pallas_bn_relu_apply(y, scale, shift, bm2):
    rows, cp = y.shape
    return pl.pallas_call(
        _bn_relu_kernel,
        out_shape=jax.ShapeDtypeStruct((rows, cp), jnp.bfloat16),
        grid_spec=pltpu.PrefetchScalarGridSpec(
            num_scalar_prefetch=0,
            grid=(rows // bm2,),
            in_specs=[pl.BlockSpec((bm2, cp), lambda i: (i, 0)),
                      pl.BlockSpec((1, cp), lambda i: (0, 0)),
                      pl.BlockSpec((1, cp), lambda i: (0, 0))],
            out_specs=pl.BlockSpec((bm2, cp), lambda i: (i, 0))),
        compiler_params=pltpu.CompilerParams(
            dimension_semantics=("parallel",),
            vmem_limit_bytes=_mem_profile()["vmem_limit"]),
    )(y, scale, shift)


# ------------------------- ConvTranspose2d im2col glue -----------------------
def _cols_stride1(x, padding):
    """Generic stride-1 ConvTranspose im2col (only layer 1, which is tiny)."""
    # TODO(synk): the im2col gather / phase interleave are XLA glue, not Pallas.
    n, ih, iw, cin = x.shape
    oh = ih - 1 - 2 * padding + KH
    ow = iw - 1 - 2 * padding + KW
    ph, pw = KH - 1 - padding, KW - 1 - padding
    xp = jnp.pad(x, ((0, 0), (ph, ph), (pw, pw), (0, 0)))
    patches = [xp[:, kh:kh + oh, kw:kw + ow, :]
               for kh in range(KH) for kw in range(KW)]
    cols = jnp.stack(patches, axis=-1).reshape(n * oh * ow, cin * KH * KW)
    return cols[None], (n, oh, ow)


def _cols_stride2_phases(x):
    """4-phase (sub-pixel) decomposition of stride-2, pad-1, k=4 ConvTranspose:
    output parity (oh%2, ow%2) == (ry, rx) is a stride-1 2x2 conv on the
    1-padded input -> K = Cin*4, no zero-dilated intermediate."""
    n, ih, iw, cin = x.shape
    xp = jnp.pad(x, ((0, 0), (1, 1), (1, 1), (0, 0)))
    phases = []
    for ry in (0, 1):
        for rx in (0, 1):
            patches = [xp[:, ry + a:ry + a + ih, rx + b:rx + b + iw, :]
                       for a in (0, 1) for b in (0, 1)]
            c = jnp.stack(patches, axis=-1)                  # (N,IH,IW,Cin,4)
            phases.append(c.reshape(n * ih * iw, cin * 4))
    return jnp.stack(phases, axis=0), (n, 2 * ih, 2 * iw)


def _layer_forward(x, layer, cfg):
    stride, padding, act, cout = cfg
    wstack = layer["wmat"]                       # (P, Kp, Cp) bf16, prepped at init
    if stride == 1:
        cols, (n, oh, ow) = _cols_stride1(x, padding)
    else:
        cols, (n, oh, ow) = _cols_stride2_phases(x)
    nph, m, kf = cols.shape
    _, kp, cp = wstack.shape
    bm = _pick_bm(m, kp)
    mp = _round_up(m, bm)
    cols_p = jnp.pad(cols, ((0, 0), (0, mp - m), (0, kp - kf)))   # zero rows/cols

    if act == "bn_relu":
        y_p, s, ss = pallas_matmul_stats(cols_p, wstack, bm)
        cnt = float(nph * m)                       # padded rows contribute 0
        mean = jnp.sum(s, axis=0) / cnt            # (1, Cp)
        ex2 = jnp.sum(ss, axis=0) / cnt
        var = jnp.maximum(ex2 - mean * mean, 0.0)  # biased var (training-mode BN)
        inv_std = jax.lax.rsqrt(var + BN_EPS)
        scale = layer["gamma"] * inv_std           # zero-padded gamma keeps pad lanes 0
        shift = layer["beta"] - mean * scale
        bm2 = _pick_apply_bm(nph * mp, cp, bm)
        out_p = pallas_bn_relu_apply(y_p.reshape(nph * mp, cp), scale, shift, bm2)
        out_p = out_p.reshape(nph, mp, cp)
    else:                                          # tanh fused into the matmul
        out_p = pallas_matmul_tanh(cols_p, wstack, bm)

    out = out_p[:, :m, :cout]
    if stride == 1:
        return out[0].reshape(n, oh, ow, cout)
    ih, iw = oh // 2, ow // 2
    out = out.reshape(2, 2, n, ih, iw, cout)               # (ry, rx, N, IH, IW, C)
    out = jnp.transpose(out, (2, 3, 0, 4, 1, 5))           # (N, IH, ry, IW, rx, C)
    return out.reshape(n, oh, ow, cout)                    # free interleave reshape


@functools.partial(jax.jit, static_argnums=2)
def generator_forward(x, params, configs):
    """x: (N, nz, 1, 1) NCHW f32 -> (N, nChannels, 64*, 64*) NCHW f32."""
    out = jnp.transpose(x, (0, 2, 3, 1)).astype(jnp.bfloat16)   # NHWC bf16 throughout
    for layer, cfg in zip(params, configs):
        out = _layer_forward(out, layer, cfg)
    return jnp.transpose(out, (0, 3, 1, 2))                     # single NCHW transpose


# -------------------------------- parameter init -----------------------------
def init_generator_params(key, nz, ngf, n_channels):
    specs = [
        # (cin,     cout,       stride, padding, activation)
        (nz,        ngf * 8,    1, 0, "bn_relu"),
        (ngf * 8,   ngf * 4,    2, 1, "bn_relu"),
        (ngf * 4,   ngf * 2,    2, 1, "bn_relu"),
        (ngf * 2,   ngf,        2, 1, "bn_relu"),
        (ngf,       n_channels, 2, 1, "tanh"),
    ]
    params, configs = [], []
    for cin, cout, s, p, act in specs:
        key, k = jax.random.split(key)
        w = 0.02 * jax.random.normal(k, (cin, cout, KH, KW), jnp.float32)  # DCGAN init
        if s == 1:
            wf = w[:, :, ::-1, ::-1]                       # flipped stride-1 conv kernel
            mats = [jnp.transpose(wf, (0, 2, 3, 1)).reshape(cin * KH * KW, cout)]
        else:
            # 4-phase weights: phase (ry, rx), patch pos (a, b) uses original
            # kernel element w[:, :, 3-(2a+ry), 3-(2b+rx)].
            mats = []
            for ry in (0, 1):
                for rx in (0, 1):
                    wk = w[:, :, [3 - ry, 1 - ry], :][:, :, :, [3 - rx, 1 - rx]]
                    mats.append(jnp.transpose(wk, (0, 2, 3, 1)).reshape(cin * 4, cout))
        kf = mats[0].shape[0]
        kp, cp = _round_up(kf, LANE), _round_up(cout, LANE)
        wstack = jnp.stack([jnp.pad(mm, ((0, kp - kf), (0, cp - cout))) for mm in mats])
        params.append({
            "wmat": wstack.astype(jnp.bfloat16),           # prepped ONCE at init
            "gamma": jnp.pad(jnp.ones((cout,), jnp.float32),
                             (0, cp - cout)).reshape(1, cp),
            "beta": jnp.zeros((1, cp), jnp.float32),
            "w_raw": w,                                    # kept for the reference check
        })
        configs.append((s, p, act, cout))
    return tuple(params), tuple(configs)


# ---------------- pure-XLA reference (numerics-matched, for checking) ---------
def _reference_forward(x, params, configs):
    """ConvTranspose via the lhs-dilated-conv identity, mirroring the kernel's
    numerics (bf16 operands, f32 accumulation, bf16 pre-BN storage)."""
    out = x.astype(jnp.bfloat16).astype(jnp.float32)
    for layer, (stride, padding, act, cout) in zip(params, configs):
        w = layer["w_raw"].astype(jnp.bfloat16).astype(jnp.float32)
        wconv = jnp.transpose(w[:, :, ::-1, ::-1], (1, 0, 2, 3))   # (Cout,Cin,kh,kw)
        pad = KH - 1 - padding
        y = jax.lax.conv_general_dilated(
            out, wconv, (1, 1), ((pad, pad), (pad, pad)),
            lhs_dilation=(stride, stride),
            dimension_numbers=("NCHW", "OIHW", "NCHW"),
            precision=jax.lax.Precision.HIGHEST)
        if act == "bn_relu":
            mean = y.mean(axis=(0, 2, 3), keepdims=True)
            var = y.var(axis=(0, 2, 3), keepdims=True)
            yq = y.astype(jnp.bfloat16).astype(jnp.float32)
            out = jnp.maximum((yq - mean) * jax.lax.rsqrt(var + BN_EPS), 0.0)
            out = out.astype(jnp.bfloat16).astype(jnp.float32)
        else:
            out = jnp.tanh(y)
    return out


if __name__ == "__main__":
    # SMALL shapes consistent with the module: latent (B, nz, 1, 1) input.
    B, NZ, NGF, NCH = 2, 16, 8, 3
    key = jax.random.PRNGKey(0)
    key, kx = jax.random.split(key)
    x = jax.random.normal(kx, (B, NZ, 1, 1), jnp.float32)

    params, configs = init_generator_params(key, NZ, NGF, NCH)
    out = generator_forward(x, params, configs)
    out = jax.block_until_ready(out)

    assert out.shape == (B, NCH, 64, 64), out.shape
    assert out.dtype == jnp.float32
    assert bool(jnp.all(jnp.isfinite(out)))
    assert bool(jnp.all(jnp.abs(out) <= 1.0))          # tanh output range

    # Validate the 4-phase decomposition + fused-BN path against a pure-XLA
    # reference with matched numerics (loose bounds cover residual rounding).
    ref = jax.jit(_reference_forward, static_argnums=2)(x, params, configs)
    ref = jax.block_until_ready(ref)
    mean_err = float(jnp.mean(jnp.abs(out - ref)))
    max_err = float(jnp.max(jnp.abs(out - ref)))
    mean_ref = float(jnp.mean(jnp.abs(ref))) + 1e-6
    max_ref = float(jnp.max(jnp.abs(ref))) + 1e-6
    assert mean_err <= 0.03 * mean_ref, (mean_err, mean_ref)
    assert max_err <= 0.15 * max_ref, (max_err, max_ref)

    print("KERNEL_OK")
</pallas_src>

<mosaic_0001>
module attributes {stable_mosaic.version = 11 : i64} {
  func.func @_mm_stats_kernel(%arg0: i32, %arg1: i32, %arg2: memref<1x128x256xbf16, #tpu.memory_space<vmem>>, %arg3: memref<1x256x128xbf16, #tpu.memory_space<vmem>>, %arg4: memref<1x128x128xbf16, #tpu.memory_space<vmem>>, %arg5: memref<1x1x128xf32, #tpu.memory_space<vmem>>, %arg6: memref<1x1x128xf32, #tpu.memory_space<vmem>>) attributes {dimension_semantics = [#tpu.dimension_semantics<parallel>, #tpu.dimension_semantics<arbitrary>], iteration_bounds = array<i64: 1, 1>, scalar_prefetch = 0 : i64, scratch_operands = 0 : i64, tpu.core_type = #tpu.core_type<tc>, window_params = [{transform_indices = @transform_0, window_bounds = array<i64: 1, 128, 256>}, {transform_indices = @transform_1, window_bounds = array<i64: 1, 256, 128>}, {transform_indices = @transform_2, window_bounds = array<i64: 1, 128, 128>}, {transform_indices = @transform_3, window_bounds = array<i64: 1, 1, 128>}, {transform_indices = @transform_4, window_bounds = array<i64: 1, 1, 128>}]} {
    %c0 = arith.constant 0 : index
    %c0_0 = arith.constant 0 : index
    %c0_1 = arith.constant 0 : index
    %0 = vector.load %arg2[%c0, %c0_0, %c0_1] : memref<1x128x256xbf16, #tpu.memory_space<vmem>>, vector<1x128x256xbf16>
    %1 = vector.shape_cast %0 : vector<1x128x256xbf16> to vector<128x256xbf16>
    %c0_2 = arith.constant 0 : index
    %c0_3 = arith.constant 0 : index
    %c0_4 = arith.constant 0 : index
    %2 = vector.load %arg3[%c0_2, %c0_3, %c0_4] : memref<1x256x128xbf16, #tpu.memory_space<vmem>>, vector<1x256x128xbf16>
    %3 = vector.shape_cast %2 : vector<1x256x128xbf16> to vector<256x128xbf16>
    %cst = arith.constant dense<0.000000e+00> : vector<128x128xf32>
    %4 = tpu.matmul %1, %3, %cst {dimension_numbers = #tpu.dot_dimension_numbers<[1], [0], [0], [1], [0, 0, 1, 1], [], []>} : vector<128x256xbf16>, vector<256x128xbf16>, vector<128x128xf32> -> vector<128x128xf32>
    %5 = arith.truncf %4 : vector<128x128xf32> to vector<128x128xbf16>
    %c0_5 = arith.constant 0 : index
    %c0_6 = arith.constant 0 : index
    %c0_7 = arith.constant 0 : index
    %6 = vector.load %arg4[%c0_5, %c0_6, %c0_7] : memref<1x128x128xbf16, #tpu.memory_space<vmem>>, vector<1x128x128xbf16>
    %7 = vector.shape_cast %6 : vector<1x128x128xbf16> to vector<128x128xbf16>
    %8 = vector.shape_cast %5 : vector<128x128xbf16> to vector<1x128x128xbf16>
    tpu.vector_store %arg4[%c0_5, %c0_6, %c0_7], %8 {strides = array<i32>} : memref<1x128x128xbf16, #tpu.memory_space<vmem>>, vector<1x128x128xbf16>,
    %c0_i32 = arith.constant 0 : i32
    %9 = arith.cmpi eq, %arg1, %c0_i32 : i32
    %10 = arith.extui %9 : i1 to i32
    %c0_i32_8 = arith.constant 0 : i32
    %11 = arith.cmpi ne, %10, %c0_i32_8 : i32
    scf.if %11 {
      %cst_23 = arith.constant 0.000000e+00 : f32
      %29 = vector.broadcast %cst_23 : f32 to vector<1x128xf32>
      %c0_24 = arith.constant 0 : index
      %c0_25 = arith.constant 0 : index
      %c0_26 = arith.constant 0 : index
      %30 = vector.load %arg5[%c0_24, %c0_25, %c0_26] : memref<1x1x128xf32, #tpu.memory_space<vmem>>, vector<1x1x128xf32>
      %31 = vector.shape_cast %30 : vector<1x1x128xf32> to vector<1x128xf32>
      %32 = vector.shape_cast %29 : vector<1x128xf32> to vector<1x1x128xf32>
      tpu.vector_store %arg5[%c0_24, %c0_25, %c0_26], %32 {strides = array<i32>} : memref<1x1x128xf32, #tpu.memory_space<vmem>>, vector<1x1x128xf32>,
      %cst_27 = arith.constant 0.000000e+00 : f32
      %33 = vector.broadcast %cst_27 : f32 to vector<1x128xf32>
      %c0_28 = arith.constant 0 : index
      %c0_29 = arith.constant 0 : index
      %c0_30 = arith.constant 0 : index
      %34 = vector.load %arg6[%c0_28, %c0_29, %c0_30] : memref<1x1x128xf32, #tpu.memory_space<vmem>>, vector<1x1x128xf32>
      %35 = vector.shape_cast %34 : vector<1x1x128xf32> to vector<1x128xf32>
      %36 = vector.shape_cast %33 : vector<1x128xf32> to vector<1x1x128xf32>
      tpu.vector_store %arg6[%c0_28, %c0_29, %c0_30], %36 {strides = array<i32>} : memref<1x1x128xf32, #tpu.memory_space<vmem>>, vector<1x1x128xf32>,
    } else {
    }
    %c0_9 = arith.constant 0 : index
    %c0_10 = arith.constant 0 : index
    %c0_11 = arith.constant 0 : index
    %12 = vector.load %arg5[%c0_9, %c0_10, %c0_11] : memref<1x1x128xf32, #tpu.memory_space<vmem>>, vector<1x1x128xf32>
    %13 = vector.shape_cast %12 : vector<1x1x128xf32> to vector<1x128xf32>
    %cst_12 = arith.constant dense<0.000000e+00> : vector<128xf32>
    %14 = vector.multi_reduction <add>, %4, %cst_12 [0] : vector<128x128xf32> to vector<128xf32>
    %15 = vector.shape_cast %14 : vector<128xf32> to vector<1x128xf32>
    %16 = arith.addf %13, %15 : vector<1x128xf32>
    %c0_13 = arith.constant 0 : index
    %c0_14 = arith.constant 0 : index
    %c0_15 = arith.constant 0 : index
    %17 = vector.load %arg5[%c0_13, %c0_14, %c0_15] : memref<1x1x128xf32, #tpu.memory_space<vmem>>, vector<1x1x128xf32>
    %18 = vector.shape_cast %17 : vector<1x1x128xf32> to vector<1x128xf32>
    %19 = vector.shape_cast %16 : vector<1x128xf32> to vector<1x1x128xf32>
    tpu.vector_store %arg5[%c0_13, %c0_14, %c0_15], %19 {strides = array<i32>} : memref<1x1x128xf32, #tpu.memory_space<vmem>>, vector<1x1x128xf32>,
    %c0_16 = arith.constant 0 : index
    %c0_17 = arith.constant 0 : index
    %c0_18 = arith.constant 0 : index
    %20 = vector.load %arg6[%c0_16, %c0_17, %c0_18] : memref<1x1x128xf32, #tpu.memory_space<vmem>>, vector<1x1x128xf32>
    %21 = vector.shape_cast %20 : vector<1x1x128xf32> to vector<1x128xf32>
    %22 = arith.mulf %4, %4 : vector<128x128xf32>
    %cst_19 = arith.constant dense<0.000000e+00> : vector<128xf32>
    %23 = vector.multi_reduction <add>, %22, %cst_19 [0] : vector<128x128xf32> to vector<128xf32>
    %24 = vector.shape_cast %23 : vector<128xf32> to vector<1x128xf32>
    %25 = arith.addf %21, %24 : vector<1x128xf32>
    %c0_20 = arith.constant 0 : index
    %c0_21 = arith.constant 0 : index
    %c0_22 = arith.constant 0 : index
    %26 = vector.load %arg6[%c0_20, %c0_21, %c0_22] : memref<1x1x128xf32, #tpu.memory_space<vmem>>, vector<1x1x128xf32>
    %27 = vector.shape_cast %26 : vector<1x1x128xf32> to vector<1x128xf32>
    %28 = vector.shape_cast %25 : vector<1x128xf32> to vector<1x1x128xf32>
    tpu.vector_store %arg6[%c0_20, %c0_21, %c0_22], %28 {strides = array<i32>} : memref<1x1x128xf32, #tpu.memory_space<vmem>>, vector<1x1x128xf32>,
    return
  }
  func.func @transform_0(%arg0: i32, %arg1: i32) -> (i32, i32, i32) {
    %c0_i32 = arith.constant 0 : i32
    %c0_i32_0 = arith.constant 0 : i32
    return %arg0, %arg1, %c0_i32 : i32, i32, i32
  }
  func.func @transform_1(%arg0: i32, %arg1: i32) -> (i32, i32, i32) {
    %c0_i32 = arith.constant 0 : i32
    %c0_i32_0 = arith.constant 0 : i32
    %c0_i32_1 = arith.constant 0 : i32
    return %arg0, %c0_i32, %c0_i32_0 : i32, i32, i32
  }
  func.func @transform_2(%arg0: i32, %arg1: i32) -> (i32, i32, i32) {
    %c0_i32 = arith.constant 0 : i32
    %c0_i32_0 = arith.constant 0 : i32
    return %arg0, %arg1, %c0_i32 : i32, i32, i32
  }
  func.func @transform_3(%arg0: i32, %arg1: i32) -> (i32, i32, i32) {
    %c0_i32 = arith.constant 0 : i32
    %c0_i32_0 = arith.constant 0 : i32
    %c0_i32_1 = arith.constant 0 : i32
    return %arg0, %c0_i32, %c0_i32_0 : i32, i32, i32
  }
  func.func @transform_4(%arg0: i32, %arg1: i32) -> (i32, i32, i32) {
    %c0_i32 = arith.constant 0 : i32
    %c0_i32_0 = arith.constant 0 : i32
    %c0_i32_1 = arith.constant 0 : i32
    return %arg0, %c0_i32, %c0_i32_0 : i32, i32, i32
  }
}

module attributes {stable_mosaic.version = 11 : i64} {
  func.func @_bn_relu_kernel(%arg0: i32, %arg1: memref<128x128xbf16, #tpu.memory_space<vmem>>, %arg2: memref<1x128xf32, #tpu.memory_space<vmem>>, %arg3: memref<1x128xf32, #tpu.memory_space<vmem>>, %arg4: memref<128x128xbf16, #tpu.memory_space<vmem>>) attributes {dimension_semantics = [#tpu.dimension_semantics<parallel>], iteration_bounds = array<i64: 1>, scalar_prefetch = 0 : i64, scratch_operands = 0 : i64, tpu.core_type = #tpu.core_type<tc>, window_params = [{transform_indices = @transform_0, window_bounds = array<i64: 128, 128>}, {pipeline_mode = #tpu.pipeline_mode<synchronous>, transform_indices = @transform_1, window_bounds = array<i64: 1, 128>}, {pipeline_mode = #tpu.pipeline_mode<synchronous>, transform_indices = @transform_2, window_bounds = array<i64: 1, 128>}, {transform_indices = @transform_3, window_bounds = array<i64: 128, 128>}]} {
    %c0 = arith.constant 0 : index
    %c0_0 = arith.constant 0 : index
    %0 = vector.load %arg1[%c0, %c0_0] : memref<128x128xbf16, #tpu.memory_space<vmem>>, vector<128x128xbf16>
    %1 = arith.extf %0 : vector<128x128xbf16> to vector<128x128xf32>
    %c0_1 = arith.constant 0 : index
    %c0_2 = arith.constant 0 : index
    %2 = vector.load %arg2[%c0_1, %c0_2] : memref<1x128xf32, #tpu.memory_space<vmem>>, vector<1x128xf32>
    %3 = vector.broadcast %2 : vector<1x128xf32> to vector<128x128xf32>
    %4 = arith.mulf %1, %3 : vector<128x128xf32>
    %c0_3 = arith.constant 0 : index
    %c0_4 = arith.constant 0 : index
    %5 = vector.load %arg3[%c0_3, %c0_4] : memref<1x128xf32, #tpu.memory_space<vmem>>, vector<1x128xf32>
    %6 = vector.broadcast %5 : vector<1x128xf32> to vector<128x128xf32>
    %7 = arith.addf %4, %6 : vector<128x128xf32>
    %cst = arith.constant 0.000000e+00 : f32
    %8 = vector.broadcast %cst : f32 to vector<128x128xf32>
    %9 = arith.maximumf %7, %8 : vector<128x128xf32>
    %10 = arith.truncf %9 : vector<128x128xf32> to vector<128x128xbf16>
    %c0_5 = arith.constant 0 : index
    %c0_6 = arith.constant 0 : index
    %11 = vector.load %arg4[%c0_5, %c0_6] : memref<128x128xbf16, #tpu.memory_space<vmem>>, vector<128x128xbf16>
    tpu.vector_store %arg4[%c0_5, %c0_6], %10 {strides = array<i32>} : memref<128x128xbf16, #tpu.memory_space<vmem>>, vector<128x128xbf16>,
    return
  }
  func.func @transform_0(%arg0: i32) -> (i32, i32) {
    %c0_i32 = arith.constant 0 : i32
    %c0_i32_0 = arith.constant 0 : i32
    return %arg0, %c0_i32 : i32, i32
  }
  func.func @transform_1(%arg0: i32) -> (i32, i32) {
    %c0_i32 = arith.constant 0 : i32
    %c0_i32_0 = arith.constant 0 : i32
    %c0_i32_1 = arith.constant 0 : i32
    return %c0_i32, %c0_i32_0 : i32, i32
  }
  func.func @transform_2(%arg0: i32) -> (i32, i32) {
    %c0_i32 = arith.constant 0 : i32
    %c0_i32_0 = arith.constant 0 : i32
    %c0_i32_1 = arith.constant 0 : i32
    return %c0_i32, %c0_i32_0 : i32, i32
  }
  func.func @transform_3(%arg0: i32) -> (i32, i32) {
    %c0_i32 = arith.constant 0 : i32
    %c0_i32_0 = arith.constant 0 : i32
    return %arg0, %c0_i32 : i32, i32
  }
}

module attributes {stable_mosaic.version = 11 : i64} {
  func.func @_mm_stats_kernel(%arg0: i32, %arg1: i32, %arg2: memref<1x128x256xbf16, #tpu.memory_space<vmem>>, %arg3: memref<1x256x128xbf16, #tpu.memory_space<vmem>>, %arg4: memref<1x128x128xbf16, #tpu.memory_space<vmem>>, %arg5: memref<1x1x128xf32, #tpu.memory_space<vmem>>, %arg6: memref<1x1x128xf32, #tpu.memory_space<vmem>>) attributes {dimension_semantics = [#tpu.dimension_semantics<parallel>, #tpu.dimension_semantics<arbitrary>], iteration_bounds = array<i64: 4, 1>, scalar_prefetch = 0 : i64, scratch_operands = 0 : i64, tpu.core_type = #tpu.core_type<tc>, window_params = [{transform_indices = @transform_0, window_bounds = array<i64: 1, 128, 256>}, {transform_indices = @transform_1, window_bounds = array<i64: 1, 256, 128>}, {transform_indices = @transform_2, window_bounds = array<i64: 1, 128, 128>}, {transform_indices = @transform_3, window_bounds = array<i64: 1, 1, 128>}, {transform_indices = @transform_4, window_bounds = array<i64: 1, 1, 128>}]} {
    %c0 = arith.constant 0 : index
    %c0_0 = arith.constant 0 : index
    %c0_1 = arith.constant 0 : index
    %0 = vector.load %arg2[%c0, %c0_0, %c0_1] : memref<1x128x256xbf16, #tpu.memory_space<vmem>>, vector<1x128x256xbf16>
    %1 = vector.shape_cast %0 : vector<1x128x256xbf16> to vector<128x256xbf16>
    %c0_2 = arith.constant 0 : index
    %c0_3 = arith.constant 0 : index
    %c0_4 = arith.constant 0 : index
    %2 = vector.load %arg3[%c0_2, %c0_3, %c0_4] : memref<1x256x128xbf16, #tpu.memory_space<vmem>>, vector<1x256x128xbf16>
    %3 = vector.shape_cast %2 : vector<1x256x128xbf16> to vector<256x128xbf16>
    %cst = arith.constant dense<0.000000e+00> : vector<128x128xf32>
    %4 = tpu.matmul %1, %3, %cst {dimension_numbers = #tpu.dot_dimension_numbers<[1], [0], [0], [1], [0, 0, 1, 1], [], []>} : vector<128x256xbf16>, vector<256x128xbf16>, vector<128x128xf32> -> vector<128x128xf32>
    %5 = arith.truncf %4 : vector<128x128xf32> to vector<128x128xbf16>
    %c0_5 = arith.constant 0 : index
    %c0_6 = arith.constant 0 : index
    %c0_7 = arith.constant 0 : index
    %6 = vector.load %arg4[%c0_5, %c0_6, %c0_7] : memref<1x128x128xbf16, #tpu.memory_space<vmem>>, vector<1x128x128xbf16>
    %7 = vector.shape_cast %6 : vector<1x128x128xbf16> to vector<128x128xbf16>
    %8 = vector.shape_cast %5 : vector<128x128xbf16> to vector<1x128x128xbf16>
    tpu.vector_store %arg4[%c0_5, %c0_6, %c0_7], %8 {strides = array<i32>} : memref<1x128x128xbf16, #tpu.memory_space<vmem>>, vector<1x128x128xbf16>,
    %c0_i32 = arith.constant 0 : i32
    %9 = arith.cmpi eq, %arg1, %c0_i32 : i32
    %10 = arith.extui %9 : i1 to i32
    %c0_i32_8 = arith.constant 0 : i32
    %11 = arith.cmpi ne, %10, %c0_i32_8 : i32
    scf.if %11 {
      %cst_23 = arith.constant 0.000000e+00 : f32
      %29 = vector.broadcast %cst_23 : f32 to vector<1x128xf32>
      %c0_24 = arith.constant 0 : index
      %c0_25 = arith.constant 0 : index
      %c0_26 = arith.constant 0 : index
      %30 = vector.load %arg5[%c0_24, %c0_25, %c0_26] : memref<1x1x128xf32, #tpu.memory_space<vmem>>, vector<1x1x128xf32>
      %31 = vector.shape_cast %30 : vector<1x1x128xf32> to vector<1x128xf32>
      %32 = vector.shape_cast %29 : vector<1x128xf32> to vector<1x1x128xf32>
      tpu.vector_store %arg5[%c0_24, %c0_25, %c0_26], %32 {strides = array<i32>} : memref<1x1x128xf32, #tpu.memory_space<vmem>>, vector<1x1x128xf32>,
      %cst_27 = arith.constant 0.000000e+00 : f32
      %33 = vector.broadcast %cst_27 : f32 to vector<1x128xf32>
      %c0_28 = arith.constant 0 : index
      %c0_29 = arith.constant 0 : index
      %c0_30 = arith.constant 0 : index
      %34 = vector.load %arg6[%c0_28, %c0_29, %c0_30] : memref<1x1x128xf32, #tpu.memory_space<vmem>>, vector<1x1x128xf32>
      %35 = vector.shape_cast %34 : vector<1x1x128xf32> to vector<1x128xf32>
      %36 = vector.shape_cast %33 : vector<1x128xf32> to vector<1x1x128xf32>
      tpu.vector_store %arg6[%c0_28, %c0_29, %c0_30], %36 {strides = array<i32>} : memref<1x1x128xf32, #tpu.memory_space<vmem>>, vector<1x1x128xf32>,
    } else {
    }
    %c0_9 = arith.constant 0 : index
    %c0_10 = arith.constant 0 : index
    %c0_11 = arith.constant 0 : index
    %12 = vector.load %arg5[%c0_9, %c0_10, %c0_11] : memref<1x1x128xf32, #tpu.memory_space<vmem>>, vector<1x1x128xf32>
    %13 = vector.shape_cast %12 : vector<1x1x128xf32> to vector<1x128xf32>
    %cst_12 = arith.constant dense<0.000000e+00> : vector<128xf32>
    %14 = vector.multi_reduction <add>, %4, %cst_12 [0] : vector<128x128xf32> to vector<128xf32>
    %15 = vector.shape_cast %14 : vector<128xf32> to vector<1x128xf32>
    %16 = arith.addf %13, %15 : vector<1x128xf32>
    %c0_13 = arith.constant 0 : index
    %c0_14 = arith.constant 0 : index
    %c0_15 = arith.constant 0 : index
    %17 = vector.load %arg5[%c0_13, %c0_14, %c0_15] : memref<1x1x128xf32, #tpu.memory_space<vmem>>, vector<1x1x128xf32>
    %18 = vector.shape_cast %17 : vector<1x1x128xf32> to vector<1x128xf32>
    %19 = vector.shape_cast %16 : vector<1x128xf32> to vector<1x1x128xf32>
    tpu.vector_store %arg5[%c0_13, %c0_14, %c0_15], %19 {strides = array<i32>} : memref<1x1x128xf32, #tpu.memory_space<vmem>>, vector<1x1x128xf32>,
    %c0_16 = arith.constant 0 : index
    %c0_17 = arith.constant 0 : index
    %c0_18 = arith.constant 0 : index
    %20 = vector.load %arg6[%c0_16, %c0_17, %c0_18] : memref<1x1x128xf32, #tpu.memory_space<vmem>>, vector<1x1x128xf32>
    %21 = vector.shape_cast %20 : vector<1x1x128xf32> to vector<1x128xf32>
    %22 = arith.mulf %4, %4 : vector<128x128xf32>
    %cst_19 = arith.constant dense<0.000000e+00> : vector<128xf32>
    %23 = vector.multi_reduction <add>, %22, %cst_19 [0] : vector<128x128xf32> to vector<128xf32>
    %24 = vector.shape_cast %23 : vector<128xf32> to vector<1x128xf32>
    %25 = arith.addf %21, %24 : vector<1x128xf32>
    %c0_20 = arith.constant 0 : index
    %c0_21 = arith.constant 0 : index
    %c0_22 = arith.constant 0 : index
    %26 = vector.load %arg6[%c0_20, %c0_21, %c0_22] : memref<1x1x128xf32, #tpu.memory_space<vmem>>, vector<1x1x128xf32>
    %27 = vector.shape_cast %26 : vector<1x1x128xf32> to vector<1x128xf32>
    %28 = vector.shape_cast %25 : vector<1x128xf32> to vector<1x1x128xf32>
    tpu.vector_store %arg6[%c0_20, %c0_21, %c0_22], %28 {strides = array<i32>} : memref<1x1x128xf32, #tpu.memory_space<vmem>>, vector<1x1x128xf32>,
    return
  }
  func.func @transform_0(%arg0: i32, %arg1: i32) -> (i32, i32, i32) {
    %c0_i32 = arith.constant 0 : i32
    %c0_i32_0 = arith.constant 0 : i32
    return %arg0, %arg1, %c0_i32 : i32, i32, i32
  }
  func.func @transform_1(%arg0: i32, %arg1: i32) -> (i32, i32, i32) {
    %c0_i32 = arith.constant 0 : i32
    %c0_i32_0 = arith.constant 0 : i32
    %c0_i32_1 = arith.constant 0 : i32
    return %arg0, %c0_i32, %c0_i32_0 : i32, i32, i32
  }
  func.func @transform_2(%arg0: i32, %arg1: i32) -> (i32, i32, i32) {
    %c0_i32 = arith.constant 0 : i32
    %c0_i32_0 = arith.constant 0 : i32
    return %arg0, %arg1, %c0_i32 : i32, i32, i32
  }
  func.func @transform_3(%arg0: i32, %arg1: i32) -> (i32, i32, i32) {
    %c0_i32 = arith.constant 0 : i32
    %c0_i32_0 = arith.constant 0 : i32
    %c0_i32_1 = arith.constant 0 : i32
    return %arg0, %c0_i32, %c0_i32_0 : i32, i32, i32
  }
  func.func @transform_4(%arg0: i32, %arg1: i32) -> (i32, i32, i32) {
    %c0_i32 = arith.constant 0 : i32
    %c0_i32_0 = arith.constant 0 : i32
    %c0_i32_1 = arith.constant 0 : i32
    return %arg0, %c0_i32, %c0_i32_0 : i32, i32, i32
  }
}

module attributes {stable_mosaic.version = 11 : i64} {
  func.func @_bn_relu_kernel(%arg0: i32, %arg1: memref<512x128xbf16, #tpu.memory_space<vmem>>, %arg2: memref<1x128xf32, #tpu.memory_space<vmem>>, %arg3: memref<1x128xf32, #tpu.memory_space<vmem>>, %arg4: memref<512x128xbf16, #tpu.memory_space<vmem>>) attributes {dimension_semantics = [#tpu.dimension_semantics<parallel>], iteration_bounds = array<i64: 1>, scalar_prefetch = 0 : i64, scratch_operands = 0 : i64, tpu.core_type = #tpu.core_type<tc>, window_params = [{transform_indices = @transform_0, window_bounds = array<i64: 512, 128>}, {pipeline_mode = #tpu.pipeline_mode<synchronous>, transform_indices = @transform_1, window_bounds = array<i64: 1, 128>}, {pipeline_mode = #tpu.pipeline_mode<synchronous>, transform_indices = @transform_2, window_bounds = array<i64: 1, 128>}, {transform_indices = @transform_3, window_bounds = array<i64: 512, 128>}]} {
    %c0 = arith.constant 0 : index
    %c0_0 = arith.constant 0 : index
    %0 = vector.load %arg1[%c0, %c0_0] : memref<512x128xbf16, #tpu.memory_space<vmem>>, vector<512x128xbf16>
    %1 = arith.extf %0 : vector<512x128xbf16> to vector<512x128xf32>
    %c0_1 = arith.constant 0 : index
    %c0_2 = arith.constant 0 : index
    %2 = vector.load %arg2[%c0_1, %c0_2] : memref<1x128xf32, #tpu.memory_space<vmem>>, vector<1x128xf32>
    %3 = vector.broadcast %2 : vector<1x128xf32> to vector<512x128xf32>
    %4 = arith.mulf %1, %3 : vector<512x128xf32>
    %c0_3 = arith.constant 0 : index
    %c0_4 = arith.constant 0 : index
    %5 = vector.load %arg3[%c0_3, %c0_4] : memref<1x128xf32, #tpu.memory_space<vmem>>, vector<1x128xf32>
    %6 = vector.broadcast %5 : vector<1x128xf32> to vector<512x128xf32>
    %7 = arith.addf %4, %6 : vector<512x128xf32>
    %cst = arith.constant 0.000000e+00 : f32
    %8 = vector.broadcast %cst : f32 to vector<512x128xf32>
    %9 = arith.maximumf %7, %8 : vector<512x128xf32>
    %10 = arith.truncf %9 : vector<512x128xf32> to vector<512x128xbf16>
    %c0_5 = arith.constant 0 : index
    %c0_6 = arith.constant 0 : index
    %11 = vector.load %arg4[%c0_5, %c0_6] : memref<512x128xbf16, #tpu.memory_space<vmem>>, vector<512x128xbf16>
    tpu.vector_store %arg4[%c0_5, %c0_6], %10 {strides = array<i32>} : memref<512x128xbf16, #tpu.memory_space<vmem>>, vector<512x128xbf16>,
    return
  }
  func.func @transform_0(%arg0: i32) -> (i32, i32) {
    %c0_i32 = arith.constant 0 : i32
    %c0_i32_0 = arith.constant 0 : i32
    return %arg0, %c0_i32 : i32, i32
  }
  func.func @transform_1(%arg0: i32) -> (i32, i32) {
    %c0_i32 = arith.constant 0 : i32
    %c0_i32_0 = arith.constant 0 : i32
    %c0_i32_1 = arith.constant 0 : i32
    return %c0_i32, %c0_i32_0 : i32, i32
  }
  func.func @transform_2(%arg0: i32) -> (i32, i32) {
    %c0_i32 = arith.constant 0 : i32
    %c0_i32_0 = arith.constant 0 : i32
    %c0_i32_1 = arith.constant 0 : i32
    return %c0_i32, %c0_i32_0 : i32, i32
  }
  func.func @transform_3(%arg0: i32) -> (i32, i32) {
    %c0_i32 = arith.constant 0 : i32
    %c0_i32_0 = arith.constant 0 : i32
    return %arg0, %c0_i32 : i32, i32
  }
}

module attributes {stable_mosaic.version = 11 : i64} {
  func.func @_mm_stats_kernel(%arg0: i32, %arg1: i32, %arg2: memref<1x128x128xbf16, #tpu.memory_space<vmem>>, %arg3: memref<1x128x128xbf16, #tpu.memory_space<vmem>>, %arg4: memref<1x128x128xbf16, #tpu.memory_space<vmem>>, %arg5: memref<1x1x128xf32, #tpu.memory_space<vmem>>, %arg6: memref<1x1x128xf32, #tpu.memory_space<vmem>>) attributes {dimension_semantics = [#tpu.dimension_semantics<parallel>, #tpu.dimension_semantics<arbitrary>], iteration_bounds = array<i64: 4, 1>, scalar_prefetch = 0 : i64, scratch_operands = 0 : i64, tpu.core_type = #tpu.core_type<tc>, window_params = [{transform_indices = @transform_0, window_bounds = array<i64: 1, 128, 128>}, {transform_indices = @transform_1, window_bounds = array<i64: 1, 128, 128>}, {transform_indices = @transform_2, window_bounds = array<i64: 1, 128, 128>}, {transform_indices = @transform_3, window_bounds = array<i64: 1, 1, 128>}, {transform_indices = @transform_4, window_bounds = array<i64: 1, 1, 128>}]} {
    %c0 = arith.constant 0 : index
    %c0_0 = arith.constant 0 : index
    %c0_1 = arith.constant 0 : index
    %0 = vector.load %arg2[%c0, %c0_0, %c0_1] : memref<1x128x128xbf16, #tpu.memory_space<vmem>>, vector<1x128x128xbf16>
    %1 = vector.shape_cast %0 : vector<1x128x128xbf16> to vector<128x128xbf16>
    %c0_2 = arith.constant 0 : index
    %c0_3 = arith.constant 0 : index
    %c0_4 = arith.constant 0 : index
    %2 = vector.load %arg3[%c0_2, %c0_3, %c0_4] : memref<1x128x128xbf16, #tpu.memory_space<vmem>>, vector<1x128x128xbf16>
    %3 = vector.shape_cast %2 : vector<1x128x128xbf16> to vector<128x128xbf16>
    %cst = arith.constant dense<0.000000e+00> : vector<128x128xf32>
    %4 = tpu.matmul %1, %3, %cst {dimension_numbers = #tpu.dot_dimension_numbers<[1], [0], [0], [1], [0, 0, 1, 1], [], []>} : vector<128x128xbf16>, vector<128x128xbf16>, vector<128x128xf32> -> vector<128x128xf32>
    %5 = arith.truncf %4 : vector<128x128xf32> to vector<128x128xbf16>
    %c0_5 = arith.constant 0 : index
    %c0_6 = arith.constant 0 : index
    %c0_7 = arith.constant 0 : index
    %6 = vector.load %arg4[%c0_5, %c0_6, %c0_7] : memref<1x128x128xbf16, #tpu.memory_space<vmem>>, vector<1x128x128xbf16>
    %7 = vector.shape_cast %6 : vector<1x128x128xbf16> to vector<128x128xbf16>
    %8 = vector.shape_cast %5 : vector<128x128xbf16> to vector<1x128x128xbf16>
    tpu.vector_store %arg4[%c0_5, %c0_6, %c0_7], %8 {strides = array<i32>} : memref<1x128x128xbf16, #tpu.memory_space<vmem>>, vector<1x128x128xbf16>,
    %c0_i32 = arith.constant 0 : i32
    %9 = arith.cmpi eq, %arg1, %c0_i32 : i32
    %10 = arith.extui %9 : i1 to i32
    %c0_i32_8 = arith.constant 0 : i32
    %11 = arith.cmpi ne, %10, %c0_i32_8 : i32
    scf.if %11 {
      %cst_23 = arith.constant 0.000000e+00 : f32
      %29 = vector.broadcast %cst_23 : f32 to vector<1x128xf32>
      %c0_24 = arith.constant 0 : index
      %c0_25 = arith.constant 0 : index
      %c0_26 = arith.constant 0 : index
      %30 = vector.load %arg5[%c0_24, %c0_25, %c0_26] : memref<1x1x128xf32, #tpu.memory_space<vmem>>, vector<1x1x128xf32>
      %31 = vector.shape_cast %30 : vector<1x1x128xf32> to vector<1x128xf32>
      %32 = vector.shape_cast %29 : vector<1x128xf32> to vector<1x1x128xf32>
      tpu.vector_store %arg5[%c0_24, %c0_25, %c0_26], %32 {strides = array<i32>} : memref<1x1x128xf32, #tpu.memory_space<vmem>>, vector<1x1x128xf32>,
      %cst_27 = arith.constant 0.000000e+00 : f32
      %33 = vector.broadcast %cst_27 : f32 to vector<1x128xf32>
      %c0_28 = arith.constant 0 : index
      %c0_29 = arith.constant 0 : index
      %c0_30 = arith.constant 0 : index
      %34 = vector.load %arg6[%c0_28, %c0_29, %c0_30] : memref<1x1x128xf32, #tpu.memory_space<vmem>>, vector<1x1x128xf32>
      %35 = vector.shape_cast %34 : vector<1x1x128xf32> to vector<1x128xf32>
      %36 = vector.shape_cast %33 : vector<1x128xf32> to vector<1x1x128xf32>
      tpu.vector_store %arg6[%c0_28, %c0_29, %c0_30], %36 {strides = array<i32>} : memref<1x1x128xf32, #tpu.memory_space<vmem>>, vector<1x1x128xf32>,
    } else {
    }
    %c0_9 = arith.constant 0 : index
    %c0_10 = arith.constant 0 : index
    %c0_11 = arith.constant 0 : index
    %12 = vector.load %arg5[%c0_9, %c0_10, %c0_11] : memref<1x1x128xf32, #tpu.memory_space<vmem>>, vector<1x1x128xf32>
    %13 = vector.shape_cast %12 : vector<1x1x128xf32> to vector<1x128xf32>
    %cst_12 = arith.constant dense<0.000000e+00> : vector<128xf32>
    %14 = vector.multi_reduction <add>, %4, %cst_12 [0] : vector<128x128xf32> to vector<128xf32>
    %15 = vector.shape_cast %14 : vector<128xf32> to vector<1x128xf32>
    %16 = arith.addf %13, %15 : vector<1x128xf32>
    %c0_13 = arith.constant 0 : index
    %c0_14 = arith.constant 0 : index
    %c0_15 = arith.constant 0 : index
    %17 = vector.load %arg5[%c0_13, %c0_14, %c0_15] : memref<1x1x128xf32, #tpu.memory_space<vmem>>, vector<1x1x128xf32>
    %18 = vector.shape_cast %17 : vector<1x1x128xf32> to vector<1x128xf32>
    %19 = vector.shape_cast %16 : vector<1x128xf32> to vector<1x1x128xf32>
    tpu.vector_store %arg5[%c0_13, %c0_14, %c0_15], %19 {strides = array<i32>} : memref<1x1x128xf32, #tpu.memory_space<vmem>>, vector<1x1x128xf32>,
    %c0_16 = arith.constant 0 : index
    %c0_17 = arith.constant 0 : index
    %c0_18 = arith.constant 0 : index
    %20 = vector.load %arg6[%c0_16, %c0_17, %c0_18] : memref<1x1x128xf32, #tpu.memory_space<vmem>>, vector<1x1x128xf32>
    %21 = vector.shape_cast %20 : vector<1x1x128xf32> to vector<1x128xf32>
    %22 = arith.mulf %4, %4 : vector<128x128xf32>
    %cst_19 = arith.constant dense<0.000000e+00> : vector<128xf32>
    %23 = vector.multi_reduction <add>, %22, %cst_19 [0] : vector<128x128xf32> to vector<128xf32>
    %24 = vector.shape_cast %23 : vector<128xf32> to vector<1x128xf32>
    %25 = arith.addf %21, %24 : vector<1x128xf32>
    %c0_20 = arith.constant 0 : index
    %c0_21 = arith.constant 0 : index
    %c0_22 = arith.constant 0 : index
    %26 = vector.load %arg6[%c0_20, %c0_21, %c0_22] : memref<1x1x128xf32, #tpu.memory_space<vmem>>, vector<1x1x128xf32>
    %27 = vector.shape_cast %26 : vector<1x1x128xf32> to vector<1x128xf32>
    %28 = vector.shape_cast %25 : vector<1x128xf32> to vector<1x1x128xf32>
    tpu.vector_store %arg6[%c0_20, %c0_21, %c0_22], %28 {strides = array<i32>} : memref<1x1x128xf32, #tpu.memory_space<vmem>>, vector<1x1x128xf32>,
    return
  }
  func.func @transform_0(%arg0: i32, %arg1: i32) -> (i32, i32, i32) {
    %c0_i32 = arith.constant 0 : i32
    %c0_i32_0 = arith.constant 0 : i32
    return %arg0, %arg1, %c0_i32 : i32, i32, i32
  }
  func.func @transform_1(%arg0: i32, %arg1: i32) -> (i32, i32, i32) {
    %c0_i32 = arith.constant 0 : i32
    %c0_i32_0 = arith.constant 0 : i32
    %c0_i32_1 = arith.constant 0 : i32
    return %arg0, %c0_i32, %c0_i32_0 : i32, i32, i32
  }
  func.func @transform_2(%arg0: i32, %arg1: i32) -> (i32, i32, i32) {
    %c0_i32 = arith.constant 0 : i32
    %c0_i32_0 = arith.constant 0 : i32
    return %arg0, %arg1, %c0_i32 : i32, i32, i32
  }
  func.func @transform_3(%arg0: i32, %arg1: i32) -> (i32, i32, i32) {
    %c0_i32 = arith.constant 0 : i32
    %c0_i32_0 = arith.constant 0 : i32
    %c0_i32_1 = arith.constant 0 : i32
    return %arg0, %c0_i32, %c0_i32_0 : i32, i32, i32
  }
  func.func @transform_4(%arg0: i32, %arg1: i32) -> (i32, i32, i32) {
    %c0_i32 = arith.constant 0 : i32
    %c0_i32_0 = arith.constant 0 : i32
    %c0_i32_1 = arith.constant 0 : i32
    return %arg0, %c0_i32, %c0_i32_0 : i32, i32, i32
  }
}

module attributes {stable_mosaic.version = 11 : i64} {
  func.func @_mm_stats_kernel(%arg0: i32, %arg1: i32, %arg2: memref<1x512x128xbf16, #tpu.memory_space<vmem>>, %arg3: memref<1x128x128xbf16, #tpu.memory_space<vmem>>, %arg4: memref<1x512x128xbf16, #tpu.memory_space<vmem>>, %arg5: memref<1x1x128xf32, #tpu.memory_space<vmem>>, %arg6: memref<1x1x128xf32, #tpu.memory_space<vmem>>) attributes {dimension_semantics = [#tpu.dimension_semantics<parallel>, #tpu.dimension_semantics<arbitrary>], iteration_bounds = array<i64: 4, 1>, scalar_prefetch = 0 : i64, scratch_operands = 0 : i64, tpu.core_type = #tpu.core_type<tc>, window_params = [{transform_indices = @transform_0, window_bounds = array<i64: 1, 512, 128>}, {transform_indices = @transform_1, window_bounds = array<i64: 1, 128, 128>}, {transform_indices = @transform_2, window_bounds = array<i64: 1, 512, 128>}, {transform_indices = @transform_3, window_bounds = array<i64: 1, 1, 128>}, {transform_indices = @transform_4, window_bounds = array<i64: 1, 1, 128>}]} {
    %c0 = arith.constant 0 : index
    %c0_0 = arith.constant 0 : index
    %c0_1 = arith.constant 0 : index
    %0 = vector.load %arg2[%c0, %c0_0, %c0_1] : memref<1x512x128xbf16, #tpu.memory_space<vmem>>, vector<1x512x128xbf16>
    %1 = vector.shape_cast %0 : vector<1x512x128xbf16> to vector<512x128xbf16>
    %c0_2 = arith.constant 0 : index
    %c0_3 = arith.constant 0 : index
    %c0_4 = arith.constant 0 : index
    %2 = vector.load %arg3[%c0_2, %c0_3, %c0_4] : memref<1x128x128xbf16, #tpu.memory_space<vmem>>, vector<1x128x128xbf16>
    %3 = vector.shape_cast %2 : vector<1x128x128xbf16> to vector<128x128xbf16>
    %cst = arith.constant dense<0.000000e+00> : vector<512x128xf32>
    %4 = tpu.matmul %1, %3, %cst {dimension_numbers = #tpu.dot_dimension_numbers<[1], [0], [0], [1], [0, 0, 1, 1], [], []>} : vector<512x128xbf16>, vector<128x128xbf16>, vector<512x128xf32> -> vector<512x128xf32>
    %5 = arith.truncf %4 : vector<512x128xf32> to vector<512x128xbf16>
    %c0_5 = arith.constant 0 : index
    %c0_6 = arith.constant 0 : index
    %c0_7 = arith.constant 0 : index
    %6 = vector.load %arg4[%c0_5, %c0_6, %c0_7] : memref<1x512x128xbf16, #tpu.memory_space<vmem>>, vector<1x512x128xbf16>
    %7 = vector.shape_cast %6 : vector<1x512x128xbf16> to vector<512x128xbf16>
    %8 = vector.shape_cast %5 : vector<512x128xbf16> to vector<1x512x128xbf16>
    tpu.vector_store %arg4[%c0_5, %c0_6, %c0_7], %8 {strides = array<i32>} : memref<1x512x128xbf16, #tpu.memory_space<vmem>>, vector<1x512x128xbf16>,
    %c0_i32 = arith.constant 0 : i32
    %9 = arith.cmpi eq, %arg1, %c0_i32 : i32
    %10 = arith.extui %9 : i1 to i32
    %c0_i32_8 = arith.constant 0 : i32
    %11 = arith.cmpi ne, %10, %c0_i32_8 : i32
    scf.if %11 {
      %cst_23 = arith.constant 0.000000e+00 : f32
      %29 = vector.broadcast %cst_23 : f32 to vector<1x128xf32>
      %c0_24 = arith.constant 0 : index
      %c0_25 = arith.constant 0 : index
      %c0_26 = arith.constant 0 : index
      %30 = vector.load %arg5[%c0_24, %c0_25, %c0_26] : memref<1x1x128xf32, #tpu.memory_space<vmem>>, vector<1x1x128xf32>
      %31 = vector.shape_cast %30 : vector<1x1x128xf32> to vector<1x128xf32>
      %32 = vector.shape_cast %29 : vector<1x128xf32> to vector<1x1x128xf32>
      tpu.vector_store %arg5[%c0_24, %c0_25, %c0_26], %32 {strides = array<i32>} : memref<1x1x128xf32, #tpu.memory_space<vmem>>, vector<1x1x128xf32>,
      %cst_27 = arith.constant 0.000000e+00 : f32
      %33 = vector.broadcast %cst_27 : f32 to vector<1x128xf32>
      %c0_28 = arith.constant 0 : index
      %c0_29 = arith.constant 0 : index
      %c0_30 = arith.constant 0 : index
      %34 = vector.load %arg6[%c0_28, %c0_29, %c0_30] : memref<1x1x128xf32, #tpu.memory_space<vmem>>, vector<1x1x128xf32>
      %35 = vector.shape_cast %34 : vector<1x1x128xf32> to vector<1x128xf32>
      %36 = vector.shape_cast %33 : vector<1x128xf32> to vector<1x1x128xf32>
      tpu.vector_store %arg6[%c0_28, %c0_29, %c0_30], %36 {strides = array<i32>} : memref<1x1x128xf32, #tpu.memory_space<vmem>>, vector<1x1x128xf32>,
    } else {
    }
    %c0_9 = arith.constant 0 : index
    %c0_10 = arith.constant 0 : index
    %c0_11 = arith.constant 0 : index
    %12 = vector.load %arg5[%c0_9, %c0_10, %c0_11] : memref<1x1x128xf32, #tpu.memory_space<vmem>>, vector<1x1x128xf32>
    %13 = vector.shape_cast %12 : vector<1x1x128xf32> to vector<1x128xf32>
    %cst_12 = arith.constant dense<0.000000e+00> : vector<128xf32>
    %14 = vector.multi_reduction <add>, %4, %cst_12 [0] : vector<512x128xf32> to vector<128xf32>
    %15 = vector.shape_cast %14 : vector<128xf32> to vector<1x128xf32>
    %16 = arith.addf %13, %15 : vector<1x128xf32>
    %c0_13 = arith.constant 0 : index
    %c0_14 = arith.constant 0 : index
    %c0_15 = arith.constant 0 : index
    %17 = vector.load %arg5[%c0_13, %c0_14, %c0_15] : memref<1x1x128xf32, #tpu.memory_space<vmem>>, vector<1x1x128xf32>
    %18 = vector.shape_cast %17 : vector<1x1x128xf32> to vector<1x128xf32>
    %19 = vector.shape_cast %16 : vector<1x128xf32> to vector<1x1x128xf32>
    tpu.vector_store %arg5[%c0_13, %c0_14, %c0_15], %19 {strides = array<i32>} : memref<1x1x128xf32, #tpu.memory_space<vmem>>, vector<1x1x128xf32>,
    %c0_16 = arith.constant 0 : index
    %c0_17 = arith.constant 0 : index
    %c0_18 = arith.constant 0 : index
    %20 = vector.load %arg6[%c0_16, %c0_17, %c0_18] : memref<1x1x128xf32, #tpu.memory_space<vmem>>, vector<1x1x128xf32>
    %21 = vector.shape_cast %20 : vector<1x1x128xf32> to vector<1x128xf32>
    %22 = arith.mulf %4, %4 : vector<512x128xf32>
    %cst_19 = arith.constant dense<0.000000e+00> : vector<128xf32>
    %23 = vector.multi_reduction <add>, %22, %cst_19 [0] : vector<512x128xf32> to vector<128xf32>
    %24 = vector.shape_cast %23 : vector<128xf32> to vector<1x128xf32>
    %25 = arith.addf %21, %24 : vector<1x128xf32>
    %c0_20 = arith.constant 0 : index
    %c0_21 = arith.constant 0 : index
    %c0_22 = arith.constant 0 : index
    %26 = vector.load %arg6[%c0_20, %c0_21, %c0_22] : memref<1x1x128xf32, #tpu.memory_space<vmem>>, vector<1x1x128xf32>
    %27 = vector.shape_cast %26 : vector<1x1x128xf32> to vector<1x128xf32>
    %28 = vector.shape_cast %25 : vector<1x128xf32> to vector<1x1x128xf32>
    tpu.vector_store %arg6[%c0_20, %c0_21, %c0_22], %28 {strides = array<i32>} : memref<1x1x128xf32, #tpu.memory_space<vmem>>, vector<1x1x128xf32>,
    return
  }
  func.func @transform_0(%arg0: i32, %arg1: i32) -> (i32, i32, i32) {
    %c0_i32 = arith.constant 0 : i32
    %c0_i32_0 = arith.constant 0 : i32
    return %arg0, %arg1, %c0_i32 : i32, i32, i32
  }
  func.func @transform_1(%arg0: i32, %arg1: i32) -> (i32, i32, i32) {
    %c0_i32 = arith.constant 0 : i32
    %c0_i32_0 = arith.constant 0 : i32
    %c0_i32_1 = arith.constant 0 : i32
    return %arg0, %c0_i32, %c0_i32_0 : i32, i32, i32
  }
  func.func @transform_2(%arg0: i32, %arg1: i32) -> (i32, i32, i32) {
    %c0_i32 = arith.constant 0 : i32
    %c0_i32_0 = arith.constant 0 : i32
    return %arg0, %arg1, %c0_i32 : i32, i32, i32
  }
  func.func @transform_3(%arg0: i32, %arg1: i32) -> (i32, i32, i32) {
    %c0_i32 = arith.constant 0 : i32
    %c0_i32_0 = arith.constant 0 : i32
    %c0_i32_1 = arith.constant 0 : i32
    return %arg0, %c0_i32, %c0_i32_0 : i32, i32, i32
  }
  func.func @transform_4(%arg0: i32, %arg1: i32) -> (i32, i32, i32) {
    %c0_i32 = arith.constant 0 : i32
    %c0_i32_0 = arith.constant 0 : i32
    %c0_i32_1 = arith.constant 0 : i32
    return %arg0, %c0_i32, %c0_i32_0 : i32, i32, i32
  }
}

module attributes {stable_mosaic.version = 11 : i64} {
  func.func @_bn_relu_kernel(%arg0: i32, %arg1: memref<2048x128xbf16, #tpu.memory_space<vmem>>, %arg2: memref<1x128xf32, #tpu.memory_space<vmem>>, %arg3: memref<1x128xf32, #tpu.memory_space<vmem>>, %arg4: memref<2048x128xbf16, #tpu.memory_space<vmem>>) attributes {dimension_semantics = [#tpu.dimension_semantics<parallel>], iteration_bounds = array<i64: 1>, scalar_prefetch = 0 : i64, scratch_operands = 0 : i64, tpu.core_type = #tpu.core_type<tc>, window_params = [{transform_indices = @transform_0, window_bounds = array<i64: 2048, 128>}, {pipeline_mode = #tpu.pipeline_mode<synchronous>, transform_indices = @transform_1, window_bounds = array<i64: 1, 128>}, {pipeline_mode = #tpu.pipeline_mode<synchronous>, transform_indices = @transform_2, window_bounds = array<i64: 1, 128>}, {transform_indices = @transform_3, window_bounds = array<i64: 2048, 128>}]} {
    %c0 = arith.constant 0 : index
    %c0_0 = arith.constant 0 : index
    %0 = vector.load %arg1[%c0, %c0_0] : memref<2048x128xbf16, #tpu.memory_space<vmem>>, vector<2048x128xbf16>
    %1 = arith.extf %0 : vector<2048x128xbf16> to vector<2048x128xf32>
    %c0_1 = arith.constant 0 : index
    %c0_2 = arith.constant 0 : index
    %2 = vector.load %arg2[%c0_1, %c0_2] : memref<1x128xf32, #tpu.memory_space<vmem>>, vector<1x128xf32>
    %3 = vector.broadcast %2 : vector<1x128xf32> to vector<2048x128xf32>
    %4 = arith.mulf %1, %3 : vector<2048x128xf32>
    %c0_3 = arith.constant 0 : index
    %c0_4 = arith.constant 0 : index
    %5 = vector.load %arg3[%c0_3, %c0_4] : memref<1x128xf32, #tpu.memory_space<vmem>>, vector<1x128xf32>
    %6 = vector.broadcast %5 : vector<1x128xf32> to vector<2048x128xf32>
    %7 = arith.addf %4, %6 : vector<2048x128xf32>
    %cst = arith.constant 0.000000e+00 : f32
    %8 = vector.broadcast %cst : f32 to vector<2048x128xf32>
    %9 = arith.maximumf %7, %8 : vector<2048x128xf32>
    %10 = arith.truncf %9 : vector<2048x128xf32> to vector<2048x128xbf16>
    %c0_5 = arith.constant 0 : index
    %c0_6 = arith.constant 0 : index
    %11 = vector.load %arg4[%c0_5, %c0_6] : memref<2048x128xbf16, #tpu.memory_space<vmem>>, vector<2048x128xbf16>
    tpu.vector_store %arg4[%c0_5, %c0_6], %10 {strides = array<i32>} : memref<2048x128xbf16, #tpu.memory_space<vmem>>, vector<2048x128xbf16>,
    return
  }
  func.func @transform_0(%arg0: i32) -> (i32, i32) {
    %c0_i32 = arith.constant 0 : i32
    %c0_i32_0 = arith.constant 0 : i32
    return %arg0, %c0_i32 : i32, i32
  }
  func.func @transform_1(%arg0: i32) -> (i32, i32) {
    %c0_i32 = arith.constant 0 : i32
    %c0_i32_0 = arith.constant 0 : i32
    %c0_i32_1 = arith.constant 0 : i32
    return %c0_i32, %c0_i32_0 : i32, i32
  }
  func.func @transform_2(%arg0: i32) -> (i32, i32) {
    %c0_i32 = arith.constant 0 : i32
    %c0_i32_0 = arith.constant 0 : i32
    %c0_i32_1 = arith.constant 0 : i32
    return %c0_i32, %c0_i32_0 : i32, i32
  }
  func.func @transform_3(%arg0: i32) -> (i32, i32) {
    %c0_i32 = arith.constant 0 : i32
    %c0_i32_0 = arith.constant 0 : i32
    return %arg0, %c0_i32 : i32, i32
  }
}

module attributes {stable_mosaic.version = 11 : i64} {
  func.func @_mm_tanh_kernel(%arg0: i32, %arg1: i32, %arg2: memref<1x1024x128xbf16, #tpu.memory_space<vmem>>, %arg3: memref<1x128x128xbf16, #tpu.memory_space<vmem>>, %arg4: memref<1x1024x128xf32, #tpu.memory_space<vmem>>) attributes {dimension_semantics = [#tpu.dimension_semantics<parallel>, #tpu.dimension_semantics<parallel>], iteration_bounds = array<i64: 4, 2>, scalar_prefetch = 0 : i64, scratch_operands = 0 : i64, tpu.core_type = #tpu.core_type<tc>, window_params = [{transform_indices = @transform_0, window_bounds = array<i64: 1, 1024, 128>}, {transform_indices = @transform_1, window_bounds = array<i64: 1, 128, 128>}, {transform_indices = @transform_2, window_bounds = array<i64: 1, 1024, 128>}]} {
    %c0 = arith.constant 0 : index
    %c0_0 = arith.constant 0 : index
    %c0_1 = arith.constant 0 : index
    %0 = vector.load %arg2[%c0, %c0_0, %c0_1] : memref<1x1024x128xbf16, #tpu.memory_space<vmem>>, vector<1x1024x128xbf16>
    %1 = vector.shape_cast %0 : vector<1x1024x128xbf16> to vector<1024x128xbf16>
    %c0_2 = arith.constant 0 : index
    %c0_3 = arith.constant 0 : index
    %c0_4 = arith.constant 0 : index
    %2 = vector.load %arg3[%c0_2, %c0_3, %c0_4] : memref<1x128x128xbf16, #tpu.memory_space<vmem>>, vector<1x128x128xbf16>
    %3 = vector.shape_cast %2 : vector<1x128x128xbf16> to vector<128x128xbf16>
    %cst = arith.constant dense<0.000000e+00> : vector<1024x128xf32>
    %4 = tpu.matmul %1, %3, %cst {dimension_numbers = #tpu.dot_dimension_numbers<[1], [0], [0], [1], [0, 0, 1, 1], [], []>} : vector<1024x128xbf16>, vector<128x128xbf16>, vector<1024x128xf32> -> vector<1024x128xf32>
    %5 = math.tanh %4 : vector<1024x128xf32>
    %c0_5 = arith.constant 0 : index
    %c0_6 = arith.constant 0 : index
    %c0_7 = arith.constant 0 : index
    %6 = vector.load %arg4[%c0_5, %c0_6, %c0_7] : memref<1x1024x128xf32, #tpu.memory_space<vmem>>, vector<1x1024x128xf32>
    %7 = vector.shape_cast %6 : vector<1x1024x128xf32> to vector<1024x128xf32>
    %8 = vector.shape_cast %5 : vector<1024x128xf32> to vector<1x1024x128xf32>
    tpu.vector_store %arg4[%c0_5, %c0_6, %c0_7], %8 {strides = array<i32>} : memref<1x1024x128xf32, #tpu.memory_space<vmem>>, vector<1x1024x128xf32>,
    return
  }
  func.func @transform_0(%arg0: i32, %arg1: i32) -> (i32, i32, i32) {
    %c0_i32 = arith.constant 0 : i32
    %c0_i32_0 = arith.constant 0 : i32
    return %arg0, %arg1, %c0_i32 : i32, i32, i32
  }
  func.func @transform_1(%arg0: i32, %arg1: i32) -> (i32, i32, i32) {
    %c0_i32 = arith.constant 0 : i32
    %c0_i32_0 = arith.constant 0 : i32
    %c0_i32_1 = arith.constant 0 : i32
    return %arg0, %c0_i32, %c0_i32_0 : i32, i32, i32
  }
  func.func @transform_2(%arg0: i32, %arg1: i32) -> (i32, i32, i32) {
    %c0_i32 = arith.constant 0 : i32
    %c0_i32_0 = arith.constant 0 : i32
    return %arg0, %arg1, %c0_i32 : i32, i32, i32
  }
}

</mosaic_0001>

<llo_original>
// kernel: generator_forward.10
$region0: #{generator_forward.10}
  #allocation0 [shape = 'u32[]', space=smem, size = 0x4, offset = 0x4, fixed_abs, tag = 'smem constant byte address 0x4 - core index']
  #allocation1 [shape = 'u32[144,128]{1,0:T(1,128)}', space=vmem, size = 0x12000, scoped, tag = 'internal scratch']
  %s0 = inlined_call_operand.vmem [shape: bf16[128,128], index: 0, kind: input, shape index: {}]
  %s1 = inlined_call_operand.vmem [shape: f32[1,128], index: 1, kind: input, shape index: {}]
  %s2 = inlined_call_operand.vmem [shape: f32[1,128], index: 2, kind: input, shape index: {}]
  %s3 = inlined_call_operand.vmem [shape: bf16[128,128], index: 3, kind: output, shape index: {}]
  %s4 = sld [smem:[#allocation0]]
  $region22: #{generator_forward.10} parent=0
    _
  %s6 = ssub.s32 1, %s4
  %s7 = scalar_select 0, %s6, %s4
  // Predicated region
  $region2: #{generator_forward.10} parent=0 // pred_check
    _
  $region3: #{generator_forward.10} parent=0 // pred_check_branch
    %9 = sbr.rel (0) target = $region5
  $region4: #{generator_forward.10} parent=0 // pred_region
    _
  $region5: #{generator_forward.10} parent=0 // pred_fallthru
    _
  // Predicated region
  $region6: #{generator_forward.10} parent=0 // pred_check
    _
  $region7: #{generator_forward.10} parent=0 // pred_check_branch
    %11 = sbr.rel (0) target = $region9
  $region8: #{generator_forward.10} parent=0 // pred_region
    _
  $region9: #{generator_forward.10} parent=0 // pred_fallthru
    _
  // Predicated region
  $region10: #{generator_forward.10} parent=0 // pred_check
    _
  $region11: #{generator_forward.10} parent=0 // pred_check_branch
    %13 = sbr.rel (0) target = $region13
  $region12: #{generator_forward.10} parent=0 // pred_region
    _
  $region13: #{generator_forward.10} parent=0 // pred_fallthru
    _
  %v14 = vld [vmem:[%s0] sm:$0xf]
  %v15 = vld [vmem:[%s0 + $0x4] sm:$0xf]
  %v16 = vld [vmem:[%s0 + $0x8] sm:$0xf]
  %v17 = vld [vmem:[%s0 + $0xc] sm:$0xf]
  %v18 = vld [vmem:[%s0 + $0x10] sm:$0xf]
  %v19 = vld [vmem:[%s0 + $0x14] sm:$0xf]
  %v20 = vld [vmem:[%s0 + $0x18] sm:$0xf]
  %v21 = vld [vmem:[%s0 + $0x1c] sm:$0xf]
  %v22 = vld [vmem:[%s0 + $0x20] sm:$0xf]
  %v23 = vld [vmem:[%s0 + $0x24] sm:$0xf]
  %v24 = vld [vmem:[%s0 + $0x28] sm:$0xf]
  %v25 = vld [vmem:[%s0 + $0x2c] sm:$0xf]
  %v26 = vld [vmem:[%s0 + $0x30] sm:$0xf]
  %v27 = vld [vmem:[%s0 + $0x34] sm:$0xf]
  %v28 = vld [vmem:[%s0 + $0x38] sm:$0xf]
  %v29 = vld [vmem:[%s0 + $0x3c] sm:$0xf]
  %v30 = vunpack.c.l.bf16 %v14
  %v31 = vunpack.c.l.bf16 %v15
  %v32 = vunpack.c.l.bf16 %v16
  %v33 = vunpack.c.l.bf16 %v17
  %v34 = vunpack.c.l.bf16 %v18
  %v35 = vunpack.c.l.bf16 %v19
  %v36 = vunpack.c.l.bf16 %v20
  %v37 = vunpack.c.l.bf16 %v21
  %v38 = vunpack.c.l.bf16 %v22
  %v39 = vunpack.c.l.bf16 %v23
  %v40 = vunpack.c.l.bf16 %v24
  %v41 = vunpack.c.l.bf16 %v25
  %v42 = vunpack.c.l.bf16 %v26
  %v43 = vunpack.c.l.bf16 %v27
  %v44 = vunpack.c.l.bf16 %v28
  %v45 = vunpack.c.l.bf16 %v29
  %v46 = vld [vmem:[%s1] sm:$0x1]
  %v48 = vlaneseq
  %v49 = vshrl.u32 %v48, 7
  %v50 = vsub.s32 0, %v49
  %v51 = vrot.slane %v46, %v50
  %v53 = vmul.f32 %v30, %v51
  %v54 = vmul.f32 %v31, %v51
  %v55 = vmul.f32 %v32, %v51
  %v56 = vmul.f32 %v33, %v51
  %v57 = vmul.f32 %v34, %v51
  %v58 = vmul.f32 %v35, %v51
  %v59 = vmul.f32 %v36, %v51
  %v60 = vmul.f32 %v37, %v51
  %v61 = vmul.f32 %v38, %v51
  %v62 = vmul.f32 %v39, %v51
  %v63 = vmul.f32 %v40, %v51
  %v64 = vmul.f32 %v41, %v51
  %v65 = vmul.f32 %v42, %v51
  %v66 = vmul.f32 %v43, %v51
  %v67 = vmul.f32 %v44, %v51
  %v68 = vmul.f32 %v45, %v51
  %v69 = vld [vmem:[%s2] sm:$0x1]
  %v71 = vlaneseq
  %v72 = vshrl.u32 %v71, 7
  %v73 = vsub.s32 0, %v72
  %v74 = vrot.slane %v69, %v73
  %v76 = vadd.f32 %v53, %v74
  %v77 = vadd.f32 %v54, %v74
  %v78 = vadd.f32 %v55, %v74
  %v79 = vadd.f32 %v56, %v74
  %v80 = vadd.f32 %v57, %v74
  %v81 = vadd.f32 %v58, %v74
  %v82 = vadd.f32 %v59, %v74
  %v83 = vadd.f32 %v60, %v74
  %v84 = vadd.f32 %v61, %v74
  %v85 = vadd.f32 %v62, %v74
  %v86 = vadd.f32 %v63, %v74
  %v87 = vadd.f32 %v64, %v74
  %v88 = vadd.f32 %v65, %v74
  %v89 = vadd.f32 %v66, %v74
  %v90 = vadd.f32 %v67, %v74
  %v91 = vadd.f32 %v68, %v74
  %v92 = vmax.f32 %v76, 0.0
  %v93 = vmax.f32 %v77, 0.0
  %v94 = vmax.f32 %v78, 0.0
  %v95 = vmax.f32 %v79, 0.0
  %v96 = vmax.f32 %v80, 0.0
  %v97 = vmax.f32 %v81, 0.0
  %v98 = vmax.f32 %v82, 0.0
  %v99 = vmax.f32 %v83, 0.0
  %v100 = vmax.f32 %v84, 0.0
  %v101 = vmax.f32 %v85, 0.0
  %v102 = vmax.f32 %v86, 0.0
  %v103 = vmax.f32 %v87, 0.0
  %v104 = vmax.f32 %v88, 0.0
  %v105 = vmax.f32 %v89, 0.0
  %v106 = vmax.f32 %v90, 0.0
  %v107 = vmax.f32 %v91, 0.0
  %v108 = vpack.c.bf16 %v93, %v92
  %v109 = vpack.c.bf16 %v95, %v94
  %v110 = vpack.c.bf16 %v97, %v96
  %v111 = vpack.c.bf16 %v99, %v98
  %v112 = vpack.c.bf16 %v101, %v100
  %v113 = vpack.c.bf16 %v103, %v102
  %v114 = vpack.c.bf16 %v105, %v104
  %v115 = vpack.c.bf16 %v107, %v106
  %v124 = vunpack.c.l.b16 %v108
  %v125 = vunpack.c.h.b16 %v108
  %v126 = vunpack.c.l.b16 %v109
  %v127 = vunpack.c.h.b16 %v109
  %v128 = vunpack.c.l.b16 %v110
  %v129 = vunpack.c.h.b16 %v110
  %v130 = vunpack.c.l.b16 %v111
  %v131 = vunpack.c.h.b16 %v111
  %v132 = vunpack.c.l.b16 %v112
  %v133 = vunpack.c.h.b16 %v112
  %v134 = vunpack.c.l.b16 %v113
  %v135 = vunpack.c.h.b16 %v113
  %v136 = vunpack.c.l.b16 %v114
  %v137 = vunpack.c.h.b16 %v114
  %v138 = vunpack.c.l.b16 %v115
  %v139 = vunpack.c.h.b16 %v115
  %v140 = vpack.c.b16 %v124, %v124
  %v141 = vpack.c.b16 %v125, %v125
  %v142 = vpack.c.b16 %v126, %v126
  %v143 = vpack.c.b16 %v127, %v127
  %v144 = vpack.c.b16 %v128, %v128
  %v145 = vpack.c.b16 %v129, %v129
  %v146 = vpack.c.b16 %v130, %v130
  %v147 = vpack.c.b16 %v131, %v131
  %v148 = vpack.c.b16 %v132, %v132
  %v149 = vpack.c.b16 %v133, %v133
  %v150 = vpack.c.b16 %v134, %v134
  %v151 = vpack.c.b16 %v135, %v135
  %v152 = vpack.c.b16 %v136, %v136
  %v153 = vpack.c.b16 %v137, %v137
  %v154 = vpack.c.b16 %v138, %v138
  %v155 = vpack.c.b16 %v139, %v139
  %172 = vst [vmem:[%s3] sm:$0xf] %v140
  %173 = vst [vmem:[%s3 + $0x4] sm:$0xf] %v141
  %174 = vst [vmem:[%s3 + $0x8] sm:$0xf] %v142
  %175 = vst [vmem:[%s3 + $0xc] sm:$0xf] %v143
  %176 = vst [vmem:[%s3 + $0x10] sm:$0xf] %v144
  %177 = vst [vmem:[%s3 + $0x14] sm:$0xf] %v145
  %178 = vst [vmem:[%s3 + $0x18] sm:$0xf] %v146
  %179 = vst [vmem:[%s3 + $0x1c] sm:$0xf] %v147
  %180 = vst [vmem:[%s3 + $0x20] sm:$0xf] %v148
  %181 = vst [vmem:[%s3 + $0x24] sm:$0xf] %v149
  %182 = vst [vmem:[%s3 + $0x28] sm:$0xf] %v150
  %183 = vst [vmem:[%s3 + $0x2c] sm:$0xf] %v151
  %184 = vst [vmem:[%s3 + $0x30] sm:$0xf] %v152
  %185 = vst [vmem:[%s3 + $0x34] sm:$0xf] %v153
  %186 = vst [vmem:[%s3 + $0x38] sm:$0xf] %v154
  %187 = vst [vmem:[%s3 + $0x3c] sm:$0xf] %v155
  // Predicated region
  $region14: #{generator_forward.10} parent=0 // pred_check
    _
  $region15: #{generator_forward.10} parent=0 // pred_check_branch
    %189 = sbr.rel (0) target = $region17
  $region16: #{generator_forward.10} parent=0 // pred_region
    _
  $region17: #{generator_forward.10} parent=0 // pred_fallthru
    _
  // Predicated region
  $region18: #{generator_forward.10} parent=0 // pred_check
    _
  $region19: #{generator_forward.10} parent=0 // pred_check_branch
    %191 = sbr.rel (0) target = $region21
  $region20: #{generator_forward.10} parent=0 // pred_region
    _
  $region21: #{generator_forward.10} parent=0 // pred_fallthru
    _

// kernel: generator_forward.9
$region0: #{generator_forward.9}
  #allocation0 [shape = 'u32[]', space=smem, size = 0x4, offset = 0x4, fixed_abs, tag = 'smem constant byte address 0x4 - core index']
  #allocation1 [shape = 'u32[144,128]{1,0:T(1,128)}', space=vmem, size = 0x12000, scoped, tag = 'internal scratch']
  %s0 = inlined_call_operand.vmem [shape: bf16[1,128,256], index: 0, kind: input, shape index: {}]
  %s1 = inlined_call_operand.hbm [shape: bf16[1,256,128], index: 1, kind: input, shape index: {}]
  %s2 = inlined_call_operand.vmem [shape: bf16[1,128,128], index: 2, kind: output, shape index: {0}]
  %s3 = inlined_call_operand.vmem [shape: f32[1,1,128], index: 3, kind: output, shape index: {1}]
  %s4 = inlined_call_operand.vmem [shape: f32[1,1,128], index: 4, kind: output, shape index: {2}]
  %5 = xla_tuple %s2, %s3, %s4
  %s6 = sld [smem:[#allocation0]]
  $region42: #{generator_forward.9} parent=0
    _
  %s8 = ssub.s32 1, %s6
  %s9 = scalar_select 0, %s8, %s6
  $region1: #{generator_forward.9} parent=0
    #allocation2 [shape = 'u8[65536]{0}', space=vmem, size = 0x10000, scoped, tag = 'input window, operand 1, single buffered']
    #allocation3 [shape = 's32[1]{0}', space=sflag, size = 0x4, scoped, tag = 'scoped memory for generator_forward.9']
    %10 = vsyncpa [#allocation3], 0
    // Predicated region
    $region2: #{generator_forward.9} parent=1 // pred_check
      _
    $region3: #{generator_forward.9} parent=1 // pred_check_branch
      %12 = sbr.rel (0) target = $region5
    $region4: #{generator_forward.9} parent=1 // pred_region
      _
    $region5: #{generator_forward.9} parent=1 // pred_fallthru
      _
    // Predicated region
    $region6: #{generator_forward.9} parent=1 // pred_check
      _
    $region7: #{generator_forward.9} parent=1 // pred_check_branch
      %14 = sbr.rel (0) target = $region9
    $region8: #{generator_forward.9} parent=1 // pred_region
      %s16 = ssub.s32 2048, 2048
      %17 = vsyncadd [#allocation3], %s16
      %s18 = sshll.u32 [#allocation2], 4
      %s19 = int_to_ptr.vmem [resolvable:$true] %s18
      %24 = dma.hbm_to_vmem [thread:$0]  %s1, 2048, %s19, [#allocation3], 64, 64, 4
    $region9: #{generator_forward.9} parent=1 // pred_fallthru
      _
    // Predicated region
    $region10: #{generator_forward.9} parent=1 // pred_check
      _
    $region11: #{generator_forward.9} parent=1 // pred_check_branch
      %26 = sbr.rel (0) target = $region13
    $region12: #{generator_forward.9} parent=1 // pred_region
      %27 = dma.done [#allocation3], 2048
    $region13: #{generator_forward.9} parent=1 // pred_fallthru
      _
    %v29 = vld [vmem:[%s0] sm:$0xff]
    %v30 = vld [vmem:[%s0 + $0x8] sm:$0xff]
    %v31 = vld [vmem:[%s0 + $0x10] sm:$0xff]
    %v32 = vld [vmem:[%s0 + $0x18] sm:$0xff]
    %v33 = vld [vmem:[%s0 + $0x20] sm:$0xff]
    %v34 = vld [vmem:[%s0 + $0x28] sm:$0xff]
    %v35 = vld [vmem:[%s0 + $0x30] sm:$0xff]
    %v36 = vld [vmem:[%s0 + $0x38] sm:$0xff]
    %v37 = vld [vmem:[%s0 + $0x40] sm:$0xff]
    %v38 = vld [vmem:[%s0 + $0x48] sm:$0xff]
    %v39 = vld [vmem:[%s0 + $0x50] sm:$0xff]
    %v40 = vld [vmem:[%s0 + $0x58] sm:$0xff]
    %v41 = vld [vmem:[%s0 + $0x60] sm:$0xff]
    %v42 = vld [vmem:[%s0 + $0x68] sm:$0xff]
    %v43 = vld [vmem:[%s0 + $0x70] sm:$0xff]
    %v44 = vld [vmem:[%s0 + $0x78] sm:$0xff]
    %v45 = vld [vmem:[#allocation2] sm:$0xf]
    %v46 = vld [vmem:[#allocation2 + $0x4] sm:$0xf]
    %v47 = vld [vmem:[#allocation2 + $0x8] sm:$0xf]
    %v48 = vld [vmem:[#allocation2 + $0xc] sm:$0xf]
    %v49 = vld [vmem:[#allocation2 + $0x10] sm:$0xf]
    %v50 = vld [vmem:[#allocation2 + $0x14] sm:$0xf]
    %v51 = vld [vmem:[#allocation2 + $0x18] sm:$0xf]
    %v52 = vld [vmem:[#allocation2 + $0x1c] sm:$0xf]
    %v53 = vld [vmem:[#allocation2 + $0x20] sm:$0xf]
    %v54 = vld [vmem:[#allocation2 + $0x24] sm:$0xf]
    %v55 = vld [vmem:[#allocation2 + $0x28] sm:$0xf]
    %v56 = vld [vmem:[#allocation2 + $0x2c] sm:$0xf]
    %v57 = vld [vmem:[#allocation2 + $0x30] sm:$0xf]
    %v58 = vld [vmem:[#allocation2 + $0x34] sm:$0xf]
    %v59 = vld [vmem:[#allocation2 + $0x38] sm:$0xf]
    %v60 = vld [vmem:[#allocation2 + $0x3c] sm:$0xf]
    %v61 = vld [vmem:[#allocation2 + $0x40] sm:$0xf]
    %v62 = vld [vmem:[#allocation2 + $0x44] sm:$0xf]
    %v63 = vld [vmem:[#allocation2 + $0x48] sm:$0xf]
    %v64 = vld [vmem:[#allocation2 + $0x4c] sm:$0xf]
    %v65 = vld [vmem:[#allocation2 + $0x50] sm:$0xf]
    %v66 = vld [vmem:[#allocation2 + $0x54] sm:$0xf]
    %v67 = vld [vmem:[#allocation2 + $0x58] sm:$0xf]
    %v68 = vld [vmem:[#allocation2 + $0x5c] sm:$0xf]
    %v69 = vld [vmem:[#allocation2 + $0x60] sm:$0xf]
    %v70 = vld [vmem:[#allocation2 + $0x64] sm:$0xf]
    %v71 = vld [vmem:[#allocation2 + $0x68] sm:$0xf]
    %v72 = vld [vmem:[#allocation2 + $0x6c] sm:$0xf]
    %v73 = vld [vmem:[#allocation2 + $0x70] sm:$0xf]
    %v74 = vld [vmem:[#allocation2 + $0x74] sm:$0xf]
    %v75 = vld [vmem:[#allocation2 + $0x78] sm:$0xf]
    %v76 = vld [vmem:[#allocation2 + $0x7c] sm:$0xf]
    %v93 = vunpack.c.l.b16 %v29
    %v94 = vunpack.c.h.b16 %v29
    %v95 = vunpack.c.l.b16 %v30
    %v96 = vunpack.c.h.b16 %v30
    %v97 = vunpack.c.l.b16 %v31
    %v98 = vunpack.c.h.b16 %v31
    %v99 = vunpack.c.l.b16 %v32
    %v100 = vunpack.c.h.b16 %v32
    %v101 = vunpack.c.l.b16 %v33
    %v102 = vunpack.c.h.b16 %v33
    %v103 = vunpack.c.l.b16 %v34
    %v104 = vunpack.c.h.b16 %v34
    %v105 = vunpack.c.l.b16 %v35
    %v106 = vunpack.c.h.b16 %v35
    %v107 = vunpack.c.l.b16 %v36
    %v108 = vunpack.c.h.b16 %v36
    %v109 = vunpack.c.l.b16 %v37
    %v110 = vunpack.c.h.b16 %v37
    %v111 = vunpack.c.l.b16 %v38
    %v112 = vunpack.c.h.b16 %v38
    %v113 = vunpack.c.l.b16 %v39
    %v114 = vunpack.c.h.b16 %v39
    %v115 = vunpack.c.l.b16 %v40
    %v116 = vunpack.c.h.b16 %v40
    %v117 = vunpack.c.l.b16 %v41
    %v118 = vunpack.c.h.b16 %v41
    %v119 = vunpack.c.l.b16 %v42
    %v120 = vunpack.c.h.b16 %v42
    %v121 = vunpack.c.l.b16 %v43
    %v122 = vunpack.c.h.b16 %v43
    %v123 = vunpack.c.l.b16 %v44
    %v124 = vunpack.c.h.b16 %v44
    %v125 = vpack.c.b16 %v95, %v93
    %v126 = vpack.c.b16 %v96, %v94
    %v127 = vpack.c.b16 %v99, %v97
    %v128 = vpack.c.b16 %v100, %v98
    %v129 = vpack.c.b16 %v103, %v101
    %v130 = vpack.c.b16 %v104, %v102
    %v131 = vpack.c.b16 %v107, %v105
    %v132 = vpack.c.b16 %v108, %v106
    %v133 = vpack.c.b16 %v111, %v109
    %v134 = vpack.c.b16 %v112, %v110
    %v135 = vpack.c.b16 %v115, %v113
    %v136 = vpack.c.b16 %v116, %v114
    %v137 = vpack.c.b16 %v119, %v117
    %v138 = vpack.c.b16 %v120, %v118
    %v139 = vpack.c.b16 %v123, %v121
    %v140 = vpack.c.b16 %v124, %v122
    %v189 = vunpack.c.l.b16 %v45
    %v190 = vunpack.c.l.b16 %v46
    %v191 = vunpack.c.l.b16 %v47
    %v192 = vunpack.c.l.b16 %v48
    %v193 = vunpack.c.l.b16 %v49
    %v194 = vunpack.c.l.b16 %v50
    %v195 = vunpack.c.l.b16 %v51
    %v196 = vunpack.c.l.b16 %v52
    %v197 = vunpack.c.l.b16 %v53
    %v198 = vunpack.c.l.b16 %v54
    %v199 = vunpack.c.l.b16 %v55
    %v200 = vunpack.c.l.b16 %v56
    %v201 = vunpack.c.l.b16 %v57
    %v202 = vunpack.c.l.b16 %v58
    %v203 = vunpack.c.l.b16 %v59
    %v204 = vunpack.c.l.b16 %v60
    %v205 = vunpack.c.l.b16 %v61
    %v206 = vunpack.c.l.b16 %v62
    %v207 = vunpack.c.l.b16 %v63
    %v208 = vunpack.c.l.b16 %v64
    %v209 = vunpack.c.l.b16 %v65
    %v210 = vunpack.c.l.b16 %v66
    %v211 = vunpack.c.l.b16 %v67
    %v212 = vunpack.c.l.b16 %v68
    %v213 = vunpack.c.l.b16 %v69
    %v214 = vunpack.c.l.b16 %v70
    %v215 = vunpack.c.l.b16 %v71
    %v216 = vunpack.c.l.b16 %v72
    %v217 = vunpack.c.l.b16 %v73
    %v218 = vunpack.c.l.b16 %v74
    %v219 = vunpack.c.l.b16 %v75
    %v220 = vunpack.c.l.b16 %v76
    %v221 = vpack.c.b16 %v190, %v189
    %v222 = vpack.c.b16 %v192, %v191
    %v223 = vpack.c.b16 %v194, %v193
    %v224 = vpack.c.b16 %v196, %v195
    %v225 = vpack.c.b16 %v198, %v197
    %v226 = vpack.c.b16 %v200, %v199
    %v227 = vpack.c.b16 %v202, %v201
    %v228 = vpack.c.b16 %v204, %v203
    %v229 = vpack.c.b16 %v206, %v205
    %v230 = vpack.c.b16 %v208, %v207
    %v231 = vpack.c.b16 %v210, %v209
    %v232 = vpack.c.b16 %v212, %v211
    %v233 = vpack.c.b16 %v214, %v213
    %v234 = vpack.c.b16 %v216, %v215
    %v235 = vpack.c.b16 %v218, %v217
    %v236 = vpack.c.b16 %v220, %v219
    %253 = vmatprep.subr.bf16.mxu0 0
    %254 = vmatpush1.bf16.msra.mxu0 %v228
    %255 = vmatprep.subr.bf16.mxu0 0
    %256 = vmatpush1.bf16.msra.mxu0 %v227
    %257 = vmatprep.subr.bf16.mxu0 0
    %258 = vmatpush1.bf16.msra.mxu0 %v226
    %259 = vmatprep.subr.bf16.mxu0 0
    %260 = vmatpush1.bf16.msra.mxu0 %v225
    %261 = vmatprep.subr.bf16.mxu0 0
    %262 = vmatpush1.bf16.msra.mxu0 %v224
    %263 = vmatprep.subr.bf16.mxu0 0
    %264 = vmatpush1.bf16.msra.mxu0 %v223
    %265 = vmatprep.subr.bf16.mxu0 0
    %266 = vmatpush1.bf16.msra.mxu0 %v222
    %267 = vmatprep.subr.bf16.mxu0 0
    %268 = vmatpush1.bf16.msra.mxu0 %v221
    %269 = vmatprep.subr.bf16.mxu0 0
    %270 = vmatpush2.bf16.msra.mxu0 %v236
    %271 = vmatprep.subr.bf16.mxu0 0
    %272 = vmatpush2.bf16.msra.mxu0 %v235
    %273 = vmatprep.subr.bf16.mxu0 0
    %274 = vmatpush2.bf16.msra.mxu0 %v234
    %275 = vmatprep.subr.bf16.mxu0 0
    %276 = vmatpush2.bf16.msra.mxu0 %v233
    %277 = vmatprep.subr.bf16.mxu0 0
    %278 = vmatpush2.bf16.msra.mxu0 %v232
    %279 = vmatprep.subr.bf16.mxu0 0
    %280 = vmatpush2.bf16.msra.mxu0 %v231
    %281 = vmatprep.subr.bf16.mxu0 0
    %282 = vmatpush2.bf16.msra.mxu0 %v230
    %283 = vmatprep.subr.bf16.mxu0 0
    %284 = vmatpush2.bf16.msra.mxu0 %v229
    %285 = vmatprep.mubr.bf16.mxu0 %v126
    %286 = vmatmul.mubr.bf16.gmra.mxu0 %v125
    %v287 = vpop.f32.mrf.mxu0
    %v288 = vadd.f32 0.0, %v287
    %v289 = vpop.f32.mrf.mxu0
    %v290 = vpop.f32.mrf.mxu0
    %v291 = vadd.f32 0.0, %v290
    %v292 = vpop.f32.mrf.mxu0
    %293 = vmatprep.mubr.bf16.mxu0 %v128
    %294 = vmatmul.mubr.bf16.gmra.mxu0 %v127
    %v295 = vpop.f32.mrf.mxu0
    %v296 = vadd.f32 0.0, %v295
    %v297 = vpop.f32.mrf.mxu0
    %v298 = vpop.f32.mrf.mxu0
    %v299 = vadd.f32 0.0, %v298
    %v300 = vpop.f32.mrf.mxu0
    %301 = vmatprep.mubr.bf16.mxu0 %v130
    %302 = vmatmul.mubr.bf16.gmra.mxu0 %v129
    %v303 = vpop.f32.mrf.mxu0
    %v304 = vadd.f32 0.0, %v303
    %v305 = vpop.f32.mrf.mxu0
    %v306 = vpop.f32.mrf.mxu0
    %v307 = vadd.f32 0.0, %v306
    %v308 = vpop.f32.mrf.mxu0
    %309 = vmatprep.mubr.bf16.mxu0 %v132
    %310 = vmatmul.mubr.bf16.gmra.mxu0 %v131
    %v311 = vpop.f32.mrf.mxu0
    %v312 = vadd.f32 0.0, %v311
    %v313 = vpop.f32.mrf.mxu0
    %v314 = vpop.f32.mrf.mxu0
    %v315 = vadd.f32 0.0, %v314
    %v316 = vpop.f32.mrf.mxu0
    %317 = vmatprep.mubr.bf16.mxu0 %v134
    %318 = vmatmul.mubr.bf16.gmra.mxu0 %v133
    %v319 = vpop.f32.mrf.mxu0
    %v320 = vadd.f32 0.0, %v319
    %v321 = vpop.f32.mrf.mxu0
    %v322 = vpop.f32.mrf.mxu0
    %v323 = vadd.f32 0.0, %v322
    %v324 = vpop.f32.mrf.mxu0
    %325 = vmatprep.mubr.bf16.mxu0 %v136
    %326 = vmatmul.mubr.bf16.gmra.mxu0 %v135
    %v327 = vpop.f32.mrf.mxu0
    %v328 = vadd.f32 0.0, %v327
    %v329 = vpop.f32.mrf.mxu0
    %v330 = vpop.f32.mrf.mxu0
    %v331 = vadd.f32 0.0, %v330
    %v332 = vpop.f32.mrf.mxu0
    %333 = vmatprep.mubr.bf16.mxu0 %v138
    %334 = vmatmul.mubr.bf16.gmra.mxu0 %v137
    %v335 = vpop.f32.mrf.mxu0
    %v336 = vadd.f32 0.0, %v335
    %v337 = vpop.f32.mrf.mxu0
    %v338 = vpop.f32.mrf.mxu0
    %v339 = vadd.f32 0.0, %v338
    %v340 = vpop.f32.mrf.mxu0
    %341 = vmatprep.mubr.bf16.mxu0 %v140
    %342 = vmatmul.mubr.bf16.gmra.mxu0 %v139
    %v343 = vpop.f32.mrf.mxu0
    %v344 = vadd.f32 0.0, %v343
    %v345 = vpop.f32.mrf.mxu0
    %v346 = vpop.f32.mrf.mxu0
    %v347 = vadd.f32 0.0, %v346
    %v348 = vpop.f32.mrf.mxu0
    %349 = vdwg.mxu0
    %v350 = vpack.c.bf16 %v291, %v288
    %v351 = vpack.c.bf16 %v299, %v296
    %v352 = vpack.c.bf16 %v307, %v304
    %v353 = vpack.c.bf16 %v315, %v312
    %v354 = vpack.c.bf16 %v323, %v320
    %v355 = vpack.c.bf16 %v331, %v328
    %v356 = vpack.c.bf16 %v339, %v336
    %v357 = vpack.c.bf16 %v347, %v344
    %v366 = vunpack.c.l.b16 %v350
    %v367 = vunpack.c.h.b16 %v350
    %v368 = vunpack.c.l.b16 %v351
    %v369 = vunpack.c.h.b16 %v351
    %v370 = vunpack.c.l.b16 %v352
    %v371 = vunpack.c.h.b16 %v352
    %v372 = vunpack.c.l.b16 %v353
    %v373 = vunpack.c.h.b16 %v353
    %v374 = vunpack.c.l.b16 %v354
    %v375 = vunpack.c.h.b16 %v354
    %v376 = vunpack.c.l.b16 %v355
    %v377 = vunpack.c.h.b16 %v355
    %v378 = vunpack.c.l.b16 %v356
    %v379 = vunpack.c.h.b16 %v356
    %v380 = vunpack.c.l.b16 %v357
    %v381 = vunpack.c.h.b16 %v357
    %v382 = vpack.c.b16 %v366, %v366
    %v383 = vpack.c.b16 %v367, %v367
    %v384 = vpack.c.b16 %v368, %v368
    %v385 = vpack.c.b16 %v369, %v369
    %v386 = vpack.c.b16 %v370, %v370
    %v387 = vpack.c.b16 %v371, %v371
    %v388 = vpack.c.b16 %v372, %v372
    %v389 = vpack.c.b16 %v373, %v373
    %v390 = vpack.c.b16 %v374, %v374
    %v391 = vpack.c.b16 %v375, %v375
    %v392 = vpack.c.b16 %v376, %v376
    %v393 = vpack.c.b16 %v377, %v377
    %v394 = vpack.c.b16 %v378, %v378
    %v395 = vpack.c.b16 %v379, %v379
    %v396 = vpack.c.b16 %v380, %v380
    %v397 = vpack.c.b16 %v381, %v381
    %414 = vst [vmem:[%s2] sm:$0xf] %v382
    %415 = vst [vmem:[%s2 + $0x4] sm:$0xf] %v383
    %416 = vst [vmem:[%s2 + $0x8] sm:$0xf] %v384
    %417 = vst [vmem:[%s2 + $0xc] sm:$0xf] %v385
    %418 = vst [vmem:[%s2 + $0x10] sm:$0xf] %v386
    %419 = vst [vmem:[%s2 + $0x14] sm:$0xf] %v387
    %420 = vst [vmem:[%s2 + $0x18] sm:$0xf] %v388
    %421 = vst [vmem:[%s2 + $0x1c] sm:$0xf] %v389
    %422 = vst [vmem:[%s2 + $0x20] sm:$0xf] %v390
    %423 = vst [vmem:[%s2 + $0x24] sm:$0xf] %v391
    %424 = vst [vmem:[%s2 + $0x28] sm:$0xf] %v392
    %425 = vst [vmem:[%s2 + $0x2c] sm:$0xf] %v393
    %426 = vst [vmem:[%s2 + $0x30] sm:$0xf] %v394
    %427 = vst [vmem:[%s2 + $0x34] sm:$0xf] %v395
    %428 = vst [vmem:[%s2 + $0x38] sm:$0xf] %v396
    %429 = vst [vmem:[%s2 + $0x3c] sm:$0xf] %v397
    %p430 = scmp.eq.s32.totalorder 0, 0
    // Predicated region
    $region14: #{generator_forward.9} parent=1 // pred_check
      %p431 = pneg %p430
    $region15: #{generator_forward.9} parent=1 // pred_check_branch
      %433 = sbr.rel (%p431) target = $region17
    $region16: #{generator_forward.9} parent=1 // pred_region
      %434 = vst [vmem:[%s3] sm:$0x1] 0.0
      %435 = vst [vmem:[%s4] sm:$0x1] 0.0
    $region17: #{generator_forward.9} parent=1 // pred_fallthru
      _
    %v436 = vld [vmem:[%s3] sm:$0x1]
    %v437 = vadd.f32 %v288, %v291
    %v438 = vadd.f32 %v437, %v296
    %v439 = vadd.f32 %v438, %v299
    %v440 = vadd.f32 %v439, %v304
    %v441 = vadd.f32 %v440, %v307
    %v442 = vadd.f32 %v441, %v312
    %v443 = vadd.f32 %v442, %v315
    %v444 = vadd.f32 %v443, %v320
    %v445 = vadd.f32 %v444, %v323
    %v446 = vadd.f32 %v445, %v328
    %v447 = vadd.f32 %v446, %v331
    %v448 = vadd.f32 %v447, %v336
    %v449 = vadd.f32 %v448, %v339
    %v450 = vadd.f32 %v449, %v344
    %v451 = vadd.f32 %v450, %v347
    %v452 = vrot.slane %v451, 4
    %v453 = vadd.f32 %v451, %v452
    %v454 = vrot.slane %v453, 2
    %v455 = vadd.f32 %v453, %v454
    %v456 = vrot.slane %v455, 1
    %v457 = vadd.f32 %v455, %v456
    %v458 = vadd.f32 %v436, %v457
    %459 = vst [vmem:[%s3] sm:$0x1] %v458
    %v460 = vld [vmem:[%s4] sm:$0x1]
    %v461 = vmul.f32 %v288, %v288
    %v462 = vmul.f32 %v291, %v291
    %v463 = vmul.f32 %v296, %v296
    %v464 = vmul.f32 %v299, %v299
    %v465 = vmul.f32 %v304, %v304
    %v466 = vmul.f32 %v307, %v307
    %v467 = vmul.f32 %v312, %v312
    %v468 = vmul.f32 %v315, %v315
    %v469 = vmul.f32 %v320, %v320
    %v470 = vmul.f32 %v323, %v323
    %v471 = vmul.f32 %v328, %v328
    %v472 = vmul.f32 %v331, %v331
    %v473 = vmul.f32 %v336, %v336
    %v474 = vmul.f32 %v339, %v339
    %v475 = vmul.f32 %v344, %v344
    %v476 = vmul.f32 %v347, %v347
    %v477 = vadd.f32 %v461, %v462
    %v478 = vadd.f32 %v477, %v463
    %v479 = vadd.f32 %v478, %v464
    %v480 = vadd.f32 %v479, %v465
    %v481 = vadd.f32 %v480, %v466
    %v482 = vadd.f32 %v481, %v467
    %v483 = vadd.f32 %v482, %v468
    %v484 = vadd.f32 %v483, %v469
    %v485 = vadd.f32 %v484, %v470
    %v486 = vadd.f32 %v485, %v471
    %v487 = vadd.f32 %v486, %v472
    %v488 = vadd.f32 %v487, %v473
    %v489 = vadd.f32 %v488, %v474
    %v490 = vadd.f32 %v489, %v475
    %v491 = vadd.f32 %v490, %v476
    %v492 = vrot.slane %v491, 4
    %v493 = vadd.f32 %v491, %v492
    %v494 = vrot.slane %v493, 2
    %v495 = vadd.f32 %v493, %v494
    %v496 = vrot.slane %v495, 1
    %v497 = vadd.f32 %v495, %v496
    %v498 = vadd.f32 %v460, %v497
    %499 = vst [vmem:[%s4] sm:$0x1] %v498
    // Predicated region
    $region18: #{generator_forward.9} parent=1 // pred_check
      _
    $region19: #{generator_forward.9} parent=1 // pred_check_branch
      %501 = sbr.rel (0) target = $region21
    $region20: #{generator_forward.9} parent=1 // pred_region
      _
    $region21: #{generator_forward.9} parent=1 // pred_fallthru
      _
    // Predicated region
    $region22: #{generator_forward.9} parent=1 // pred_check
      _
    $region23: #{generator_forward.9} parent=1 // pred_check_branch
      %503 = sbr.rel (0) target = $region25
    $region24: #{generator_forward.9} parent=1 // pred_region
      _
    $region25: #{generator_forward.9} parent=1 // pred_fallthru
      _
    // Predicated region
    $region26: #{generator_forward.9} parent=1 // pred_check
      _
    $region27: #{generator_forward.9} parent=1 // pred_check_branch
      %505 = sbr.rel (0) target = $region29
    $region28: #{generator_forward.9} parent=1 // pred_region
      _
    $region29: #{generator_forward.9} parent=1 // pred_fallthru
      _
    // Predicated region
    $region30: #{generator_forward.9} parent=1 // pred_check
      _
    $region31: #{generator_forward.9} parent=1 // pred_check_branch
      %507 = sbr.rel (0) target = $region33
    $region32: #{generator_forward.9} parent=1 // pred_region
      _
    $region33: #{generator_forward.9} parent=1 // pred_fallthru
      _
    // Predicated region
    $region34: #{generator_forward.9} parent=1 // pred_check
      _
    $region35: #{generator_forward.9} parent=1 // pred_check_branch
      %509 = sbr.rel (0) target = $region37
    $region36: #{generator_forward.9} parent=1 // pred_region
      _
    $region37: #{generator_forward.9} parent=1 // pred_fallthru
      _
    // Predicated region
    $region38: #{generator_forward.9} parent=1 // pred_check
      _
    $region39: #{generator_forward.9} parent=1 // pred_check_branch
      %511 = sbr.rel (0) target = $region41
    $region40: #{generator_forward.9} parent=1 // pred_region
      _
    $region41: #{generator_forward.9} parent=1 // pred_fallthru
      _
    %512 = vsyncpa [#allocation3], 1

// kernel: generator_forward.11
$region0: #{generator_forward.11}
  #allocation0 [shape = 'u32[]', space=smem, size = 0x4, offset = 0x4, fixed_abs, tag = 'smem constant byte address 0x4 - core index']
  #allocation1 [shape = 'u32[144,128]{1,0:T(1,128)}', space=vmem, size = 0x12000, scoped, tag = 'internal scratch']
  %s0 = inlined_call_operand.vmem [shape: bf16[4,128,256], index: 0, kind: input, shape index: {}]
  %s1 = inlined_call_operand.vmem [shape: bf16[4,256,128], index: 1, kind: input, shape index: {}]
  %s2 = inlined_call_operand.vmem [shape: bf16[4,128,128], index: 2, kind: output, shape index: {0}]
  %s3 = inlined_call_operand.vmem [shape: f32[4,1,128], index: 3, kind: output, shape index: {1}]
  %s4 = inlined_call_operand.vmem [shape: f32[4,1,128], index: 4, kind: output, shape index: {2}]
  %5 = xla_tuple %s2, %s3, %s4
  %s6 = sld [smem:[#allocation0]]
  $region61: #{generator_forward.11} parent=0
    _
  %s8 = ssub.s32 1, %s6
  %s9 = scalar_select 0, %s8, %s6
  loop: start=0, step=1, limit=6
  $region2: #{generator_forward.11} parent=0 // loop_pre_header
    _
  $region3: #{generator_forward.11} parent=0 // loop_header
    %s11 = sphi 0, %s15
    %p12 = scmp.ge.s32.totalorder %s11, 6
    %s18 = sphi 0, %s30
    %s19 = sphi 0, %s26
    %s20 = sphi 0, %s18
    %s21 = sphi 0, %s19
    %s22 = sphi 0, %s20
    %s23 = sphi 0, %s21
    %s35 = sphi 0, %s37
    %s38 = sphi 0, %s35
    %s39 = sphi 0, %s38
    %s55 = sphi 0, %s39
    %s61 = sphi 0, %s63
    %s64 = sphi 0, %s61
    %s65 = sphi 0, %s64
    %s81 = sphi 0, %s65
    %s89 = sphi 0, %s91
    %s92 = sphi 0, %s89
    %s93 = sphi 0, %s92
    %s109 = sphi 0, %s93
    %s115 = sphi 0, %s117
    %s118 = sphi 0, %s115
    %s119 = sphi 0, %s118
    %s135 = sphi 0, %s119
    %s141 = sphi 0, %s143
    %s144 = sphi 0, %s141
    %s145 = sphi 0, %s144
    %s161 = sphi 0, %s145
  $region4: #{generator_forward.11} parent=0 // loop_header_branch
    %14 = sbr.rel (%p12) target = $region8
  $region5: #{generator_forward.11} parent=0 // loop_body
    %s16 = ssub.s32 %s11, 1
    %s17 = ssub.s32 %s11, 2
    %s24 = sadd.s32 1, %s19
    %p25 = scmp.ge.s32.totalorder %s24, 1
    %s26 = scalar_select %p25, 0, %s24
    %s27 = sadd.s32 1, %s18
    %s28 = scalar_select %p25, %s27, %s18
    %p29 = scmp.ge.s32.totalorder %s28, 4
    %s30 = scalar_select %p29, 0, %s28
    %s31 = ssub.s32 %s18, %s30
    %s32 = ssub.s32 %s19, %s26
    %s33 = sor.u32 %s31, %s32
    %p34 = scmp.eq.s32.totalorder %s33, 0
    %s36 = sadd.s32 %s35, 1
    %s37 = scalar_select %p34, %s35, %s36
    %p40 = pneg %p34
    %p41 = scmp.eq.s32.totalorder %s11, 3
    %p42 = por %p40, %p41
    %p43 = scmp.ne.s32.totalorder %s35, %s38
    %p44 = scmp.eq.s32.totalorder %s11, 0
    %p45 = por %p43, %p44
    %p46 = scmp.ne.s32.totalorder %s35, %s38
    %p47 = scmp.eq.s32.totalorder %s16, 3
    %p48 = por %p46, %p47
    %p49 = scmp.ne.s32.totalorder %s38, %s39
    %p50 = scmp.eq.s32.totalorder %s16, 0
    %p51 = por %p49, %p50
    %p52 = scmp.ne.s32.totalorder %s38, %s39
    %p53 = scmp.eq.s32.totalorder %s17, 3
    %p54 = por %p52, %p53
    %p56 = scmp.ne.s32.totalorder %s39, %s55
    %p57 = scmp.eq.s32.totalorder %s17, 0
    %p58 = por %p56, %p57
    %s59 = ssub.s32 %s18, %s30
    %p60 = scmp.eq.s32.totalorder %s59, 0
    %s62 = sadd.s32 %s61, 1
    %s63 = scalar_select %p60, %s61, %s62
    %p66 = pneg %p60
    %p67 = scmp.eq.s32.totalorder %s11, 3
    %p68 = por %p66, %p67
    %p69 = scmp.ne.s32.totalorder %s61, %s64
    %p70 = scmp.eq.s32.totalorder %s11, 0
    %p71 = por %p69, %p70
    %p72 = scmp.ne.s32.totalorder %s61, %s64
    %p73 = scmp.eq.s32.totalorder %s16, 3
    %p74 = por %p72, %p73
    %p75 = scmp.ne.s32.totalorder %s64, %s65
    %p76 = scmp.eq.s32.totalorder %s16, 0
    %p77 = por %p75, %p76
    %p78 = scmp.ne.s32.totalorder %s64, %s65
    %p79 = scmp.eq.s32.totalorder %s17, 3
    %p80 = por %p78, %p79
    %p82 = scmp.ne.s32.totalorder %s65, %s81
    %p83 = scmp.eq.s32.totalorder %s17, 0
    %p84 = por %p82, %p83
    %s85 = ssub.s32 %s18, %s30
    %s86 = ssub.s32 %s19, %s26
    %s87 = sor.u32 %s85, %s86
    %p88 = scmp.eq.s32.totalorder %s87, 0
    %s90 = sadd.s32 %s89, 1
    %s91 = scalar_select %p88, %s89, %s90
    %p94 = pneg %p88
    %p95 = scmp.eq.s32.totalorder %s11, 3
    %p96 = por %p94, %p95
    %p97 = scmp.ne.s32.totalorder %s89, %s92
    %p98 = scmp.eq.s32.totalorder %s11, 0
    %p99 = por %p97, %p98
    %p100 = scmp.ne.s32.totalorder %s89, %s92
    %p101 = scmp.eq.s32.totalorder %s16, 3
    %p102 = por %p100, %p101
    %p103 = scmp.ne.s32.totalorder %s92, %s93
    %p104 = scmp.eq.s32.totalorder %s16, 0
    %p105 = por %p103, %p104
    %p106 = scmp.ne.s32.totalorder %s92, %s93
    %p107 = scmp.eq.s32.totalorder %s17, 3
    %p108 = por %p106, %p107
    %p110 = scmp.ne.s32.totalorder %s93, %s109
    %p111 = scmp.eq.s32.totalorder %s17, 0
    %p112 = por %p110, %p111
    %s113 = ssub.s32 %s18, %s30
    %p114 = scmp.eq.s32.totalorder %s113, 0
    %s116 = sadd.s32 %s115, 1
    %s117 = scalar_select %p114, %s115, %s116
    %p120 = pneg %p114
    %p121 = scmp.eq.s32.totalorder %s11, 3
    %p122 = por %p120, %p121
    %p123 = scmp.ne.s32.totalorder %s115, %s118
    %p124 = scmp.eq.s32.totalorder %s11, 0
    %p125 = por %p123, %p124
    %p126 = scmp.ne.s32.totalorder %s115, %s118
    %p127 = scmp.eq.s32.totalorder %s16, 3
    %p128 = por %p126, %p127
    %p129 = scmp.ne.s32.totalorder %s118, %s119
    %p130 = scmp.eq.s32.totalorder %s16, 0
    %p131 = por %p129, %p130
    %p132 = scmp.ne.s32.totalorder %s118, %s119
    %p133 = scmp.eq.s32.totalorder %s17, 3
    %p134 = por %p132, %p133
    %p136 = scmp.ne.s32.totalorder %s119, %s135
    %p137 = scmp.eq.s32.totalorder %s17, 0
    %p138 = por %p136, %p137
    %s139 = ssub.s32 %s18, %s30
    %p140 = scmp.eq.s32.totalorder %s139, 0
    %s142 = sadd.s32 %s141, 1
    %s143 = scalar_select %p140, %s141, %s142
    %p146 = pneg %p140
    %p147 = scmp.eq.s32.totalorder %s11, 3
    %p148 = por %p146, %p147
    %p149 = scmp.ne.s32.totalorder %s141, %s144
    %p150 = scmp.eq.s32.totalorder %s11, 0
    %p151 = por %p149, %p150
    %p152 = scmp.ne.s32.totalorder %s141, %s144
    %p153 = scmp.eq.s32.totalorder %s16, 3
    %p154 = por %p152, %p153
    %p155 = scmp.ne.s32.totalorder %s144, %s145
    %p156 = scmp.eq.s32.totalorder %s16, 0
    %p157 = por %p155, %p156
    %p158 = scmp.ne.s32.totalorder %s144, %s145
    %p159 = scmp.eq.s32.totalorder %s17, 3
    %p160 = por %p158, %p159
    %p162 = scmp.ne.s32.totalorder %s145, %s161
    %p163 = scmp.eq.s32.totalorder %s17, 0
    %p164 = por %p162, %p163
    %p165 = scmp.le.s32.totalorder 1, %s11
    %p166 = scmp.lt.s32.totalorder %s11, 5
    %p167 = pnand %p165, %p166
    %p168 = pneg %p167
    // Predicated region
    $region9: #{generator_forward.11} parent=5 // pred_check
      _
    $region10: #{generator_forward.11} parent=5 // pred_check_branch
      %170 = sbr.rel (%p167) target = $region12
    $region11: #{generator_forward.11} parent=5 // pred_region
      %s171 = ssub.s32 %s11, 1
    $region12: #{generator_forward.11} parent=5 // pred_fallthru
      _
    %p172 = scmp.lt.s32.totalorder %s11, 4
    // Predicated region
    $region13: #{generator_forward.11} parent=5 // pred_check
      %p173 = pneg %p172
    $region14: #{generator_forward.11} parent=5 // pred_check_branch
      %175 = sbr.rel (%p173) target = $region16
    $region15: #{generator_forward.11} parent=5 // pred_region
      // Predicated region
      $region17: #{generator_forward.11} parent=15 // pred_check
        %p176 = pneg %p45
      $region18: #{generator_forward.11} parent=15 // pred_check_branch
        %178 = sbr.rel (%p176) target = $region20
      $region19: #{generator_forward.11} parent=15 // pred_region
        %s179 = smul.u32 16, %s19
        %p180 = scmp.lt.s32.totalorder %s18, 3
        %s181 = scalar_select %p180, %s18, 3
        %p182 = scmp.lt.s32.totalorder %s179, 15
        %s183 = scalar_select %p182, %s179, 15
        %s184 = smul.addr %s183, 2
        %s185 = smul.addr %s181, 32
        %s186 = sadd.s32 %s184, %s185
        %s187 = smul.addr %s186, 4
        %s188 = scalar_lea.vmem %s0, %s187
        %s189 = smul.u32 16, %s19
      $region20: #{generator_forward.11} parent=15 // pred_fallthru
        _
      // Predicated region
      $region21: #{generator_forward.11} parent=15 // pred_check
        %p190 = pneg %p71
      $region22: #{generator_forward.11} parent=15 // pred_check_branch
        %192 = sbr.rel (%p190) target = $region24
      $region23: #{generator_forward.11} parent=15 // pred_region
        %p193 = scmp.lt.s32.totalorder %s18, 3
        %s194 = scalar_select %p193, %s18, 3
        %s195 = smul.addr %s194, 32
        %s196 = smul.addr %s195, 4
        %s197 = scalar_lea.vmem %s1, %s196
      $region24: #{generator_forward.11} parent=15 // pred_fallthru
        _
    $region16: #{generator_forward.11} parent=5 // pred_fallthru
      _
    %p198 = scmp.le.s32.totalorder 1, %s11
    %p199 = scmp.lt.s32.totalorder %s11, 5
    %p200 = pnand %p198, %p199
    %p201 = pneg %p200
    // Predicated region
    $region25: #{generator_forward.11} parent=5 // pred_check
      _
    $region26: #{generator_forward.11} parent=5 // pred_check_branch
      %203 = sbr.rel (%p200) target = $region28
    $region27: #{generator_forward.11} parent=5 // pred_region
      %s204 = ssub.s32 %s11, 1
      %s205 = smul.u32 16, %s21
      %p206 = scmp.lt.s32.totalorder %s20, 3
      %s207 = scalar_select %p206, %s20, 3
      %p208 = scmp.lt.s32.totalorder %s205, 15
      %s209 = scalar_select %p208, %s205, 15
      %s210 = smul.addr %s209, 2
      %s211 = smul.addr %s207, 32
      %s212 = sadd.s32 %s210, %s211
      %s213 = smul.addr %s212, 4
      %s214 = scalar_lea.vmem %s0, %s213
      %p215 = pneg %p51
      %p216 = pneg %p48
      %p217 = scmp.lt.s32.totalorder %s20, 3
      %s218 = scalar_select %p217, %s20, 3
      %s219 = smul.addr %s218, 32
      %s220 = smul.addr %s219, 4
      %s221 = scalar_lea.vmem %s1, %s220
      %p222 = pneg %p77
      %p223 = pneg %p74
      %p224 = pneg %p105
      %p225 = pneg %p102
      %s226 = smul.u32 16, %s21
      %p227 = scmp.lt.s32.totalorder %s20, 3
      %s228 = scalar_select %p227, %s20, 3
      %p229 = scmp.lt.s32.totalorder %s226, 15
      %s230 = scalar_select %p229, %s226, 15
      %s231 = smul.addr %s228, 16
      %s232 = sadd.s32 %s230, %s231
      %s233 = smul.addr %s232, 4
      %s234 = scalar_lea.vmem %s2, %s233
      %p235 = pneg %p131
      %p236 = pneg %p128
      %p237 = scmp.lt.s32.totalorder %s20, 3
      %s238 = scalar_select %p237, %s20, 3
      %s239 = scalar_lea.vmem %s3, %s238
      %p240 = pneg %p157
      %p241 = pneg %p154
      %p242 = scmp.lt.s32.totalorder %s20, 3
      %s243 = scalar_select %p242, %s20, 3
      %s244 = scalar_lea.vmem %s4, %s243
      %s245 = smul.u32 16, %s21
      %p246 = scmp.lt.s32.totalorder %s20, 3
      %s247 = scalar_select %p246, %s20, 3
      %p248 = scmp.lt.s32.totalorder %s245, 15
      %s249 = scalar_select %p248, %s245, 15
      %s250 = smul.addr %s249, 2
      %s251 = smul.addr %s247, 32
      %s252 = sadd.s32 %s250, %s251
      %s253 = smul.addr %s252, 4
      %s254 = scalar_lea.vmem %s0, %s253
      %s255 = smul.u32 16, %s21
      %p256 = scmp.lt.s32.totalorder %s20, 3
      %s257 = scalar_select %p256, %s20, 3
      %s258 = smul.addr %s257, 32
      %s259 = smul.addr %s258, 4
      %s260 = scalar_lea.vmem %s1, %s259
      %s261 = smul.u32 16, %s21
      %p262 = scmp.lt.s32.totalorder %s20, 3
      %s263 = scalar_select %p262, %s20, 3
      %p264 = scmp.lt.s32.totalorder %s261, 15
      %s265 = scalar_select %p264, %s261, 15
      %s266 = smul.addr %s263, 16
      %s267 = sadd.s32 %s265, %s266
      %s268 = smul.addr %s267, 4
      %s269 = scalar_lea.vmem %s2, %s268
      %s270 = smul.u32 16, %s21
      %p271 = scmp.lt.s32.totalorder %s20, 3
      %s272 = scalar_select %p271, %s20, 3
      %s273 = scalar_lea.vmem %s3, %s272
      %p274 = scmp.lt.s32.totalorder %s20, 3
      %s275 = scalar_select %p274, %s20, 3
      %s276 = scalar_lea.vmem %s4, %s275
      %v278 = vld [vmem:[%s254] sm:$0xff]
      %v279 = vld [vmem:[%s254 + $0x8] sm:$0xff]
      %v280 = vld [vmem:[%s254 + $0x10] sm:$0xff]
      %v281 = vld [vmem:[%s254 + $0x18] sm:$0xff]
      %v282 = vld [vmem:[%s254 + $0x20] sm:$0xff]
      %v283 = vld [vmem:[%s254 + $0x28] sm:$0xff]
      %v284 = vld [vmem:[%s254 + $0x30] sm:$0xff]
      %v285 = vld [vmem:[%s254 + $0x38] sm:$0xff]
      %v286 = vld [vmem:[%s254 + $0x40] sm:$0xff]
      %v287 = vld [vmem:[%s254 + $0x48] sm:$0xff]
      %v288 = vld [vmem:[%s254 + $0x50] sm:$0xff]
      %v289 = vld [vmem:[%s254 + $0x58] sm:$0xff]
      %v290 = vld [vmem:[%s254 + $0x60] sm:$0xff]
      %v291 = vld [vmem:[%s254 + $0x68] sm:$0xff]
      %v292 = vld [vmem:[%s254 + $0x70] sm:$0xff]
      %v293 = vld [vmem:[%s254 + $0x78] sm:$0xff]
      %v294 = vld [vmem:[%s260] sm:$0xf]
      %v295 = vld [vmem:[%s260 + $0x4] sm:$0xf]
      %v296 = vld [vmem:[%s260 + $0x8] sm:$0xf]
      %v297 = vld [vmem:[%s260 + $0xc] sm:$0xf]
      %v298 = vld [vmem:[%s260 + $0x10] sm:$0xf]
      %v299 = vld [vmem:[%s260 + $0x14] sm:$0xf]
      %v300 = vld [vmem:[%s260 + $0x18] sm:$0xf]
      %v301 = vld [vmem:[%s260 + $0x1c] sm:$0xf]
      %v302 = vld [vmem:[%s260 + $0x20] sm:$0xf]
      %v303 = vld [vmem:[%s260 + $0x24] sm:$0xf]
      %v304 = vld [vmem:[%s260 + $0x28] sm:$0xf]
      %v305 = vld [vmem:[%s260 + $0x2c] sm:$0xf]
      %v306 = vld [vmem:[%s260 + $0x30] sm:$0xf]
      %v307 = vld [vmem:[%s260 + $0x34] sm:$0xf]
      %v308 = vld [vmem:[%s260 + $0x38] sm:$0xf]
      %v309 = vld [vmem:[%s260 + $0x3c] sm:$0xf]
      %v310 = vld [vmem:[%s260 + $0x40] sm:$0xf]
      %v311 = vld [vmem:[%s260 + $0x44] sm:$0xf]
      %v312 = vld [vmem:[%s260 + $0x48] sm:$0xf]
      %v313 = vld [vmem:[%s260 + $0x4c] sm:$0xf]
      %v314 = vld [vmem:[%s260 + $0x50] sm:$0xf]
      %v315 = vld [vmem:[%s260 + $0x54] sm:$0xf]
      %v316 = vld [vmem:[%s260 + $0x58] sm:$0xf]
      %v317 = vld [vmem:[%s260 + $0x5c] sm:$0xf]
      %v318 = vld [vmem:[%s260 + $0x60] sm:$0xf]
      %v319 = vld [vmem:[%s260 + $0x64] sm:$0xf]
      %v320 = vld [vmem:[%s260 + $0x68] sm:$0xf]
      %v321 = vld [vmem:[%s260 + $0x6c] sm:$0xf]
      %v322 = vld [vmem:[%s260 + $0x70] sm:$0xf]
      %v323 = vld [vmem:[%s260 + $0x74] sm:$0xf]
      %v324 = vld [vmem:[%s260 + $0x78] sm:$0xf]
      %v325 = vld [vmem:[%s260 + $0x7c] sm:$0xf]
      %v342 = vunpack.c.l.b16 %v278
      %v343 = vunpack.c.h.b16 %v278
      %v344 = vunpack.c.l.b16 %v279
      %v345 = vunpack.c.h.b16 %v279
      %v346 = vunpack.c.l.b16 %v280
      %v347 = vunpack.c.h.b16 %v280
      %v348 = vunpack.c.l.b16 %v281
      %v349 = vunpack.c.h.b16 %v281
      %v350 = vunpack.c.l.b16 %v282
      %v351 = vunpack.c.h.b16 %v282
      %v352 = vunpack.c.l.b16 %v283
      %v353 = vunpack.c.h.b16 %v283
      %v354 = vunpack.c.l.b16 %v284
      %v355 = vunpack.c.h.b16 %v284
      %v356 = vunpack.c.l.b16 %v285
      %v357 = vunpack.c.h.b16 %v285
      %v358 = vunpack.c.l.b16 %v286
      %v359 = vunpack.c.h.b16 %v286
      %v360 = vunpack.c.l.b16 %v287
      %v361 = vunpack.c.h.b16 %v287
      %v362 = vunpack.c.l.b16 %v288
      %v363 = vunpack.c.h.b16 %v288
      %v364 = vunpack.c.l.b16 %v289
      %v365 = vunpack.c.h.b16 %v289
      %v366 = vunpack.c.l.b16 %v290
      %v367 = vunpack.c.h.b16 %v290
      %v368 = vunpack.c.l.b16 %v291
      %v369 = vunpack.c.h.b16 %v291
      %v370 = vunpack.c.l.b16 %v292
      %v371 = vunpack.c.h.b16 %v292
      %v372 = vunpack.c.l.b16 %v293
      %v373 = vunpack.c.h.b16 %v293
      %v374 = vpack.c.b16 %v344, %v342
      %v375 = vpack.c.b16 %v345, %v343
      %v376 = vpack.c.b16 %v348, %v346
      %v377 = vpack.c.b16 %v349, %v347
      %v378 = vpack.c.b16 %v352, %v350
      %v379 = vpack.c.b16 %v353, %v351
      %v380 = vpack.c.b16 %v356, %v354
      %v381 = vpack.c.b16 %v357, %v355
      %v382 = vpack.c.b16 %v360, %v358
      %v383 = vpack.c.b16 %v361, %v359
      %v384 = vpack.c.b16 %v364, %v362
      %v385 = vpack.c.b16 %v365, %v363
      %v386 = vpack.c.b16 %v368, %v366
      %v387 = vpack.c.b16 %v369, %v367
      %v388 = vpack.c.b16 %v372, %v370
      %v389 = vpack.c.b16 %v373, %v371
      %v438 = vunpack.c.l.b16 %v294
      %v439 = vunpack.c.l.b16 %v295
      %v440 = vunpack.c.l.b16 %v296
      %v441 = vunpack.c.l.b16 %v297
      %v442 = vunpack.c.l.b16 %v298
      %v443 = vunpack.c.l.b16 %v299
      %v444 = vunpack.c.l.b16 %v300
      %v445 = vunpack.c.l.b16 %v301
      %v446 = vunpack.c.l.b16 %v302
      %v447 = vunpack.c.l.b16 %v303
      %v448 = vunpack.c.l.b16 %v304
      %v449 = vunpack.c.l.b16 %v305
      %v450 = vunpack.c.l.b16 %v306
      %v451 = vunpack.c.l.b16 %v307
      %v452 = vunpack.c.l.b16 %v308
      %v453 = vunpack.c.l.b16 %v309
      %v454 = vunpack.c.l.b16 %v310
      %v455 = vunpack.c.l.b16 %v311
      %v456 = vunpack.c.l.b16 %v312
      %v457 = vunpack.c.l.b16 %v313
      %v458 = vunpack.c.l.b16 %v314
      %v459 = vunpack.c.l.b16 %v315
      %v460 = vunpack.c.l.b16 %v316
      %v461 = vunpack.c.l.b16 %v317
      %v462 = vunpack.c.l.b16 %v318
      %v463 = vunpack.c.l.b16 %v319
      %v464 = vunpack.c.l.b16 %v320
      %v465 = vunpack.c.l.b16 %v321
      %v466 = vunpack.c.l.b16 %v322
      %v467 = vunpack.c.l.b16 %v323
      %v468 = vunpack.c.l.b16 %v324
      %v469 = vunpack.c.l.b16 %v325
      %v470 = vpack.c.b16 %v439, %v438
      %v471 = vpack.c.b16 %v441, %v440
      %v472 = vpack.c.b16 %v443, %v442
      %v473 = vpack.c.b16 %v445, %v444
      %v474 = vpack.c.b16 %v447, %v446
      %v475 = vpack.c.b16 %v449, %v448
      %v476 = vpack.c.b16 %v451, %v450
      %v477 = vpack.c.b16 %v453, %v452
      %v478 = vpack.c.b16 %v455, %v454
      %v479 = vpack.c.b16 %v457, %v456
      %v480 = vpack.c.b16 %v459, %v458
      %v481 = vpack.c.b16 %v461, %v460
      %v482 = vpack.c.b16 %v463, %v462
      %v483 = vpack.c.b16 %v465, %v464
      %v484 = vpack.c.b16 %v467, %v466
      %v485 = vpack.c.b16 %v469, %v468
      %502 = vmatprep.subr.bf16.mxu0 0
      %503 = vmatpush1.bf16.msra.mxu0 %v477
      %504 = vmatprep.subr.bf16.mxu0 0
      %505 = vmatpush1.bf16.msra.mxu0 %v476
      %506 = vmatprep.subr.bf16.mxu0 0
      %507 = vmatpush1.bf16.msra.mxu0 %v475
      %508 = vmatprep.subr.bf16.mxu0 0
      %509 = vmatpush1.bf16.msra.mxu0 %v474
      %510 = vmatprep.subr.bf16.mxu0 0
      %511 = vmatpush1.bf16.msra.mxu0 %v473
      %512 = vmatprep.subr.bf16.mxu0 0
      %513 = vmatpush1.bf16.msra.mxu0 %v472
      %514 = vmatprep.subr.bf16.mxu0 0
      %515 = vmatpush1.bf16.msra.mxu0 %v471
      %516 = vmatprep.subr.bf16.mxu0 0
      %517 = vmatpush1.bf16.msra.mxu0 %v470
      %518 = vmatprep.subr.bf16.mxu0 0
      %519 = vmatpush2.bf16.msra.mxu0 %v485
      %520 = vmatprep.subr.bf16.mxu0 0
      %521 = vmatpush2.bf16.msra.mxu0 %v484
      %522 = vmatprep.subr.bf16.mxu0 0
      %523 = vmatpush2.bf16.msra.mxu0 %v483
      %524 = vmatprep.subr.bf16.mxu0 0
      %525 = vmatpush2.bf16.msra.mxu0 %v482
      %526 = vmatprep.subr.bf16.mxu0 0
      %527 = vmatpush2.bf16.msra.mxu0 %v481
      %528 = vmatprep.subr.bf16.mxu0 0
      %529 = vmatpush2.bf16.msra.mxu0 %v480
      %530 = vmatprep.subr.bf16.mxu0 0
      %531 = vmatpush2.bf16.msra.mxu0 %v479
      %532 = vmatprep.subr.bf16.mxu0 0
      %533 = vmatpush2.bf16.msra.mxu0 %v478
      %534 = vmatprep.mubr.bf16.mxu0 %v375
      %535 = vmatmul.mubr.bf16.gmra.mxu0 %v374
      %v536 = vpop.f32.mrf.mxu0
      %v537 = vadd.f32 0.0, %v536
      %v538 = vpop.f32.mrf.mxu0
      %v539 = vpop.f32.mrf.mxu0
      %v540 = vadd.f32 0.0, %v539
      %v541 = vpop.f32.mrf.mxu0
      %542 = vmatprep.mubr.bf16.mxu0 %v377
      %543 = vmatmul.mubr.bf16.gmra.mxu0 %v376
      %v544 = vpop.f32.mrf.mxu0
      %v545 = vadd.f32 0.0, %v544
      %v546 = vpop.f32.mrf.mxu0
      %v547 = vpop.f32.mrf.mxu0
      %v548 = vadd.f32 0.0, %v547
      %v549 = vpop.f32.mrf.mxu0
      %550 = vmatprep.mubr.bf16.mxu0 %v379
      %551 = vmatmul.mubr.bf16.gmra.mxu0 %v378
      %v552 = vpop.f32.mrf.mxu0
      %v553 = vadd.f32 0.0, %v552
      %v554 = vpop.f32.mrf.mxu0
      %v555 = vpop.f32.mrf.mxu0
      %v556 = vadd.f32 0.0, %v555
      %v557 = vpop.f32.mrf.mxu0
      %558 = vmatprep.mubr.bf16.mxu0 %v381
      %559 = vmatmul.mubr.bf16.gmra.mxu0 %v380
      %v560 = vpop.f32.mrf.mxu0
      %v561 = vadd.f32 0.0, %v560
      %v562 = vpop.f32.mrf.mxu0
      %v563 = vpop.f32.mrf.mxu0
      %v564 = vadd.f32 0.0, %v563
      %v565 = vpop.f32.mrf.mxu0
      %566 = vmatprep.mubr.bf16.mxu0 %v383
      %567 = vmatmul.mubr.bf16.gmra.mxu0 %v382
      %v568 = vpop.f32.mrf.mxu0
      %v569 = vadd.f32 0.0, %v568
      %v570 = vpop.f32.mrf.mxu0
      %v571 = vpop.f32.mrf.mxu0
      %v572 = vadd.f32 0.0, %v571
      %v573 = vpop.f32.mrf.mxu0
      %574 = vmatprep.mubr.bf16.mxu0 %v385
      %575 = vmatmul.mubr.bf16.gmra.mxu0 %v384
      %v576 = vpop.f32.mrf.mxu0
      %v577 = vadd.f32 0.0, %v576
      %v578 = vpop.f32.mrf.mxu0
      %v579 = vpop.f32.mrf.mxu0
      %v580 = vadd.f32 0.0, %v579
      %v581 = vpop.f32.mrf.mxu0
      %582 = vmatprep.mubr.bf16.mxu0 %v387
      %583 = vmatmul.mubr.bf16.gmra.mxu0 %v386
      %v584 = vpop.f32.mrf.mxu0
      %v585 = vadd.f32 0.0, %v584
      %v586 = vpop.f32.mrf.mxu0
      %v587 = vpop.f32.mrf.mxu0
      %v588 = vadd.f32 0.0, %v587
      %v589 = vpop.f32.mrf.mxu0
      %590 = vmatprep.mubr.bf16.mxu0 %v389
      %591 = vmatmul.mubr.bf16.gmra.mxu0 %v388
      %v592 = vpop.f32.mrf.mxu0
      %v593 = vadd.f32 0.0, %v592
      %v594 = vpop.f32.mrf.mxu0
      %v595 = vpop.f32.mrf.mxu0
      %v596 = vadd.f32 0.0, %v595
      %v597 = vpop.f32.mrf.mxu0
      %598 = vdwg.mxu0
      %v599 = vpack.c.bf16 %v540, %v537
      %v600 = vpack.c.bf16 %v548, %v545
      %v601 = vpack.c.bf16 %v556, %v553
      %v602 = vpack.c.bf16 %v564, %v561
      %v603 = vpack.c.bf16 %v572, %v569
      %v604 = vpack.c.bf16 %v580, %v577
      %v605 = vpack.c.bf16 %v588, %v585
      %v606 = vpack.c.bf16 %v596, %v593
      %v615 = vunpack.c.l.b16 %v599
      %v616 = vunpack.c.h.b16 %v599
      %v617 = vunpack.c.l.b16 %v600
      %v618 = vunpack.c.h.b16 %v600
      %v619 = vunpack.c.l.b16 %v601
      %v620 = vunpack.c.h.b16 %v601
      %v621 = vunpack.c.l.b16 %v602
      %v622 = vunpack.c.h.b16 %v602
      %v623 = vunpack.c.l.b16 %v603
      %v624 = vunpack.c.h.b16 %v603
      %v625 = vunpack.c.l.b16 %v604
      %v626 = vunpack.c.h.b16 %v604
      %v627 = vunpack.c.l.b16 %v605
      %v628 = vunpack.c.h.b16 %v605
      %v629 = vunpack.c.l.b16 %v606
      %v630 = vunpack.c.h.b16 %v606
      %v631 = vpack.c.b16 %v615, %v615
      %v632 = vpack.c.b16 %v616, %v616
      %v633 = vpack.c.b16 %v617, %v617
      %v634 = vpack.c.b16 %v618, %v618
      %v635 = vpack.c.b16 %v619, %v619
      %v636 = vpack.c.b16 %v620, %v620
      %v637 = vpack.c.b16 %v621, %v621
      %v638 = vpack.c.b16 %v622, %v622
      %v639 = vpack.c.b16 %v623, %v623
      %v640 = vpack.c.b16 %v624, %v624
      %v641 = vpack.c.b16 %v625, %v625
      %v642 = vpack.c.b16 %v626, %v626
      %v643 = vpack.c.b16 %v627, %v627
      %v644 = vpack.c.b16 %v628, %v628
      %v645 = vpack.c.b16 %v629, %v629
      %v646 = vpack.c.b16 %v630, %v630
      %663 = vst [vmem:[%s269] sm:$0xf] %v631
      %664 = vst [vmem:[%s269 + $0x4] sm:$0xf] %v632
      %665 = vst [vmem:[%s269 + $0x8] sm:$0xf] %v633
      %666 = vst [vmem:[%s269 + $0xc] sm:$0xf] %v634
      %667 = vst [vmem:[%s269 + $0x10] sm:$0xf] %v635
      %668 = vst [vmem:[%s269 + $0x14] sm:$0xf] %v636
      %669 = vst [vmem:[%s269 + $0x18] sm:$0xf] %v637
      %670 = vst [vmem:[%s269 + $0x1c] sm:$0xf] %v638
      %671 = vst [vmem:[%s269 + $0x20] sm:$0xf] %v639
      %672 = vst [vmem:[%s269 + $0x24] sm:$0xf] %v640
      %673 = vst [vmem:[%s269 + $0x28] sm:$0xf] %v641
      %674 = vst [vmem:[%s269 + $0x2c] sm:$0xf] %v642
      %675 = vst [vmem:[%s269 + $0x30] sm:$0xf] %v643
      %676 = vst [vmem:[%s269 + $0x34] sm:$0xf] %v644
      %677 = vst [vmem:[%s269 + $0x38] sm:$0xf] %v645
      %678 = vst [vmem:[%s269 + $0x3c] sm:$0xf] %v646
      %p679 = scmp.eq.s32.totalorder %s21, 0
      // Predicated region
      $region29: #{generator_forward.11} parent=27 // pred_check
        %p680 = pneg %p679
      $region30: #{generator_forward.11} parent=27 // pred_check_branch
        %682 = sbr.rel (%p680) target = $region32
      $region31: #{generator_forward.11} parent=27 // pred_region
        %683 = vst [vmem:[%s273] sm:$0x1] 0.0
        %684 = vst [vmem:[%s276] sm:$0x1] 0.0
      $region32: #{generator_forward.11} parent=27 // pred_fallthru
        _
      %v685 = vld [vmem:[%s273] sm:$0x1]
      %v686 = vadd.f32 %v537, %v540
      %v687 = vadd.f32 %v686, %v545
      %v688 = vadd.f32 %v687, %v548
      %v689 = vadd.f32 %v688, %v553
      %v690 = vadd.f32 %v689, %v556
      %v691 = vadd.f32 %v690, %v561
      %v692 = vadd.f32 %v691, %v564
      %v693 = vadd.f32 %v692, %v569
      %v694 = vadd.f32 %v693, %v572
      %v695 = vadd.f32 %v694, %v577
      %v696 = vadd.f32 %v695, %v580
      %v697 = vadd.f32 %v696, %v585
      %v698 = vadd.f32 %v697, %v588
      %v699 = vadd.f32 %v698, %v593
      %v700 = vadd.f32 %v699, %v596
      %v701 = vrot.slane %v700, 4
      %v702 = vadd.f32 %v700, %v701
      %v703 = vrot.slane %v702, 2
      %v704 = vadd.f32 %v702, %v703
      %v705 = vrot.slane %v704, 1
      %v706 = vadd.f32 %v704, %v705
      %v707 = vadd.f32 %v685, %v706
      %708 = vst [vmem:[%s273] sm:$0x1] %v707
      %v709 = vld [vmem:[%s276] sm:$0x1]
      %v710 = vmul.f32 %v537, %v537
      %v711 = vmul.f32 %v540, %v540
      %v712 = vmul.f32 %v545, %v545
      %v713 = vmul.f32 %v548, %v548
      %v714 = vmul.f32 %v553, %v553
      %v715 = vmul.f32 %v556, %v556
      %v716 = vmul.f32 %v561, %v561
      %v717 = vmul.f32 %v564, %v564
      %v718 = vmul.f32 %v569, %v569
      %v719 = vmul.f32 %v572, %v572
      %v720 = vmul.f32 %v577, %v577
      %v721 = vmul.f32 %v580, %v580
      %v722 = vmul.f32 %v585, %v585
      %v723 = vmul.f32 %v588, %v588
      %v724 = vmul.f32 %v593, %v593
      %v725 = vmul.f32 %v596, %v596
      %v726 = vadd.f32 %v710, %v711
      %v727 = vadd.f32 %v726, %v712
      %v728 = vadd.f32 %v727, %v713
      %v729 = vadd.f32 %v728, %v714
      %v730 = vadd.f32 %v729, %v715
      %v731 = vadd.f32 %v730, %v716
      %v732 = vadd.f32 %v731, %v717
      %v733 = vadd.f32 %v732, %v718
      %v734 = vadd.f32 %v733, %v719
      %v735 = vadd.f32 %v734, %v720
      %v736 = vadd.f32 %v735, %v721
      %v737 = vadd.f32 %v736, %v722
      %v738 = vadd.f32 %v737, %v723
      %v739 = vadd.f32 %v738, %v724
      %v740 = vadd.f32 %v739, %v725
      %v741 = vrot.slane %v740, 4
      %v742 = vadd.f32 %v740, %v741
      %v743 = vrot.slane %v742, 2
      %v744 = vadd.f32 %v742, %v743
      %v745 = vrot.slane %v744, 1
      %v746 = vadd.f32 %v744, %v745
      %v747 = vadd.f32 %v709, %v746
      %748 = vst [vmem:[%s276] sm:$0x1] %v747
      %s749 = smul.u32 16, %s21
      %p750 = scmp.lt.s32.totalorder %s20, 3
      %s751 = scalar_select %p750, %s20, 3
      %p752 = scmp.lt.s32.totalorder %s749, 15
      %s753 = scalar_select %p752, %s749, 15
      %s754 = smul.addr %s751, 16
      %s755 = sadd.s32 %s753, %s754
      %s756 = smul.addr %s755, 4
      %s757 = scalar_lea.vmem %s2, %s756
      %p758 = scmp.lt.s32.totalorder %s20, 3
      %s759 = scalar_select %p758, %s20, 3
      %s760 = scalar_lea.vmem %s3, %s759
      %p761 = scmp.lt.s32.totalorder %s20, 3
      %s762 = scalar_select %p761, %s20, 3
      %s763 = scalar_lea.vmem %s4, %s762
      // Predicated region
      $region33: #{generator_forward.11} parent=27 // pred_check
        %p764 = pneg %p102
      $region34: #{generator_forward.11} parent=27 // pred_check_branch
        %766 = sbr.rel (%p764) target = $region36
      $region35: #{generator_forward.11} parent=27 // pred_region
        %s767 = smul.u32 16, %s21
      $region36: #{generator_forward.11} parent=27 // pred_fallthru
        _
      // Predicated region
      $region37: #{generator_forward.11} parent=27 // pred_check
        %p768 = pneg %p128
      $region38: #{generator_forward.11} parent=27 // pred_check_branch
        %770 = sbr.rel (%p768) target = $region40
      $region39: #{generator_forward.11} parent=27 // pred_region
        _
      $region40: #{generator_forward.11} parent=27 // pred_fallthru
        _
      // Predicated region
      $region41: #{generator_forward.11} parent=27 // pred_check
        %p771 = pneg %p154
      $region42: #{generator_forward.11} parent=27 // pred_check_branch
        %773 = sbr.rel (%p771) target = $region44
      $region43: #{generator_forward.11} parent=27 // pred_region
        _
      $region44: #{generator_forward.11} parent=27 // pred_fallthru
        _
    $region28: #{generator_forward.11} parent=5 // pred_fallthru
      _
    %p774 = scmp.le.s32.totalorder 2, %s11
    // Predicated region
    $region45: #{generator_forward.11} parent=5 // pred_check
      %p775 = pneg %p774
    $region46: #{generator_forward.11} parent=5 // pred_check_branch
      %777 = sbr.rel (%p775) target = $region48
    $region47: #{generator_forward.11} parent=5 // pred_region
      %s778 = ssub.s32 %s11, 2
      // Predicated region
      $region49: #{generator_forward.11} parent=47 // pred_check
        %p779 = pneg %p108
      $region50: #{generator_forward.11} parent=47 // pred_check_branch
        %781 = sbr.rel (%p779) target = $region52
      $region51: #{generator_forward.11} parent=47 // pred_region
        %s782 = smul.u32 16, %s23
        %p783 = scmp.lt.s32.totalorder %s22, 3
        %s784 = scalar_select %p783, %s22, 3
        %p785 = scmp.lt.s32.totalorder %s782, 15
        %s786 = scalar_select %p785, %s782, 15
        %s787 = smul.addr %s784, 16
        %s788 = sadd.s32 %s786, %s787
        %s789 = smul.addr %s788, 4
        %s790 = scalar_lea.vmem %s2, %s789
      $region52: #{generator_forward.11} parent=47 // pred_fallthru
        _
      // Predicated region
      $region53: #{generator_forward.11} parent=47 // pred_check
        %p791 = pneg %p134
      $region54: #{generator_forward.11} parent=47 // pred_check_branch
        %793 = sbr.rel (%p791) target = $region56
      $region55: #{generator_forward.11} parent=47 // pred_region
        %p794 = scmp.lt.s32.totalorder %s22, 3
        %s795 = scalar_select %p794, %s22, 3
        %s796 = scalar_lea.vmem %s3, %s795
      $region56: #{generator_forward.11} parent=47 // pred_fallthru
        _
      // Predicated region
      $region57: #{generator_forward.11} parent=47 // pred_check
        %p797 = pneg %p160
      $region58: #{generator_forward.11} parent=47 // pred_check_branch
        %799 = sbr.rel (%p797) target = $region60
      $region59: #{generator_forward.11} parent=47 // pred_region
        %p800 = scmp.lt.s32.totalorder %s22, 3
        %s801 = scalar_select %p800, %s22, 3
        %s802 = scalar_lea.vmem %s4, %s801
      $region60: #{generator_forward.11} parent=47 // pred_fallthru
        _
    $region48: #{generator_forward.11} parent=5 // pred_fallthru
      _
  $region6: #{generator_forward.11} parent=0 // loop_footer
    %s15 = sadd.s32 1, %s11
  $region7: #{generator_forward.11} parent=0 // loop_footer_branch
    %10 = sbr.rel target = $region3
  $region8: #{generator_forward.11} parent=0 // loop_exit
    _

// kernel: generator_forward.12
$region0: #{generator_forward.12}
  #allocation0 [shape = 'u32[]', space=smem, size = 0x4, offset = 0x4, fixed_abs, tag = 'smem constant byte address 0x4 - core index']
  #allocation1 [shape = 'u32[144,128]{1,0:T(1,128)}', space=vmem, size = 0x12000, scoped, tag = 'internal scratch']
  %s0 = inlined_call_operand.vmem [shape: bf16[512,128], index: 0, kind: input, shape index: {}]
  %s1 = inlined_call_operand.vmem [shape: f32[1,128], index: 1, kind: input, shape index: {}]
  %s2 = inlined_call_operand.vmem [shape: f32[1,128], index: 2, kind: input, shape index: {}]
  %s3 = inlined_call_operand.vmem [shape: bf16[512,128], index: 3, kind: output, shape index: {}]
  %s4 = sld [smem:[#allocation0]]
  $region22: #{generator_forward.12} parent=0
    _
  %s6 = ssub.s32 1, %s4
  %s7 = scalar_select 0, %s6, %s4
  // Predicated region
  $region2: #{generator_forward.12} parent=0 // pred_check
    _
  $region3: #{generator_forward.12} parent=0 // pred_check_branch
    %9 = sbr.rel (0) target = $region5
  $region4: #{generator_forward.12} parent=0 // pred_region
    _
  $region5: #{generator_forward.12} parent=0 // pred_fallthru
    _
  // Predicated region
  $region6: #{generator_forward.12} parent=0 // pred_check
    _
  $region7: #{generator_forward.12} parent=0 // pred_check_branch
    %11 = sbr.rel (0) target = $region9
  $region8: #{generator_forward.12} parent=0 // pred_region
    _
  $region9: #{generator_forward.12} parent=0 // pred_fallthru
    _
  // Predicated region
  $region10: #{generator_forward.12} parent=0 // pred_check
    _
  $region11: #{generator_forward.12} parent=0 // pred_check_branch
    %13 = sbr.rel (0) target = $region13
  $region12: #{generator_forward.12} parent=0 // pred_region
    _
  $region13: #{generator_forward.12} parent=0 // pred_fallthru
    _
  %v14 = vld [vmem:[%s0] sm:$0xf]
  %v15 = vld [vmem:[%s0 + $0x4] sm:$0xf]
  %v16 = vld [vmem:[%s0 + $0x8] sm:$0xf]
  %v17 = vld [vmem:[%s0 + $0xc] sm:$0xf]
  %v18 = vld [vmem:[%s0 + $0x10] sm:$0xf]
  %v19 = vld [vmem:[%s0 + $0x14] sm:$0xf]
  %v20 = vld [vmem:[%s0 + $0x18] sm:$0xf]
  %v21 = vld [vmem:[%s0 + $0x1c] sm:$0xf]
  %v22 = vld [vmem:[%s0 + $0x20] sm:$0xf]
  %v23 = vld [vmem:[%s0 + $0x24] sm:$0xf]
  %v24 = vld [vmem:[%s0 + $0x28] sm:$0xf]
  %v25 = vld [vmem:[%s0 + $0x2c] sm:$0xf]
  %v26 = vld [vmem:[%s0 + $0x30] sm:$0xf]
  %v27 = vld [vmem:[%s0 + $0x34] sm:$0xf]
  %v28 = vld [vmem:[%s0 + $0x38] sm:$0xf]
  %v29 = vld [vmem:[%s0 + $0x3c] sm:$0xf]
  %v30 = vld [vmem:[%s0 + $0x40] sm:$0xf]
  %v31 = vld [vmem:[%s0 + $0x44] sm:$0xf]
  %v32 = vld [vmem:[%s0 + $0x48] sm:$0xf]
  %v33 = vld [vmem:[%s0 + $0x4c] sm:$0xf]
  %v34 = vld [vmem:[%s0 + $0x50] sm:$0xf]
  %v35 = vld [vmem:[%s0 + $0x54] sm:$0xf]
  %v36 = vld [vmem:[%s0 + $0x58] sm:$0xf]
  %v37 = vld [vmem:[%s0 + $0x5c] sm:$0xf]
  %v38 = vld [vmem:[%s0 + $0x60] sm:$0xf]
  %v39 = vld [vmem:[%s0 + $0x64] sm:$0xf]
  %v40 = vld [vmem:[%s0 + $0x68] sm:$0xf]
  %v41 = vld [vmem:[%s0 + $0x6c] sm:$0xf]
  %v42 = vld [vmem:[%s0 + $0x70] sm:$0xf]
  %v43 = vld [vmem:[%s0 + $0x74] sm:$0xf]
  %v44 = vld [vmem:[%s0 + $0x78] sm:$0xf]
  %v45 = vld [vmem:[%s0 + $0x7c] sm:$0xf]
  %v46 = vld [vmem:[%s0 + $0x80] sm:$0xf]
  %v47 = vld [vmem:[%s0 + $0x84] sm:$0xf]
  %v48 = vld [vmem:[%s0 + $0x88] sm:$0xf]
  %v49 = vld [vmem:[%s0 + $0x8c] sm:$0xf]
  %v50 = vld [vmem:[%s0 + $0x90] sm:$0xf]
  %v51 = vld [vmem:[%s0 + $0x94] sm:$0xf]
  %v52 = vld [vmem:[%s0 + $0x98] sm:$0xf]
  %v53 = vld [vmem:[%s0 + $0x9c] sm:$0xf]
  %v54 = vld [vmem:[%s0 + $0xa0] sm:$0xf]
  %v55 = vld [vmem:[%s0 + $0xa4] sm:$0xf]
  %v56 = vld [vmem:[%s0 + $0xa8] sm:$0xf]
  %v57 = vld [vmem:[%s0 + $0xac] sm:$0xf]
  %v58 = vld [vmem:[%s0 + $0xb0] sm:$0xf]
  %v59 = vld [vmem:[%s0 + $0xb4] sm:$0xf]
  %v60 = vld [vmem:[%s0 + $0xb8] sm:$0xf]
  %v61 = vld [vmem:[%s0 + $0xbc] sm:$0xf]
  %v62 = vld [vmem:[%s0 + $0xc0] sm:$0xf]
  %v63 = vld [vmem:[%s0 + $0xc4] sm:$0xf]
  %v64 = vld [vmem:[%s0 + $0xc8] sm:$0xf]
  %v65 = vld [vmem:[%s0 + $0xcc] sm:$0xf]
  %v66 = vld [vmem:[%s0 + $0xd0] sm:$0xf]
  %v67 = vld [vmem:[%s0 + $0xd4] sm:$0xf]
  %v68 = vld [vmem:[%s0 + $0xd8] sm:$0xf]
  %v69 = vld [vmem:[%s0 + $0xdc] sm:$0xf]
  %v70 = vld [vmem:[%s0 + $0xe0] sm:$0xf]
  %v71 = vld [vmem:[%s0 + $0xe4] sm:$0xf]
  %v72 = vld [vmem:[%s0 + $0xe8] sm:$0xf]
  %v73 = vld [vmem:[%s0 + $0xec] sm:$0xf]
  %v74 = vld [vmem:[%s0 + $0xf0] sm:$0xf]
  %v75 = vld [vmem:[%s0 + $0xf4] sm:$0xf]
  %v76 = vld [vmem:[%s0 + $0xf8] sm:$0xf]
  %v77 = vld [vmem:[%s0 + $0xfc] sm:$0xf]
  %v78 = vunpack.c.l.bf16 %v14
  %v79 = vunpack.c.l.bf16 %v15
  %v80 = vunpack.c.l.bf16 %v16
  %v81 = vunpack.c.l.bf16 %v17
  %v82 = vunpack.c.l.bf16 %v18
  %v83 = vunpack.c.l.bf16 %v19
  %v84 = vunpack.c.l.bf16 %v20
  %v85 = vunpack.c.l.bf16 %v21
  %v86 = vunpack.c.l.bf16 %v22
  %v87 = vunpack.c.l.bf16 %v23
  %v88 = vunpack.c.l.bf16 %v24
  %v89 = vunpack.c.l.bf16 %v25
  %v90 = vunpack.c.l.bf16 %v26
  %v91 = vunpack.c.l.bf16 %v27
  %v92 = vunpack.c.l.bf16 %v28
  %v93 = vunpack.c.l.bf16 %v29
  %v94 = vunpack.c.l.bf16 %v30
  %v95 = vunpack.c.l.bf16 %v31
  %v96 = vunpack.c.l.bf16 %v32
  %v97 = vunpack.c.l.bf16 %v33
  %v98 = vunpack.c.l.bf16 %v34
  %v99 = vunpack.c.l.bf16 %v35
  %v100 = vunpack.c.l.bf16 %v36
  %v101 = vunpack.c.l.bf16 %v37
  %v102 = vunpack.c.l.bf16 %v38
  %v103 = vunpack.c.l.bf16 %v39
  %v104 = vunpack.c.l.bf16 %v40
  %v105 = vunpack.c.l.bf16 %v41
  %v106 = vunpack.c.l.bf16 %v42
  %v107 = vunpack.c.l.bf16 %v43
  %v108 = vunpack.c.l.bf16 %v44
  %v109 = vunpack.c.l.bf16 %v45
  %v110 = vunpack.c.l.bf16 %v46
  %v111 = vunpack.c.l.bf16 %v47
  %v112 = vunpack.c.l.bf16 %v48
  %v113 = vunpack.c.l.bf16 %v49
  %v114 = vunpack.c.l.bf16 %v50
  %v115 = vunpack.c.l.bf16 %v51
  %v116 = vunpack.c.l.bf16 %v52
  %v117 = vunpack.c.l.bf16 %v53
  %v118 = vunpack.c.l.bf16 %v54
  %v119 = vunpack.c.l.bf16 %v55
  %v120 = vunpack.c.l.bf16 %v56
  %v121 = vunpack.c.l.bf16 %v57
  %v122 = vunpack.c.l.bf16 %v58
  %v123 = vunpack.c.l.bf16 %v59
  %v124 = vunpack.c.l.bf16 %v60
  %v125 = vunpack.c.l.bf16 %v61
  %v126 = vunpack.c.l.bf16 %v62
  %v127 = vunpack.c.l.bf16 %v63
  %v128 = vunpack.c.l.bf16 %v64
  %v129 = vunpack.c.l.bf16 %v65
  %v130 = vunpack.c.l.bf16 %v66
  %v131 = vunpack.c.l.bf16 %v67
  %v132 = vunpack.c.l.bf16 %v68
  %v133 = vunpack.c.l.bf16 %v69
  %v134 = vunpack.c.l.bf16 %v70
  %v135 = vunpack.c.l.bf16 %v71
  %v136 = vunpack.c.l.bf16 %v72
  %v137 = vunpack.c.l.bf16 %v73
  %v138 = vunpack.c.l.bf16 %v74
  %v139 = vunpack.c.l.bf16 %v75
  %v140 = vunpack.c.l.bf16 %v76
  %v141 = vunpack.c.l.bf16 %v77
  %v142 = vld [vmem:[%s1] sm:$0x1]
  %v144 = vlaneseq
  %v145 = vshrl.u32 %v144, 7
  %v146 = vsub.s32 0, %v145
  %v147 = vrot.slane %v142, %v146
  %v149 = vmul.f32 %v78, %v147
  %v150 = vmul.f32 %v79, %v147
  %v151 = vmul.f32 %v80, %v147
  %v152 = vmul.f32 %v81, %v147
  %v153 = vmul.f32 %v82, %v147
  %v154 = vmul.f32 %v83, %v147
  %v155 = vmul.f32 %v84, %v147
  %v156 = vmul.f32 %v85, %v147
  %v157 = vmul.f32 %v86, %v147
  %v158 = vmul.f32 %v87, %v147
  %v159 = vmul.f32 %v88, %v147
  %v160 = vmul.f32 %v89, %v147
  %v161 = vmul.f32 %v90, %v147
  %v162 = vmul.f32 %v91, %v147
  %v163 = vmul.f32 %v92, %v147
  %v164 = vmul.f32 %v93, %v147
  %v165 = vmul.f32 %v94, %v147
  %v166 = vmul.f32 %v95, %v147
  %v167 = vmul.f32 %v96, %v147
  %v168 = vmul.f32 %v97, %v147
  %v169 = vmul.f32 %v98, %v147
  %v170 = vmul.f32 %v99, %v147
  %v171 = vmul.f32 %v100, %v147
  %v172 = vmul.f32 %v101, %v147
  %v173 = vmul.f32 %v102, %v147
  %v174 = vmul.f32 %v103, %v147
  %v175 = vmul.f32 %v104, %v147
  %v176 = vmul.f32 %v105, %v147
  %v177 = vmul.f32 %v106, %v147
  %v178 = vmul.f32 %v107, %v147
  %v179 = vmul.f32 %v108, %v147
  %v180 = vmul.f32 %v109, %v147
  %v181 = vmul.f32 %v110, %v147
  %v182 = vmul.f32 %v111, %v147
  %v183 = vmul.f32 %v112, %v147
  %v184 = vmul.f32 %v113, %v147
  %v185 = vmul.f32 %v114, %v147
  %v186 = vmul.f32 %v115, %v147
  %v187 = vmul.f32 %v116, %v147
  %v188 = vmul.f32 %v117, %v147
  %v189 = vmul.f32 %v118, %v147
  %v190 = vmul.f32 %v119, %v147
  %v191 = vmul.f32 %v120, %v147
  %v192 = vmul.f32 %v121, %v147
  %v193 = vmul.f32 %v122, %v147
  %v194 = vmul.f32 %v123, %v147
  %v195 = vmul.f32 %v124, %v147
  %v196 = vmul.f32 %v125, %v147
  %v197 = vmul.f32 %v126, %v147
  %v198 = vmul.f32 %v127, %v147
  %v199 = vmul.f32 %v128, %v147
  %v200 = vmul.f32 %v129, %v147
  %v201 = vmul.f32 %v130, %v147
  %v202 = vmul.f32 %v131, %v147
  %v203 = vmul.f32 %v132, %v147
  %v204 = vmul.f32 %v133, %v147
  %v205 = vmul.f32 %v134, %v147
  %v206 = vmul.f32 %v135, %v147
  %v207 = vmul.f32 %v136, %v147
  %v208 = vmul.f32 %v137, %v147
  %v209 = vmul.f32 %v138, %v147
  %v210 = vmul.f32 %v139, %v147
  %v211 = vmul.f32 %v140, %v147
  %v212 = vmul.f32 %v141, %v147
  %v213 = vld [vmem:[%s2] sm:$0x1]
  %v215 = vlaneseq
  %v216 = vshrl.u32 %v215, 7
  %v217 = vsub.s32 0, %v216
  %v218 = vrot.slane %v213, %v217
  %v220 = vadd.f32 %v149, %v218
  %v221 = vadd.f32 %v150, %v218
  %v222 = vadd.f32 %v151, %v218
  %v223 = vadd.f32 %v152, %v218
  %v224 = vadd.f32 %v153, %v218
  %v225 = vadd.f32 %v154, %v218
  %v226 = vadd.f32 %v155, %v218
  %v227 = vadd.f32 %v156, %v218
  %v228 = vadd.f32 %v157, %v218
  %v229 = vadd.f32 %v158, %v218
  %v230 = vadd.f32 %v159, %v218
  %v231 = vadd.f32 %v160, %v218
  %v232 = vadd.f32 %v161, %v218
  %v233 = vadd.f32 %v162, %v218
  %v234 = vadd.f32 %v163, %v218
  %v235 = vadd.f32 %v164, %v218
  %v236 = vadd.f32 %v165, %v218
  %v237 = vadd.f32 %v166, %v218
  %v238 = vadd.f32 %v167, %v218
  %v239 = vadd.f32 %v168, %v218
  %v240 = vadd.f32 %v169, %v218
  %v241 = vadd.f32 %v170, %v218
  %v242 = vadd.f32 %v171, %v218
  %v243 = vadd.f32 %v172, %v218
  %v244 = vadd.f32 %v173, %v218
  %v245 = vadd.f32 %v174, %v218
  %v246 = vadd.f32 %v175, %v218
  %v247 = vadd.f32 %v176, %v218
  %v248 = vadd.f32 %v177, %v218
  %v249 = vadd.f32 %v178, %v218
  %v250 = vadd.f32 %v179, %v218
  %v251 = vadd.f32 %v180, %v218
  %v252 = vadd.f32 %v181, %v218
  %v253 = vadd.f32 %v182, %v218
  %v254 = vadd.f32 %v183, %v218
  %v255 = vadd.f32 %v184, %v218
  %v256 = vadd.f32 %v185, %v218
  %v257 = vadd.f32 %v186, %v218
  %v258 = vadd.f32 %v187, %v218
  %v259 = vadd.f32 %v188, %v218
  %v260 = vadd.f32 %v189, %v218
  %v261 = vadd.f32 %v190, %v218
  %v262 = vadd.f32 %v191, %v218
  %v263 = vadd.f32 %v192, %v218
  %v264 = vadd.f32 %v193, %v218
  %v265 = vadd.f32 %v194, %v218
  %v266 = vadd.f32 %v195, %v218
  %v267 = vadd.f32 %v196, %v218
  %v268 = vadd.f32 %v197, %v218
  %v269 = vadd.f32 %v198, %v218
  %v270 = vadd.f32 %v199, %v218
  %v271 = vadd.f32 %v200, %v218
  %v272 = vadd.f32 %v201, %v218
  %v273 = vadd.f32 %v202, %v218
  %v274 = vadd.f32 %v203, %v218
  %v275 = vadd.f32 %v204, %v218
  %v276 = vadd.f32 %v205, %v218
  %v277 = vadd.f32 %v206, %v218
  %v278 = vadd.f32 %v207, %v218
  %v279 = vadd.f32 %v208, %v218
  %v280 = vadd.f32 %v209, %v218
  %v281 = vadd.f32 %v210, %v218
  %v282 = vadd.f32 %v211, %v218
  %v283 = vadd.f32 %v212, %v218
  %v284 = vmax.f32 %v220, 0.0
  %v285 = vmax.f32 %v221, 0.0
  %v286 = vmax.f32 %v222, 0.0
  %v287 = vmax.f32 %v223, 0.0
  %v288 = vmax.f32 %v224, 0.0
  %v289 = vmax.f32 %v225, 0.0
  %v290 = vmax.f32 %v226, 0.0
  %v291 = vmax.f32 %v227, 0.0
  %v292 = vmax.f32 %v228, 0.0
  %v293 = vmax.f32 %v229, 0.0
  %v294 = vmax.f32 %v230, 0.0
  %v295 = vmax.f32 %v231, 0.0
  %v296 = vmax.f32 %v232, 0.0
  %v297 = vmax.f32 %v233, 0.0
  %v298 = vmax.f32 %v234, 0.0
  %v299 = vmax.f32 %v235, 0.0
  %v300 = vmax.f32 %v236, 0.0
  %v301 = vmax.f32 %v237, 0.0
  %v302 = vmax.f32 %v238, 0.0
  %v303 = vmax.f32 %v239, 0.0
  %v304 = vmax.f32 %v240, 0.0
  %v305 = vmax.f32 %v241, 0.0
  %v306 = vmax.f32 %v242, 0.0
  %v307 = vmax.f32 %v243, 0.0
  %v308 = vmax.f32 %v244, 0.0
  %v309 = vmax.f32 %v245, 0.0
  %v310 = vmax.f32 %v246, 0.0
  %v311 = vmax.f32 %v247, 0.0
  %v312 = vmax.f32 %v248, 0.0
  %v313 = vmax.f32 %v249, 0.0
  %v314 = vmax.f32 %v250, 0.0
  %v315 = vmax.f32 %v251, 0.0
  %v316 = vmax.f32 %v252, 0.0
  %v317 = vmax.f32 %v253, 0.0
  %v318 = vmax.f32 %v254, 0.0
  %v319 = vmax.f32 %v255, 0.0
  %v320 = vmax.f32 %v256, 0.0
  %v321 = vmax.f32 %v257, 0.0
  %v322 = vmax.f32 %v258, 0.0
  %v323 = vmax.f32 %v259, 0.0
  %v324 = vmax.f32 %v260, 0.0
  %v325 = vmax.f32 %v261, 0.0
  %v326 = vmax.f32 %v262, 0.0
  %v327 = vmax.f32 %v263, 0.0
  %v328 = vmax.f32 %v264, 0.0
  %v329 = vmax.f32 %v265, 0.0
  %v330 = vmax.f32 %v266, 0.0
  %v331 = vmax.f32 %v267, 0.0
  %v332 = vmax.f32 %v268, 0.0
  %v333 = vmax.f32 %v269, 0.0
  %v334 = vmax.f32 %v270, 0.0
  %v335 = vmax.f32 %v271, 0.0
  %v336 = vmax.f32 %v272, 0.0
  %v337 = vmax.f32 %v273, 0.0
  %v338 = vmax.f32 %v274, 0.0
  %v339 = vmax.f32 %v275, 0.0
  %v340 = vmax.f32 %v276, 0.0
  %v341 = vmax.f32 %v277, 0.0
  %v342 = vmax.f32 %v278, 0.0
  %v343 = vmax.f32 %v279, 0.0
  %v344 = vmax.f32 %v280, 0.0
  %v345 = vmax.f32 %v281, 0.0
  %v346 = vmax.f32 %v282, 0.0
  %v347 = vmax.f32 %v283, 0.0
  %v348 = vpack.c.bf16 %v285, %v284
  %v349 = vpack.c.bf16 %v287, %v286
  %v350 = vpack.c.bf16 %v289, %v288
  %v351 = vpack.c.bf16 %v291, %v290
  %v352 = vpack.c.bf16 %v293, %v292
  %v353 = vpack.c.bf16 %v295, %v294
  %v354 = vpack.c.bf16 %v297, %v296
  %v355 = vpack.c.bf16 %v299, %v298
  %v356 = vpack.c.bf16 %v301, %v300
  %v357 = vpack.c.bf16 %v303, %v302
  %v358 = vpack.c.bf16 %v305, %v304
  %v359 = vpack.c.bf16 %v307, %v306
  %v360 = vpack.c.bf16 %v309, %v308
  %v361 = vpack.c.bf16 %v311, %v310
  %v362 = vpack.c.bf16 %v313, %v312
  %v363 = vpack.c.bf16 %v315, %v314
  %v364 = vpack.c.bf16 %v317, %v316
  %v365 = vpack.c.bf16 %v319, %v318
  %v366 = vpack.c.bf16 %v321, %v320
  %v367 = vpack.c.bf16 %v323, %v322
  %v368 = vpack.c.bf16 %v325, %v324
  %v369 = vpack.c.bf16 %v327, %v326
  %v370 = vpack.c.bf16 %v329, %v328
  %v371 = vpack.c.bf16 %v331, %v330
  %v372 = vpack.c.bf16 %v333, %v332
  %v373 = vpack.c.bf16 %v335, %v334
  %v374 = vpack.c.bf16 %v337, %v336
  %v375 = vpack.c.bf16 %v339, %v338
  %v376 = vpack.c.bf16 %v341, %v340
  %v377 = vpack.c.bf16 %v343, %v342
  %v378 = vpack.c.bf16 %v345, %v344
  %v379 = vpack.c.bf16 %v347, %v346
  %v412 = vunpack.c.l.b16 %v348
  %v413 = vunpack.c.h.b16 %v348
  %v414 = vunpack.c.l.b16 %v349
  %v415 = vunpack.c.h.b16 %v349
  %v416 = vunpack.c.l.b16 %v350
  %v417 = vunpack.c.h.b16 %v350
  %v418 = vunpack.c.l.b16 %v351
  %v419 = vunpack.c.h.b16 %v351
  %v420 = vunpack.c.l.b16 %v352
  %v421 = vunpack.c.h.b16 %v352
  %v422 = vunpack.c.l.b16 %v353
  %v423 = vunpack.c.h.b16 %v353
  %v424 = vunpack.c.l.b16 %v354
  %v425 = vunpack.c.h.b16 %v354
  %v426 = vunpack.c.l.b16 %v355
  %v427 = vunpack.c.h.b16 %v355
  %v428 = vunpack.c.l.b16 %v356
  %v429 = vunpack.c.h.b16 %v356
  %v430 = vunpack.c.l.b16 %v357
  %v431 = vunpack.c.h.b16 %v357
  %v432 = vunpack.c.l.b16 %v358
  %v433 = vunpack.c.h.b16 %v358
  %v434 = vunpack.c.l.b16 %v359
  %v435 = vunpack.c.h.b16 %v359
  %v436 = vunpack.c.l.b16 %v360
  %v437 = vunpack.c.h.b16 %v360
  %v438 = vunpack.c.l.b16 %v361
  %v439 = vunpack.c.h.b16 %v361
  %v440 = vunpack.c.l.b16 %v362
  %v441 = vunpack.c.h.b16 %v362
  %v442 = vunpack.c.l.b16 %v363
  %v443 = vunpack.c.h.b16 %v363
  %v444 = vunpack.c.l.b16 %v364
  %v445 = vunpack.c.h.b16 %v364
  %v446 = vunpack.c.l.b16 %v365
  %v447 = vunpack.c.h.b16 %v365
  %v448 = vunpack.c.l.b16 %v366
  %v449 = vunpack.c.h.b16 %v366
  %v450 = vunpack.c.l.b16 %v367
  %v451 = vunpack.c.h.b16 %v367
  %v452 = vunpack.c.l.b16 %v368
  %v453 = vunpack.c.h.b16 %v368
  %v454 = vunpack.c.l.b16 %v369
  %v455 = vunpack.c.h.b16 %v369
  %v456 = vunpack.c.l.b16 %v370
  %v457 = vunpack.c.h.b16 %v370
  %v458 = vunpack.c.l.b16 %v371
  %v459 = vunpack.c.h.b16 %v371
  %v460 = vunpack.c.l.b16 %v372
  %v461 = vunpack.c.h.b16 %v372
  %v462 = vunpack.c.l.b16 %v373
  %v463 = vunpack.c.h.b16 %v373
  %v464 = vunpack.c.l.b16 %v374
  %v465 = vunpack.c.h.b16 %v374
  %v466 = vunpack.c.l.b16 %v375
  %v467 = vunpack.c.h.b16 %v375
  %v468 = vunpack.c.l.b16 %v376
  %v469 = vunpack.c.h.b16 %v376
  %v470 = vunpack.c.l.b16 %v377
  %v471 = vunpack.c.h.b16 %v377
  %v472 = vunpack.c.l.b16 %v378
  %v473 = vunpack.c.h.b16 %v378
  %v474 = vunpack.c.l.b16 %v379
  %v475 = vunpack.c.h.b16 %v379
  %v476 = vpack.c.b16 %v412, %v412
  %v477 = vpack.c.b16 %v413, %v413
  %v478 = vpack.c.b16 %v414, %v414
  %v479 = vpack.c.b16 %v415, %v415
  %v480 = vpack.c.b16 %v416, %v416
  %v481 = vpack.c.b16 %v417, %v417
  %v482 = vpack.c.b16 %v418, %v418
  %v483 = vpack.c.b16 %v419, %v419
  %v484 = vpack.c.b16 %v420, %v420
  %v485 = vpack.c.b16 %v421, %v421
  %v486 = vpack.c.b16 %v422, %v422
  %v487 = vpack.c.b16 %v423, %v423
  %v488 = vpack.c.b16 %v424, %v424
  %v489 = vpack.c.b16 %v425, %v425
  %v490 = vpack.c.b16 %v426, %v426
  %v491 = vpack.c.b16 %v427, %v427
  %v492 = vpack.c.b16 %v428, %v428
  %v493 = vpack.c.b16 %v429, %v429
  %v494 = vpack.c.b16 %v430, %v430
  %v495 = vpack.c.b16 %v431, %v431
  %v496 = vpack.c.b16 %v432, %v432
  %v497 = vpack.c.b16 %v433, %v433
  %v498 = vpack.c.b16 %v434, %v434
  %v499 = vpack.c.b16 %v435, %v435
  %v500 = vpack.c.b16 %v436, %v436
  %v501 = vpack.c.b16 %v437, %v437
  %v502 = vpack.c.b16 %v438, %v438
  %v503 = vpack.c.b16 %v439, %v439
  %v504 = vpack.c.b16 %v440, %v440
  %v505 = vpack.c.b16 %v441, %v441
  %v506 = vpack.c.b16 %v442, %v442
  %v507 = vpack.c.b16 %v443, %v443
  %v508 = vpack.c.b16 %v444, %v444
  %v509 = vpack.c.b16 %v445, %v445
  %v510 = vpack.c.b16 %v446, %v446
  %v511 = vpack.c.b16 %v447, %v447
  %v512 = vpack.c.b16 %v448, %v448
  %v513 = vpack.c.b16 %v449, %v449
  %v514 = vpack.c.b16 %v450, %v450
  %v515 = vpack.c.b16 %v451, %v451
  %v516 = vpack.c.b16 %v452, %v452
  %v517 = vpack.c.b16 %v453, %v453
  %v518 = vpack.c.b16 %v454, %v454
  %v519 = vpack.c.b16 %v455, %v455
  %v520 = vpack.c.b16 %v456, %v456
  %v521 = vpack.c.b16 %v457, %v457
  %v522 = vpack.c.b16 %v458, %v458
  %v523 = vpack.c.b16 %v459, %v459
  %v524 = vpack.c.b16 %v460, %v460
  %v525 = vpack.c.b16 %v461, %v461
  %v526 = vpack.c.b16 %v462, %v462
  %v527 = vpack.c.b16 %v463, %v463
  %v528 = vpack.c.b16 %v464, %v464
  %v529 = vpack.c.b16 %v465, %v465
  %v530 = vpack.c.b16 %v466, %v466
  %v531 = vpack.c.b16 %v467, %v467
  %v532 = vpack.c.b16 %v468, %v468
  %v533 = vpack.c.b16 %v469, %v469
  %v534 = vpack.c.b16 %v470, %v470
  %v535 = vpack.c.b16 %v471, %v471
  %v536 = vpack.c.b16 %v472, %v472
  %v537 = vpack.c.b16 %v473, %v473
  %v538 = vpack.c.b16 %v474, %v474
  %v539 = vpack.c.b16 %v475, %v475
  %604 = vst [vmem:[%s3] sm:$0xf] %v476
  %605 = vst [vmem:[%s3 + $0x4] sm:$0xf] %v477
  %606 = vst [vmem:[%s3 + $0x8] sm:$0xf] %v478
  %607 = vst [vmem:[%s3 + $0xc] sm:$0xf] %v479
  %608 = vst [vmem:[%s3 + $0x10] sm:$0xf] %v480
  %609 = vst [vmem:[%s3 + $0x14] sm:$0xf] %v481
  %610 = vst [vmem:[%s3 + $0x18] sm:$0xf] %v482
  %611 = vst [vmem:[%s3 + $0x1c] sm:$0xf] %v483
  %612 = vst [vmem:[%s3 + $0x20] sm:$0xf] %v484
  %613 = vst [vmem:[%s3 + $0x24] sm:$0xf] %v485
  %614 = vst [vmem:[%s3 + $0x28] sm:$0xf] %v486
  %615 = vst [vmem:[%s3 + $0x2c] sm:$0xf] %v487
  %616 = vst [vmem:[%s3 + $0x30] sm:$0xf] %v488
  %617 = vst [vmem:[%s3 + $0x34] sm:$0xf] %v489
  %618 = vst [vmem:[%s3 + $0x38] sm:$0xf] %v490
  %619 = vst [vmem:[%s3 + $0x3c] sm:$0xf] %v491
  %620 = vst [vmem:[%s3 + $0x40] sm:$0xf] %v492
  %621 = vst [vmem:[%s3 + $0x44] sm:$0xf] %v493
  %622 = vst [vmem:[%s3 + $0x48] sm:$0xf] %v494
  %623 = vst [vmem:[%s3 + $0x4c] sm:$0xf] %v495
  %624 = vst [vmem:[%s3 + $0x50] sm:$0xf] %v496
  %625 = vst [vmem:[%s3 + $0x54] sm:$0xf] %v497
  %626 = vst [vmem:[%s3 + $0x58] sm:$0xf] %v498
  %627 = vst [vmem:[%s3 + $0x5c] sm:$0xf] %v499
  %628 = vst [vmem:[%s3 + $0x60] sm:$0xf] %v500
  %629 = vst [vmem:[%s3 + $0x64] sm:$0xf] %v501
  %630 = vst [vmem:[%s3 + $0x68] sm:$0xf] %v502
  %631 = vst [vmem:[%s3 + $0x6c] sm:$0xf] %v503
  %632 = vst [vmem:[%s3 + $0x70] sm:$0xf] %v504
  %633 = vst [vmem:[%s3 + $0x74] sm:$0xf] %v505
  %634 = vst [vmem:[%s3 + $0x78] sm:$0xf] %v506
  %635 = vst [vmem:[%s3 + $0x7c] sm:$0xf] %v507
  %636 = vst [vmem:[%s3 + $0x80] sm:$0xf] %v508
  %637 = vst [vmem:[%s3 + $0x84] sm:$0xf] %v509
  %638 = vst [vmem:[%s3 + $0x88] sm:$0xf] %v510
  %639 = vst [vmem:[%s3 + $0x8c] sm:$0xf] %v511
  %640 = vst [vmem:[%s3 + $0x90] sm:$0xf] %v512
  %641 = vst [vmem:[%s3 + $0x94] sm:$0xf] %v513
  %642 = vst [vmem:[%s3 + $0x98] sm:$0xf] %v514
  %643 = vst [vmem:[%s3 + $0x9c] sm:$0xf] %v515
  %644 = vst [vmem:[%s3 + $0xa0] sm:$0xf] %v516
  %645 = vst [vmem:[%s3 + $0xa4] sm:$0xf] %v517
  %646 = vst [vmem:[%s3 + $0xa8] sm:$0xf] %v518
  %647 = vst [vmem:[%s3 + $0xac] sm:$0xf] %v519
  %648 = vst [vmem:[%s3 + $0xb0] sm:$0xf] %v520
  %649 = vst [vmem:[%s3 + $0xb4] sm:$0xf] %v521
  %650 = vst [vmem:[%s3 + $0xb8] sm:$0xf] %v522
  %651 = vst [vmem:[%s3 + $0xbc] sm:$0xf] %v523
  %652 = vst [vmem:[%s3 + $0xc0] sm:$0xf] %v524
  %653 = vst [vmem:[%s3 + $0xc4] sm:$0xf] %v525
  %654 = vst [vmem:[%s3 + $0xc8] sm:$0xf] %v526
  %655 = vst [vmem:[%s3 + $0xcc] sm:$0xf] %v527
  %656 = vst [vmem:[%s3 + $0xd0] sm:$0xf] %v528
  %657 = vst [vmem:[%s3 + $0xd4] sm:$0xf] %v529
  %658 = vst [vmem:[%s3 + $0xd8] sm:$0xf] %v530
  %659 = vst [vmem:[%s3 + $0xdc] sm:$0xf] %v531
  %660 = vst [vmem:[%s3 + $0xe0] sm:$0xf] %v532
  %661 = vst [vmem:[%s3 + $0xe4] sm:$0xf] %v533
  %662 = vst [vmem:[%s3 + $0xe8] sm:$0xf] %v534
  %663 = vst [vmem:[%s3 + $0xec] sm:$0xf] %v535
  %664 = vst [vmem:[%s3 + $0xf0] sm:$0xf] %v536
  %665 = vst [vmem:[%s3 + $0xf4] sm:$0xf] %v537
  %666 = vst [vmem:[%s3 + $0xf8] sm:$0xf] %v538
  %667 = vst [vmem:[%s3 + $0xfc] sm:$0xf] %v539
  // Predicated region
  $region14: #{generator_forward.12} parent=0 // pred_check
    _
  $region15: #{generator_forward.12} parent=0 // pred_check_branch
    %669 = sbr.rel (0) target = $region17
  $region16: #{generator_forward.12} parent=0 // pred_region
    _
  $region17: #{generator_forward.12} parent=0 // pred_fallthru
    _
  // Predicated region
  $region18: #{generator_forward.12} parent=0 // pred_check
    _
  $region19: #{generator_forward.12} parent=0 // pred_check_branch
    %671 = sbr.rel (0) target = $region21
  $region20: #{generator_forward.12} parent=0 // pred_region
    _
  $region21: #{generator_forward.12} parent=0 // pred_fallthru
    _

// kernel: generator_forward.13
$region0: #{generator_forward.13}
  #allocation0 [shape = 'u32[]', space=smem, size = 0x4, offset = 0x4, fixed_abs, tag = 'smem constant byte address 0x4 - core index']
  #allocation1 [shape = 'u32[144,128]{1,0:T(1,128)}', space=vmem, size = 0x12000, scoped, tag = 'internal scratch']
  %s0 = inlined_call_operand.vmem [shape: bf16[4,128,128], index: 0, kind: input, shape index: {}]
  %s1 = inlined_call_operand.vmem [shape: bf16[4,128,128], index: 1, kind: input, shape index: {}]
  %s2 = inlined_call_operand.vmem [shape: bf16[4,128,128], index: 2, kind: output, shape index: {0}]
  %s3 = inlined_call_operand.vmem [shape: f32[4,1,128], index: 3, kind: output, shape index: {1}]
  %s4 = inlined_call_operand.vmem [shape: f32[4,1,128], index: 4, kind: output, shape index: {2}]
  %5 = xla_tuple %s2, %s3, %s4
  %s6 = sld [smem:[#allocation0]]
  $region61: #{generator_forward.13} parent=0
    _
  %s8 = ssub.s32 1, %s6
  %s9 = scalar_select 0, %s8, %s6
  loop: start=0, step=1, limit=6
  $region2: #{generator_forward.13} parent=0 // loop_pre_header
    _
  $region3: #{generator_forward.13} parent=0 // loop_header
    %s11 = sphi 0, %s15
    %p12 = scmp.ge.s32.totalorder %s11, 6
    %s18 = sphi 0, %s30
    %s19 = sphi 0, %s26
    %s20 = sphi 0, %s18
    %s21 = sphi 0, %s19
    %s22 = sphi 0, %s20
    %s23 = sphi 0, %s21
    %s35 = sphi 0, %s37
    %s38 = sphi 0, %s35
    %s39 = sphi 0, %s38
    %s55 = sphi 0, %s39
    %s61 = sphi 0, %s63
    %s64 = sphi 0, %s61
    %s65 = sphi 0, %s64
    %s81 = sphi 0, %s65
    %s89 = sphi 0, %s91
    %s92 = sphi 0, %s89
    %s93 = sphi 0, %s92
    %s109 = sphi 0, %s93
    %s115 = sphi 0, %s117
    %s118 = sphi 0, %s115
    %s119 = sphi 0, %s118
    %s135 = sphi 0, %s119
    %s141 = sphi 0, %s143
    %s144 = sphi 0, %s141
    %s145 = sphi 0, %s144
    %s161 = sphi 0, %s145
  $region4: #{generator_forward.13} parent=0 // loop_header_branch
    %14 = sbr.rel (%p12) target = $region8
  $region5: #{generator_forward.13} parent=0 // loop_body
    %s16 = ssub.s32 %s11, 1
    %s17 = ssub.s32 %s11, 2
    %s24 = sadd.s32 1, %s19
    %p25 = scmp.ge.s32.totalorder %s24, 1
    %s26 = scalar_select %p25, 0, %s24
    %s27 = sadd.s32 1, %s18
    %s28 = scalar_select %p25, %s27, %s18
    %p29 = scmp.ge.s32.totalorder %s28, 4
    %s30 = scalar_select %p29, 0, %s28
    %s31 = ssub.s32 %s18, %s30
    %s32 = ssub.s32 %s19, %s26
    %s33 = sor.u32 %s31, %s32
    %p34 = scmp.eq.s32.totalorder %s33, 0
    %s36 = sadd.s32 %s35, 1
    %s37 = scalar_select %p34, %s35, %s36
    %p40 = pneg %p34
    %p41 = scmp.eq.s32.totalorder %s11, 3
    %p42 = por %p40, %p41
    %p43 = scmp.ne.s32.totalorder %s35, %s38
    %p44 = scmp.eq.s32.totalorder %s11, 0
    %p45 = por %p43, %p44
    %p46 = scmp.ne.s32.totalorder %s35, %s38
    %p47 = scmp.eq.s32.totalorder %s16, 3
    %p48 = por %p46, %p47
    %p49 = scmp.ne.s32.totalorder %s38, %s39
    %p50 = scmp.eq.s32.totalorder %s16, 0
    %p51 = por %p49, %p50
    %p52 = scmp.ne.s32.totalorder %s38, %s39
    %p53 = scmp.eq.s32.totalorder %s17, 3
    %p54 = por %p52, %p53
    %p56 = scmp.ne.s32.totalorder %s39, %s55
    %p57 = scmp.eq.s32.totalorder %s17, 0
    %p58 = por %p56, %p57
    %s59 = ssub.s32 %s18, %s30
    %p60 = scmp.eq.s32.totalorder %s59, 0
    %s62 = sadd.s32 %s61, 1
    %s63 = scalar_select %p60, %s61, %s62
    %p66 = pneg %p60
    %p67 = scmp.eq.s32.totalorder %s11, 3
    %p68 = por %p66, %p67
    %p69 = scmp.ne.s32.totalorder %s61, %s64
    %p70 = scmp.eq.s32.totalorder %s11, 0
    %p71 = por %p69, %p70
    %p72 = scmp.ne.s32.totalorder %s61, %s64
    %p73 = scmp.eq.s32.totalorder %s16, 3
    %p74 = por %p72, %p73
    %p75 = scmp.ne.s32.totalorder %s64, %s65
    %p76 = scmp.eq.s32.totalorder %s16, 0
    %p77 = por %p75, %p76
    %p78 = scmp.ne.s32.totalorder %s64, %s65
    %p79 = scmp.eq.s32.totalorder %s17, 3
    %p80 = por %p78, %p79
    %p82 = scmp.ne.s32.totalorder %s65, %s81
    %p83 = scmp.eq.s32.totalorder %s17, 0
    %p84 = por %p82, %p83
    %s85 = ssub.s32 %s18, %s30
    %s86 = ssub.s32 %s19, %s26
    %s87 = sor.u32 %s85, %s86
    %p88 = scmp.eq.s32.totalorder %s87, 0
    %s90 = sadd.s32 %s89, 1
    %s91 = scalar_select %p88, %s89, %s90
    %p94 = pneg %p88
    %p95 = scmp.eq.s32.totalorder %s11, 3
    %p96 = por %p94, %p95
    %p97 = scmp.ne.s32.totalorder %s89, %s92
    %p98 = scmp.eq.s32.totalorder %s11, 0
    %p99 = por %p97, %p98
    %p100 = scmp.ne.s32.totalorder %s89, %s92
    %p101 = scmp.eq.s32.totalorder %s16, 3
    %p102 = por %p100, %p101
    %p103 = scmp.ne.s32.totalorder %s92, %s93
    %p104 = scmp.eq.s32.totalorder %s16, 0
    %p105 = por %p103, %p104
    %p106 = scmp.ne.s32.totalorder %s92, %s93
    %p107 = scmp.eq.s32.totalorder %s17, 3
    %p108 = por %p106, %p107
    %p110 = scmp.ne.s32.totalorder %s93, %s109
    %p111 = scmp.eq.s32.totalorder %s17, 0
    %p112 = por %p110, %p111
    %s113 = ssub.s32 %s18, %s30
    %p114 = scmp.eq.s32.totalorder %s113, 0
    %s116 = sadd.s32 %s115, 1
    %s117 = scalar_select %p114, %s115, %s116
    %p120 = pneg %p114
    %p121 = scmp.eq.s32.totalorder %s11, 3
    %p122 = por %p120, %p121
    %p123 = scmp.ne.s32.totalorder %s115, %s118
    %p124 = scmp.eq.s32.totalorder %s11, 0
    %p125 = por %p123, %p124
    %p126 = scmp.ne.s32.totalorder %s115, %s118
    %p127 = scmp.eq.s32.totalorder %s16, 3
    %p128 = por %p126, %p127
    %p129 = scmp.ne.s32.totalorder %s118, %s119
    %p130 = scmp.eq.s32.totalorder %s16, 0
    %p131 = por %p129, %p130
    %p132 = scmp.ne.s32.totalorder %s118, %s119
    %p133 = scmp.eq.s32.totalorder %s17, 3
    %p134 = por %p132, %p133
    %p136 = scmp.ne.s32.totalorder %s119, %s135
    %p137 = scmp.eq.s32.totalorder %s17, 0
    %p138 = por %p136, %p137
    %s139 = ssub.s32 %s18, %s30
    %p140 = scmp.eq.s32.totalorder %s139, 0
    %s142 = sadd.s32 %s141, 1
    %s143 = scalar_select %p140, %s141, %s142
    %p146 = pneg %p140
    %p147 = scmp.eq.s32.totalorder %s11, 3
    %p148 = por %p146, %p147
    %p149 = scmp.ne.s32.totalorder %s141, %s144
    %p150 = scmp.eq.s32.totalorder %s11, 0
    %p151 = por %p149, %p150
    %p152 = scmp.ne.s32.totalorder %s141, %s144
    %p153 = scmp.eq.s32.totalorder %s16, 3
    %p154 = por %p152, %p153
    %p155 = scmp.ne.s32.totalorder %s144, %s145
    %p156 = scmp.eq.s32.totalorder %s16, 0
    %p157 = por %p155, %p156
    %p158 = scmp.ne.s32.totalorder %s144, %s145
    %p159 = scmp.eq.s32.totalorder %s17, 3
    %p160 = por %p158, %p159
    %p162 = scmp.ne.s32.totalorder %s145, %s161
    %p163 = scmp.eq.s32.totalorder %s17, 0
    %p164 = por %p162, %p163
    %p165 = scmp.le.s32.totalorder 1, %s11
    %p166 = scmp.lt.s32.totalorder %s11, 5
    %p167 = pnand %p165, %p166
    %p168 = pneg %p167
    // Predicated region
    $region9: #{generator_forward.13} parent=5 // pred_check
      _
    $region10: #{generator_forward.13} parent=5 // pred_check_branch
      %170 = sbr.rel (%p167) target = $region12
    $region11: #{generator_forward.13} parent=5 // pred_region
      %s171 = ssub.s32 %s11, 1
    $region12: #{generator_forward.13} parent=5 // pred_fallthru
      _
    %p172 = scmp.lt.s32.totalorder %s11, 4
    // Predicated region
    $region13: #{generator_forward.13} parent=5 // pred_check
      %p173 = pneg %p172
    $region14: #{generator_forward.13} parent=5 // pred_check_branch
      %175 = sbr.rel (%p173) target = $region16
    $region15: #{generator_forward.13} parent=5 // pred_region
      // Predicated region
      $region17: #{generator_forward.13} parent=15 // pred_check
        %p176 = pneg %p45
      $region18: #{generator_forward.13} parent=15 // pred_check_branch
        %178 = sbr.rel (%p176) target = $region20
      $region19: #{generator_forward.13} parent=15 // pred_region
        %s179 = smul.u32 16, %s19
        %p180 = scmp.lt.s32.totalorder %s18, 3
        %s181 = scalar_select %p180, %s18, 3
        %p182 = scmp.lt.s32.totalorder %s179, 15
        %s183 = scalar_select %p182, %s179, 15
        %s184 = smul.addr %s181, 16
        %s185 = sadd.s32 %s183, %s184
        %s186 = smul.addr %s185, 4
        %s187 = scalar_lea.vmem %s0, %s186
        %s188 = smul.u32 16, %s19
      $region20: #{generator_forward.13} parent=15 // pred_fallthru
        _
      // Predicated region
      $region21: #{generator_forward.13} parent=15 // pred_check
        %p189 = pneg %p71
      $region22: #{generator_forward.13} parent=15 // pred_check_branch
        %191 = sbr.rel (%p189) target = $region24
      $region23: #{generator_forward.13} parent=15 // pred_region
        %p192 = scmp.lt.s32.totalorder %s18, 3
        %s193 = scalar_select %p192, %s18, 3
        %s194 = smul.addr %s193, 16
        %s195 = smul.addr %s194, 4
        %s196 = scalar_lea.vmem %s1, %s195
      $region24: #{generator_forward.13} parent=15 // pred_fallthru
        _
    $region16: #{generator_forward.13} parent=5 // pred_fallthru
      _
    %p197 = scmp.le.s32.totalorder 1, %s11
    %p198 = scmp.lt.s32.totalorder %s11, 5
    %p199 = pnand %p197, %p198
    %p200 = pneg %p199
    // Predicated region
    $region25: #{generator_forward.13} parent=5 // pred_check
      _
    $region26: #{generator_forward.13} parent=5 // pred_check_branch
      %202 = sbr.rel (%p199) target = $region28
    $region27: #{generator_forward.13} parent=5 // pred_region
      %s203 = ssub.s32 %s11, 1
      %s204 = smul.u32 16, %s21
      %p205 = scmp.lt.s32.totalorder %s20, 3
      %s206 = scalar_select %p205, %s20, 3
      %p207 = scmp.lt.s32.totalorder %s204, 15
      %s208 = scalar_select %p207, %s204, 15
      %s209 = smul.addr %s206, 16
      %s210 = sadd.s32 %s208, %s209
      %s211 = smul.addr %s210, 4
      %s212 = scalar_lea.vmem %s0, %s211
      %p213 = pneg %p51
      %p214 = pneg %p48
      %p215 = scmp.lt.s32.totalorder %s20, 3
      %s216 = scalar_select %p215, %s20, 3
      %s217 = smul.addr %s216, 16
      %s218 = smul.addr %s217, 4
      %s219 = scalar_lea.vmem %s1, %s218
      %p220 = pneg %p77
      %p221 = pneg %p74
      %p222 = pneg %p105
      %p223 = pneg %p102
      %s224 = smul.u32 16, %s21
      %p225 = scmp.lt.s32.totalorder %s20, 3
      %s226 = scalar_select %p225, %s20, 3
      %p227 = scmp.lt.s32.totalorder %s224, 15
      %s228 = scalar_select %p227, %s224, 15
      %s229 = smul.addr %s226, 16
      %s230 = sadd.s32 %s228, %s229
      %s231 = smul.addr %s230, 4
      %s232 = scalar_lea.vmem %s2, %s231
      %p233 = pneg %p131
      %p234 = pneg %p128
      %p235 = scmp.lt.s32.totalorder %s20, 3
      %s236 = scalar_select %p235, %s20, 3
      %s237 = scalar_lea.vmem %s3, %s236
      %p238 = pneg %p157
      %p239 = pneg %p154
      %p240 = scmp.lt.s32.totalorder %s20, 3
      %s241 = scalar_select %p240, %s20, 3
      %s242 = scalar_lea.vmem %s4, %s241
      %s243 = smul.u32 16, %s21
      %p244 = scmp.lt.s32.totalorder %s20, 3
      %s245 = scalar_select %p244, %s20, 3
      %p246 = scmp.lt.s32.totalorder %s243, 15
      %s247 = scalar_select %p246, %s243, 15
      %s248 = smul.addr %s245, 16
      %s249 = sadd.s32 %s247, %s248
      %s250 = smul.addr %s249, 4
      %s251 = scalar_lea.vmem %s0, %s250
      %s252 = smul.u32 16, %s21
      %p253 = scmp.lt.s32.totalorder %s20, 3
      %s254 = scalar_select %p253, %s20, 3
      %s255 = smul.addr %s254, 16
      %s256 = smul.addr %s255, 4
      %s257 = scalar_lea.vmem %s1, %s256
      %s258 = smul.u32 16, %s21
      %p259 = scmp.lt.s32.totalorder %s20, 3
      %s260 = scalar_select %p259, %s20, 3
      %p261 = scmp.lt.s32.totalorder %s258, 15
      %s262 = scalar_select %p261, %s258, 15
      %s263 = smul.addr %s260, 16
      %s264 = sadd.s32 %s262, %s263
      %s265 = smul.addr %s264, 4
      %s266 = scalar_lea.vmem %s2, %s265
      %s267 = smul.u32 16, %s21
      %p268 = scmp.lt.s32.totalorder %s20, 3
      %s269 = scalar_select %p268, %s20, 3
      %s270 = scalar_lea.vmem %s3, %s269
      %p271 = scmp.lt.s32.totalorder %s20, 3
      %s272 = scalar_select %p271, %s20, 3
      %s273 = scalar_lea.vmem %s4, %s272
      %v275 = vld [vmem:[%s251] sm:$0xf]
      %v276 = vld [vmem:[%s251 + $0x4] sm:$0xf]
      %v277 = vld [vmem:[%s251 + $0x8] sm:$0xf]
      %v278 = vld [vmem:[%s251 + $0xc] sm:$0xf]
      %v279 = vld [vmem:[%s251 + $0x10] sm:$0xf]
      %v280 = vld [vmem:[%s251 + $0x14] sm:$0xf]
      %v281 = vld [vmem:[%s251 + $0x18] sm:$0xf]
      %v282 = vld [vmem:[%s251 + $0x1c] sm:$0xf]
      %v283 = vld [vmem:[%s251 + $0x20] sm:$0xf]
      %v284 = vld [vmem:[%s251 + $0x24] sm:$0xf]
      %v285 = vld [vmem:[%s251 + $0x28] sm:$0xf]
      %v286 = vld [vmem:[%s251 + $0x2c] sm:$0xf]
      %v287 = vld [vmem:[%s251 + $0x30] sm:$0xf]
      %v288 = vld [vmem:[%s251 + $0x34] sm:$0xf]
      %v289 = vld [vmem:[%s251 + $0x38] sm:$0xf]
      %v290 = vld [vmem:[%s251 + $0x3c] sm:$0xf]
      %v291 = vld [vmem:[%s257] sm:$0xf]
      %v292 = vld [vmem:[%s257 + $0x4] sm:$0xf]
      %v293 = vld [vmem:[%s257 + $0x8] sm:$0xf]
      %v294 = vld [vmem:[%s257 + $0xc] sm:$0xf]
      %v295 = vld [vmem:[%s257 + $0x10] sm:$0xf]
      %v296 = vld [vmem:[%s257 + $0x14] sm:$0xf]
      %v297 = vld [vmem:[%s257 + $0x18] sm:$0xf]
      %v298 = vld [vmem:[%s257 + $0x1c] sm:$0xf]
      %v299 = vld [vmem:[%s257 + $0x20] sm:$0xf]
      %v300 = vld [vmem:[%s257 + $0x24] sm:$0xf]
      %v301 = vld [vmem:[%s257 + $0x28] sm:$0xf]
      %v302 = vld [vmem:[%s257 + $0x2c] sm:$0xf]
      %v303 = vld [vmem:[%s257 + $0x30] sm:$0xf]
      %v304 = vld [vmem:[%s257 + $0x34] sm:$0xf]
      %v305 = vld [vmem:[%s257 + $0x38] sm:$0xf]
      %v306 = vld [vmem:[%s257 + $0x3c] sm:$0xf]
      %v323 = vunpack.c.l.b16 %v275
      %v324 = vunpack.c.l.b16 %v276
      %v325 = vunpack.c.l.b16 %v277
      %v326 = vunpack.c.l.b16 %v278
      %v327 = vunpack.c.l.b16 %v279
      %v328 = vunpack.c.l.b16 %v280
      %v329 = vunpack.c.l.b16 %v281
      %v330 = vunpack.c.l.b16 %v282
      %v331 = vunpack.c.l.b16 %v283
      %v332 = vunpack.c.l.b16 %v284
      %v333 = vunpack.c.l.b16 %v285
      %v334 = vunpack.c.l.b16 %v286
      %v335 = vunpack.c.l.b16 %v287
      %v336 = vunpack.c.l.b16 %v288
      %v337 = vunpack.c.l.b16 %v289
      %v338 = vunpack.c.l.b16 %v290
      %v339 = vpack.c.b16 %v324, %v323
      %v340 = vpack.c.b16 %v326, %v325
      %v341 = vpack.c.b16 %v328, %v327
      %v342 = vpack.c.b16 %v330, %v329
      %v343 = vpack.c.b16 %v332, %v331
      %v344 = vpack.c.b16 %v334, %v333
      %v345 = vpack.c.b16 %v336, %v335
      %v346 = vpack.c.b16 %v338, %v337
      %v371 = vunpack.c.l.b16 %v291
      %v372 = vunpack.c.l.b16 %v292
      %v373 = vunpack.c.l.b16 %v293
      %v374 = vunpack.c.l.b16 %v294
      %v375 = vunpack.c.l.b16 %v295
      %v376 = vunpack.c.l.b16 %v296
      %v377 = vunpack.c.l.b16 %v297
      %v378 = vunpack.c.l.b16 %v298
      %v379 = vunpack.c.l.b16 %v299
      %v380 = vunpack.c.l.b16 %v300
      %v381 = vunpack.c.l.b16 %v301
      %v382 = vunpack.c.l.b16 %v302
      %v383 = vunpack.c.l.b16 %v303
      %v384 = vunpack.c.l.b16 %v304
      %v385 = vunpack.c.l.b16 %v305
      %v386 = vunpack.c.l.b16 %v306
      %v387 = vpack.c.b16 %v372, %v371
      %v388 = vpack.c.b16 %v374, %v373
      %v389 = vpack.c.b16 %v376, %v375
      %v390 = vpack.c.b16 %v378, %v377
      %v391 = vpack.c.b16 %v380, %v379
      %v392 = vpack.c.b16 %v382, %v381
      %v393 = vpack.c.b16 %v384, %v383
      %v394 = vpack.c.b16 %v386, %v385
      %403 = vmatprep.subr.bf16.mxu0 0
      %404 = vmatpush1.bf16.msra.mxu0 %v394
      %405 = vmatprep.subr.bf16.mxu0 0
      %406 = vmatpush1.bf16.msra.mxu0 %v393
      %407 = vmatprep.subr.bf16.mxu0 0
      %408 = vmatpush1.bf16.msra.mxu0 %v392
      %409 = vmatprep.subr.bf16.mxu0 0
      %410 = vmatpush1.bf16.msra.mxu0 %v391
      %411 = vmatprep.subr.bf16.mxu0 0
      %412 = vmatpush1.bf16.msra.mxu0 %v390
      %413 = vmatprep.subr.bf16.mxu0 0
      %414 = vmatpush1.bf16.msra.mxu0 %v389
      %415 = vmatprep.subr.bf16.mxu0 0
      %416 = vmatpush1.bf16.msra.mxu0 %v388
      %417 = vmatprep.subr.bf16.mxu0 0
      %418 = vmatpush1.bf16.msra.mxu0 %v387
      %419 = vmatprep.subr.bf16.mxu0 0
      %420 = vmatpush2.bf16.msra.mxu0 0
      %421 = vmatprep.subr.bf16.mxu0 0
      %422 = vmatpush2.bf16.msra.mxu0 0
      %423 = vmatprep.subr.bf16.mxu0 0
      %424 = vmatpush2.bf16.msra.mxu0 0
      %425 = vmatprep.subr.bf16.mxu0 0
      %426 = vmatpush2.bf16.msra.mxu0 0
      %427 = vmatprep.subr.bf16.mxu0 0
      %428 = vmatpush2.bf16.msra.mxu0 0
      %429 = vmatprep.subr.bf16.mxu0 0
      %430 = vmatpush2.bf16.msra.mxu0 0
      %431 = vmatprep.subr.bf16.mxu0 0
      %432 = vmatpush2.bf16.msra.mxu0 0
      %433 = vmatprep.subr.bf16.mxu0 0
      %434 = vmatpush2.bf16.msra.mxu0 0
      %435 = vmatprep.mubr.bf16.mxu0 0
      %436 = vmatmul.mubr.bf16.gmra.mxu0 %v339
      %v437 = vpop.f32.mrf.mxu0
      %v438 = vadd.f32 0.0, %v437
      %v439 = vpop.f32.mrf.mxu0
      %v440 = vpop.f32.mrf.mxu0
      %v441 = vadd.f32 0.0, %v440
      %v442 = vpop.f32.mrf.mxu0
      %443 = vmatprep.mubr.bf16.mxu0 0
      %444 = vmatmul.mubr.bf16.gmra.mxu0 %v340
      %v445 = vpop.f32.mrf.mxu0
      %v446 = vadd.f32 0.0, %v445
      %v447 = vpop.f32.mrf.mxu0
      %v448 = vpop.f32.mrf.mxu0
      %v449 = vadd.f32 0.0, %v448
      %v450 = vpop.f32.mrf.mxu0
      %451 = vmatprep.mubr.bf16.mxu0 0
      %452 = vmatmul.mubr.bf16.gmra.mxu0 %v341
      %v453 = vpop.f32.mrf.mxu0
      %v454 = vadd.f32 0.0, %v453
      %v455 = vpop.f32.mrf.mxu0
      %v456 = vpop.f32.mrf.mxu0
      %v457 = vadd.f32 0.0, %v456
      %v458 = vpop.f32.mrf.mxu0
      %459 = vmatprep.mubr.bf16.mxu0 0
      %460 = vmatmul.mubr.bf16.gmra.mxu0 %v342
      %v461 = vpop.f32.mrf.mxu0
      %v462 = vadd.f32 0.0, %v461
      %v463 = vpop.f32.mrf.mxu0
      %v464 = vpop.f32.mrf.mxu0
      %v465 = vadd.f32 0.0, %v464
      %v466 = vpop.f32.mrf.mxu0
      %467 = vmatprep.mubr.bf16.mxu0 0
      %468 = vmatmul.mubr.bf16.gmra.mxu0 %v343
      %v469 = vpop.f32.mrf.mxu0
      %v470 = vadd.f32 0.0, %v469
      %v471 = vpop.f32.mrf.mxu0
      %v472 = vpop.f32.mrf.mxu0
      %v473 = vadd.f32 0.0, %v472
      %v474 = vpop.f32.mrf.mxu0
      %475 = vmatprep.mubr.bf16.mxu0 0
      %476 = vmatmul.mubr.bf16.gmra.mxu0 %v344
      %v477 = vpop.f32.mrf.mxu0
      %v478 = vadd.f32 0.0, %v477
      %v479 = vpop.f32.mrf.mxu0
      %v480 = vpop.f32.mrf.mxu0
      %v481 = vadd.f32 0.0, %v480
      %v482 = vpop.f32.mrf.mxu0
      %483 = vmatprep.mubr.bf16.mxu0 0
      %484 = vmatmul.mubr.bf16.gmra.mxu0 %v345
      %v485 = vpop.f32.mrf.mxu0
      %v486 = vadd.f32 0.0, %v485
      %v487 = vpop.f32.mrf.mxu0
      %v488 = vpop.f32.mrf.mxu0
      %v489 = vadd.f32 0.0, %v488
      %v490 = vpop.f32.mrf.mxu0
      %491 = vmatprep.mubr.bf16.mxu0 0
      %492 = vmatmul.mubr.bf16.gmra.mxu0 %v346
      %v493 = vpop.f32.mrf.mxu0
      %v494 = vadd.f32 0.0, %v493
      %v495 = vpop.f32.mrf.mxu0
      %v496 = vpop.f32.mrf.mxu0
      %v497 = vadd.f32 0.0, %v496
      %v498 = vpop.f32.mrf.mxu0
      %499 = vdwg.mxu0
      %v500 = vpack.c.bf16 %v441, %v438
      %v501 = vpack.c.bf16 %v449, %v446
      %v502 = vpack.c.bf16 %v457, %v454
      %v503 = vpack.c.bf16 %v465, %v462
      %v504 = vpack.c.bf16 %v473, %v470
      %v505 = vpack.c.bf16 %v481, %v478
      %v506 = vpack.c.bf16 %v489, %v486
      %v507 = vpack.c.bf16 %v497, %v494
      %v516 = vunpack.c.l.b16 %v500
      %v517 = vunpack.c.h.b16 %v500
      %v518 = vunpack.c.l.b16 %v501
      %v519 = vunpack.c.h.b16 %v501
      %v520 = vunpack.c.l.b16 %v502
      %v521 = vunpack.c.h.b16 %v502
      %v522 = vunpack.c.l.b16 %v503
      %v523 = vunpack.c.h.b16 %v503
      %v524 = vunpack.c.l.b16 %v504
      %v525 = vunpack.c.h.b16 %v504
      %v526 = vunpack.c.l.b16 %v505
      %v527 = vunpack.c.h.b16 %v505
      %v528 = vunpack.c.l.b16 %v506
      %v529 = vunpack.c.h.b16 %v506
      %v530 = vunpack.c.l.b16 %v507
      %v531 = vunpack.c.h.b16 %v507
      %v532 = vpack.c.b16 %v516, %v516
      %v533 = vpack.c.b16 %v517, %v517
      %v534 = vpack.c.b16 %v518, %v518
      %v535 = vpack.c.b16 %v519, %v519
      %v536 = vpack.c.b16 %v520, %v520
      %v537 = vpack.c.b16 %v521, %v521
      %v538 = vpack.c.b16 %v522, %v522
      %v539 = vpack.c.b16 %v523, %v523
      %v540 = vpack.c.b16 %v524, %v524
      %v541 = vpack.c.b16 %v525, %v525
      %v542 = vpack.c.b16 %v526, %v526
      %v543 = vpack.c.b16 %v527, %v527
      %v544 = vpack.c.b16 %v528, %v528
      %v545 = vpack.c.b16 %v529, %v529
      %v546 = vpack.c.b16 %v530, %v530
      %v547 = vpack.c.b16 %v531, %v531
      %564 = vst [vmem:[%s266] sm:$0xf] %v532
      %565 = vst [vmem:[%s266 + $0x4] sm:$0xf] %v533
      %566 = vst [vmem:[%s266 + $0x8] sm:$0xf] %v534
      %567 = vst [vmem:[%s266 + $0xc] sm:$0xf] %v535
      %568 = vst [vmem:[%s266 + $0x10] sm:$0xf] %v536
      %569 = vst [vmem:[%s266 + $0x14] sm:$0xf] %v537
      %570 = vst [vmem:[%s266 + $0x18] sm:$0xf] %v538
      %571 = vst [vmem:[%s266 + $0x1c] sm:$0xf] %v539
      %572 = vst [vmem:[%s266 + $0x20] sm:$0xf] %v540
      %573 = vst [vmem:[%s266 + $0x24] sm:$0xf] %v541
      %574 = vst [vmem:[%s266 + $0x28] sm:$0xf] %v542
      %575 = vst [vmem:[%s266 + $0x2c] sm:$0xf] %v543
      %576 = vst [vmem:[%s266 + $0x30] sm:$0xf] %v544
      %577 = vst [vmem:[%s266 + $0x34] sm:$0xf] %v545
      %578 = vst [vmem:[%s266 + $0x38] sm:$0xf] %v546
      %579 = vst [vmem:[%s266 + $0x3c] sm:$0xf] %v547
      %p580 = scmp.eq.s32.totalorder %s21, 0
      // Predicated region
      $region29: #{generator_forward.13} parent=27 // pred_check
        %p581 = pneg %p580
      $region30: #{generator_forward.13} parent=27 // pred_check_branch
        %583 = sbr.rel (%p581) target = $region32
      $region31: #{generator_forward.13} parent=27 // pred_region
        %584 = vst [vmem:[%s270] sm:$0x1] 0.0
        %585 = vst [vmem:[%s273] sm:$0x1] 0.0
      $region32: #{generator_forward.13} parent=27 // pred_fallthru
        _
      %v586 = vld [vmem:[%s270] sm:$0x1]
      %v587 = vadd.f32 %v438, %v441
      %v588 = vadd.f32 %v587, %v446
      %v589 = vadd.f32 %v588, %v449
      %v590 = vadd.f32 %v589, %v454
      %v591 = vadd.f32 %v590, %v457
      %v592 = vadd.f32 %v591, %v462
      %v593 = vadd.f32 %v592, %v465
      %v594 = vadd.f32 %v593, %v470
      %v595 = vadd.f32 %v594, %v473
      %v596 = vadd.f32 %v595, %v478
      %v597 = vadd.f32 %v596, %v481
      %v598 = vadd.f32 %v597, %v486
      %v599 = vadd.f32 %v598, %v489
      %v600 = vadd.f32 %v599, %v494
      %v601 = vadd.f32 %v600, %v497
      %v602 = vrot.slane %v601, 4
      %v603 = vadd.f32 %v601, %v602
      %v604 = vrot.slane %v603, 2
      %v605 = vadd.f32 %v603, %v604
      %v606 = vrot.slane %v605, 1
      %v607 = vadd.f32 %v605, %v606
      %v608 = vadd.f32 %v586, %v607
      %609 = vst [vmem:[%s270] sm:$0x1] %v608
      %v610 = vld [vmem:[%s273] sm:$0x1]
      %v611 = vmul.f32 %v438, %v438
      %v612 = vmul.f32 %v441, %v441
      %v613 = vmul.f32 %v446, %v446
      %v614 = vmul.f32 %v449, %v449
      %v615 = vmul.f32 %v454, %v454
      %v616 = vmul.f32 %v457, %v457
      %v617 = vmul.f32 %v462, %v462
      %v618 = vmul.f32 %v465, %v465
      %v619 = vmul.f32 %v470, %v470
      %v620 = vmul.f32 %v473, %v473
      %v621 = vmul.f32 %v478, %v478
      %v622 = vmul.f32 %v481, %v481
      %v623 = vmul.f32 %v486, %v486
      %v624 = vmul.f32 %v489, %v489
      %v625 = vmul.f32 %v494, %v494
      %v626 = vmul.f32 %v497, %v497
      %v627 = vadd.f32 %v611, %v612
      %v628 = vadd.f32 %v627, %v613
      %v629 = vadd.f32 %v628, %v614
      %v630 = vadd.f32 %v629, %v615
      %v631 = vadd.f32 %v630, %v616
      %v632 = vadd.f32 %v631, %v617
      %v633 = vadd.f32 %v632, %v618
      %v634 = vadd.f32 %v633, %v619
      %v635 = vadd.f32 %v634, %v620
      %v636 = vadd.f32 %v635, %v621
      %v637 = vadd.f32 %v636, %v622
      %v638 = vadd.f32 %v637, %v623
      %v639 = vadd.f32 %v638, %v624
      %v640 = vadd.f32 %v639, %v625
      %v641 = vadd.f32 %v640, %v626
      %v642 = vrot.slane %v641, 4
      %v643 = vadd.f32 %v641, %v642
      %v644 = vrot.slane %v643, 2
      %v645 = vadd.f32 %v643, %v644
      %v646 = vrot.slane %v645, 1
      %v647 = vadd.f32 %v645, %v646
      %v648 = vadd.f32 %v610, %v647
      %649 = vst [vmem:[%s273] sm:$0x1] %v648
      %s650 = smul.u32 16, %s21
      %p651 = scmp.lt.s32.totalorder %s20, 3
      %s652 = scalar_select %p651, %s20, 3
      %p653 = scmp.lt.s32.totalorder %s650, 15
      %s654 = scalar_select %p653, %s650, 15
      %s655 = smul.addr %s652, 16
      %s656 = sadd.s32 %s654, %s655
      %s657 = smul.addr %s656, 4
      %s658 = scalar_lea.vmem %s2, %s657
      %p659 = scmp.lt.s32.totalorder %s20, 3
      %s660 = scalar_select %p659, %s20, 3
      %s661 = scalar_lea.vmem %s3, %s660
      %p662 = scmp.lt.s32.totalorder %s20, 3
      %s663 = scalar_select %p662, %s20, 3
      %s664 = scalar_lea.vmem %s4, %s663
      // Predicated region
      $region33: #{generator_forward.13} parent=27 // pred_check
        %p665 = pneg %p102
      $region34: #{generator_forward.13} parent=27 // pred_check_branch
        %667 = sbr.rel (%p665) target = $region36
      $region35: #{generator_forward.13} parent=27 // pred_region
        %s668 = smul.u32 16, %s21
      $region36: #{generator_forward.13} parent=27 // pred_fallthru
        _
      // Predicated region
      $region37: #{generator_forward.13} parent=27 // pred_check
        %p669 = pneg %p128
      $region38: #{generator_forward.13} parent=27 // pred_check_branch
        %671 = sbr.rel (%p669) target = $region40
      $region39: #{generator_forward.13} parent=27 // pred_region
        _
      $region40: #{generator_forward.13} parent=27 // pred_fallthru
        _
      // Predicated region
      $region41: #{generator_forward.13} parent=27 // pred_check
        %p672 = pneg %p154
      $region42: #{generator_forward.13} parent=27 // pred_check_branch
        %674 = sbr.rel (%p672) target = $region44
      $region43: #{generator_forward.13} parent=27 // pred_region
        _
      $region44: #{generator_forward.13} parent=27 // pred_fallthru
        _
    $region28: #{generator_forward.13} parent=5 // pred_fallthru
      _
    %p675 = scmp.le.s32.totalorder 2, %s11
    // Predicated region
    $region45: #{generator_forward.13} parent=5 // pred_check
      %p676 = pneg %p675
    $region46: #{generator_forward.13} parent=5 // pred_check_branch
      %678 = sbr.rel (%p676) target = $region48
    $region47: #{generator_forward.13} parent=5 // pred_region
      %s679 = ssub.s32 %s11, 2
      // Predicated region
      $region49: #{generator_forward.13} parent=47 // pred_check
        %p680 = pneg %p108
      $region50: #{generator_forward.13} parent=47 // pred_check_branch
        %682 = sbr.rel (%p680) target = $region52
      $region51: #{generator_forward.13} parent=47 // pred_region
        %s683 = smul.u32 16, %s23
        %p684 = scmp.lt.s32.totalorder %s22, 3
        %s685 = scalar_select %p684, %s22, 3
        %p686 = scmp.lt.s32.totalorder %s683, 15
        %s687 = scalar_select %p686, %s683, 15
        %s688 = smul.addr %s685, 16
        %s689 = sadd.s32 %s687, %s688
        %s690 = smul.addr %s689, 4
        %s691 = scalar_lea.vmem %s2, %s690
      $region52: #{generator_forward.13} parent=47 // pred_fallthru
        _
      // Predicated region
      $region53: #{generator_forward.13} parent=47 // pred_check
        %p692 = pneg %p134
      $region54: #{generator_forward.13} parent=47 // pred_check_branch
        %694 = sbr.rel (%p692) target = $region56
      $region55: #{generator_forward.13} parent=47 // pred_region
        %p695 = scmp.lt.s32.totalorder %s22, 3
        %s696 = scalar_select %p695, %s22, 3
        %s697 = scalar_lea.vmem %s3, %s696
      $region56: #{generator_forward.13} parent=47 // pred_fallthru
        _
      // Predicated region
      $region57: #{generator_forward.13} parent=47 // pred_check
        %p698 = pneg %p160
      $region58: #{generator_forward.13} parent=47 // pred_check_branch
        %700 = sbr.rel (%p698) target = $region60
      $region59: #{generator_forward.13} parent=47 // pred_region
        %p701 = scmp.lt.s32.totalorder %s22, 3
        %s702 = scalar_select %p701, %s22, 3
        %s703 = scalar_lea.vmem %s4, %s702
      $region60: #{generator_forward.13} parent=47 // pred_fallthru
        _
    $region48: #{generator_forward.13} parent=5 // pred_fallthru
      _
  $region6: #{generator_forward.13} parent=0 // loop_footer
    %s15 = sadd.s32 1, %s11
  $region7: #{generator_forward.13} parent=0 // loop_footer_branch
    %10 = sbr.rel target = $region3
  $region8: #{generator_forward.13} parent=0 // loop_exit
    _

// kernel: generator_forward.15
$region0: #{generator_forward.15}
  #allocation0 [shape = 'u32[]', space=smem, size = 0x4, offset = 0x4, fixed_abs, tag = 'smem constant byte address 0x4 - core index']
  #allocation1 [shape = 'u32[144,128]{1,0:T(1,128)}', space=vmem, size = 0x12000, scoped, tag = 'internal scratch']
  %s0 = inlined_call_operand.vmem [shape: bf16[4,512,128], index: 0, kind: input, shape index: {}]
  %s1 = inlined_call_operand.vmem [shape: bf16[4,128,128], index: 1, kind: input, shape index: {}]
  %s2 = inlined_call_operand.vmem [shape: bf16[4,512,128], index: 2, kind: output, shape index: {0}]
  %s3 = inlined_call_operand.vmem [shape: f32[4,1,128], index: 3, kind: output, shape index: {1}]
  %s4 = inlined_call_operand.vmem [shape: f32[4,1,128], index: 4, kind: output, shape index: {2}]
  %5 = xla_tuple %s2, %s3, %s4
  %s6 = sld [smem:[#allocation0]]
  $region61: #{generator_forward.15} parent=0
    _
  %s8 = ssub.s32 1, %s6
  %s9 = scalar_select 0, %s8, %s6
  loop: start=0, step=1, limit=6
  $region2: #{generator_forward.15} parent=0 // loop_pre_header
    _
  $region3: #{generator_forward.15} parent=0 // loop_header
    %s11 = sphi 0, %s15
    %p12 = scmp.ge.s32.totalorder %s11, 6
    %s18 = sphi 0, %s30
    %s19 = sphi 0, %s26
    %s20 = sphi 0, %s18
    %s21 = sphi 0, %s19
    %s22 = sphi 0, %s20
    %s23 = sphi 0, %s21
    %s35 = sphi 0, %s37
    %s38 = sphi 0, %s35
    %s39 = sphi 0, %s38
    %s55 = sphi 0, %s39
    %s61 = sphi 0, %s63
    %s64 = sphi 0, %s61
    %s65 = sphi 0, %s64
    %s81 = sphi 0, %s65
    %s89 = sphi 0, %s91
    %s92 = sphi 0, %s89
    %s93 = sphi 0, %s92
    %s109 = sphi 0, %s93
    %s115 = sphi 0, %s117
    %s118 = sphi 0, %s115
    %s119 = sphi 0, %s118
    %s135 = sphi 0, %s119
    %s141 = sphi 0, %s143
    %s144 = sphi 0, %s141
    %s145 = sphi 0, %s144
    %s161 = sphi 0, %s145
  $region4: #{generator_forward.15} parent=0 // loop_header_branch
    %14 = sbr.rel (%p12) target = $region8
  $region5: #{generator_forward.15} parent=0 // loop_body
    %s16 = ssub.s32 %s11, 1
    %s17 = ssub.s32 %s11, 2
    %s24 = sadd.s32 1, %s19
    %p25 = scmp.ge.s32.totalorder %s24, 1
    %s26 = scalar_select %p25, 0, %s24
    %s27 = sadd.s32 1, %s18
    %s28 = scalar_select %p25, %s27, %s18
    %p29 = scmp.ge.s32.totalorder %s28, 4
    %s30 = scalar_select %p29, 0, %s28
    %s31 = ssub.s32 %s18, %s30
    %s32 = ssub.s32 %s19, %s26
    %s33 = sor.u32 %s31, %s32
    %p34 = scmp.eq.s32.totalorder %s33, 0
    %s36 = sadd.s32 %s35, 1
    %s37 = scalar_select %p34, %s35, %s36
    %p40 = pneg %p34
    %p41 = scmp.eq.s32.totalorder %s11, 3
    %p42 = por %p40, %p41
    %p43 = scmp.ne.s32.totalorder %s35, %s38
    %p44 = scmp.eq.s32.totalorder %s11, 0
    %p45 = por %p43, %p44
    %p46 = scmp.ne.s32.totalorder %s35, %s38
    %p47 = scmp.eq.s32.totalorder %s16, 3
    %p48 = por %p46, %p47
    %p49 = scmp.ne.s32.totalorder %s38, %s39
    %p50 = scmp.eq.s32.totalorder %s16, 0
    %p51 = por %p49, %p50
    %p52 = scmp.ne.s32.totalorder %s38, %s39
    %p53 = scmp.eq.s32.totalorder %s17, 3
    %p54 = por %p52, %p53
    %p56 = scmp.ne.s32.totalorder %s39, %s55
    %p57 = scmp.eq.s32.totalorder %s17, 0
    %p58 = por %p56, %p57
    %s59 = ssub.s32 %s18, %s30
    %p60 = scmp.eq.s32.totalorder %s59, 0
    %s62 = sadd.s32 %s61, 1
    %s63 = scalar_select %p60, %s61, %s62
    %p66 = pneg %p60
    %p67 = scmp.eq.s32.totalorder %s11, 3
    %p68 = por %p66, %p67
    %p69 = scmp.ne.s32.totalorder %s61, %s64
    %p70 = scmp.eq.s32.totalorder %s11, 0
    %p71 = por %p69, %p70
    %p72 = scmp.ne.s32.totalorder %s61, %s64
    %p73 = scmp.eq.s32.totalorder %s16, 3
    %p74 = por %p72, %p73
    %p75 = scmp.ne.s32.totalorder %s64, %s65
    %p76 = scmp.eq.s32.totalorder %s16, 0
    %p77 = por %p75, %p76
    %p78 = scmp.ne.s32.totalorder %s64, %s65
    %p79 = scmp.eq.s32.totalorder %s17, 3
    %p80 = por %p78, %p79
    %p82 = scmp.ne.s32.totalorder %s65, %s81
    %p83 = scmp.eq.s32.totalorder %s17, 0
    %p84 = por %p82, %p83
    %s85 = ssub.s32 %s18, %s30
    %s86 = ssub.s32 %s19, %s26
    %s87 = sor.u32 %s85, %s86
    %p88 = scmp.eq.s32.totalorder %s87, 0
    %s90 = sadd.s32 %s89, 1
    %s91 = scalar_select %p88, %s89, %s90
    %p94 = pneg %p88
    %p95 = scmp.eq.s32.totalorder %s11, 3
    %p96 = por %p94, %p95
    %p97 = scmp.ne.s32.totalorder %s89, %s92
    %p98 = scmp.eq.s32.totalorder %s11, 0
    %p99 = por %p97, %p98
    %p100 = scmp.ne.s32.totalorder %s89, %s92
    %p101 = scmp.eq.s32.totalorder %s16, 3
    %p102 = por %p100, %p101
    %p103 = scmp.ne.s32.totalorder %s92, %s93
    %p104 = scmp.eq.s32.totalorder %s16, 0
    %p105 = por %p103, %p104
    %p106 = scmp.ne.s32.totalorder %s92, %s93
    %p107 = scmp.eq.s32.totalorder %s17, 3
    %p108 = por %p106, %p107
    %p110 = scmp.ne.s32.totalorder %s93, %s109
    %p111 = scmp.eq.s32.totalorder %s17, 0
    %p112 = por %p110, %p111
    %s113 = ssub.s32 %s18, %s30
    %p114 = scmp.eq.s32.totalorder %s113, 0
    %s116 = sadd.s32 %s115, 1
    %s117 = scalar_select %p114, %s115, %s116
    %p120 = pneg %p114
    %p121 = scmp.eq.s32.totalorder %s11, 3
    %p122 = por %p120, %p121
    %p123 = scmp.ne.s32.totalorder %s115, %s118
    %p124 = scmp.eq.s32.totalorder %s11, 0
    %p125 = por %p123, %p124
    %p126 = scmp.ne.s32.totalorder %s115, %s118
    %p127 = scmp.eq.s32.totalorder %s16, 3
    %p128 = por %p126, %p127
    %p129 = scmp.ne.s32.totalorder %s118, %s119
    %p130 = scmp.eq.s32.totalorder %s16, 0
    %p131 = por %p129, %p130
    %p132 = scmp.ne.s32.totalorder %s118, %s119
    %p133 = scmp.eq.s32.totalorder %s17, 3
    %p134 = por %p132, %p133
    %p136 = scmp.ne.s32.totalorder %s119, %s135
    %p137 = scmp.eq.s32.totalorder %s17, 0
    %p138 = por %p136, %p137
    %s139 = ssub.s32 %s18, %s30
    %p140 = scmp.eq.s32.totalorder %s139, 0
    %s142 = sadd.s32 %s141, 1
    %s143 = scalar_select %p140, %s141, %s142
    %p146 = pneg %p140
    %p147 = scmp.eq.s32.totalorder %s11, 3
    %p148 = por %p146, %p147
    %p149 = scmp.ne.s32.totalorder %s141, %s144
    %p150 = scmp.eq.s32.totalorder %s11, 0
    %p151 = por %p149, %p150
    %p152 = scmp.ne.s32.totalorder %s141, %s144
    %p153 = scmp.eq.s32.totalorder %s16, 3
    %p154 = por %p152, %p153
    %p155 = scmp.ne.s32.totalorder %s144, %s145
    %p156 = scmp.eq.s32.totalorder %s16, 0
    %p157 = por %p155, %p156
    %p158 = scmp.ne.s32.totalorder %s144, %s145
    %p159 = scmp.eq.s32.totalorder %s17, 3
    %p160 = por %p158, %p159
    %p162 = scmp.ne.s32.totalorder %s145, %s161
    %p163 = scmp.eq.s32.totalorder %s17, 0
    %p164 = por %p162, %p163
    %p165 = scmp.le.s32.totalorder 1, %s11
    %p166 = scmp.lt.s32.totalorder %s11, 5
    %p167 = pnand %p165, %p166
    %p168 = pneg %p167
    // Predicated region
    $region9: #{generator_forward.15} parent=5 // pred_check
      _
    $region10: #{generator_forward.15} parent=5 // pred_check_branch
      %170 = sbr.rel (%p167) target = $region12
    $region11: #{generator_forward.15} parent=5 // pred_region
      %s171 = ssub.s32 %s11, 1
    $region12: #{generator_forward.15} parent=5 // pred_fallthru
      _
    %p172 = scmp.lt.s32.totalorder %s11, 4
    // Predicated region
    $region13: #{generator_forward.15} parent=5 // pred_check
      %p173 = pneg %p172
    $region14: #{generator_forward.15} parent=5 // pred_check_branch
      %175 = sbr.rel (%p173) target = $region16
    $region15: #{generator_forward.15} parent=5 // pred_region
      // Predicated region
      $region17: #{generator_forward.15} parent=15 // pred_check
        %p176 = pneg %p45
      $region18: #{generator_forward.15} parent=15 // pred_check_branch
        %178 = sbr.rel (%p176) target = $region20
      $region19: #{generator_forward.15} parent=15 // pred_region
        %s179 = smul.u32 64, %s19
        %p180 = scmp.lt.s32.totalorder %s18, 3
        %s181 = scalar_select %p180, %s18, 3
        %p182 = scmp.lt.s32.totalorder %s179, 63
        %s183 = scalar_select %p182, %s179, 63
        %s184 = smul.addr %s181, 64
        %s185 = sadd.s32 %s183, %s184
        %s186 = smul.addr %s185, 4
        %s187 = scalar_lea.vmem %s0, %s186
        %s188 = smul.u32 64, %s19
      $region20: #{generator_forward.15} parent=15 // pred_fallthru
        _
      // Predicated region
      $region21: #{generator_forward.15} parent=15 // pred_check
        %p189 = pneg %p71
      $region22: #{generator_forward.15} parent=15 // pred_check_branch
        %191 = sbr.rel (%p189) target = $region24
      $region23: #{generator_forward.15} parent=15 // pred_region
        %p192 = scmp.lt.s32.totalorder %s18, 3
        %s193 = scalar_select %p192, %s18, 3
        %s194 = smul.addr %s193, 16
        %s195 = smul.addr %s194, 4
        %s196 = scalar_lea.vmem %s1, %s195
      $region24: #{generator_forward.15} parent=15 // pred_fallthru
        _
    $region16: #{generator_forward.15} parent=5 // pred_fallthru
      _
    %p197 = scmp.le.s32.totalorder 1, %s11
    %p198 = scmp.lt.s32.totalorder %s11, 5
    %p199 = pnand %p197, %p198
    %p200 = pneg %p199
    // Predicated region
    $region25: #{generator_forward.15} parent=5 // pred_check
      _
    $region26: #{generator_forward.15} parent=5 // pred_check_branch
      %202 = sbr.rel (%p199) target = $region28
    $region27: #{generator_forward.15} parent=5 // pred_region
      %s203 = ssub.s32 %s11, 1
      %s204 = smul.u32 64, %s21
      %p205 = scmp.lt.s32.totalorder %s20, 3
      %s206 = scalar_select %p205, %s20, 3
      %p207 = scmp.lt.s32.totalorder %s204, 63
      %s208 = scalar_select %p207, %s204, 63
      %s209 = smul.addr %s206, 64
      %s210 = sadd.s32 %s208, %s209
      %s211 = smul.addr %s210, 4
      %s212 = scalar_lea.vmem %s0, %s211
      %p213 = pneg %p51
      %p214 = pneg %p48
      %p215 = scmp.lt.s32.totalorder %s20, 3
      %s216 = scalar_select %p215, %s20, 3
      %s217 = smul.addr %s216, 16
      %s218 = smul.addr %s217, 4
      %s219 = scalar_lea.vmem %s1, %s218
      %p220 = pneg %p77
      %p221 = pneg %p74
      %p222 = pneg %p105
      %p223 = pneg %p102
      %s224 = smul.u32 64, %s21
      %p225 = scmp.lt.s32.totalorder %s20, 3
      %s226 = scalar_select %p225, %s20, 3
      %p227 = scmp.lt.s32.totalorder %s224, 63
      %s228 = scalar_select %p227, %s224, 63
      %s229 = smul.addr %s226, 64
      %s230 = sadd.s32 %s228, %s229
      %s231 = smul.addr %s230, 4
      %s232 = scalar_lea.vmem %s2, %s231
      %p233 = pneg %p131
      %p234 = pneg %p128
      %p235 = scmp.lt.s32.totalorder %s20, 3
      %s236 = scalar_select %p235, %s20, 3
      %s237 = scalar_lea.vmem %s3, %s236
      %p238 = pneg %p157
      %p239 = pneg %p154
      %p240 = scmp.lt.s32.totalorder %s20, 3
      %s241 = scalar_select %p240, %s20, 3
      %s242 = scalar_lea.vmem %s4, %s241
      %s243 = smul.u32 64, %s21
      %p244 = scmp.lt.s32.totalorder %s20, 3
      %s245 = scalar_select %p244, %s20, 3
      %p246 = scmp.lt.s32.totalorder %s243, 63
      %s247 = scalar_select %p246, %s243, 63
      %s248 = smul.addr %s245, 64
      %s249 = sadd.s32 %s247, %s248
      %s250 = smul.addr %s249, 4
      %s251 = scalar_lea.vmem %s0, %s250
      %s252 = smul.u32 64, %s21
      %p253 = scmp.lt.s32.totalorder %s20, 3
      %s254 = scalar_select %p253, %s20, 3
      %s255 = smul.addr %s254, 16
      %s256 = smul.addr %s255, 4
      %s257 = scalar_lea.vmem %s1, %s256
      %s258 = smul.u32 64, %s21
      %p259 = scmp.lt.s32.totalorder %s20, 3
      %s260 = scalar_select %p259, %s20, 3
      %p261 = scmp.lt.s32.totalorder %s258, 63
      %s262 = scalar_select %p261, %s258, 63
      %s263 = smul.addr %s260, 64
      %s264 = sadd.s32 %s262, %s263
      %s265 = smul.addr %s264, 4
      %s266 = scalar_lea.vmem %s2, %s265
      %s267 = smul.u32 64, %s21
      %p268 = scmp.lt.s32.totalorder %s20, 3
      %s269 = scalar_select %p268, %s20, 3
      %s270 = scalar_lea.vmem %s3, %s269
      %p271 = scmp.lt.s32.totalorder %s20, 3
      %s272 = scalar_select %p271, %s20, 3
      %s273 = scalar_lea.vmem %s4, %s272
      %v275 = vld [vmem:[%s251] sm:$0xf]
      %v276 = vld [vmem:[%s251 + $0x4] sm:$0xf]
      %v277 = vld [vmem:[%s251 + $0x8] sm:$0xf]
      %v278 = vld [vmem:[%s251 + $0xc] sm:$0xf]
      %v279 = vld [vmem:[%s251 + $0x10] sm:$0xf]
      %v280 = vld [vmem:[%s251 + $0x14] sm:$0xf]
      %v281 = vld [vmem:[%s251 + $0x18] sm:$0xf]
      %v282 = vld [vmem:[%s251 + $0x1c] sm:$0xf]
      %v283 = vld [vmem:[%s251 + $0x20] sm:$0xf]
      %v284 = vld [vmem:[%s251 + $0x24] sm:$0xf]
      %v285 = vld [vmem:[%s251 + $0x28] sm:$0xf]
      %v286 = vld [vmem:[%s251 + $0x2c] sm:$0xf]
      %v287 = vld [vmem:[%s251 + $0x30] sm:$0xf]
      %v288 = vld [vmem:[%s251 + $0x34] sm:$0xf]
      %v289 = vld [vmem:[%s251 + $0x38] sm:$0xf]
      %v290 = vld [vmem:[%s251 + $0x3c] sm:$0xf]
      %v291 = vld [vmem:[%s251 + $0x40] sm:$0xf]
      %v292 = vld [vmem:[%s251 + $0x44] sm:$0xf]
      %v293 = vld [vmem:[%s251 + $0x48] sm:$0xf]
      %v294 = vld [vmem:[%s251 + $0x4c] sm:$0xf]
      %v295 = vld [vmem:[%s251 + $0x50] sm:$0xf]
      %v296 = vld [vmem:[%s251 + $0x54] sm:$0xf]
      %v297 = vld [vmem:[%s251 + $0x58] sm:$0xf]
      %v298 = vld [vmem:[%s251 + $0x5c] sm:$0xf]
      %v299 = vld [vmem:[%s251 + $0x60] sm:$0xf]
      %v300 = vld [vmem:[%s251 + $0x64] sm:$0xf]
      %v301 = vld [vmem:[%s251 + $0x68] sm:$0xf]
      %v302 = vld [vmem:[%s251 + $0x6c] sm:$0xf]
      %v303 = vld [vmem:[%s251 + $0x70] sm:$0xf]
      %v304 = vld [vmem:[%s251 + $0x74] sm:$0xf]
      %v305 = vld [vmem:[%s251 + $0x78] sm:$0xf]
      %v306 = vld [vmem:[%s251 + $0x7c] sm:$0xf]
      %v307 = vld [vmem:[%s251 + $0x80] sm:$0xf]
      %v308 = vld [vmem:[%s251 + $0x84] sm:$0xf]
      %v309 = vld [vmem:[%s251 + $0x88] sm:$0xf]
      %v310 = vld [vmem:[%s251 + $0x8c] sm:$0xf]
      %v311 = vld [vmem:[%s251 + $0x90] sm:$0xf]
      %v312 = vld [vmem:[%s251 + $0x94] sm:$0xf]
      %v313 = vld [vmem:[%s251 + $0x98] sm:$0xf]
      %v314 = vld [vmem:[%s251 + $0x9c] sm:$0xf]
      %v315 = vld [vmem:[%s251 + $0xa0] sm:$0xf]
      %v316 = vld [vmem:[%s251 + $0xa4] sm:$0xf]
      %v317 = vld [vmem:[%s251 + $0xa8] sm:$0xf]
      %v318 = vld [vmem:[%s251 + $0xac] sm:$0xf]
      %v319 = vld [vmem:[%s251 + $0xb0] sm:$0xf]
      %v320 = vld [vmem:[%s251 + $0xb4] sm:$0xf]
      %v321 = vld [vmem:[%s251 + $0xb8] sm:$0xf]
      %v322 = vld [vmem:[%s251 + $0xbc] sm:$0xf]
      %v323 = vld [vmem:[%s251 + $0xc0] sm:$0xf]
      %v324 = vld [vmem:[%s251 + $0xc4] sm:$0xf]
      %v325 = vld [vmem:[%s251 + $0xc8] sm:$0xf]
      %v326 = vld [vmem:[%s251 + $0xcc] sm:$0xf]
      %v327 = vld [vmem:[%s251 + $0xd0] sm:$0xf]
      %v328 = vld [vmem:[%s251 + $0xd4] sm:$0xf]
      %v329 = vld [vmem:[%s251 + $0xd8] sm:$0xf]
      %v330 = vld [vmem:[%s251 + $0xdc] sm:$0xf]
      %v331 = vld [vmem:[%s251 + $0xe0] sm:$0xf]
      %v332 = vld [vmem:[%s251 + $0xe4] sm:$0xf]
      %v333 = vld [vmem:[%s251 + $0xe8] sm:$0xf]
      %v334 = vld [vmem:[%s251 + $0xec] sm:$0xf]
      %v335 = vld [vmem:[%s251 + $0xf0] sm:$0xf]
      %v336 = vld [vmem:[%s251 + $0xf4] sm:$0xf]
      %v337 = vld [vmem:[%s251 + $0xf8] sm:$0xf]
      %v338 = vld [vmem:[%s251 + $0xfc] sm:$0xf]
      %v339 = vld [vmem:[%s257] sm:$0xf]
      %v340 = vld [vmem:[%s257 + $0x4] sm:$0xf]
      %v341 = vld [vmem:[%s257 + $0x8] sm:$0xf]
      %v342 = vld [vmem:[%s257 + $0xc] sm:$0xf]
      %v343 = vld [vmem:[%s257 + $0x10] sm:$0xf]
      %v344 = vld [vmem:[%s257 + $0x14] sm:$0xf]
      %v345 = vld [vmem:[%s257 + $0x18] sm:$0xf]
      %v346 = vld [vmem:[%s257 + $0x1c] sm:$0xf]
      %v347 = vld [vmem:[%s257 + $0x20] sm:$0xf]
      %v348 = vld [vmem:[%s257 + $0x24] sm:$0xf]
      %v349 = vld [vmem:[%s257 + $0x28] sm:$0xf]
      %v350 = vld [vmem:[%s257 + $0x2c] sm:$0xf]
      %v351 = vld [vmem:[%s257 + $0x30] sm:$0xf]
      %v352 = vld [vmem:[%s257 + $0x34] sm:$0xf]
      %v353 = vld [vmem:[%s257 + $0x38] sm:$0xf]
      %v354 = vld [vmem:[%s257 + $0x3c] sm:$0xf]
      %v419 = vunpack.c.l.b16 %v275
      %v420 = vunpack.c.l.b16 %v276
      %v421 = vunpack.c.l.b16 %v277
      %v422 = vunpack.c.l.b16 %v278
      %v423 = vunpack.c.l.b16 %v279
      %v424 = vunpack.c.l.b16 %v280
      %v425 = vunpack.c.l.b16 %v281
      %v426 = vunpack.c.l.b16 %v282
      %v427 = vunpack.c.l.b16 %v283
      %v428 = vunpack.c.l.b16 %v284
      %v429 = vunpack.c.l.b16 %v285
      %v430 = vunpack.c.l.b16 %v286
      %v431 = vunpack.c.l.b16 %v287
      %v432 = vunpack.c.l.b16 %v288
      %v433 = vunpack.c.l.b16 %v289
      %v434 = vunpack.c.l.b16 %v290
      %v435 = vunpack.c.l.b16 %v291
      %v436 = vunpack.c.l.b16 %v292
      %v437 = vunpack.c.l.b16 %v293
      %v438 = vunpack.c.l.b16 %v294
      %v439 = vunpack.c.l.b16 %v295
      %v440 = vunpack.c.l.b16 %v296
      %v441 = vunpack.c.l.b16 %v297
      %v442 = vunpack.c.l.b16 %v298
      %v443 = vunpack.c.l.b16 %v299
      %v444 = vunpack.c.l.b16 %v300
      %v445 = vunpack.c.l.b16 %v301
      %v446 = vunpack.c.l.b16 %v302
      %v447 = vunpack.c.l.b16 %v303
      %v448 = vunpack.c.l.b16 %v304
      %v449 = vunpack.c.l.b16 %v305
      %v450 = vunpack.c.l.b16 %v306
      %v451 = vunpack.c.l.b16 %v307
      %v452 = vunpack.c.l.b16 %v308
      %v453 = vunpack.c.l.b16 %v309
      %v454 = vunpack.c.l.b16 %v310
      %v455 = vunpack.c.l.b16 %v311
      %v456 = vunpack.c.l.b16 %v312
      %v457 = vunpack.c.l.b16 %v313
      %v458 = vunpack.c.l.b16 %v314
      %v459 = vunpack.c.l.b16 %v315
      %v460 = vunpack.c.l.b16 %v316
      %v461 = vunpack.c.l.b16 %v317
      %v462 = vunpack.c.l.b16 %v318
      %v463 = vunpack.c.l.b16 %v319
      %v464 = vunpack.c.l.b16 %v320
      %v465 = vunpack.c.l.b16 %v321
      %v466 = vunpack.c.l.b16 %v322
      %v467 = vunpack.c.l.b16 %v323
      %v468 = vunpack.c.l.b16 %v324
      %v469 = vunpack.c.l.b16 %v325
      %v470 = vunpack.c.l.b16 %v326
      %v471 = vunpack.c.l.b16 %v327
      %v472 = vunpack.c.l.b16 %v328
      %v473 = vunpack.c.l.b16 %v329
      %v474 = vunpack.c.l.b16 %v330
      %v475 = vunpack.c.l.b16 %v331
      %v476 = vunpack.c.l.b16 %v332
      %v477 = vunpack.c.l.b16 %v333
      %v478 = vunpack.c.l.b16 %v334
      %v479 = vunpack.c.l.b16 %v335
      %v480 = vunpack.c.l.b16 %v336
      %v481 = vunpack.c.l.b16 %v337
      %v482 = vunpack.c.l.b16 %v338
      %v483 = vpack.c.b16 %v420, %v419
      %v484 = vpack.c.b16 %v422, %v421
      %v485 = vpack.c.b16 %v424, %v423
      %v486 = vpack.c.b16 %v426, %v425
      %v487 = vpack.c.b16 %v428, %v427
      %v488 = vpack.c.b16 %v430, %v429
      %v489 = vpack.c.b16 %v432, %v431
      %v490 = vpack.c.b16 %v434, %v433
      %v491 = vpack.c.b16 %v436, %v435
      %v492 = vpack.c.b16 %v438, %v437
      %v493 = vpack.c.b16 %v440, %v439
      %v494 = vpack.c.b16 %v442, %v441
      %v495 = vpack.c.b16 %v444, %v443
      %v496 = vpack.c.b16 %v446, %v445
      %v497 = vpack.c.b16 %v448, %v447
      %v498 = vpack.c.b16 %v450, %v449
      %v499 = vpack.c.b16 %v452, %v451
      %v500 = vpack.c.b16 %v454, %v453
      %v501 = vpack.c.b16 %v456, %v455
      %v502 = vpack.c.b16 %v458, %v457
      %v503 = vpack.c.b16 %v460, %v459
      %v504 = vpack.c.b16 %v462, %v461
      %v505 = vpack.c.b16 %v464, %v463
      %v506 = vpack.c.b16 %v466, %v465
      %v507 = vpack.c.b16 %v468, %v467
      %v508 = vpack.c.b16 %v470, %v469
      %v509 = vpack.c.b16 %v472, %v471
      %v510 = vpack.c.b16 %v474, %v473
      %v511 = vpack.c.b16 %v476, %v475
      %v512 = vpack.c.b16 %v478, %v477
      %v513 = vpack.c.b16 %v480, %v479
      %v514 = vpack.c.b16 %v482, %v481
      %v563 = vunpack.c.l.b16 %v339
      %v564 = vunpack.c.l.b16 %v340
      %v565 = vunpack.c.l.b16 %v341
      %v566 = vunpack.c.l.b16 %v342
      %v567 = vunpack.c.l.b16 %v343
      %v568 = vunpack.c.l.b16 %v344
      %v569 = vunpack.c.l.b16 %v345
      %v570 = vunpack.c.l.b16 %v346
      %v571 = vunpack.c.l.b16 %v347
      %v572 = vunpack.c.l.b16 %v348
      %v573 = vunpack.c.l.b16 %v349
      %v574 = vunpack.c.l.b16 %v350
      %v575 = vunpack.c.l.b16 %v351
      %v576 = vunpack.c.l.b16 %v352
      %v577 = vunpack.c.l.b16 %v353
      %v578 = vunpack.c.l.b16 %v354
      %v579 = vpack.c.b16 %v564, %v563
      %v580 = vpack.c.b16 %v566, %v565
      %v581 = vpack.c.b16 %v568, %v567
      %v582 = vpack.c.b16 %v570, %v569
      %v583 = vpack.c.b16 %v572, %v571
      %v584 = vpack.c.b16 %v574, %v573
      %v585 = vpack.c.b16 %v576, %v575
      %v586 = vpack.c.b16 %v578, %v577
      %595 = vmatprep.subr.bf16.mxu0 0
      %596 = vmatpush1.bf16.msra.mxu0 %v586
      %597 = vmatprep.subr.bf16.mxu0 0
      %598 = vmatpush1.bf16.msra.mxu0 %v585
      %599 = vmatprep.subr.bf16.mxu0 0
      %600 = vmatpush1.bf16.msra.mxu0 %v584
      %601 = vmatprep.subr.bf16.mxu0 0
      %602 = vmatpush1.bf16.msra.mxu0 %v583
      %603 = vmatprep.subr.bf16.mxu0 0
      %604 = vmatpush1.bf16.msra.mxu0 %v582
      %605 = vmatprep.subr.bf16.mxu0 0
      %606 = vmatpush1.bf16.msra.mxu0 %v581
      %607 = vmatprep.subr.bf16.mxu0 0
      %608 = vmatpush1.bf16.msra.mxu0 %v580
      %609 = vmatprep.subr.bf16.mxu0 0
      %610 = vmatpush1.bf16.msra.mxu0 %v579
      %611 = vmatprep.subr.bf16.mxu0 0
      %612 = vmatpush2.bf16.msra.mxu0 0
      %613 = vmatprep.subr.bf16.mxu0 0
      %614 = vmatpush2.bf16.msra.mxu0 0
      %615 = vmatprep.subr.bf16.mxu0 0
      %616 = vmatpush2.bf16.msra.mxu0 0
      %617 = vmatprep.subr.bf16.mxu0 0
      %618 = vmatpush2.bf16.msra.mxu0 0
      %619 = vmatprep.subr.bf16.mxu0 0
      %620 = vmatpush2.bf16.msra.mxu0 0
      %621 = vmatprep.subr.bf16.mxu0 0
      %622 = vmatpush2.bf16.msra.mxu0 0
      %623 = vmatprep.subr.bf16.mxu0 0
      %624 = vmatpush2.bf16.msra.mxu0 0
      %625 = vmatprep.subr.bf16.mxu0 0
      %626 = vmatpush2.bf16.msra.mxu0 0
      %627 = vmatprep.mubr.bf16.mxu0 0
      %628 = vmatmul.mubr.bf16.gmra.mxu0 %v483
      %v629 = vpop.f32.mrf.mxu0
      %v630 = vadd.f32 0.0, %v629
      %v631 = vpop.f32.mrf.mxu0
      %v632 = vpop.f32.mrf.mxu0
      %v633 = vadd.f32 0.0, %v632
      %v634 = vpop.f32.mrf.mxu0
      %635 = vmatprep.mubr.bf16.mxu0 0
      %636 = vmatmul.mubr.bf16.gmra.mxu0 %v484
      %v637 = vpop.f32.mrf.mxu0
      %v638 = vadd.f32 0.0, %v637
      %v639 = vpop.f32.mrf.mxu0
      %v640 = vpop.f32.mrf.mxu0
      %v641 = vadd.f32 0.0, %v640
      %v642 = vpop.f32.mrf.mxu0
      %643 = vmatprep.mubr.bf16.mxu0 0
      %644 = vmatmul.mubr.bf16.gmra.mxu0 %v485
      %v645 = vpop.f32.mrf.mxu0
      %v646 = vadd.f32 0.0, %v645
      %v647 = vpop.f32.mrf.mxu0
      %v648 = vpop.f32.mrf.mxu0
      %v649 = vadd.f32 0.0, %v648
      %v650 = vpop.f32.mrf.mxu0
      %651 = vmatprep.mubr.bf16.mxu0 0
      %652 = vmatmul.mubr.bf16.gmra.mxu0 %v486
      %v653 = vpop.f32.mrf.mxu0
      %v654 = vadd.f32 0.0, %v653
      %v655 = vpop.f32.mrf.mxu0
      %v656 = vpop.f32.mrf.mxu0
      %v657 = vadd.f32 0.0, %v656
      %v658 = vpop.f32.mrf.mxu0
      %659 = vmatprep.mubr.bf16.mxu0 0
      %660 = vmatmul.mubr.bf16.gmra.mxu0 %v487
      %v661 = vpop.f32.mrf.mxu0
      %v662 = vadd.f32 0.0, %v661
      %v663 = vpop.f32.mrf.mxu0
      %v664 = vpop.f32.mrf.mxu0
      %v665 = vadd.f32 0.0, %v664
      %v666 = vpop.f32.mrf.mxu0
      %667 = vmatprep.mubr.bf16.mxu0 0
      %668 = vmatmul.mubr.bf16.gmra.mxu0 %v488
      %v669 = vpop.f32.mrf.mxu0
      %v670 = vadd.f32 0.0, %v669
      %v671 = vpop.f32.mrf.mxu0
      %v672 = vpop.f32.mrf.mxu0
      %v673 = vadd.f32 0.0, %v672
      %v674 = vpop.f32.mrf.mxu0
      %675 = vmatprep.mubr.bf16.mxu0 0
      %676 = vmatmul.mubr.bf16.gmra.mxu0 %v489
      %v677 = vpop.f32.mrf.mxu0
      %v678 = vadd.f32 0.0, %v677
      %v679 = vpop.f32.mrf.mxu0
      %v680 = vpop.f32.mrf.mxu0
      %v681 = vadd.f32 0.0, %v680
      %v682 = vpop.f32.mrf.mxu0
      %683 = vmatprep.mubr.bf16.mxu0 0
      %684 = vmatmul.mubr.bf16.gmra.mxu0 %v490
      %v685 = vpop.f32.mrf.mxu0
      %v686 = vadd.f32 0.0, %v685
      %v687 = vpop.f32.mrf.mxu0
      %v688 = vpop.f32.mrf.mxu0
      %v689 = vadd.f32 0.0, %v688
      %v690 = vpop.f32.mrf.mxu0
      %691 = vmatprep.mubr.bf16.mxu0 0
      %692 = vmatmul.mubr.bf16.gmra.mxu0 %v491
      %v693 = vpop.f32.mrf.mxu0
      %v694 = vadd.f32 0.0, %v693
      %v695 = vpop.f32.mrf.mxu0
      %v696 = vpop.f32.mrf.mxu0
      %v697 = vadd.f32 0.0, %v696
      %v698 = vpop.f32.mrf.mxu0
      %699 = vmatprep.mubr.bf16.mxu0 0
      %700 = vmatmul.mubr.bf16.gmra.mxu0 %v492
      %v701 = vpop.f32.mrf.mxu0
      %v702 = vadd.f32 0.0, %v701
      %v703 = vpop.f32.mrf.mxu0
      %v704 = vpop.f32.mrf.mxu0
      %v705 = vadd.f32 0.0, %v704
      %v706 = vpop.f32.mrf.mxu0
      %707 = vmatprep.mubr.bf16.mxu0 0
      %708 = vmatmul.mubr.bf16.gmra.mxu0 %v493
      %v709 = vpop.f32.mrf.mxu0
      %v710 = vadd.f32 0.0, %v709
      %v711 = vpop.f32.mrf.mxu0
      %v712 = vpop.f32.mrf.mxu0
      %v713 = vadd.f32 0.0, %v712
      %v714 = vpop.f32.mrf.mxu0
      %715 = vmatprep.mubr.bf16.mxu0 0
      %716 = vmatmul.mubr.bf16.gmra.mxu0 %v494
      %v717 = vpop.f32.mrf.mxu0
      %v718 = vadd.f32 0.0, %v717
      %v719 = vpop.f32.mrf.mxu0
      %v720 = vpop.f32.mrf.mxu0
      %v721 = vadd.f32 0.0, %v720
      %v722 = vpop.f32.mrf.mxu0
      %723 = vmatprep.mubr.bf16.mxu0 0
      %724 = vmatmul.mubr.bf16.gmra.mxu0 %v495
      %v725 = vpop.f32.mrf.mxu0
      %v726 = vadd.f32 0.0, %v725
      %v727 = vpop.f32.mrf.mxu0
      %v728 = vpop.f32.mrf.mxu0
      %v729 = vadd.f32 0.0, %v728
      %v730 = vpop.f32.mrf.mxu0
      %731 = vmatprep.mubr.bf16.mxu0 0
      %732 = vmatmul.mubr.bf16.gmra.mxu0 %v496
      %v733 = vpop.f32.mrf.mxu0
      %v734 = vadd.f32 0.0, %v733
      %v735 = vpop.f32.mrf.mxu0
      %v736 = vpop.f32.mrf.mxu0
      %v737 = vadd.f32 0.0, %v736
      %v738 = vpop.f32.mrf.mxu0
      %739 = vmatprep.mubr.bf16.mxu0 0
      %740 = vmatmul.mubr.bf16.gmra.mxu0 %v497
      %v741 = vpop.f32.mrf.mxu0
      %v742 = vadd.f32 0.0, %v741
      %v743 = vpop.f32.mrf.mxu0
      %v744 = vpop.f32.mrf.mxu0
      %v745 = vadd.f32 0.0, %v744
      %v746 = vpop.f32.mrf.mxu0
      %747 = vmatprep.mubr.bf16.mxu0 0
      %748 = vmatmul.mubr.bf16.gmra.mxu0 %v498
      %v749 = vpop.f32.mrf.mxu0
      %v750 = vadd.f32 0.0, %v749
      %v751 = vpop.f32.mrf.mxu0
      %v752 = vpop.f32.mrf.mxu0
      %v753 = vadd.f32 0.0, %v752
      %v754 = vpop.f32.mrf.mxu0
      %755 = vmatprep.mubr.bf16.mxu0 0
      %756 = vmatmul.mubr.bf16.gmra.mxu0 %v499
      %v757 = vpop.f32.mrf.mxu0
      %v758 = vadd.f32 0.0, %v757
      %v759 = vpop.f32.mrf.mxu0
      %v760 = vpop.f32.mrf.mxu0
      %v761 = vadd.f32 0.0, %v760
      %v762 = vpop.f32.mrf.mxu0
      %763 = vmatprep.mubr.bf16.mxu0 0
      %764 = vmatmul.mubr.bf16.gmra.mxu0 %v500
      %v765 = vpop.f32.mrf.mxu0
      %v766 = vadd.f32 0.0, %v765
      %v767 = vpop.f32.mrf.mxu0
      %v768 = vpop.f32.mrf.mxu0
      %v769 = vadd.f32 0.0, %v768
      %v770 = vpop.f32.mrf.mxu0
      %771 = vmatprep.mubr.bf16.mxu0 0
      %772 = vmatmul.mubr.bf16.gmra.mxu0 %v501
      %v773 = vpop.f32.mrf.mxu0
      %v774 = vadd.f32 0.0, %v773
      %v775 = vpop.f32.mrf.mxu0
      %v776 = vpop.f32.mrf.mxu0
      %v777 = vadd.f32 0.0, %v776
      %v778 = vpop.f32.mrf.mxu0
      %779 = vmatprep.mubr.bf16.mxu0 0
      %780 = vmatmul.mubr.bf16.gmra.mxu0 %v502
      %v781 = vpop.f32.mrf.mxu0
      %v782 = vadd.f32 0.0, %v781
      %v783 = vpop.f32.mrf.mxu0
      %v784 = vpop.f32.mrf.mxu0
      %v785 = vadd.f32 0.0, %v784
      %v786 = vpop.f32.mrf.mxu0
      %787 = vmatprep.mubr.bf16.mxu0 0
      %788 = vmatmul.mubr.bf16.gmra.mxu0 %v503
      %v789 = vpop.f32.mrf.mxu0
      %v790 = vadd.f32 0.0, %v789
      %v791 = vpop.f32.mrf.mxu0
      %v792 = vpop.f32.mrf.mxu0
      %v793 = vadd.f32 0.0, %v792
      %v794 = vpop.f32.mrf.mxu0
      %795 = vmatprep.mubr.bf16.mxu0 0
      %796 = vmatmul.mubr.bf16.gmra.mxu0 %v504
      %v797 = vpop.f32.mrf.mxu0
      %v798 = vadd.f32 0.0, %v797
      %v799 = vpop.f32.mrf.mxu0
      %v800 = vpop.f32.mrf.mxu0
      %v801 = vadd.f32 0.0, %v800
      %v802 = vpop.f32.mrf.mxu0
      %803 = vmatprep.mubr.bf16.mxu0 0
      %804 = vmatmul.mubr.bf16.gmra.mxu0 %v505
      %v805 = vpop.f32.mrf.mxu0
      %v806 = vadd.f32 0.0, %v805
      %v807 = vpop.f32.mrf.mxu0
      %v808 = vpop.f32.mrf.mxu0
      %v809 = vadd.f32 0.0, %v808
      %v810 = vpop.f32.mrf.mxu0
      %811 = vmatprep.mubr.bf16.mxu0 0
      %812 = vmatmul.mubr.bf16.gmra.mxu0 %v506
      %v813 = vpop.f32.mrf.mxu0
      %v814 = vadd.f32 0.0, %v813
      %v815 = vpop.f32.mrf.mxu0
      %v816 = vpop.f32.mrf.mxu0
      %v817 = vadd.f32 0.0, %v816
      %v818 = vpop.f32.mrf.mxu0
      %819 = vmatprep.mubr.bf16.mxu0 0
      %820 = vmatmul.mubr.bf16.gmra.mxu0 %v507
      %v821 = vpop.f32.mrf.mxu0
      %v822 = vadd.f32 0.0, %v821
      %v823 = vpop.f32.mrf.mxu0
      %v824 = vpop.f32.mrf.mxu0
      %v825 = vadd.f32 0.0, %v824
      %v826 = vpop.f32.mrf.mxu0
      %827 = vmatprep.mubr.bf16.mxu0 0
      %828 = vmatmul.mubr.bf16.gmra.mxu0 %v508
      %v829 = vpop.f32.mrf.mxu0
      %v830 = vadd.f32 0.0, %v829
      %v831 = vpop.f32.mrf.mxu0
      %v832 = vpop.f32.mrf.mxu0
      %v833 = vadd.f32 0.0, %v832
      %v834 = vpop.f32.mrf.mxu0
      %835 = vmatprep.mubr.bf16.mxu0 0
      %836 = vmatmul.mubr.bf16.gmra.mxu0 %v509
      %v837 = vpop.f32.mrf.mxu0
      %v838 = vadd.f32 0.0, %v837
      %v839 = vpop.f32.mrf.mxu0
      %v840 = vpop.f32.mrf.mxu0
      %v841 = vadd.f32 0.0, %v840
      %v842 = vpop.f32.mrf.mxu0
      %843 = vmatprep.mubr.bf16.mxu0 0
      %844 = vmatmul.mubr.bf16.gmra.mxu0 %v510
      %v845 = vpop.f32.mrf.mxu0
      %v846 = vadd.f32 0.0, %v845
      %v847 = vpop.f32.mrf.mxu0
      %v848 = vpop.f32.mrf.mxu0
      %v849 = vadd.f32 0.0, %v848
      %v850 = vpop.f32.mrf.mxu0
      %851 = vmatprep.mubr.bf16.mxu0 0
      %852 = vmatmul.mubr.bf16.gmra.mxu0 %v511
      %v853 = vpop.f32.mrf.mxu0
      %v854 = vadd.f32 0.0, %v853
      %v855 = vpop.f32.mrf.mxu0
      %v856 = vpop.f32.mrf.mxu0
      %v857 = vadd.f32 0.0, %v856
      %v858 = vpop.f32.mrf.mxu0
      %859 = vmatprep.mubr.bf16.mxu0 0
      %860 = vmatmul.mubr.bf16.gmra.mxu0 %v512
      %v861 = vpop.f32.mrf.mxu0
      %v862 = vadd.f32 0.0, %v861
      %v863 = vpop.f32.mrf.mxu0
      %v864 = vpop.f32.mrf.mxu0
      %v865 = vadd.f32 0.0, %v864
      %v866 = vpop.f32.mrf.mxu0
      %867 = vmatprep.mubr.bf16.mxu0 0
      %868 = vmatmul.mubr.bf16.gmra.mxu0 %v513
      %v869 = vpop.f32.mrf.mxu0
      %v870 = vadd.f32 0.0, %v869
      %v871 = vpop.f32.mrf.mxu0
      %v872 = vpop.f32.mrf.mxu0
      %v873 = vadd.f32 0.0, %v872
      %v874 = vpop.f32.mrf.mxu0
      %875 = vmatprep.mubr.bf16.mxu0 0
      %876 = vmatmul.mubr.bf16.gmra.mxu0 %v514
      %v877 = vpop.f32.mrf.mxu0
      %v878 = vadd.f32 0.0, %v877
      %v879 = vpop.f32.mrf.mxu0
      %v880 = vpop.f32.mrf.mxu0
      %v881 = vadd.f32 0.0, %v880
      %v882 = vpop.f32.mrf.mxu0
      %883 = vdwg.mxu0
      %v884 = vpack.c.bf16 %v633, %v630
      %v885 = vpack.c.bf16 %v641, %v638
      %v886 = vpack.c.bf16 %v649, %v646
      %v887 = vpack.c.bf16 %v657, %v654
      %v888 = vpack.c.bf16 %v665, %v662
      %v889 = vpack.c.bf16 %v673, %v670
      %v890 = vpack.c.bf16 %v681, %v678
      %v891 = vpack.c.bf16 %v689, %v686
      %v892 = vpack.c.bf16 %v697, %v694
      %v893 = vpack.c.bf16 %v705, %v702
      %v894 = vpack.c.bf16 %v713, %v710
      %v895 = vpack.c.bf16 %v721, %v718
      %v896 = vpack.c.bf16 %v729, %v726
      %v897 = vpack.c.bf16 %v737, %v734
      %v898 = vpack.c.bf16 %v745, %v742
      %v899 = vpack.c.bf16 %v753, %v750
      %v900 = vpack.c.bf16 %v761, %v758
      %v901 = vpack.c.bf16 %v769, %v766
      %v902 = vpack.c.bf16 %v777, %v774
      %v903 = vpack.c.bf16 %v785, %v782
      %v904 = vpack.c.bf16 %v793, %v790
      %v905 = vpack.c.bf16 %v801, %v798
      %v906 = vpack.c.bf16 %v809, %v806
      %v907 = vpack.c.bf16 %v817, %v814
      %v908 = vpack.c.bf16 %v825, %v822
      %v909 = vpack.c.bf16 %v833, %v830
      %v910 = vpack.c.bf16 %v841, %v838
      %v911 = vpack.c.bf16 %v849, %v846
      %v912 = vpack.c.bf16 %v857, %v854
      %v913 = vpack.c.bf16 %v865, %v862
      %v914 = vpack.c.bf16 %v873, %v870
      %v915 = vpack.c.bf16 %v881, %v878
      %v948 = vunpack.c.l.b16 %v884
      %v949 = vunpack.c.h.b16 %v884
      %v950 = vunpack.c.l.b16 %v885
      %v951 = vunpack.c.h.b16 %v885
      %v952 = vunpack.c.l.b16 %v886
      %v953 = vunpack.c.h.b16 %v886
      %v954 = vunpack.c.l.b16 %v887
      %v955 = vunpack.c.h.b16 %v887
      %v956 = vunpack.c.l.b16 %v888
      %v957 = vunpack.c.h.b16 %v888
      %v958 = vunpack.c.l.b16 %v889
      %v959 = vunpack.c.h.b16 %v889
      %v960 = vunpack.c.l.b16 %v890
      %v961 = vunpack.c.h.b16 %v890
      %v962 = vunpack.c.l.b16 %v891
      %v963 = vunpack.c.h.b16 %v891
      %v964 = vunpack.c.l.b16 %v892
      %v965 = vunpack.c.h.b16 %v892
      %v966 = vunpack.c.l.b16 %v893
      %v967 = vunpack.c.h.b16 %v893
      %v968 = vunpack.c.l.b16 %v894
      %v969 = vunpack.c.h.b16 %v894
      %v970 = vunpack.c.l.b16 %v895
      %v971 = vunpack.c.h.b16 %v895
      %v972 = vunpack.c.l.b16 %v896
      %v973 = vunpack.c.h.b16 %v896
      %v974 = vunpack.c.l.b16 %v897
      %v975 = vunpack.c.h.b16 %v897
      %v976 = vunpack.c.l.b16 %v898
      %v977 = vunpack.c.h.b16 %v898
      %v978 = vunpack.c.l.b16 %v899
      %v979 = vunpack.c.h.b16 %v899
      %v980 = vunpack.c.l.b16 %v900
      %v981 = vunpack.c.h.b16 %v900
      %v982 = vunpack.c.l.b16 %v901
      %v983 = vunpack.c.h.b16 %v901
      %v984 = vunpack.c.l.b16 %v902
      %v985 = vunpack.c.h.b16 %v902
      %v986 = vunpack.c.l.b16 %v903
      %v987 = vunpack.c.h.b16 %v903
      %v988 = vunpack.c.l.b16 %v904
      %v989 = vunpack.c.h.b16 %v904
      %v990 = vunpack.c.l.b16 %v905
      %v991 = vunpack.c.h.b16 %v905
      %v992 = vunpack.c.l.b16 %v906
      %v993 = vunpack.c.h.b16 %v906
      %v994 = vunpack.c.l.b16 %v907
      %v995 = vunpack.c.h.b16 %v907
      %v996 = vunpack.c.l.b16 %v908
      %v997 = vunpack.c.h.b16 %v908
      %v998 = vunpack.c.l.b16 %v909
      %v999 = vunpack.c.h.b16 %v909
      %v1000 = vunpack.c.l.b16 %v910
      %v1001 = vunpack.c.h.b16 %v910
      %v1002 = vunpack.c.l.b16 %v911
      %v1003 = vunpack.c.h.b16 %v911
      %v1004 = vunpack.c.l.b16 %v912
      %v1005 = vunpack.c.h.b16 %v912
      %v1006 = vunpack.c.l.b16 %v913
      %v1007 = vunpack.c.h.b16 %v913
      %v1008 = vunpack.c.l.b16 %v914
      %v1009 = vunpack.c.h.b16 %v914
      %v1010 = vunpack.c.l.b16 %v915
      %v1011 = vunpack.c.h.b16 %v915
      %v1012 = vpack.c.b16 %v948, %v948
      %v1013 = vpack.c.b16 %v949, %v949
      %v1014 = vpack.c.b16 %v950, %v950
      %v1015 = vpack.c.b16 %v951, %v951
      %v1016 = vpack.c.b16 %v952, %v952
      %v1017 = vpack.c.b16 %v953, %v953
      %v1018 = vpack.c.b16 %v954, %v954
      %v1019 = vpack.c.b16 %v955, %v955
      %v1020 = vpack.c.b16 %v956, %v956
      %v1021 = vpack.c.b16 %v957, %v957
      %v1022 = vpack.c.b16 %v958, %v958
      %v1023 = vpack.c.b16 %v959, %v959
      %v1024 = vpack.c.b16 %v960, %v960
      %v1025 = vpack.c.b16 %v961, %v961
      %v1026 = vpack.c.b16 %v962, %v962
      %v1027 = vpack.c.b16 %v963, %v963
      %v1028 = vpack.c.b16 %v964, %v964
      %v1029 = vpack.c.b16 %v965, %v965
      %v1030 = vpack.c.b16 %v966, %v966
      %v1031 = vpack.c.b16 %v967, %v967
      %v1032 = vpack.c.b16 %v968, %v968
      %v1033 = vpack.c.b16 %v969, %v969
      %v1034 = vpack.c.b16 %v970, %v970
      %v1035 = vpack.c.b16 %v971, %v971
      %v1036 = vpack.c.b16 %v972, %v972
      %v1037 = vpack.c.b16 %v973, %v973
      %v1038 = vpack.c.b16 %v974, %v974
      %v1039 = vpack.c.b16 %v975, %v975
      %v1040 = vpack.c.b16 %v976, %v976
      %v1041 = vpack.c.b16 %v977, %v977
      %v1042 = vpack.c.b16 %v978, %v978
      %v1043 = vpack.c.b16 %v979, %v979
      %v1044 = vpack.c.b16 %v980, %v980
      %v1045 = vpack.c.b16 %v981, %v981
      %v1046 = vpack.c.b16 %v982, %v982
      %v1047 = vpack.c.b16 %v983, %v983
      %v1048 = vpack.c.b16 %v984, %v984
      %v1049 = vpack.c.b16 %v985, %v985
      %v1050 = vpack.c.b16 %v986, %v986
      %v1051 = vpack.c.b16 %v987, %v987
      %v1052 = vpack.c.b16 %v988, %v988
      %v1053 = vpack.c.b16 %v989, %v989
      %v1054 = vpack.c.b16 %v990, %v990
      %v1055 = vpack.c.b16 %v991, %v991
      %v1056 = vpack.c.b16 %v992, %v992
      %v1057 = vpack.c.b16 %v993, %v993
      %v1058 = vpack.c.b16 %v994, %v994
      %v1059 = vpack.c.b16 %v995, %v995
      %v1060 = vpack.c.b16 %v996, %v996
      %v1061 = vpack.c.b16 %v997, %v997
      %v1062 = vpack.c.b16 %v998, %v998
      %v1063 = vpack.c.b16 %v999, %v999
      %v1064 = vpack.c.b16 %v1000, %v1000
      %v1065 = vpack.c.b16 %v1001, %v1001
      %v1066 = vpack.c.b16 %v1002, %v1002
      %v1067 = vpack.c.b16 %v1003, %v1003
      %v1068 = vpack.c.b16 %v1004, %v1004
      %v1069 = vpack.c.b16 %v1005, %v1005
      %v1070 = vpack.c.b16 %v1006, %v1006
      %v1071 = vpack.c.b16 %v1007, %v1007
      %v1072 = vpack.c.b16 %v1008, %v1008
      %v1073 = vpack.c.b16 %v1009, %v1009
      %v1074 = vpack.c.b16 %v1010, %v1010
      %v1075 = vpack.c.b16 %v1011, %v1011
      %1140 = vst [vmem:[%s266] sm:$0xf] %v1012
      %1141 = vst [vmem:[%s266 + $0x4] sm:$0xf] %v1013
      %1142 = vst [vmem:[%s266 + $0x8] sm:$0xf] %v1014
      %1143 = vst [vmem:[%s266 + $0xc] sm:$0xf] %v1015
      %1144 = vst [vmem:[%s266 + $0x10] sm:$0xf] %v1016
      %1145 = vst [vmem:[%s266 + $0x14] sm:$0xf] %v1017
      %1146 = vst [vmem:[%s266 + $0x18] sm:$0xf] %v1018
      %1147 = vst [vmem:[%s266 + $0x1c] sm:$0xf] %v1019
      %1148 = vst [vmem:[%s266 + $0x20] sm:$0xf] %v1020
      %1149 = vst [vmem:[%s266 + $0x24] sm:$0xf] %v1021
      %1150 = vst [vmem:[%s266 + $0x28] sm:$0xf] %v1022
      %1151 = vst [vmem:[%s266 + $0x2c] sm:$0xf] %v1023
      %1152 = vst [vmem:[%s266 + $0x30] sm:$0xf] %v1024
      %1153 = vst [vmem:[%s266 + $0x34] sm:$0xf] %v1025
      %1154 = vst [vmem:[%s266 + $0x38] sm:$0xf] %v1026
      %1155 = vst [vmem:[%s266 + $0x3c] sm:$0xf] %v1027
      %1156 = vst [vmem:[%s266 + $0x40] sm:$0xf] %v1028
      %1157 = vst [vmem:[%s266 + $0x44] sm:$0xf] %v1029
      %1158 = vst [vmem:[%s266 + $0x48] sm:$0xf] %v1030
      %1159 = vst [vmem:[%s266 + $0x4c] sm:$0xf] %v1031
      %1160 = vst [vmem:[%s266 + $0x50] sm:$0xf] %v1032
      %1161 = vst [vmem:[%s266 + $0x54] sm:$0xf] %v1033
      %1162 = vst [vmem:[%s266 + $0x58] sm:$0xf] %v1034
      %1163 = vst [vmem:[%s266 + $0x5c] sm:$0xf] %v1035
      %1164 = vst [vmem:[%s266 + $0x60] sm:$0xf] %v1036
      %1165 = vst [vmem:[%s266 + $0x64] sm:$0xf] %v1037
      %1166 = vst [vmem:[%s266 + $0x68] sm:$0xf] %v1038
      %1167 = vst [vmem:[%s266 + $0x6c] sm:$0xf] %v1039
      %1168 = vst [vmem:[%s266 + $0x70] sm:$0xf] %v1040
      %1169 = vst [vmem:[%s266 + $0x74] sm:$0xf] %v1041
      %1170 = vst [vmem:[%s266 + $0x78] sm:$0xf] %v1042
      %1171 = vst [vmem:[%s266 + $0x7c] sm:$0xf] %v1043
      %1172 = vst [vmem:[%s266 + $0x80] sm:$0xf] %v1044
      %1173 = vst [vmem:[%s266 + $0x84] sm:$0xf] %v1045
      %1174 = vst [vmem:[%s266 + $0x88] sm:$0xf] %v1046
      %1175 = vst [vmem:[%s266 + $0x8c] sm:$0xf] %v1047
      %1176 = vst [vmem:[%s266 + $0x90] sm:$0xf] %v1048
      %1177 = vst [vmem:[%s266 + $0x94] sm:$0xf] %v1049
      %1178 = vst [vmem:[%s266 + $0x98] sm:$0xf] %v1050
      %1179 = vst [vmem:[%s266 + $0x9c] sm:$0xf] %v1051
      %1180 = vst [vmem:[%s266 + $0xa0] sm:$0xf] %v1052
      %1181 = vst [vmem:[%s266 + $0xa4] sm:$0xf] %v1053
      %1182 = vst [vmem:[%s266 + $0xa8] sm:$0xf] %v1054
      %1183 = vst [vmem:[%s266 + $0xac] sm:$0xf] %v1055
      %1184 = vst [vmem:[%s266 + $0xb0] sm:$0xf] %v1056
      %1185 = vst [vmem:[%s266 + $0xb4] sm:$0xf] %v1057
      %1186 = vst [vmem:[%s266 + $0xb8] sm:$0xf] %v1058
      %1187 = vst [vmem:[%s266 + $0xbc] sm:$0xf] %v1059
      %1188 = vst [vmem:[%s266 + $0xc0] sm:$0xf] %v1060
      %1189 = vst [vmem:[%s266 + $0xc4] sm:$0xf] %v1061
      %1190 = vst [vmem:[%s266 + $0xc8] sm:$0xf] %v1062
      %1191 = vst [vmem:[%s266 + $0xcc] sm:$0xf] %v1063
      %1192 = vst [vmem:[%s266 + $0xd0] sm:$0xf] %v1064
      %1193 = vst [vmem:[%s266 + $0xd4] sm:$0xf] %v1065
      %1194 = vst [vmem:[%s266 + $0xd8] sm:$0xf] %v1066
      %1195 = vst [vmem:[%s266 + $0xdc] sm:$0xf] %v1067
      %1196 = vst [vmem:[%s266 + $0xe0] sm:$0xf] %v1068
      %1197 = vst [vmem:[%s266 + $0xe4] sm:$0xf] %v1069
      %1198 = vst [vmem:[%s266 + $0xe8] sm:$0xf] %v1070
      %1199 = vst [vmem:[%s266 + $0xec] sm:$0xf] %v1071
      %1200 = vst [vmem:[%s266 + $0xf0] sm:$0xf] %v1072
      %1201 = vst [vmem:[%s266 + $0xf4] sm:$0xf] %v1073
      %1202 = vst [vmem:[%s266 + $0xf8] sm:$0xf] %v1074
      %1203 = vst [vmem:[%s266 + $0xfc] sm:$0xf] %v1075
      %p1204 = scmp.eq.s32.totalorder %s21, 0
      // Predicated region
      $region29: #{generator_forward.15} parent=27 // pred_check
        %p1205 = pneg %p1204
      $region30: #{generator_forward.15} parent=27 // pred_check_branch
        %1207 = sbr.rel (%p1205) target = $region32
      $region31: #{generator_forward.15} parent=27 // pred_region
        %1208 = vst [vmem:[%s270] sm:$0x1] 0.0
        %1209 = vst [vmem:[%s273] sm:$0x1] 0.0
      $region32: #{generator_forward.15} parent=27 // pred_fallthru
        _
      %v1210 = vld [vmem:[%s270] sm:$0x1]
      %v1211 = vadd.f32 %v630, %v633
      %v1212 = vadd.f32 %v1211, %v638
      %v1213 = vadd.f32 %v1212, %v641
      %v1214 = vadd.f32 %v1213, %v646
      %v1215 = vadd.f32 %v1214, %v649
      %v1216 = vadd.f32 %v1215, %v654
      %v1217 = vadd.f32 %v1216, %v657
      %v1218 = vadd.f32 %v1217, %v662
      %v1219 = vadd.f32 %v1218, %v665
      %v1220 = vadd.f32 %v1219, %v670
      %v1221 = vadd.f32 %v1220, %v673
      %v1222 = vadd.f32 %v1221, %v678
      %v1223 = vadd.f32 %v1222, %v681
      %v1224 = vadd.f32 %v1223, %v686
      %v1225 = vadd.f32 %v1224, %v689
      %v1226 = vadd.f32 %v1225, %v694
      %v1227 = vadd.f32 %v1226, %v697
      %v1228 = vadd.f32 %v1227, %v702
      %v1229 = vadd.f32 %v1228, %v705
      %v1230 = vadd.f32 %v1229, %v710
      %v1231 = vadd.f32 %v1230, %v713
      %v1232 = vadd.f32 %v1231, %v718
      %v1233 = vadd.f32 %v1232, %v721
      %v1234 = vadd.f32 %v1233, %v726
      %v1235 = vadd.f32 %v1234, %v729
      %v1236 = vadd.f32 %v1235, %v734
      %v1237 = vadd.f32 %v1236, %v737
      %v1238 = vadd.f32 %v1237, %v742
      %v1239 = vadd.f32 %v1238, %v745
      %v1240 = vadd.f32 %v1239, %v750
      %v1241 = vadd.f32 %v1240, %v753
      %v1242 = vadd.f32 %v1241, %v758
      %v1243 = vadd.f32 %v1242, %v761
      %v1244 = vadd.f32 %v1243, %v766
      %v1245 = vadd.f32 %v1244, %v769
      %v1246 = vadd.f32 %v1245, %v774
      %v1247 = vadd.f32 %v1246, %v777
      %v1248 = vadd.f32 %v1247, %v782
      %v1249 = vadd.f32 %v1248, %v785
      %v1250 = vadd.f32 %v1249, %v790
      %v1251 = vadd.f32 %v1250, %v793
      %v1252 = vadd.f32 %v1251, %v798
      %v1253 = vadd.f32 %v1252, %v801
      %v1254 = vadd.f32 %v1253, %v806
      %v1255 = vadd.f32 %v1254, %v809
      %v1256 = vadd.f32 %v1255, %v814
      %v1257 = vadd.f32 %v1256, %v817
      %v1258 = vadd.f32 %v1257, %v822
      %v1259 = vadd.f32 %v1258, %v825
      %v1260 = vadd.f32 %v1259, %v830
      %v1261 = vadd.f32 %v1260, %v833
      %v1262 = vadd.f32 %v1261, %v838
      %v1263 = vadd.f32 %v1262, %v841
      %v1264 = vadd.f32 %v1263, %v846
      %v1265 = vadd.f32 %v1264, %v849
      %v1266 = vadd.f32 %v1265, %v854
      %v1267 = vadd.f32 %v1266, %v857
      %v1268 = vadd.f32 %v1267, %v862
      %v1269 = vadd.f32 %v1268, %v865
      %v1270 = vadd.f32 %v1269, %v870
      %v1271 = vadd.f32 %v1270, %v873
      %v1272 = vadd.f32 %v1271, %v878
      %v1273 = vadd.f32 %v1272, %v881
      %v1274 = vrot.slane %v1273, 4
      %v1275 = vadd.f32 %v1273, %v1274
      %v1276 = vrot.slane %v1275, 2
      %v1277 = vadd.f32 %v1275, %v1276
      %v1278 = vrot.slane %v1277, 1
      %v1279 = vadd.f32 %v1277, %v1278
      %v1280 = vadd.f32 %v1210, %v1279
      %1281 = vst [vmem:[%s270] sm:$0x1] %v1280
      %v1282 = vld [vmem:[%s273] sm:$0x1]
      %v1283 = vmul.f32 %v630, %v630
      %v1284 = vmul.f32 %v633, %v633
      %v1285 = vmul.f32 %v638, %v638
      %v1286 = vmul.f32 %v641, %v641
      %v1287 = vmul.f32 %v646, %v646
      %v1288 = vmul.f32 %v649, %v649
      %v1289 = vmul.f32 %v654, %v654
      %v1290 = vmul.f32 %v657, %v657
      %v1291 = vmul.f32 %v662, %v662
      %v1292 = vmul.f32 %v665, %v665
      %v1293 = vmul.f32 %v670, %v670
      %v1294 = vmul.f32 %v673, %v673
      %v1295 = vmul.f32 %v678, %v678
      %v1296 = vmul.f32 %v681, %v681
      %v1297 = vmul.f32 %v686, %v686
      %v1298 = vmul.f32 %v689, %v689
      %v1299 = vmul.f32 %v694, %v694
      %v1300 = vmul.f32 %v697, %v697
      %v1301 = vmul.f32 %v702, %v702
      %v1302 = vmul.f32 %v705, %v705
      %v1303 = vmul.f32 %v710, %v710
      %v1304 = vmul.f32 %v713, %v713
      %v1305 = vmul.f32 %v718, %v718
      %v1306 = vmul.f32 %v721, %v721
      %v1307 = vmul.f32 %v726, %v726
      %v1308 = vmul.f32 %v729, %v729
      %v1309 = vmul.f32 %v734, %v734
      %v1310 = vmul.f32 %v737, %v737
      %v1311 = vmul.f32 %v742, %v742
      %v1312 = vmul.f32 %v745, %v745
      %v1313 = vmul.f32 %v750, %v750
      %v1314 = vmul.f32 %v753, %v753
      %v1315 = vmul.f32 %v758, %v758
      %v1316 = vmul.f32 %v761, %v761
      %v1317 = vmul.f32 %v766, %v766
      %v1318 = vmul.f32 %v769, %v769
      %v1319 = vmul.f32 %v774, %v774
      %v1320 = vmul.f32 %v777, %v777
      %v1321 = vmul.f32 %v782, %v782
      %v1322 = vmul.f32 %v785, %v785
      %v1323 = vmul.f32 %v790, %v790
      %v1324 = vmul.f32 %v793, %v793
      %v1325 = vmul.f32 %v798, %v798
      %v1326 = vmul.f32 %v801, %v801
      %v1327 = vmul.f32 %v806, %v806
      %v1328 = vmul.f32 %v809, %v809
      %v1329 = vmul.f32 %v814, %v814
      %v1330 = vmul.f32 %v817, %v817
      %v1331 = vmul.f32 %v822, %v822
      %v1332 = vmul.f32 %v825, %v825
      %v1333 = vmul.f32 %v830, %v830
      %v1334 = vmul.f32 %v833, %v833
      %v1335 = vmul.f32 %v838, %v838
      %v1336 = vmul.f32 %v841, %v841
      %v1337 = vmul.f32 %v846, %v846
      %v1338 = vmul.f32 %v849, %v849
      %v1339 = vmul.f32 %v854, %v854
      %v1340 = vmul.f32 %v857, %v857
      %v1341 = vmul.f32 %v862, %v862
      %v1342 = vmul.f32 %v865, %v865
      %v1343 = vmul.f32 %v870, %v870
      %v1344 = vmul.f32 %v873, %v873
      %v1345 = vmul.f32 %v878, %v878
      %v1346 = vmul.f32 %v881, %v881
      %v1347 = vadd.f32 %v1283, %v1284
      %v1348 = vadd.f32 %v1347, %v1285
      %v1349 = vadd.f32 %v1348, %v1286
      %v1350 = vadd.f32 %v1349, %v1287
      %v1351 = vadd.f32 %v1350, %v1288
      %v1352 = vadd.f32 %v1351, %v1289
      %v1353 = vadd.f32 %v1352, %v1290
      %v1354 = vadd.f32 %v1353, %v1291
      %v1355 = vadd.f32 %v1354, %v1292
      %v1356 = vadd.f32 %v1355, %v1293
      %v1357 = vadd.f32 %v1356, %v1294
      %v1358 = vadd.f32 %v1357, %v1295
      %v1359 = vadd.f32 %v1358, %v1296
      %v1360 = vadd.f32 %v1359, %v1297
      %v1361 = vadd.f32 %v1360, %v1298
      %v1362 = vadd.f32 %v1361, %v1299
      %v1363 = vadd.f32 %v1362, %v1300
      %v1364 = vadd.f32 %v1363, %v1301
      %v1365 = vadd.f32 %v1364, %v1302
      %v1366 = vadd.f32 %v1365, %v1303
      %v1367 = vadd.f32 %v1366, %v1304
      %v1368 = vadd.f32 %v1367, %v1305
      %v1369 = vadd.f32 %v1368, %v1306
      %v1370 = vadd.f32 %v1369, %v1307
      %v1371 = vadd.f32 %v1370, %v1308
      %v1372 = vadd.f32 %v1371, %v1309
      %v1373 = vadd.f32 %v1372, %v1310
      %v1374 = vadd.f32 %v1373, %v1311
      %v1375 = vadd.f32 %v1374, %v1312
      %v1376 = vadd.f32 %v1375, %v1313
      %v1377 = vadd.f32 %v1376, %v1314
      %v1378 = vadd.f32 %v1377, %v1315
      %v1379 = vadd.f32 %v1378, %v1316
      %v1380 = vadd.f32 %v1379, %v1317
      %v1381 = vadd.f32 %v1380, %v1318
      %v1382 = vadd.f32 %v1381, %v1319
      %v1383 = vadd.f32 %v1382, %v1320
      %v1384 = vadd.f32 %v1383, %v1321
      %v1385 = vadd.f32 %v1384, %v1322
      %v1386 = vadd.f32 %v1385, %v1323
      %v1387 = vadd.f32 %v1386, %v1324
      %v1388 = vadd.f32 %v1387, %v1325
      %v1389 = vadd.f32 %v1388, %v1326
      %v1390 = vadd.f32 %v1389, %v1327
      %v1391 = vadd.f32 %v1390, %v1328
      %v1392 = vadd.f32 %v1391, %v1329
      %v1393 = vadd.f32 %v1392, %v1330
      %v1394 = vadd.f32 %v1393, %v1331
      %v1395 = vadd.f32 %v1394, %v1332
      %v1396 = vadd.f32 %v1395, %v1333
      %v1397 = vadd.f32 %v1396, %v1334
      %v1398 = vadd.f32 %v1397, %v1335
      %v1399 = vadd.f32 %v1398, %v1336
      %v1400 = vadd.f32 %v1399, %v1337
      %v1401 = vadd.f32 %v1400, %v1338
      %v1402 = vadd.f32 %v1401, %v1339
      %v1403 = vadd.f32 %v1402, %v1340
      %v1404 = vadd.f32 %v1403, %v1341
      %v1405 = vadd.f32 %v1404, %v1342
      %v1406 = vadd.f32 %v1405, %v1343
      %v1407 = vadd.f32 %v1406, %v1344
      %v1408 = vadd.f32 %v1407, %v1345
      %v1409 = vadd.f32 %v1408, %v1346
      %v1410 = vrot.slane %v1409, 4
      %v1411 = vadd.f32 %v1409, %v1410
      %v1412 = vrot.slane %v1411, 2
      %v1413 = vadd.f32 %v1411, %v1412
      %v1414 = vrot.slane %v1413, 1
      %v1415 = vadd.f32 %v1413, %v1414
      %v1416 = vadd.f32 %v1282, %v1415
      %1417 = vst [vmem:[%s273] sm:$0x1] %v1416
      %s1418 = smul.u32 64, %s21
      %p1419 = scmp.lt.s32.totalorder %s20, 3
      %s1420 = scalar_select %p1419, %s20, 3
      %p1421 = scmp.lt.s32.totalorder %s1418, 63
      %s1422 = scalar_select %p1421, %s1418, 63
      %s1423 = smul.addr %s1420, 64
      %s1424 = sadd.s32 %s1422, %s1423
      %s1425 = smul.addr %s1424, 4
      %s1426 = scalar_lea.vmem %s2, %s1425
      %p1427 = scmp.lt.s32.totalorder %s20, 3
      %s1428 = scalar_select %p1427, %s20, 3
      %s1429 = scalar_lea.vmem %s3, %s1428
      %p1430 = scmp.lt.s32.totalorder %s20, 3
      %s1431 = scalar_select %p1430, %s20, 3
      %s1432 = scalar_lea.vmem %s4, %s1431
      // Predicated region
      $region33: #{generator_forward.15} parent=27 // pred_check
        %p1433 = pneg %p102
      $region34: #{generator_forward.15} parent=27 // pred_check_branch
        %1435 = sbr.rel (%p1433) target = $region36
      $region35: #{generator_forward.15} parent=27 // pred_region
        %s1436 = smul.u32 64, %s21
      $region36: #{generator_forward.15} parent=27 // pred_fallthru
        _
      // Predicated region
      $region37: #{generator_forward.15} parent=27 // pred_check
        %p1437 = pneg %p128
      $region38: #{generator_forward.15} parent=27 // pred_check_branch
        %1439 = sbr.rel (%p1437) target = $region40
      $region39: #{generator_forward.15} parent=27 // pred_region
        _
      $region40: #{generator_forward.15} parent=27 // pred_fallthru
        _
      // Predicated region
      $region41: #{generator_forward.15} parent=27 // pred_check
        %p1440 = pneg %p154
      $region42: #{generator_forward.15} parent=27 // pred_check_branch
        %1442 = sbr.rel (%p1440) target = $region44
      $region43: #{generator_forward.15} parent=27 // pred_region
        _
      $region44: #{generator_forward.15} parent=27 // pred_fallthru
        _
    $region28: #{generator_forward.15} parent=5 // pred_fallthru
      _
    %p1443 = scmp.le.s32.totalorder 2, %s11
    // Predicated region
    $region45: #{generator_forward.15} parent=5 // pred_check
      %p1444 = pneg %p1443
    $region46: #{generator_forward.15} parent=5 // pred_check_branch
      %1446 = sbr.rel (%p1444) target = $region48
    $region47: #{generator_forward.15} parent=5 // pred_region
      %s1447 = ssub.s32 %s11, 2
      // Predicated region
      $region49: #{generator_forward.15} parent=47 // pred_check
        %p1448 = pneg %p108
      $region50: #{generator_forward.15} parent=47 // pred_check_branch
        %1450 = sbr.rel (%p1448) target = $region52
      $region51: #{generator_forward.15} parent=47 // pred_region
        %s1451 = smul.u32 64, %s23
        %p1452 = scmp.lt.s32.totalorder %s22, 3
        %s1453 = scalar_select %p1452, %s22, 3
        %p1454 = scmp.lt.s32.totalorder %s1451, 63
        %s1455 = scalar_select %p1454, %s1451, 63
        %s1456 = smul.addr %s1453, 64
        %s1457 = sadd.s32 %s1455, %s1456
        %s1458 = smul.addr %s1457, 4
        %s1459 = scalar_lea.vmem %s2, %s1458
      $region52: #{generator_forward.15} parent=47 // pred_fallthru
        _
      // Predicated region
      $region53: #{generator_forward.15} parent=47 // pred_check
        %p1460 = pneg %p134
      $region54: #{generator_forward.15} parent=47 // pred_check_branch
        %1462 = sbr.rel (%p1460) target = $region56
      $region55: #{generator_forward.15} parent=47 // pred_region
        %p1463 = scmp.lt.s32.totalorder %s22, 3
        %s1464 = scalar_select %p1463, %s22, 3
        %s1465 = scalar_lea.vmem %s3, %s1464
      $region56: #{generator_forward.15} parent=47 // pred_fallthru
        _
      // Predicated region
      $region57: #{generator_forward.15} parent=47 // pred_check
        %p1466 = pneg %p160
      $region58: #{generator_forward.15} parent=47 // pred_check_branch
        %1468 = sbr.rel (%p1466) target = $region60
      $region59: #{generator_forward.15} parent=47 // pred_region
        %p1469 = scmp.lt.s32.totalorder %s22, 3
        %s1470 = scalar_select %p1469, %s22, 3
        %s1471 = scalar_lea.vmem %s4, %s1470
      $region60: #{generator_forward.15} parent=47 // pred_fallthru
        _
    $region48: #{generator_forward.15} parent=5 // pred_fallthru
      _
  $region6: #{generator_forward.15} parent=0 // loop_footer
    %s15 = sadd.s32 1, %s11
  $region7: #{generator_forward.15} parent=0 // loop_footer_branch
    %10 = sbr.rel target = $region3
  $region8: #{generator_forward.15} parent=0 // loop_exit
    _

// kernel: generator_forward.16
$region0: #{generator_forward.16}
  #allocation0 [shape = 'u32[]', space=smem, size = 0x4, offset = 0x4, fixed_abs, tag = 'smem constant byte address 0x4 - core index']
  #allocation1 [shape = 'u32[144,128]{1,0:T(1,128)}', space=vmem, size = 0x12000, scoped, tag = 'internal scratch']
  %s0 = inlined_call_operand.vmem [shape: bf16[2048,128], index: 0, kind: input, shape index: {}]
  %s1 = inlined_call_operand.vmem [shape: f32[1,128], index: 1, kind: input, shape index: {}]
  %s2 = inlined_call_operand.vmem [shape: f32[1,128], index: 2, kind: input, shape index: {}]
  %s3 = inlined_call_operand.vmem [shape: bf16[2048,128], index: 3, kind: output, shape index: {}]
  %s4 = sld [smem:[#allocation0]]
  $region22: #{generator_forward.16} parent=0
    _
  %s6 = ssub.s32 1, %s4
  %s7 = scalar_select 0, %s6, %s4
  // Predicated region
  $region2: #{generator_forward.16} parent=0 // pred_check
    _
  $region3: #{generator_forward.16} parent=0 // pred_check_branch
    %9 = sbr.rel (0) target = $region5
  $region4: #{generator_forward.16} parent=0 // pred_region
    _
  $region5: #{generator_forward.16} parent=0 // pred_fallthru
    _
  // Predicated region
  $region6: #{generator_forward.16} parent=0 // pred_check
    _
  $region7: #{generator_forward.16} parent=0 // pred_check_branch
    %11 = sbr.rel (0) target = $region9
  $region8: #{generator_forward.16} parent=0 // pred_region
    _
  $region9: #{generator_forward.16} parent=0 // pred_fallthru
    _
  // Predicated region
  $region10: #{generator_forward.16} parent=0 // pred_check
    _
  $region11: #{generator_forward.16} parent=0 // pred_check_branch
    %13 = sbr.rel (0) target = $region13
  $region12: #{generator_forward.16} parent=0 // pred_region
    _
  $region13: #{generator_forward.16} parent=0 // pred_fallthru
    _
  %v14 = vld [vmem:[%s0] sm:$0xf]
  %v15 = vld [vmem:[%s0 + $0x4] sm:$0xf]
  %v16 = vld [vmem:[%s0 + $0x8] sm:$0xf]
  %v17 = vld [vmem:[%s0 + $0xc] sm:$0xf]
  %v18 = vld [vmem:[%s0 + $0x10] sm:$0xf]
  %v19 = vld [vmem:[%s0 + $0x14] sm:$0xf]
  %v20 = vld [vmem:[%s0 + $0x18] sm:$0xf]
  %v21 = vld [vmem:[%s0 + $0x1c] sm:$0xf]
  %v22 = vld [vmem:[%s0 + $0x20] sm:$0xf]
  %v23 = vld [vmem:[%s0 + $0x24] sm:$0xf]
  %v24 = vld [vmem:[%s0 + $0x28] sm:$0xf]
  %v25 = vld [vmem:[%s0 + $0x2c] sm:$0xf]
  %v26 = vld [vmem:[%s0 + $0x30] sm:$0xf]
  %v27 = vld [vmem:[%s0 + $0x34] sm:$0xf]
  %v28 = vld [vmem:[%s0 + $0x38] sm:$0xf]
  %v29 = vld [vmem:[%s0 + $0x3c] sm:$0xf]
  %v30 = vld [vmem:[%s0 + $0x40] sm:$0xf]
  %v31 = vld [vmem:[%s0 + $0x44] sm:$0xf]
  %v32 = vld [vmem:[%s0 + $0x48] sm:$0xf]
  %v33 = vld [vmem:[%s0 + $0x4c] sm:$0xf]
  %v34 = vld [vmem:[%s0 + $0x50] sm:$0xf]
  %v35 = vld [vmem:[%s0 + $0x54] sm:$0xf]
  %v36 = vld [vmem:[%s0 + $0x58] sm:$0xf]
  %v37 = vld [vmem:[%s0 + $0x5c] sm:$0xf]
  %v38 = vld [vmem:[%s0 + $0x60] sm:$0xf]
  %v39 = vld [vmem:[%s0 + $0x64] sm:$0xf]
  %v40 = vld [vmem:[%s0 + $0x68] sm:$0xf]
  %v41 = vld [vmem:[%s0 + $0x6c] sm:$0xf]
  %v42 = vld [vmem:[%s0 + $0x70] sm:$0xf]
  %v43 = vld [vmem:[%s0 + $0x74] sm:$0xf]
  %v44 = vld [vmem:[%s0 + $0x78] sm:$0xf]
  %v45 = vld [vmem:[%s0 + $0x7c] sm:$0xf]
  %v46 = vld [vmem:[%s0 + $0x80] sm:$0xf]
  %v47 = vld [vmem:[%s0 + $0x84] sm:$0xf]
  %v48 = vld [vmem:[%s0 + $0x88] sm:$0xf]
  %v49 = vld [vmem:[%s0 + $0x8c] sm:$0xf]
  %v50 = vld [vmem:[%s0 + $0x90] sm:$0xf]
  %v51 = vld [vmem:[%s0 + $0x94] sm:$0xf]
  %v52 = vld [vmem:[%s0 + $0x98] sm:$0xf]
  %v53 = vld [vmem:[%s0 + $0x9c] sm:$0xf]
  %v54 = vld [vmem:[%s0 + $0xa0] sm:$0xf]
  %v55 = vld [vmem:[%s0 + $0xa4] sm:$0xf]
  %v56 = vld [vmem:[%s0 + $0xa8] sm:$0xf]
  %v57 = vld [vmem:[%s0 + $0xac] sm:$0xf]
  %v58 = vld [vmem:[%s0 + $0xb0] sm:$0xf]
  %v59 = vld [vmem:[%s0 + $0xb4] sm:$0xf]
  %v60 = vld [vmem:[%s0 + $0xb8] sm:$0xf]
  %v61 = vld [vmem:[%s0 + $0xbc] sm:$0xf]
  %v62 = vld [vmem:[%s0 + $0xc0] sm:$0xf]
  %v63 = vld [vmem:[%s0 + $0xc4] sm:$0xf]
  %v64 = vld [vmem:[%s0 + $0xc8] sm:$0xf]
  %v65 = vld [vmem:[%s0 + $0xcc] sm:$0xf]
  %v66 = vld [vmem:[%s0 + $0xd0] sm:$0xf]
  %v67 = vld [vmem:[%s0 + $0xd4] sm:$0xf]
  %v68 = vld [vmem:[%s0 + $0xd8] sm:$0xf]
  %v69 = vld [vmem:[%s0 + $0xdc] sm:$0xf]
  %v70 = vld [vmem:[%s0 + $0xe0] sm:$0xf]
  %v71 = vld [vmem:[%s0 + $0xe4] sm:$0xf]
  %v72 = vld [vmem:[%s0 + $0xe8] sm:$0xf]
  %v73 = vld [vmem:[%s0 + $0xec] sm:$0xf]
  %v74 = vld [vmem:[%s0 + $0xf0] sm:$0xf]
  %v75 = vld [vmem:[%s0 + $0xf4] sm:$0xf]
  %v76 = vld [vmem:[%s0 + $0xf8] sm:$0xf]
  %v77 = vld [vmem:[%s0 + $0xfc] sm:$0xf]
  %v78 = vld [vmem:[%s0 + $0x100] sm:$0xf]
  %v79 = vld [vmem:[%s0 + $0x104] sm:$0xf]
  %v80 = vld [vmem:[%s0 + $0x108] sm:$0xf]
  %v81 = vld [vmem:[%s0 + $0x10c] sm:$0xf]
  %v82 = vld [vmem:[%s0 + $0x110] sm:$0xf]
  %v83 = vld [vmem:[%s0 + $0x114] sm:$0xf]
  %v84 = vld [vmem:[%s0 + $0x118] sm:$0xf]
  %v85 = vld [vmem:[%s0 + $0x11c] sm:$0xf]
  %v86 = vld [vmem:[%s0 + $0x120] sm:$0xf]
  %v87 = vld [vmem:[%s0 + $0x124] sm:$0xf]
  %v88 = vld [vmem:[%s0 + $0x128] sm:$0xf]
  %v89 = vld [vmem:[%s0 + $0x12c] sm:$0xf]
  %v90 = vld [vmem:[%s0 + $0x130] sm:$0xf]
  %v91 = vld [vmem:[%s0 + $0x134] sm:$0xf]
  %v92 = vld [vmem:[%s0 + $0x138] sm:$0xf]
  %v93 = vld [vmem:[%s0 + $0x13c] sm:$0xf]
  %v94 = vld [vmem:[%s0 + $0x140] sm:$0xf]
  %v95 = vld [vmem:[%s0 + $0x144] sm:$0xf]
  %v96 = vld [vmem:[%s0 + $0x148] sm:$0xf]
  %v97 = vld [vmem:[%s0 + $0x14c] sm:$0xf]
  %v98 = vld [vmem:[%s0 + $0x150] sm:$0xf]
  %v99 = vld [vmem:[%s0 + $0x154] sm:$0xf]
  %v100 = vld [vmem:[%s0 + $0x158] sm:$0xf]
  %v101 = vld [vmem:[%s0 + $0x15c] sm:$0xf]
  %v102 = vld [vmem:[%s0 + $0x160] sm:$0xf]
  %v103 = vld [vmem:[%s0 + $0x164] sm:$0xf]
  %v104 = vld [vmem:[%s0 + $0x168] sm:$0xf]
  %v105 = vld [vmem:[%s0 + $0x16c] sm:$0xf]
  %v106 = vld [vmem:[%s0 + $0x170] sm:$0xf]
  %v107 = vld [vmem:[%s0 + $0x174] sm:$0xf]
  %v108 = vld [vmem:[%s0 + $0x178] sm:$0xf]
  %v109 = vld [vmem:[%s0 + $0x17c] sm:$0xf]
  %v110 = vld [vmem:[%s0 + $0x180] sm:$0xf]
  %v111 = vld [vmem:[%s0 + $0x184] sm:$0xf]
  %v112 = vld [vmem:[%s0 + $0x188] sm:$0xf]
  %v113 = vld [vmem:[%s0 + $0x18c] sm:$0xf]
  %v114 = vld [vmem:[%s0 + $0x190] sm:$0xf]
  %v115 = vld [vmem:[%s0 + $0x194] sm:$0xf]
  %v116 = vld [vmem:[%s0 + $0x198] sm:$0xf]
  %v117 = vld [vmem:[%s0 + $0x19c] sm:$0xf]
  %v118 = vld [vmem:[%s0 + $0x1a0] sm:$0xf]
  %v119 = vld [vmem:[%s0 + $0x1a4] sm:$0xf]
  %v120 = vld [vmem:[%s0 + $0x1a8] sm:$0xf]
  %v121 = vld [vmem:[%s0 + $0x1ac] sm:$0xf]
  %v122 = vld [vmem:[%s0 + $0x1b0] sm:$0xf]
  %v123 = vld [vmem:[%s0 + $0x1b4] sm:$0xf]
  %v124 = vld [vmem:[%s0 + $0x1b8] sm:$0xf]
  %v125 = vld [vmem:[%s0 + $0x1bc] sm:$0xf]
  %v126 = vld [vmem:[%s0 + $0x1c0] sm:$0xf]
  %v127 = vld [vmem:[%s0 + $0x1c4] sm:$0xf]
  %v128 = vld [vmem:[%s0 + $0x1c8] sm:$0xf]
  %v129 = vld [vmem:[%s0 + $0x1cc] sm:$0xf]
  %v130 = vld [vmem:[%s0 + $0x1d0] sm:$0xf]
  %v131 = vld [vmem:[%s0 + $0x1d4] sm:$0xf]
  %v132 = vld [vmem:[%s0 + $0x1d8] sm:$0xf]
  %v133 = vld [vmem:[%s0 + $0x1dc] sm:$0xf]
  %v134 = vld [vmem:[%s0 + $0x1e0] sm:$0xf]
  %v135 = vld [vmem:[%s0 + $0x1e4] sm:$0xf]
  %v136 = vld [vmem:[%s0 + $0x1e8] sm:$0xf]
  %v137 = vld [vmem:[%s0 + $0x1ec] sm:$0xf]
  %v138 = vld [vmem:[%s0 + $0x1f0] sm:$0xf]
  %v139 = vld [vmem:[%s0 + $0x1f4] sm:$0xf]
  %v140 = vld [vmem:[%s0 + $0x1f8] sm:$0xf]
  %v141 = vld [vmem:[%s0 + $0x1fc] sm:$0xf]
  %v142 = vld [vmem:[%s0 + $0x200] sm:$0xf]
  %v143 = vld [vmem:[%s0 + $0x204] sm:$0xf]
  %v144 = vld [vmem:[%s0 + $0x208] sm:$0xf]
  %v145 = vld [vmem:[%s0 + $0x20c] sm:$0xf]
  %v146 = vld [vmem:[%s0 + $0x210] sm:$0xf]
  %v147 = vld [vmem:[%s0 + $0x214] sm:$0xf]
  %v148 = vld [vmem:[%s0 + $0x218] sm:$0xf]
  %v149 = vld [vmem:[%s0 + $0x21c] sm:$0xf]
  %v150 = vld [vmem:[%s0 + $0x220] sm:$0xf]
  %v151 = vld [vmem:[%s0 + $0x224] sm:$0xf]
  %v152 = vld [vmem:[%s0 + $0x228] sm:$0xf]
  %v153 = vld [vmem:[%s0 + $0x22c] sm:$0xf]
  %v154 = vld [vmem:[%s0 + $0x230] sm:$0xf]
  %v155 = vld [vmem:[%s0 + $0x234] sm:$0xf]
  %v156 = vld [vmem:[%s0 + $0x238] sm:$0xf]
  %v157 = vld [vmem:[%s0 + $0x23c] sm:$0xf]
  %v158 = vld [vmem:[%s0 + $0x240] sm:$0xf]
  %v159 = vld [vmem:[%s0 + $0x244] sm:$0xf]
  %v160 = vld [vmem:[%s0 + $0x248] sm:$0xf]
  %v161 = vld [vmem:[%s0 + $0x24c] sm:$0xf]
  %v162 = vld [vmem:[%s0 + $0x250] sm:$0xf]
  %v163 = vld [vmem:[%s0 + $0x254] sm:$0xf]
  %v164 = vld [vmem:[%s0 + $0x258] sm:$0xf]
  %v165 = vld [vmem:[%s0 + $0x25c] sm:$0xf]
  %v166 = vld [vmem:[%s0 + $0x260] sm:$0xf]
  %v167 = vld [vmem:[%s0 + $0x264] sm:$0xf]
  %v168 = vld [vmem:[%s0 + $0x268] sm:$0xf]
  %v169 = vld [vmem:[%s0 + $0x26c] sm:$0xf]
  %v170 = vld [vmem:[%s0 + $0x270] sm:$0xf]
  %v171 = vld [vmem:[%s0 + $0x274] sm:$0xf]
  %v172 = vld [vmem:[%s0 + $0x278] sm:$0xf]
  %v173 = vld [vmem:[%s0 + $0x27c] sm:$0xf]
  %v174 = vld [vmem:[%s0 + $0x280] sm:$0xf]
  %v175 = vld [vmem:[%s0 + $0x284] sm:$0xf]
  %v176 = vld [vmem:[%s0 + $0x288] sm:$0xf]
  %v177 = vld [vmem:[%s0 + $0x28c] sm:$0xf]
  %v178 = vld [vmem:[%s0 + $0x290] sm:$0xf]
  %v179 = vld [vmem:[%s0 + $0x294] sm:$0xf]
  %v180 = vld [vmem:[%s0 + $0x298] sm:$0xf]
  %v181 = vld [vmem:[%s0 + $0x29c] sm:$0xf]
  %v182 = vld [vmem:[%s0 + $0x2a0] sm:$0xf]
  %v183 = vld [vmem:[%s0 + $0x2a4] sm:$0xf]
  %v184 = vld [vmem:[%s0 + $0x2a8] sm:$0xf]
  %v185 = vld [vmem:[%s0 + $0x2ac] sm:$0xf]
  %v186 = vld [vmem:[%s0 + $0x2b0] sm:$0xf]
  %v187 = vld [vmem:[%s0 + $0x2b4] sm:$0xf]
  %v188 = vld [vmem:[%s0 + $0x2b8] sm:$0xf]
  %v189 = vld [vmem:[%s0 + $0x2bc] sm:$0xf]
  %v190 = vld [vmem:[%s0 + $0x2c0] sm:$0xf]
  %v191 = vld [vmem:[%s0 + $0x2c4] sm:$0xf]
  %v192 = vld [vmem:[%s0 + $0x2c8] sm:$0xf]
  %v193 = vld [vmem:[%s0 + $0x2cc] sm:$0xf]
  %v194 = vld [vmem:[%s0 + $0x2d0] sm:$0xf]
  %v195 = vld [vmem:[%s0 + $0x2d4] sm:$0xf]
  %v196 = vld [vmem:[%s0 + $0x2d8] sm:$0xf]
  %v197 = vld [vmem:[%s0 + $0x2dc] sm:$0xf]
  %v198 = vld [vmem:[%s0 + $0x2e0] sm:$0xf]
  %v199 = vld [vmem:[%s0 + $0x2e4] sm:$0xf]
  %v200 = vld [vmem:[%s0 + $0x2e8] sm:$0xf]
  %v201 = vld [vmem:[%s0 + $0x2ec] sm:$0xf]
  %v202 = vld [vmem:[%s0 + $0x2f0] sm:$0xf]
  %v203 = vld [vmem:[%s0 + $0x2f4] sm:$0xf]
  %v204 = vld [vmem:[%s0 + $0x2f8] sm:$0xf]
  %v205 = vld [vmem:[%s0 + $0x2fc] sm:$0xf]
  %v206 = vld [vmem:[%s0 + $0x300] sm:$0xf]
  %v207 = vld [vmem:[%s0 + $0x304] sm:$0xf]
  %v208 = vld [vmem:[%s0 + $0x308] sm:$0xf]
  %v209 = vld [vmem:[%s0 + $0x30c] sm:$0xf]
  %v210 = vld [vmem:[%s0 + $0x310] sm:$0xf]
  %v211 = vld [vmem:[%s0 + $0x314] sm:$0xf]
  %v212 = vld [vmem:[%s0 + $0x318] sm:$0xf]
  %v213 = vld [vmem:[%s0 + $0x31c] sm:$0xf]
  %v214 = vld [vmem:[%s0 + $0x320] sm:$0xf]
  %v215 = vld [vmem:[%s0 + $0x324] sm:$0xf]
  %v216 = vld [vmem:[%s0 + $0x328] sm:$0xf]
  %v217 = vld [vmem:[%s0 + $0x32c] sm:$0xf]
  %v218 = vld [vmem:[%s0 + $0x330] sm:$0xf]
  %v219 = vld [vmem:[%s0 + $0x334] sm:$0xf]
  %v220 = vld [vmem:[%s0 + $0x338] sm:$0xf]
  %v221 = vld [vmem:[%s0 + $0x33c] sm:$0xf]
  %v222 = vld [vmem:[%s0 + $0x340] sm:$0xf]
  %v223 = vld [vmem:[%s0 + $0x344] sm:$0xf]
  %v224 = vld [vmem:[%s0 + $0x348] sm:$0xf]
  %v225 = vld [vmem:[%s0 + $0x34c] sm:$0xf]
  %v226 = vld [vmem:[%s0 + $0x350] sm:$0xf]
  %v227 = vld [vmem:[%s0 + $0x354] sm:$0xf]
  %v228 = vld [vmem:[%s0 + $0x358] sm:$0xf]
  %v229 = vld [vmem:[%s0 + $0x35c] sm:$0xf]
  %v230 = vld [vmem:[%s0 + $0x360] sm:$0xf]
  %v231 = vld [vmem:[%s0 + $0x364] sm:$0xf]
  %v232 = vld [vmem:[%s0 + $0x368] sm:$0xf]
  %v233 = vld [vmem:[%s0 + $0x36c] sm:$0xf]
  %v234 = vld [vmem:[%s0 + $0x370] sm:$0xf]
  %v235 = vld [vmem:[%s0 + $0x374] sm:$0xf]
  %v236 = vld [vmem:[%s0 + $0x378] sm:$0xf]
  %v237 = vld [vmem:[%s0 + $0x37c] sm:$0xf]
  %v238 = vld [vmem:[%s0 + $0x380] sm:$0xf]
  %v239 = vld [vmem:[%s0 + $0x384] sm:$0xf]
  %v240 = vld [vmem:[%s0 + $0x388] sm:$0xf]
  %v241 = vld [vmem:[%s0 + $0x38c] sm:$0xf]
  %v242 = vld [vmem:[%s0 + $0x390] sm:$0xf]
  %v243 = vld [vmem:[%s0 + $0x394] sm:$0xf]
  %v244 = vld [vmem:[%s0 + $0x398] sm:$0xf]
  %v245 = vld [vmem:[%s0 + $0x39c] sm:$0xf]
  %v246 = vld [vmem:[%s0 + $0x3a0] sm:$0xf]
  %v247 = vld [vmem:[%s0 + $0x3a4] sm:$0xf]
  %v248 = vld [vmem:[%s0 + $0x3a8] sm:$0xf]
  %v249 = vld [vmem:[%s0 + $0x3ac] sm:$0xf]
  %v250 = vld [vmem:[%s0 + $0x3b0] sm:$0xf]
  %v251 = vld [vmem:[%s0 + $0x3b4] sm:$0xf]
  %v252 = vld [vmem:[%s0 + $0x3b8] sm:$0xf]
  %v253 = vld [vmem:[%s0 + $0x3bc] sm:$0xf]
  %v254 = vld [vmem:[%s0 + $0x3c0] sm:$0xf]
  %v255 = vld [vmem:[%s0 + $0x3c4] sm:$0xf]
  %v256 = vld [vmem:[%s0 + $0x3c8] sm:$0xf]
  %v257 = vld [vmem:[%s0 + $0x3cc] sm:$0xf]
  %v258 = vld [vmem:[%s0 + $0x3d0] sm:$0xf]
  %v259 = vld [vmem:[%s0 + $0x3d4] sm:$0xf]
  %v260 = vld [vmem:[%s0 + $0x3d8] sm:$0xf]
  %v261 = vld [vmem:[%s0 + $0x3dc] sm:$0xf]
  %v262 = vld [vmem:[%s0 + $0x3e0] sm:$0xf]
  %v263 = vld [vmem:[%s0 + $0x3e4] sm:$0xf]
  %v264 = vld [vmem:[%s0 + $0x3e8] sm:$0xf]
  %v265 = vld [vmem:[%s0 + $0x3ec] sm:$0xf]
  %v266 = vld [vmem:[%s0 + $0x3f0] sm:$0xf]
  %v267 = vld [vmem:[%s0 + $0x3f4] sm:$0xf]
  %v268 = vld [vmem:[%s0 + $0x3f8] sm:$0xf]
  %v269 = vld [vmem:[%s0 + $0x3fc] sm:$0xf]
  %v270 = vunpack.c.l.bf16 %v14
  %v271 = vunpack.c.l.bf16 %v15
  %v272 = vunpack.c.l.bf16 %v16
  %v273 = vunpack.c.l.bf16 %v17
  %v274 = vunpack.c.l.bf16 %v18
  %v275 = vunpack.c.l.bf16 %v19
  %v276 = vunpack.c.l.bf16 %v20
  %v277 = vunpack.c.l.bf16 %v21
  %v278 = vunpack.c.l.bf16 %v22
  %v279 = vunpack.c.l.bf16 %v23
  %v280 = vunpack.c.l.bf16 %v24
  %v281 = vunpack.c.l.bf16 %v25
  %v282 = vunpack.c.l.bf16 %v26
  %v283 = vunpack.c.l.bf16 %v27
  %v284 = vunpack.c.l.bf16 %v28
  %v285 = vunpack.c.l.bf16 %v29
  %v286 = vunpack.c.l.bf16 %v30
  %v287 = vunpack.c.l.bf16 %v31
  %v288 = vunpack.c.l.bf16 %v32
  %v289 = vunpack.c.l.bf16 %v33
  %v290 = vunpack.c.l.bf16 %v34
  %v291 = vunpack.c.l.bf16 %v35
  %v292 = vunpack.c.l.bf16 %v36
  %v293 = vunpack.c.l.bf16 %v37
  %v294 = vunpack.c.l.bf16 %v38
  %v295 = vunpack.c.l.bf16 %v39
  %v296 = vunpack.c.l.bf16 %v40
  %v297 = vunpack.c.l.bf16 %v41
  %v298 = vunpack.c.l.bf16 %v42
  %v299 = vunpack.c.l.bf16 %v43
  %v300 = vunpack.c.l.bf16 %v44
  %v301 = vunpack.c.l.bf16 %v45
  %v302 = vunpack.c.l.bf16 %v46
  %v303 = vunpack.c.l.bf16 %v47
  %v304 = vunpack.c.l.bf16 %v48
  %v305 = vunpack.c.l.bf16 %v49
  %v306 = vunpack.c.l.bf16 %v50
  %v307 = vunpack.c.l.bf16 %v51
  %v308 = vunpack.c.l.bf16 %v52
  %v309 = vunpack.c.l.bf16 %v53
  %v310 = vunpack.c.l.bf16 %v54
  %v311 = vunpack.c.l.bf16 %v55
  %v312 = vunpack.c.l.bf16 %v56
  %v313 = vunpack.c.l.bf16 %v57
  %v314 = vunpack.c.l.bf16 %v58
  %v315 = vunpack.c.l.bf16 %v59
  %v316 = vunpack.c.l.bf16 %v60
  %v317 = vunpack.c.l.bf16 %v61
  %v318 = vunpack.c.l.bf16 %v62
  %v319 = vunpack.c.l.bf16 %v63
  %v320 = vunpack.c.l.bf16 %v64
  %v321 = vunpack.c.l.bf16 %v65
  %v322 = vunpack.c.l.bf16 %v66
  %v323 = vunpack.c.l.bf16 %v67
  %v324 = vunpack.c.l.bf16 %v68
  %v325 = vunpack.c.l.bf16 %v69
  %v326 = vunpack.c.l.bf16 %v70
  %v327 = vunpack.c.l.bf16 %v71
  %v328 = vunpack.c.l.bf16 %v72
  %v329 = vunpack.c.l.bf16 %v73
  %v330 = vunpack.c.l.bf16 %v74
  %v331 = vunpack.c.l.bf16 %v75
  %v332 = vunpack.c.l.bf16 %v76
  %v333 = vunpack.c.l.bf16 %v77
  %v334 = vunpack.c.l.bf16 %v78
  %v335 = vunpack.c.l.bf16 %v79
  %v336 = vunpack.c.l.bf16 %v80
  %v337 = vunpack.c.l.bf16 %v81
  %v338 = vunpack.c.l.bf16 %v82
  %v339 = vunpack.c.l.bf16 %v83
  %v340 = vunpack.c.l.bf16 %v84
  %v341 = vunpack.c.l.bf16 %v85
  %v342 = vunpack.c.l.bf16 %v86
  %v343 = vunpack.c.l.bf16 %v87
  %v344 = vunpack.c.l.bf16 %v88
  %v345 = vunpack.c.l.bf16 %v89
  %v346 = vunpack.c.l.bf16 %v90
  %v347 = vunpack.c.l.bf16 %v91
  %v348 = vunpack.c.l.bf16 %v92
  %v349 = vunpack.c.l.bf16 %v93
  %v350 = vunpack.c.l.bf16 %v94
  %v351 = vunpack.c.l.bf16 %v95
  %v352 = vunpack.c.l.bf16 %v96
  %v353 = vunpack.c.l.bf16 %v97
  %v354 = vunpack.c.l.bf16 %v98
  %v355 = vunpack.c.l.bf16 %v99
  %v356 = vunpack.c.l.bf16 %v100
  %v357 = vunpack.c.l.bf16 %v101
  %v358 = vunpack.c.l.bf16 %v102
  %v359 = vunpack.c.l.bf16 %v103
  %v360 = vunpack.c.l.bf16 %v104
  %v361 = vunpack.c.l.bf16 %v105
  %v362 = vunpack.c.l.bf16 %v106
  %v363 = vunpack.c.l.bf16 %v107
  %v364 = vunpack.c.l.bf16 %v108
  %v365 = vunpack.c.l.bf16 %v109
  %v366 = vunpack.c.l.bf16 %v110
  %v367 = vunpack.c.l.bf16 %v111
  %v368 = vunpack.c.l.bf16 %v112
  %v369 = vunpack.c.l.bf16 %v113
  %v370 = vunpack.c.l.bf16 %v114
  %v371 = vunpack.c.l.bf16 %v115
  %v372 = vunpack.c.l.bf16 %v116
  %v373 = vunpack.c.l.bf16 %v117
  %v374 = vunpack.c.l.bf16 %v118
  %v375 = vunpack.c.l.bf16 %v119
  %v376 = vunpack.c.l.bf16 %v120
  %v377 = vunpack.c.l.bf16 %v121
  %v378 = vunpack.c.l.bf16 %v122
  %v379 = vunpack.c.l.bf16 %v123
  %v380 = vunpack.c.l.bf16 %v124
  %v381 = vunpack.c.l.bf16 %v125
  %v382 = vunpack.c.l.bf16 %v126
  %v383 = vunpack.c.l.bf16 %v127
  %v384 = vunpack.c.l.bf16 %v128
  %v385 = vunpack.c.l.bf16 %v129
  %v386 = vunpack.c.l.bf16 %v130
  %v387 = vunpack.c.l.bf16 %v131
  %v388 = vunpack.c.l.bf16 %v132
  %v389 = vunpack.c.l.bf16 %v133
  %v390 = vunpack.c.l.bf16 %v134
  %v391 = vunpack.c.l.bf16 %v135
  %v392 = vunpack.c.l.bf16 %v136
  %v393 = vunpack.c.l.bf16 %v137
  %v394 = vunpack.c.l.bf16 %v138
  %v395 = vunpack.c.l.bf16 %v139
  %v396 = vunpack.c.l.bf16 %v140
  %v397 = vunpack.c.l.bf16 %v141
  %v398 = vunpack.c.l.bf16 %v142
  %v399 = vunpack.c.l.bf16 %v143
  %v400 = vunpack.c.l.bf16 %v144
  %v401 = vunpack.c.l.bf16 %v145
  %v402 = vunpack.c.l.bf16 %v146
  %v403 = vunpack.c.l.bf16 %v147
  %v404 = vunpack.c.l.bf16 %v148
  %v405 = vunpack.c.l.bf16 %v149
  %v406 = vunpack.c.l.bf16 %v150
  %v407 = vunpack.c.l.bf16 %v151
  %v408 = vunpack.c.l.bf16 %v152
  %v409 = vunpack.c.l.bf16 %v153
  %v410 = vunpack.c.l.bf16 %v154
  %v411 = vunpack.c.l.bf16 %v155
  %v412 = vunpack.c.l.bf16 %v156
  %v413 = vunpack.c.l.bf16 %v157
  %v414 = vunpack.c.l.bf16 %v158
  %v415 = vunpack.c.l.bf16 %v159
  %v416 = vunpack.c.l.bf16 %v160
  %v417 = vunpack.c.l.bf16 %v161
  %v418 = vunpack.c.l.bf16 %v162
  %v419 = vunpack.c.l.bf16 %v163
  %v420 = vunpack.c.l.bf16 %v164
  %v421 = vunpack.c.l.bf16 %v165
  %v422 = vunpack.c.l.bf16 %v166
  %v423 = vunpack.c.l.bf16 %v167
  %v424 = vunpack.c.l.bf16 %v168
  %v425 = vunpack.c.l.bf16 %v169
  %v426 = vunpack.c.l.bf16 %v170
  %v427 = vunpack.c.l.bf16 %v171
  %v428 = vunpack.c.l.bf16 %v172
  %v429 = vunpack.c.l.bf16 %v173
  %v430 = vunpack.c.l.bf16 %v174
  %v431 = vunpack.c.l.bf16 %v175
  %v432 = vunpack.c.l.bf16 %v176
  %v433 = vunpack.c.l.bf16 %v177
  %v434 = vunpack.c.l.bf16 %v178
  %v435 = vunpack.c.l.bf16 %v179
  %v436 = vunpack.c.l.bf16 %v180
  %v437 = vunpack.c.l.bf16 %v181
  %v438 = vunpack.c.l.bf16 %v182
  %v439 = vunpack.c.l.bf16 %v183
  %v440 = vunpack.c.l.bf16 %v184
  %v441 = vunpack.c.l.bf16 %v185
  %v442 = vunpack.c.l.bf16 %v186
  %v443 = vunpack.c.l.bf16 %v187
  %v444 = vunpack.c.l.bf16 %v188
  %v445 = vunpack.c.l.bf16 %v189
  %v446 = vunpack.c.l.bf16 %v190
  %v447 = vunpack.c.l.bf16 %v191
  %v448 = vunpack.c.l.bf16 %v192
  %v449 = vunpack.c.l.bf16 %v193
  %v450 = vunpack.c.l.bf16 %v194
  %v451 = vunpack.c.l.bf16 %v195
  %v452 = vunpack.c.l.bf16 %v196
  %v453 = vunpack.c.l.bf16 %v197
  %v454 = vunpack.c.l.bf16 %v198
  %v455 = vunpack.c.l.bf16 %v199
  %v456 = vunpack.c.l.bf16 %v200
  %v457 = vunpack.c.l.bf16 %v201
  %v458 = vunpack.c.l.bf16 %v202
  %v459 = vunpack.c.l.bf16 %v203
  %v460 = vunpack.c.l.bf16 %v204
  %v461 = vunpack.c.l.bf16 %v205
  %v462 = vunpack.c.l.bf16 %v206
  %v463 = vunpack.c.l.bf16 %v207
  %v464 = vunpack.c.l.bf16 %v208
  %v465 = vunpack.c.l.bf16 %v209
  %v466 = vunpack.c.l.bf16 %v210
  %v467 = vunpack.c.l.bf16 %v211
  %v468 = vunpack.c.l.bf16 %v212
  %v469 = vunpack.c.l.bf16 %v213
  %v470 = vunpack.c.l.bf16 %v214
  %v471 = vunpack.c.l.bf16 %v215
  %v472 = vunpack.c.l.bf16 %v216
  %v473 = vunpack.c.l.bf16 %v217
  %v474 = vunpack.c.l.bf16 %v218
  %v475 = vunpack.c.l.bf16 %v219
  %v476 = vunpack.c.l.bf16 %v220
  %v477 = vunpack.c.l.bf16 %v221
  %v478 = vunpack.c.l.bf16 %v222
  %v479 = vunpack.c.l.bf16 %v223
  %v480 = vunpack.c.l.bf16 %v224
  %v481 = vunpack.c.l.bf16 %v225
  %v482 = vunpack.c.l.bf16 %v226
  %v483 = vunpack.c.l.bf16 %v227
  %v484 = vunpack.c.l.bf16 %v228
  %v485 = vunpack.c.l.bf16 %v229
  %v486 = vunpack.c.l.bf16 %v230
  %v487 = vunpack.c.l.bf16 %v231
  %v488 = vunpack.c.l.bf16 %v232
  %v489 = vunpack.c.l.bf16 %v233
  %v490 = vunpack.c.l.bf16 %v234
  %v491 = vunpack.c.l.bf16 %v235
  %v492 = vunpack.c.l.bf16 %v236
  %v493 = vunpack.c.l.bf16 %v237
  %v494 = vunpack.c.l.bf16 %v238
  %v495 = vunpack.c.l.bf16 %v239
  %v496 = vunpack.c.l.bf16 %v240
  %v497 = vunpack.c.l.bf16 %v241
  %v498 = vunpack.c.l.bf16 %v242
  %v499 = vunpack.c.l.bf16 %v243
  %v500 = vunpack.c.l.bf16 %v244
  %v501 = vunpack.c.l.bf16 %v245
  %v502 = vunpack.c.l.bf16 %v246
  %v503 = vunpack.c.l.bf16 %v247
  %v504 = vunpack.c.l.bf16 %v248
  %v505 = vunpack.c.l.bf16 %v249
  %v506 = vunpack.c.l.bf16 %v250
  %v507 = vunpack.c.l.bf16 %v251
  %v508 = vunpack.c.l.bf16 %v252
  %v509 = vunpack.c.l.bf16 %v253
  %v510 = vunpack.c.l.bf16 %v254
  %v511 = vunpack.c.l.bf16 %v255
  %v512 = vunpack.c.l.bf16 %v256
  %v513 = vunpack.c.l.bf16 %v257
  %v514 = vunpack.c.l.bf16 %v258
  %v515 = vunpack.c.l.bf16 %v259
  %v516 = vunpack.c.l.bf16 %v260
  %v517 = vunpack.c.l.bf16 %v261
  %v518 = vunpack.c.l.bf16 %v262
  %v519 = vunpack.c.l.bf16 %v263
  %v520 = vunpack.c.l.bf16 %v264
  %v521 = vunpack.c.l.bf16 %v265
  %v522 = vunpack.c.l.bf16 %v266
  %v523 = vunpack.c.l.bf16 %v267
  %v524 = vunpack.c.l.bf16 %v268
  %v525 = vunpack.c.l.bf16 %v269
  %v526 = vld [vmem:[%s1] sm:$0x1]
  %v528 = vlaneseq
  %v529 = vshrl.u32 %v528, 7
  %v530 = vsub.s32 0, %v529
  %v531 = vrot.slane %v526, %v530
  %v533 = vmul.f32 %v270, %v531
  %v534 = vmul.f32 %v271, %v531
  %v535 = vmul.f32 %v272, %v531
  %v536 = vmul.f32 %v273, %v531
  %v537 = vmul.f32 %v274, %v531
  %v538 = vmul.f32 %v275, %v531
  %v539 = vmul.f32 %v276, %v531
  %v540 = vmul.f32 %v277, %v531
  %v541 = vmul.f32 %v278, %v531
  %v542 = vmul.f32 %v279, %v531
  %v543 = vmul.f32 %v280, %v531
  %v544 = vmul.f32 %v281, %v531
  %v545 = vmul.f32 %v282, %v531
  %v546 = vmul.f32 %v283, %v531
  %v547 = vmul.f32 %v284, %v531
  %v548 = vmul.f32 %v285, %v531
  %v549 = vmul.f32 %v286, %v531
  %v550 = vmul.f32 %v287, %v531
  %v551 = vmul.f32 %v288, %v531
  %v552 = vmul.f32 %v289, %v531
  %v553 = vmul.f32 %v290, %v531
  %v554 = vmul.f32 %v291, %v531
  %v555 = vmul.f32 %v292, %v531
  %v556 = vmul.f32 %v293, %v531
  %v557 = vmul.f32 %v294, %v531
  %v558 = vmul.f32 %v295, %v531
  %v559 = vmul.f32 %v296, %v531
  %v560 = vmul.f32 %v297, %v531
  %v561 = vmul.f32 %v298, %v531
  %v562 = vmul.f32 %v299, %v531
  %v563 = vmul.f32 %v300, %v531
  %v564 = vmul.f32 %v301, %v531
  %v565 = vmul.f32 %v302, %v531
  %v566 = vmul.f32 %v303, %v531
  %v567 = vmul.f32 %v304, %v531
  %v568 = vmul.f32 %v305, %v531
  %v569 = vmul.f32 %v306, %v531
  %v570 = vmul.f32 %v307, %v531
  %v571 = vmul.f32 %v308, %v531
  %v572 = vmul.f32 %v309, %v531
  %v573 = vmul.f32 %v310, %v531
  %v574 = vmul.f32 %v311, %v531
  %v575 = vmul.f32 %v312, %v531
  %v576 = vmul.f32 %v313, %v531
  %v577 = vmul.f32 %v314, %v531
  %v578 = vmul.f32 %v315, %v531
  %v579 = vmul.f32 %v316, %v531
  %v580 = vmul.f32 %v317, %v531
  %v581 = vmul.f32 %v318, %v531
  %v582 = vmul.f32 %v319, %v531
  %v583 = vmul.f32 %v320, %v531
  %v584 = vmul.f32 %v321, %v531
  %v585 = vmul.f32 %v322, %v531
  %v586 = vmul.f32 %v323, %v531
  %v587 = vmul.f32 %v324, %v531
  %v588 = vmul.f32 %v325, %v531
  %v589 = vmul.f32 %v326, %v531
  %v590 = vmul.f32 %v327, %v531
  %v591 = vmul.f32 %v328, %v531
  %v592 = vmul.f32 %v329, %v531
  %v593 = vmul.f32 %v330, %v531
  %v594 = vmul.f32 %v331, %v531
  %v595 = vmul.f32 %v332, %v531
  %v596 = vmul.f32 %v333, %v531
  %v597 = vmul.f32 %v334, %v531
  %v598 = vmul.f32 %v335, %v531
  %v599 = vmul.f32 %v336, %v531
  %v600 = vmul.f32 %v337, %v531
  %v601 = vmul.f32 %v338, %v531
  %v602 = vmul.f32 %v339, %v531
  %v603 = vmul.f32 %v340, %v531
  %v604 = vmul.f32 %v341, %v531
  %v605 = vmul.f32 %v342, %v531
  %v606 = vmul.f32 %v343, %v531
  %v607 = vmul.f32 %v344, %v531
  %v608 = vmul.f32 %v345, %v531
  %v609 = vmul.f32 %v346, %v531
  %v610 = vmul.f32 %v347, %v531
  %v611 = vmul.f32 %v348, %v531
  %v612 = vmul.f32 %v349, %v531
  %v613 = vmul.f32 %v350, %v531
  %v614 = vmul.f32 %v351, %v531
  %v615 = vmul.f32 %v352, %v531
  %v616 = vmul.f32 %v353, %v531
  %v617 = vmul.f32 %v354, %v531
  %v618 = vmul.f32 %v355, %v531
  %v619 = vmul.f32 %v356, %v531
  %v620 = vmul.f32 %v357, %v531
  %v621 = vmul.f32 %v358, %v531
  %v622 = vmul.f32 %v359, %v531
  %v623 = vmul.f32 %v360, %v531
  %v624 = vmul.f32 %v361, %v531
  %v625 = vmul.f32 %v362, %v531
  %v626 = vmul.f32 %v363, %v531
  %v627 = vmul.f32 %v364, %v531
  %v628 = vmul.f32 %v365, %v531
  %v629 = vmul.f32 %v366, %v531
  %v630 = vmul.f32 %v367, %v531
  %v631 = vmul.f32 %v368, %v531
  %v632 = vmul.f32 %v369, %v531
  %v633 = vmul.f32 %v370, %v531
  %v634 = vmul.f32 %v371, %v531
  %v635 = vmul.f32 %v372, %v531
  %v636 = vmul.f32 %v373, %v531
  %v637 = vmul.f32 %v374, %v531
  %v638 = vmul.f32 %v375, %v531
  %v639 = vmul.f32 %v376, %v531
  %v640 = vmul.f32 %v377, %v531
  %v641 = vmul.f32 %v378, %v531
  %v642 = vmul.f32 %v379, %v531
  %v643 = vmul.f32 %v380, %v531
  %v644 = vmul.f32 %v381, %v531
  %v645 = vmul.f32 %v382, %v531
  %v646 = vmul.f32 %v383, %v531
  %v647 = vmul.f32 %v384, %v531
  %v648 = vmul.f32 %v385, %v531
  %v649 = vmul.f32 %v386, %v531
  %v650 = vmul.f32 %v387, %v531
  %v651 = vmul.f32 %v388, %v531
  %v652 = vmul.f32 %v389, %v531
  %v653 = vmul.f32 %v390, %v531
  %v654 = vmul.f32 %v391, %v531
  %v655 = vmul.f32 %v392, %v531
  %v656 = vmul.f32 %v393, %v531
  %v657 = vmul.f32 %v394, %v531
  %v658 = vmul.f32 %v395, %v531
  %v659 = vmul.f32 %v396, %v531
  %v660 = vmul.f32 %v397, %v531
  %v661 = vmul.f32 %v398, %v531
  %v662 = vmul.f32 %v399, %v531
  %v663 = vmul.f32 %v400, %v531
  %v664 = vmul.f32 %v401, %v531
  %v665 = vmul.f32 %v402, %v531
  %v666 = vmul.f32 %v403, %v531
  %v667 = vmul.f32 %v404, %v531
  %v668 = vmul.f32 %v405, %v531
  %v669 = vmul.f32 %v406, %v531
  %v670 = vmul.f32 %v407, %v531
  %v671 = vmul.f32 %v408, %v531
  %v672 = vmul.f32 %v409, %v531
  %v673 = vmul.f32 %v410, %v531
  %v674 = vmul.f32 %v411, %v531
  %v675 = vmul.f32 %v412, %v531
  %v676 = vmul.f32 %v413, %v531
  %v677 = vmul.f32 %v414, %v531
  %v678 = vmul.f32 %v415, %v531
  %v679 = vmul.f32 %v416, %v531
  %v680 = vmul.f32 %v417, %v531
  %v681 = vmul.f32 %v418, %v531
  %v682 = vmul.f32 %v419, %v531
  %v683 = vmul.f32 %v420, %v531
  %v684 = vmul.f32 %v421, %v531
  %v685 = vmul.f32 %v422, %v531
  %v686 = vmul.f32 %v423, %v531
  %v687 = vmul.f32 %v424, %v531
  %v688 = vmul.f32 %v425, %v531
  %v689 = vmul.f32 %v426, %v531
  %v690 = vmul.f32 %v427, %v531
  %v691 = vmul.f32 %v428, %v531
  %v692 = vmul.f32 %v429, %v531
  %v693 = vmul.f32 %v430, %v531
  %v694 = vmul.f32 %v431, %v531
  %v695 = vmul.f32 %v432, %v531
  %v696 = vmul.f32 %v433, %v531
  %v697 = vmul.f32 %v434, %v531
  %v698 = vmul.f32 %v435, %v531
  %v699 = vmul.f32 %v436, %v531
  %v700 = vmul.f32 %v437, %v531
  %v701 = vmul.f32 %v438, %v531
  %v702 = vmul.f32 %v439, %v531
  %v703 = vmul.f32 %v440, %v531
  %v704 = vmul.f32 %v441, %v531
  %v705 = vmul.f32 %v442, %v531
  %v706 = vmul.f32 %v443, %v531
  %v707 = vmul.f32 %v444, %v531
  %v708 = vmul.f32 %v445, %v531
  %v709 = vmul.f32 %v446, %v531
  %v710 = vmul.f32 %v447, %v531
  %v711 = vmul.f32 %v448, %v531
  %v712 = vmul.f32 %v449, %v531
  %v713 = vmul.f32 %v450, %v531
  %v714 = vmul.f32 %v451, %v531
  %v715 = vmul.f32 %v452, %v531
  %v716 = vmul.f32 %v453, %v531
  %v717 = vmul.f32 %v454, %v531
  %v718 = vmul.f32 %v455, %v531
  %v719 = vmul.f32 %v456, %v531
  %v720 = vmul.f32 %v457, %v531
  %v721 = vmul.f32 %v458, %v531
  %v722 = vmul.f32 %v459, %v531
  %v723 = vmul.f32 %v460, %v531
  %v724 = vmul.f32 %v461, %v531
  %v725 = vmul.f32 %v462, %v531
  %v726 = vmul.f32 %v463, %v531
  %v727 = vmul.f32 %v464, %v531
  %v728 = vmul.f32 %v465, %v531
  %v729 = vmul.f32 %v466, %v531
  %v730 = vmul.f32 %v467, %v531
  %v731 = vmul.f32 %v468, %v531
  %v732 = vmul.f32 %v469, %v531
  %v733 = vmul.f32 %v470, %v531
  %v734 = vmul.f32 %v471, %v531
  %v735 = vmul.f32 %v472, %v531
  %v736 = vmul.f32 %v473, %v531
  %v737 = vmul.f32 %v474, %v531
  %v738 = vmul.f32 %v475, %v531
  %v739 = vmul.f32 %v476, %v531
  %v740 = vmul.f32 %v477, %v531
  %v741 = vmul.f32 %v478, %v531
  %v742 = vmul.f32 %v479, %v531
  %v743 = vmul.f32 %v480, %v531
  %v744 = vmul.f32 %v481, %v531
  %v745 = vmul.f32 %v482, %v531
  %v746 = vmul.f32 %v483, %v531
  %v747 = vmul.f32 %v484, %v531
  %v748 = vmul.f32 %v485, %v531
  %v749 = vmul.f32 %v486, %v531
  %v750 = vmul.f32 %v487, %v531
  %v751 = vmul.f32 %v488, %v531
  %v752 = vmul.f32 %v489, %v531
  %v753 = vmul.f32 %v490, %v531
  %v754 = vmul.f32 %v491, %v531
  %v755 = vmul.f32 %v492, %v531
  %v756 = vmul.f32 %v493, %v531
  %v757 = vmul.f32 %v494, %v531
  %v758 = vmul.f32 %v495, %v531
  %v759 = vmul.f32 %v496, %v531
  %v760 = vmul.f32 %v497, %v531
  %v761 = vmul.f32 %v498, %v531
  %v762 = vmul.f32 %v499, %v531
  %v763 = vmul.f32 %v500, %v531
  %v764 = vmul.f32 %v501, %v531
  %v765 = vmul.f32 %v502, %v531
  %v766 = vmul.f32 %v503, %v531
  %v767 = vmul.f32 %v504, %v531
  %v768 = vmul.f32 %v505, %v531
  %v769 = vmul.f32 %v506, %v531
  %v770 = vmul.f32 %v507, %v531
  %v771 = vmul.f32 %v508, %v531
  %v772 = vmul.f32 %v509, %v531
  %v773 = vmul.f32 %v510, %v531
  %v774 = vmul.f32 %v511, %v531
  %v775 = vmul.f32 %v512, %v531
  %v776 = vmul.f32 %v513, %v531
  %v777 = vmul.f32 %v514, %v531
  %v778 = vmul.f32 %v515, %v531
  %v779 = vmul.f32 %v516, %v531
  %v780 = vmul.f32 %v517, %v531
  %v781 = vmul.f32 %v518, %v531
  %v782 = vmul.f32 %v519, %v531
  %v783 = vmul.f32 %v520, %v531
  %v784 = vmul.f32 %v521, %v531
  %v785 = vmul.f32 %v522, %v531
  %v786 = vmul.f32 %v523, %v531
  %v787 = vmul.f32 %v524, %v531
  %v788 = vmul.f32 %v525, %v531
  %v789 = vld [vmem:[%s2] sm:$0x1]
  %v791 = vlaneseq
  %v792 = vshrl.u32 %v791, 7
  %v793 = vsub.s32 0, %v792
  %v794 = vrot.slane %v789, %v793
  %v796 = vadd.f32 %v533, %v794
  %v797 = vadd.f32 %v534, %v794
  %v798 = vadd.f32 %v535, %v794
  %v799 = vadd.f32 %v536, %v794
  %v800 = vadd.f32 %v537, %v794
  %v801 = vadd.f32 %v538, %v794
  %v802 = vadd.f32 %v539, %v794
  %v803 = vadd.f32 %v540, %v794
  %v804 = vadd.f32 %v541, %v794
  %v805 = vadd.f32 %v542, %v794
  %v806 = vadd.f32 %v543, %v794
  %v807 = vadd.f32 %v544, %v794
  %v808 = vadd.f32 %v545, %v794
  %v809 = vadd.f32 %v546, %v794
  %v810 = vadd.f32 %v547, %v794
  %v811 = vadd.f32 %v548, %v794
  %v812 = vadd.f32 %v549, %v794
  %v813 = vadd.f32 %v550, %v794
  %v814 = vadd.f32 %v551, %v794
  %v815 = vadd.f32 %v552, %v794
  %v816 = vadd.f32 %v553, %v794
  %v817 = vadd.f32 %v554, %v794
  %v818 = vadd.f32 %v555, %v794
  %v819 = vadd.f32 %v556, %v794
  %v820 = vadd.f32 %v557, %v794
  %v821 = vadd.f32 %v558, %v794
  %v822 = vadd.f32 %v559, %v794
  %v823 = vadd.f32 %v560, %v794
  %v824 = vadd.f32 %v561, %v794
  %v825 = vadd.f32 %v562, %v794
  %v826 = vadd.f32 %v563, %v794
  %v827 = vadd.f32 %v564, %v794
  %v828 = vadd.f32 %v565, %v794
  %v829 = vadd.f32 %v566, %v794
  %v830 = vadd.f32 %v567, %v794
  %v831 = vadd.f32 %v568, %v794
  %v832 = vadd.f32 %v569, %v794
  %v833 = vadd.f32 %v570, %v794
  %v834 = vadd.f32 %v571, %v794
  %v835 = vadd.f32 %v572, %v794
  %v836 = vadd.f32 %v573, %v794
  %v837 = vadd.f32 %v574, %v794
  %v838 = vadd.f32 %v575, %v794
  %v839 = vadd.f32 %v576, %v794
  %v840 = vadd.f32 %v577, %v794
  %v841 = vadd.f32 %v578, %v794
  %v842 = vadd.f32 %v579, %v794
  %v843 = vadd.f32 %v580, %v794
  %v844 = vadd.f32 %v581, %v794
  %v845 = vadd.f32 %v582, %v794
  %v846 = vadd.f32 %v583, %v794
  %v847 = vadd.f32 %v584, %v794
  %v848 = vadd.f32 %v585, %v794
  %v849 = vadd.f32 %v586, %v794
  %v850 = vadd.f32 %v587, %v794
  %v851 = vadd.f32 %v588, %v794
  %v852 = vadd.f32 %v589, %v794
  %v853 = vadd.f32 %v590, %v794
  %v854 = vadd.f32 %v591, %v794
  %v855 = vadd.f32 %v592, %v794
  %v856 = vadd.f32 %v593, %v794
  %v857 = vadd.f32 %v594, %v794
  %v858 = vadd.f32 %v595, %v794
  %v859 = vadd.f32 %v596, %v794
  %v860 = vadd.f32 %v597, %v794
  %v861 = vadd.f32 %v598, %v794
  %v862 = vadd.f32 %v599, %v794
  %v863 = vadd.f32 %v600, %v794
  %v864 = vadd.f32 %v601, %v794
  %v865 = vadd.f32 %v602, %v794
  %v866 = vadd.f32 %v603, %v794
  %v867 = vadd.f32 %v604, %v794
  %v868 = vadd.f32 %v605, %v794
  %v869 = vadd.f32 %v606, %v794
  %v870 = vadd.f32 %v607, %v794
  %v871 = vadd.f32 %v608, %v794
  %v872 = vadd.f32 %v609, %v794
  %v873 = vadd.f32 %v610, %v794
  %v874 = vadd.f32 %v611, %v794
  %v875 = vadd.f32 %v612, %v794
  %v876 = vadd.f32 %v613, %v794
  %v877 = vadd.f32 %v614, %v794
  %v878 = vadd.f32 %v615, %v794
  %v879 = vadd.f32 %v616, %v794
  %v880 = vadd.f32 %v617, %v794
  %v881 = vadd.f32 %v618, %v794
  %v882 = vadd.f32 %v619, %v794
  %v883 = vadd.f32 %v620, %v794
  %v884 = vadd.f32 %v621, %v794
  %v885 = vadd.f32 %v622, %v794
  %v886 = vadd.f32 %v623, %v794
  %v887 = vadd.f32 %v624, %v794
  %v888 = vadd.f32 %v625, %v794
  %v889 = vadd.f32 %v626, %v794
  %v890 = vadd.f32 %v627, %v794
  %v891 = vadd.f32 %v628, %v794
  %v892 = vadd.f32 %v629, %v794
  %v893 = vadd.f32 %v630, %v794
  %v894 = vadd.f32 %v631, %v794
  %v895 = vadd.f32 %v632, %v794
  %v896 = vadd.f32 %v633, %v794
  %v897 = vadd.f32 %v634, %v794
  %v898 = vadd.f32 %v635, %v794
  %v899 = vadd.f32 %v636, %v794
  %v900 = vadd.f32 %v637, %v794
  %v901 = vadd.f32 %v638, %v794
  %v902 = vadd.f32 %v639, %v794
  %v903 = vadd.f32 %v640, %v794
  %v904 = vadd.f32 %v641, %v794
  %v905 = vadd.f32 %v642, %v794
  %v906 = vadd.f32 %v643, %v794
  %v907 = vadd.f32 %v644, %v794
  %v908 = vadd.f32 %v645, %v794
  %v909 = vadd.f32 %v646, %v794
  %v910 = vadd.f32 %v647, %v794
  %v911 = vadd.f32 %v648, %v794
  %v912 = vadd.f32 %v649, %v794
  %v913 = vadd.f32 %v650, %v794
  %v914 = vadd.f32 %v651, %v794
  %v915 = vadd.f32 %v652, %v794
  %v916 = vadd.f32 %v653, %v794
  %v917 = vadd.f32 %v654, %v794
  %v918 = vadd.f32 %v655, %v794
  %v919 = vadd.f32 %v656, %v794
  %v920 = vadd.f32 %v657, %v794
  %v921 = vadd.f32 %v658, %v794
  %v922 = vadd.f32 %v659, %v794
  %v923 = vadd.f32 %v660, %v794
  %v924 = vadd.f32 %v661, %v794
  %v925 = vadd.f32 %v662, %v794
  %v926 = vadd.f32 %v663, %v794
  %v927 = vadd.f32 %v664, %v794
  %v928 = vadd.f32 %v665, %v794
  %v929 = vadd.f32 %v666, %v794
  %v930 = vadd.f32 %v667, %v794
  %v931 = vadd.f32 %v668, %v794
  %v932 = vadd.f32 %v669, %v794
  %v933 = vadd.f32 %v670, %v794
  %v934 = vadd.f32 %v671, %v794
  %v935 = vadd.f32 %v672, %v794
  %v936 = vadd.f32 %v673, %v794
  %v937 = vadd.f32 %v674, %v794
  %v938 = vadd.f32 %v675, %v794
  %v939 = vadd.f32 %v676, %v794
  %v940 = vadd.f32 %v677, %v794
  %v941 = vadd.f32 %v678, %v794
  %v942 = vadd.f32 %v679, %v794
  %v943 = vadd.f32 %v680, %v794
  %v944 = vadd.f32 %v681, %v794
  %v945 = vadd.f32 %v682, %v794
  %v946 = vadd.f32 %v683, %v794
  %v947 = vadd.f32 %v684, %v794
  %v948 = vadd.f32 %v685, %v794
  %v949 = vadd.f32 %v686, %v794
  %v950 = vadd.f32 %v687, %v794
  %v951 = vadd.f32 %v688, %v794
  %v952 = vadd.f32 %v689, %v794
  %v953 = vadd.f32 %v690, %v794
  %v954 = vadd.f32 %v691, %v794
  %v955 = vadd.f32 %v692, %v794
  %v956 = vadd.f32 %v693, %v794
  %v957 = vadd.f32 %v694, %v794
  %v958 = vadd.f32 %v695, %v794
  %v959 = vadd.f32 %v696, %v794
  %v960 = vadd.f32 %v697, %v794
  %v961 = vadd.f32 %v698, %v794
  %v962 = vadd.f32 %v699, %v794
  %v963 = vadd.f32 %v700, %v794
  %v964 = vadd.f32 %v701, %v794
  %v965 = vadd.f32 %v702, %v794
  %v966 = vadd.f32 %v703, %v794
  %v967 = vadd.f32 %v704, %v794
  %v968 = vadd.f32 %v705, %v794
  %v969 = vadd.f32 %v706, %v794
  %v970 = vadd.f32 %v707, %v794
  %v971 = vadd.f32 %v708, %v794
  %v972 = vadd.f32 %v709, %v794
  %v973 = vadd.f32 %v710, %v794
  %v974 = vadd.f32 %v711, %v794
  %v975 = vadd.f32 %v712, %v794
  %v976 = vadd.f32 %v713, %v794
  %v977 = vadd.f32 %v714, %v794
  %v978 = vadd.f32 %v715, %v794
  %v979 = vadd.f32 %v716, %v794
  %v980 = vadd.f32 %v717, %v794
  %v981 = vadd.f32 %v718, %v794
  %v982 = vadd.f32 %v719, %v794
  %v983 = vadd.f32 %v720, %v794
  %v984 = vadd.f32 %v721, %v794
  %v985 = vadd.f32 %v722, %v794
  %v986 = vadd.f32 %v723, %v794
  %v987 = vadd.f32 %v724, %v794
  %v988 = vadd.f32 %v725, %v794
  %v989 = vadd.f32 %v726, %v794
  %v990 = vadd.f32 %v727, %v794
  %v991 = vadd.f32 %v728, %v794
  %v992 = vadd.f32 %v729, %v794
  %v993 = vadd.f32 %v730, %v794
  %v994 = vadd.f32 %v731, %v794
  %v995 = vadd.f32 %v732, %v794
  %v996 = vadd.f32 %v733, %v794
  %v997 = vadd.f32 %v734, %v794
  %v998 = vadd.f32 %v735, %v794
  %v999 = vadd.f32 %v736, %v794
  %v1000 = vadd.f32 %v737, %v794
  %v1001 = vadd.f32 %v738, %v794
  %v1002 = vadd.f32 %v739, %v794
  %v1003 = vadd.f32 %v740, %v794
  %v1004 = vadd.f32 %v741, %v794
  %v1005 = vadd.f32 %v742, %v794
  %v1006 = vadd.f32 %v743, %v794
  %v1007 = vadd.f32 %v744, %v794
  %v1008 = vadd.f32 %v745, %v794
  %v1009 = vadd.f32 %v746, %v794
  %v1010 = vadd.f32 %v747, %v794
  %v1011 = vadd.f32 %v748, %v794
  %v1012 = vadd.f32 %v749, %v794
  %v1013 = vadd.f32 %v750, %v794
  %v1014 = vadd.f32 %v751, %v794
  %v1015 = vadd.f32 %v752, %v794
  %v1016 = vadd.f32 %v753, %v794
  %v1017 = vadd.f32 %v754, %v794
  %v1018 = vadd.f32 %v755, %v794
  %v1019 = vadd.f32 %v756, %v794
  %v1020 = vadd.f32 %v757, %v794
  %v1021 = vadd.f32 %v758, %v794
  %v1022 = vadd.f32 %v759, %v794
  %v1023 = vadd.f32 %v760, %v794
  %v1024 = vadd.f32 %v761, %v794
  %v1025 = vadd.f32 %v762, %v794
  %v1026 = vadd.f32 %v763, %v794
  %v1027 = vadd.f32 %v764, %v794
  %v1028 = vadd.f32 %v765, %v794
  %v1029 = vadd.f32 %v766, %v794
  %v1030 = vadd.f32 %v767, %v794
  %v1031 = vadd.f32 %v768, %v794
  %v1032 = vadd.f32 %v769, %v794
  %v1033 = vadd.f32 %v770, %v794
  %v1034 = vadd.f32 %v771, %v794
  %v1035 = vadd.f32 %v772, %v794
  %v1036 = vadd.f32 %v773, %v794
  %v1037 = vadd.f32 %v774, %v794
  %v1038 = vadd.f32 %v775, %v794
  %v1039 = vadd.f32 %v776, %v794
  %v1040 = vadd.f32 %v777, %v794
  %v1041 = vadd.f32 %v778, %v794
  %v1042 = vadd.f32 %v779, %v794
  %v1043 = vadd.f32 %v780, %v794
  %v1044 = vadd.f32 %v781, %v794
  %v1045 = vadd.f32 %v782, %v794
  %v1046 = vadd.f32 %v783, %v794
  %v1047 = vadd.f32 %v784, %v794
  %v1048 = vadd.f32 %v785, %v794
  %v1049 = vadd.f32 %v786, %v794
  %v1050 = vadd.f32 %v787, %v794
  %v1051 = vadd.f32 %v788, %v794
  %v1052 = vmax.f32 %v796, 0.0
  %v1053 = vmax.f32 %v797, 0.0
  %v1054 = vmax.f32 %v798, 0.0
  %v1055 = vmax.f32 %v799, 0.0
  %v1056 = vmax.f32 %v800, 0.0
  %v1057 = vmax.f32 %v801, 0.0
  %v1058 = vmax.f32 %v802, 0.0
  %v1059 = vmax.f32 %v803, 0.0
  %v1060 = vmax.f32 %v804, 0.0
  %v1061 = vmax.f32 %v805, 0.0
  %v1062 = vmax.f32 %v806, 0.0
  %v1063 = vmax.f32 %v807, 0.0
  %v1064 = vmax.f32 %v808, 0.0
  %v1065 = vmax.f32 %v809, 0.0
  %v1066 = vmax.f32 %v810, 0.0
  %v1067 = vmax.f32 %v811, 0.0
  %v1068 = vmax.f32 %v812, 0.0
  %v1069 = vmax.f32 %v813, 0.0
  %v1070 = vmax.f32 %v814, 0.0
  %v1071 = vmax.f32 %v815, 0.0
  %v1072 = vmax.f32 %v816, 0.0
  %v1073 = vmax.f32 %v817, 0.0
  %v1074 = vmax.f32 %v818, 0.0
  %v1075 = vmax.f32 %v819, 0.0
  %v1076 = vmax.f32 %v820, 0.0
  %v1077 = vmax.f32 %v821, 0.0
  %v1078 = vmax.f32 %v822, 0.0
  %v1079 = vmax.f32 %v823, 0.0
  %v1080 = vmax.f32 %v824, 0.0
  %v1081 = vmax.f32 %v825, 0.0
  %v1082 = vmax.f32 %v826, 0.0
  %v1083 = vmax.f32 %v827, 0.0
  %v1084 = vmax.f32 %v828, 0.0
  %v1085 = vmax.f32 %v829, 0.0
  %v1086 = vmax.f32 %v830, 0.0
  %v1087 = vmax.f32 %v831, 0.0
  %v1088 = vmax.f32 %v832, 0.0
  %v1089 = vmax.f32 %v833, 0.0
  %v1090 = vmax.f32 %v834, 0.0
  %v1091 = vmax.f32 %v835, 0.0
  %v1092 = vmax.f32 %v836, 0.0
  %v1093 = vmax.f32 %v837, 0.0
  %v1094 = vmax.f32 %v838, 0.0
  %v1095 = vmax.f32 %v839, 0.0
  %v1096 = vmax.f32 %v840, 0.0
  %v1097 = vmax.f32 %v841, 0.0
  %v1098 = vmax.f32 %v842, 0.0
  %v1099 = vmax.f32 %v843, 0.0
  %v1100 = vmax.f32 %v844, 0.0
  %v1101 = vmax.f32 %v845, 0.0
  %v1102 = vmax.f32 %v846, 0.0
  %v1103 = vmax.f32 %v847, 0.0
  %v1104 = vmax.f32 %v848, 0.0
  %v1105 = vmax.f32 %v849, 0.0
  %v1106 = vmax.f32 %v850, 0.0
  %v1107 = vmax.f32 %v851, 0.0
  %v1108 = vmax.f32 %v852, 0.0
  %v1109 = vmax.f32 %v853, 0.0
  %v1110 = vmax.f32 %v854, 0.0
  %v1111 = vmax.f32 %v855, 0.0
  %v1112 = vmax.f32 %v856, 0.0
  %v1113 = vmax.f32 %v857, 0.0
  %v1114 = vmax.f32 %v858, 0.0
  %v1115 = vmax.f32 %v859, 0.0
  %v1116 = vmax.f32 %v860, 0.0
  %v1117 = vmax.f32 %v861, 0.0
  %v1118 = vmax.f32 %v862, 0.0
  %v1119 = vmax.f32 %v863, 0.0
  %v1120 = vmax.f32 %v864, 0.0
  %v1121 = vmax.f32 %v865, 0.0
  %v1122 = vmax.f32 %v866, 0.0
  %v1123 = vmax.f32 %v867, 0.0
  %v1124 = vmax.f32 %v868, 0.0
  %v1125 = vmax.f32 %v869, 0.0
  %v1126 = vmax.f32 %v870, 0.0
  %v1127 = vmax.f32 %v871, 0.0
  %v1128 = vmax.f32 %v872, 0.0
  %v1129 = vmax.f32 %v873, 0.0
  %v1130 = vmax.f32 %v874, 0.0
  %v1131 = vmax.f32 %v875, 0.0
  %v1132 = vmax.f32 %v876, 0.0
  %v1133 = vmax.f32 %v877, 0.0
  %v1134 = vmax.f32 %v878, 0.0
  %v1135 = vmax.f32 %v879, 0.0
  %v1136 = vmax.f32 %v880, 0.0
  %v1137 = vmax.f32 %v881, 0.0
  %v1138 = vmax.f32 %v882, 0.0
  %v1139 = vmax.f32 %v883, 0.0
  %v1140 = vmax.f32 %v884, 0.0
  %v1141 = vmax.f32 %v885, 0.0
  %v1142 = vmax.f32 %v886, 0.0
  %v1143 = vmax.f32 %v887, 0.0
  %v1144 = vmax.f32 %v888, 0.0
  %v1145 = vmax.f32 %v889, 0.0
  %v1146 = vmax.f32 %v890, 0.0
  %v1147 = vmax.f32 %v891, 0.0
  %v1148 = vmax.f32 %v892, 0.0
  %v1149 = vmax.f32 %v893, 0.0
  %v1150 = vmax.f32 %v894, 0.0
  %v1151 = vmax.f32 %v895, 0.0
  %v1152 = vmax.f32 %v896, 0.0
  %v1153 = vmax.f32 %v897, 0.0
  %v1154 = vmax.f32 %v898, 0.0
  %v1155 = vmax.f32 %v899, 0.0
  %v1156 = vmax.f32 %v900, 0.0
  %v1157 = vmax.f32 %v901, 0.0
  %v1158 = vmax.f32 %v902, 0.0
  %v1159 = vmax.f32 %v903, 0.0
  %v1160 = vmax.f32 %v904, 0.0
  %v1161 = vmax.f32 %v905, 0.0
  %v1162 = vmax.f32 %v906, 0.0
  %v1163 = vmax.f32 %v907, 0.0
  %v1164 = vmax.f32 %v908, 0.0
  %v1165 = vmax.f32 %v909, 0.0
  %v1166 = vmax.f32 %v910, 0.0
  %v1167 = vmax.f32 %v911, 0.0
  %v1168 = vmax.f32 %v912, 0.0
  %v1169 = vmax.f32 %v913, 0.0
  %v1170 = vmax.f32 %v914, 0.0
  %v1171 = vmax.f32 %v915, 0.0
  %v1172 = vmax.f32 %v916, 0.0
  %v1173 = vmax.f32 %v917, 0.0
  %v1174 = vmax.f32 %v918, 0.0
  %v1175 = vmax.f32 %v919, 0.0
  %v1176 = vmax.f32 %v920, 0.0
  %v1177 = vmax.f32 %v921, 0.0
  %v1178 = vmax.f32 %v922, 0.0
  %v1179 = vmax.f32 %v923, 0.0
  %v1180 = vmax.f32 %v924, 0.0
  %v1181 = vmax.f32 %v925, 0.0
  %v1182 = vmax.f32 %v926, 0.0
  %v1183 = vmax.f32 %v927, 0.0
  %v1184 = vmax.f32 %v928, 0.0
  %v1185 = vmax.f32 %v929, 0.0
  %v1186 = vmax.f32 %v930, 0.0
  %v1187 = vmax.f32 %v931, 0.0
  %v1188 = vmax.f32 %v932, 0.0
  %v1189 = vmax.f32 %v933, 0.0
  %v1190 = vmax.f32 %v934, 0.0
  %v1191 = vmax.f32 %v935, 0.0
  %v1192 = vmax.f32 %v936, 0.0
  %v1193 = vmax.f32 %v937, 0.0
  %v1194 = vmax.f32 %v938, 0.0
  %v1195 = vmax.f32 %v939, 0.0
  %v1196 = vmax.f32 %v940, 0.0
  %v1197 = vmax.f32 %v941, 0.0
  %v1198 = vmax.f32 %v942, 0.0
  %v1199 = vmax.f32 %v943, 0.0
  %v1200 = vmax.f32 %v944, 0.0
  %v1201 = vmax.f32 %v945, 0.0
  %v1202 = vmax.f32 %v946, 0.0
  %v1203 = vmax.f32 %v947, 0.0
  %v1204 = vmax.f32 %v948, 0.0
  %v1205 = vmax.f32 %v949, 0.0
  %v1206 = vmax.f32 %v950, 0.0
  %v1207 = vmax.f32 %v951, 0.0
  %v1208 = vmax.f32 %v952, 0.0
  %v1209 = vmax.f32 %v953, 0.0
  %v1210 = vmax.f32 %v954, 0.0
  %v1211 = vmax.f32 %v955, 0.0
  %v1212 = vmax.f32 %v956, 0.0
  %v1213 = vmax.f32 %v957, 0.0
  %v1214 = vmax.f32 %v958, 0.0
  %v1215 = vmax.f32 %v959, 0.0
  %v1216 = vmax.f32 %v960, 0.0
  %v1217 = vmax.f32 %v961, 0.0
  %v1218 = vmax.f32 %v962, 0.0
  %v1219 = vmax.f32 %v963, 0.0
  %v1220 = vmax.f32 %v964, 0.0
  %v1221 = vmax.f32 %v965, 0.0
  %v1222 = vmax.f32 %v966, 0.0
  %v1223 = vmax.f32 %v967, 0.0
  %v1224 = vmax.f32 %v968, 0.0
  %v1225 = vmax.f32 %v969, 0.0
  %v1226 = vmax.f32 %v970, 0.0
  %v1227 = vmax.f32 %v971, 0.0
  %v1228 = vmax.f32 %v972, 0.0
  %v1229 = vmax.f32 %v973, 0.0
  %v1230 = vmax.f32 %v974, 0.0
  %v1231 = vmax.f32 %v975, 0.0
  %v1232 = vmax.f32 %v976, 0.0
  %v1233 = vmax.f32 %v977, 0.0
  %v1234 = vmax.f32 %v978, 0.0
  %v1235 = vmax.f32 %v979, 0.0
  %v1236 = vmax.f32 %v980, 0.0
  %v1237 = vmax.f32 %v981, 0.0
  %v1238 = vmax.f32 %v982, 0.0
  %v1239 = vmax.f32 %v983, 0.0
  %v1240 = vmax.f32 %v984, 0.0
  %v1241 = vmax.f32 %v985, 0.0
  %v1242 = vmax.f32 %v986, 0.0
  %v1243 = vmax.f32 %v987, 0.0
  %v1244 = vmax.f32 %v988, 0.0
  %v1245 = vmax.f32 %v989, 0.0
  %v1246 = vmax.f32 %v990, 0.0
  %v1247 = vmax.f32 %v991, 0.0
  %v1248 = vmax.f32 %v992, 0.0
  %v1249 = vmax.f32 %v993, 0.0
  %v1250 = vmax.f32 %v994, 0.0
  %v1251 = vmax.f32 %v995, 0.0
  %v1252 = vmax.f32 %v996, 0.0
  %v1253 = vmax.f32 %v997, 0.0
  %v1254 = vmax.f32 %v998, 0.0
  %v1255 = vmax.f32 %v999, 0.0
  %v1256 = vmax.f32 %v1000, 0.0
  %v1257 = vmax.f32 %v1001, 0.0
  %v1258 = vmax.f32 %v1002, 0.0
  %v1259 = vmax.f32 %v1003, 0.0
  %v1260 = vmax.f32 %v1004, 0.0
  %v1261 = vmax.f32 %v1005, 0.0
  %v1262 = vmax.f32 %v1006, 0.0
  %v1263 = vmax.f32 %v1007, 0.0
  %v1264 = vmax.f32 %v1008, 0.0
  %v1265 = vmax.f32 %v1009, 0.0
  %v1266 = vmax.f32 %v1010, 0.0
  %v1267 = vmax.f32 %v1011, 0.0
  %v1268 = vmax.f32 %v1012, 0.0
  %v1269 = vmax.f32 %v1013, 0.0
  %v1270 = vmax.f32 %v1014, 0.0
  %v1271 = vmax.f32 %v1015, 0.0
  %v1272 = vmax.f32 %v1016, 0.0
  %v1273 = vmax.f32 %v1017, 0.0
  %v1274 = vmax.f32 %v1018, 0.0
  %v1275 = vmax.f32 %v1019, 0.0
  %v1276 = vmax.f32 %v1020, 0.0
  %v1277 = vmax.f32 %v1021, 0.0
  %v1278 = vmax.f32 %v1022, 0.0
  %v1279 = vmax.f32 %v1023, 0.0
  %v1280 = vmax.f32 %v1024, 0.0
  %v1281 = vmax.f32 %v1025, 0.0
  %v1282 = vmax.f32 %v1026, 0.0
  %v1283 = vmax.f32 %v1027, 0.0
  %v1284 = vmax.f32 %v1028, 0.0
  %v1285 = vmax.f32 %v1029, 0.0
  %v1286 = vmax.f32 %v1030, 0.0
  %v1287 = vmax.f32 %v1031, 0.0
  %v1288 = vmax.f32 %v1032, 0.0
  %v1289 = vmax.f32 %v1033, 0.0
  %v1290 = vmax.f32 %v1034, 0.0
  %v1291 = vmax.f32 %v1035, 0.0
  %v1292 = vmax.f32 %v1036, 0.0
  %v1293 = vmax.f32 %v1037, 0.0
  %v1294 = vmax.f32 %v1038, 0.0
  %v1295 = vmax.f32 %v1039, 0.0
  %v1296 = vmax.f32 %v1040, 0.0
  %v1297 = vmax.f32 %v1041, 0.0
  %v1298 = vmax.f32 %v1042, 0.0
  %v1299 = vmax.f32 %v1043, 0.0
  %v1300 = vmax.f32 %v1044, 0.0
  %v1301 = vmax.f32 %v1045, 0.0
  %v1302 = vmax.f32 %v1046, 0.0
  %v1303 = vmax.f32 %v1047, 0.0
  %v1304 = vmax.f32 %v1048, 0.0
  %v1305 = vmax.f32 %v1049, 0.0
  %v1306 = vmax.f32 %v1050, 0.0
  %v1307 = vmax.f32 %v1051, 0.0
  %v1308 = vpack.c.bf16 %v1053, %v1052
  %v1309 = vpack.c.bf16 %v1055, %v1054
  %v1310 = vpack.c.bf16 %v1057, %v1056
  %v1311 = vpack.c.bf16 %v1059, %v1058
  %v1312 = vpack.c.bf16 %v1061, %v1060
  %v1313 = vpack.c.bf16 %v1063, %v1062
  %v1314 = vpack.c.bf16 %v1065, %v1064
  %v1315 = vpack.c.bf16 %v1067, %v1066
  %v1316 = vpack.c.bf16 %v1069, %v1068
  %v1317 = vpack.c.bf16 %v1071, %v1070
  %v1318 = vpack.c.bf16 %v1073, %v1072
  %v1319 = vpack.c.bf16 %v1075, %v1074
  %v1320 = vpack.c.bf16 %v1077, %v1076
  %v1321 = vpack.c.bf16 %v1079, %v1078
  %v1322 = vpack.c.bf16 %v1081, %v1080
  %v1323 = vpack.c.bf16 %v1083, %v1082
  %v1324 = vpack.c.bf16 %v1085, %v1084
  %v1325 = vpack.c.bf16 %v1087, %v1086
  %v1326 = vpack.c.bf16 %v1089, %v1088
  %v1327 = vpack.c.bf16 %v1091, %v1090
  %v1328 = vpack.c.bf16 %v1093, %v1092
  %v1329 = vpack.c.bf16 %v1095, %v1094
  %v1330 = vpack.c.bf16 %v1097, %v1096
  %v1331 = vpack.c.bf16 %v1099, %v1098
  %v1332 = vpack.c.bf16 %v1101, %v1100
  %v1333 = vpack.c.bf16 %v1103, %v1102
  %v1334 = vpack.c.bf16 %v1105, %v1104
  %v1335 = vpack.c.bf16 %v1107, %v1106
  %v1336 = vpack.c.bf16 %v1109, %v1108
  %v1337 = vpack.c.bf16 %v1111, %v1110
  %v1338 = vpack.c.bf16 %v1113, %v1112
  %v1339 = vpack.c.bf16 %v1115, %v1114
  %v1340 = vpack.c.bf16 %v1117, %v1116
  %v1341 = vpack.c.bf16 %v1119, %v1118
  %v1342 = vpack.c.bf16 %v1121, %v1120
  %v1343 = vpack.c.bf16 %v1123, %v1122
  %v1344 = vpack.c.bf16 %v1125, %v1124
  %v1345 = vpack.c.bf16 %v1127, %v1126
  %v1346 = vpack.c.bf16 %v1129, %v1128
  %v1347 = vpack.c.bf16 %v1131, %v1130
  %v1348 = vpack.c.bf16 %v1133, %v1132
  %v1349 = vpack.c.bf16 %v1135, %v1134
  %v1350 = vpack.c.bf16 %v1137, %v1136
  %v1351 = vpack.c.bf16 %v1139, %v1138
  %v1352 = vpack.c.bf16 %v1141, %v1140
  %v1353 = vpack.c.bf16 %v1143, %v1142
  %v1354 = vpack.c.bf16 %v1145, %v1144
  %v1355 = vpack.c.bf16 %v1147, %v1146
  %v1356 = vpack.c.bf16 %v1149, %v1148
  %v1357 = vpack.c.bf16 %v1151, %v1150
  %v1358 = vpack.c.bf16 %v1153, %v1152
  %v1359 = vpack.c.bf16 %v1155, %v1154
  %v1360 = vpack.c.bf16 %v1157, %v1156
  %v1361 = vpack.c.bf16 %v1159, %v1158
  %v1362 = vpack.c.bf16 %v1161, %v1160
  %v1363 = vpack.c.bf16 %v1163, %v1162
  %v1364 = vpack.c.bf16 %v1165, %v1164
  %v1365 = vpack.c.bf16 %v1167, %v1166
  %v1366 = vpack.c.bf16 %v1169, %v1168
  %v1367 = vpack.c.bf16 %v1171, %v1170
  %v1368 = vpack.c.bf16 %v1173, %v1172
  %v1369 = vpack.c.bf16 %v1175, %v1174
  %v1370 = vpack.c.bf16 %v1177, %v1176
  %v1371 = vpack.c.bf16 %v1179, %v1178
  %v1372 = vpack.c.bf16 %v1181, %v1180
  %v1373 = vpack.c.bf16 %v1183, %v1182
  %v1374 = vpack.c.bf16 %v1185, %v1184
  %v1375 = vpack.c.bf16 %v1187, %v1186
  %v1376 = vpack.c.bf16 %v1189, %v1188
  %v1377 = vpack.c.bf16 %v1191, %v1190
  %v1378 = vpack.c.bf16 %v1193, %v1192
  %v1379 = vpack.c.bf16 %v1195, %v1194
  %v1380 = vpack.c.bf16 %v1197, %v1196
  %v1381 = vpack.c.bf16 %v1199, %v1198
  %v1382 = vpack.c.bf16 %v1201, %v1200
  %v1383 = vpack.c.bf16 %v1203, %v1202
  %v1384 = vpack.c.bf16 %v1205, %v1204
  %v1385 = vpack.c.bf16 %v1207, %v1206
  %v1386 = vpack.c.bf16 %v1209, %v1208
  %v1387 = vpack.c.bf16 %v1211, %v1210
  %v1388 = vpack.c.bf16 %v1213, %v1212
  %v1389 = vpack.c.bf16 %v1215, %v1214
  %v1390 = vpack.c.bf16 %v1217, %v1216
  %v1391 = vpack.c.bf16 %v1219, %v1218
  %v1392 = vpack.c.bf16 %v1221, %v1220
  %v1393 = vpack.c.bf16 %v1223, %v1222
  %v1394 = vpack.c.bf16 %v1225, %v1224
  %v1395 = vpack.c.bf16 %v1227, %v1226
  %v1396 = vpack.c.bf16 %v1229, %v1228
  %v1397 = vpack.c.bf16 %v1231, %v1230
  %v1398 = vpack.c.bf16 %v1233, %v1232
  %v1399 = vpack.c.bf16 %v1235, %v1234
  %v1400 = vpack.c.bf16 %v1237, %v1236
  %v1401 = vpack.c.bf16 %v1239, %v1238
  %v1402 = vpack.c.bf16 %v1241, %v1240
  %v1403 = vpack.c.bf16 %v1243, %v1242
  %v1404 = vpack.c.bf16 %v1245, %v1244
  %v1405 = vpack.c.bf16 %v1247, %v1246
  %v1406 = vpack.c.bf16 %v1249, %v1248
  %v1407 = vpack.c.bf16 %v1251, %v1250
  %v1408 = vpack.c.bf16 %v1253, %v1252
  %v1409 = vpack.c.bf16 %v1255, %v1254
  %v1410 = vpack.c.bf16 %v1257, %v1256
  %v1411 = vpack.c.bf16 %v1259, %v1258
  %v1412 = vpack.c.bf16 %v1261, %v1260
  %v1413 = vpack.c.bf16 %v1263, %v1262
  %v1414 = vpack.c.bf16 %v1265, %v1264
  %v1415 = vpack.c.bf16 %v1267, %v1266
  %v1416 = vpack.c.bf16 %v1269, %v1268
  %v1417 = vpack.c.bf16 %v1271, %v1270
  %v1418 = vpack.c.bf16 %v1273, %v1272
  %v1419 = vpack.c.bf16 %v1275, %v1274
  %v1420 = vpack.c.bf16 %v1277, %v1276
  %v1421 = vpack.c.bf16 %v1279, %v1278
  %v1422 = vpack.c.bf16 %v1281, %v1280
  %v1423 = vpack.c.bf16 %v1283, %v1282
  %v1424 = vpack.c.bf16 %v1285, %v1284
  %v1425 = vpack.c.bf16 %v1287, %v1286
  %v1426 = vpack.c.bf16 %v1289, %v1288
  %v1427 = vpack.c.bf16 %v1291, %v1290
  %v1428 = vpack.c.bf16 %v1293, %v1292
  %v1429 = vpack.c.bf16 %v1295, %v1294
  %v1430 = vpack.c.bf16 %v1297, %v1296
  %v1431 = vpack.c.bf16 %v1299, %v1298
  %v1432 = vpack.c.bf16 %v1301, %v1300
  %v1433 = vpack.c.bf16 %v1303, %v1302
  %v1434 = vpack.c.bf16 %v1305, %v1304
  %v1435 = vpack.c.bf16 %v1307, %v1306
  %v1564 = vunpack.c.l.b16 %v1308
  %v1565 = vunpack.c.h.b16 %v1308
  %v1566 = vunpack.c.l.b16 %v1309
  %v1567 = vunpack.c.h.b16 %v1309
  %v1568 = vunpack.c.l.b16 %v1310
  %v1569 = vunpack.c.h.b16 %v1310
  %v1570 = vunpack.c.l.b16 %v1311
  %v1571 = vunpack.c.h.b16 %v1311
  %v1572 = vunpack.c.l.b16 %v1312
  %v1573 = vunpack.c.h.b16 %v1312
  %v1574 = vunpack.c.l.b16 %v1313
  %v1575 = vunpack.c.h.b16 %v1313
  %v1576 = vunpack.c.l.b16 %v1314
  %v1577 = vunpack.c.h.b16 %v1314
  %v1578 = vunpack.c.l.b16 %v1315
  %v1579 = vunpack.c.h.b16 %v1315
  %v1580 = vunpack.c.l.b16 %v1316
  %v1581 = vunpack.c.h.b16 %v1316
  %v1582 = vunpack.c.l.b16 %v1317
  %v1583 = vunpack.c.h.b16 %v1317
  %v1584 = vunpack.c.l.b16 %v1318
  %v1585 = vunpack.c.h.b16 %v1318
  %v1586 = vunpack.c.l.b16 %v1319
  %v1587 = vunpack.c.h.b16 %v1319
  %v1588 = vunpack.c.l.b16 %v1320
  %v1589 = vunpack.c.h.b16 %v1320
  %v1590 = vunpack.c.l.b16 %v1321
  %v1591 = vunpack.c.h.b16 %v1321
  %v1592 = vunpack.c.l.b16 %v1322
  %v1593 = vunpack.c.h.b16 %v1322
  %v1594 = vunpack.c.l.b16 %v1323
  %v1595 = vunpack.c.h.b16 %v1323
  %v1596 = vunpack.c.l.b16 %v1324
  %v1597 = vunpack.c.h.b16 %v1324
  %v1598 = vunpack.c.l.b16 %v1325
  %v1599 = vunpack.c.h.b16 %v1325
  %v1600 = vunpack.c.l.b16 %v1326
  %v1601 = vunpack.c.h.b16 %v1326
  %v1602 = vunpack.c.l.b16 %v1327
  %v1603 = vunpack.c.h.b16 %v1327
  %v1604 = vunpack.c.l.b16 %v1328
  %v1605 = vunpack.c.h.b16 %v1328
  %v1606 = vunpack.c.l.b16 %v1329
  %v1607 = vunpack.c.h.b16 %v1329
  %v1608 = vunpack.c.l.b16 %v1330
  %v1609 = vunpack.c.h.b16 %v1330
  %v1610 = vunpack.c.l.b16 %v1331
  %v1611 = vunpack.c.h.b16 %v1331
  %v1612 = vunpack.c.l.b16 %v1332
  %v1613 = vunpack.c.h.b16 %v1332
  %v1614 = vunpack.c.l.b16 %v1333
  %v1615 = vunpack.c.h.b16 %v1333
  %v1616 = vunpack.c.l.b16 %v1334
  %v1617 = vunpack.c.h.b16 %v1334
  %v1618 = vunpack.c.l.b16 %v1335
  %v1619 = vunpack.c.h.b16 %v1335
  %v1620 = vunpack.c.l.b16 %v1336
  %v1621 = vunpack.c.h.b16 %v1336
  %v1622 = vunpack.c.l.b16 %v1337
  %v1623 = vunpack.c.h.b16 %v1337
  %v1624 = vunpack.c.l.b16 %v1338
  %v1625 = vunpack.c.h.b16 %v1338
  %v1626 = vunpack.c.l.b16 %v1339
  %v1627 = vunpack.c.h.b16 %v1339
  %v1628 = vunpack.c.l.b16 %v1340
  %v1629 = vunpack.c.h.b16 %v1340
  %v1630 = vunpack.c.l.b16 %v1341
  %v1631 = vunpack.c.h.b16 %v1341
  %v1632 = vunpack.c.l.b16 %v1342
  %v1633 = vunpack.c.h.b16 %v1342
  %v1634 = vunpack.c.l.b16 %v1343
  %v1635 = vunpack.c.h.b16 %v1343
  %v1636 = vunpack.c.l.b16 %v1344
  %v1637 = vunpack.c.h.b16 %v1344
  %v1638 = vunpack.c.l.b16 %v1345
  %v1639 = vunpack.c.h.b16 %v1345
  %v1640 = vunpack.c.l.b16 %v1346
  %v1641 = vunpack.c.h.b16 %v1346
  %v1642 = vunpack.c.l.b16 %v1347
  %v1643 = vunpack.c.h.b16 %v1347
  %v1644 = vunpack.c.l.b16 %v1348
  %v1645 = vunpack.c.h.b16 %v1348
  %v1646 = vunpack.c.l.b16 %v1349
  %v1647 = vunpack.c.h.b16 %v1349
  %v1648 = vunpack.c.l.b16 %v1350
  %v1649 = vunpack.c.h.b16 %v1350
  %v1650 = vunpack.c.l.b16 %v1351
  %v1651 = vunpack.c.h.b16 %v1351
  %v1652 = vunpack.c.l.b16 %v1352
  %v1653 = vunpack.c.h.b16 %v1352
  %v1654 = vunpack.c.l.b16 %v1353
  %v1655 = vunpack.c.h.b16 %v1353
  %v1656 = vunpack.c.l.b16 %v1354
  %v1657 = vunpack.c.h.b16 %v1354
  %v1658 = vunpack.c.l.b16 %v1355
  %v1659 = vunpack.c.h.b16 %v1355
  %v1660 = vunpack.c.l.b16 %v1356
  %v1661 = vunpack.c.h.b16 %v1356
  %v1662 = vunpack.c.l.b16 %v1357
  %v1663 = vunpack.c.h.b16 %v1357
  %v1664 = vunpack.c.l.b16 %v1358
  %v1665 = vunpack.c.h.b16 %v1358
  %v1666 = vunpack.c.l.b16 %v1359
  %v1667 = vunpack.c.h.b16 %v1359
  %v1668 = vunpack.c.l.b16 %v1360
  %v1669 = vunpack.c.h.b16 %v1360
  %v1670 = vunpack.c.l.b16 %v1361
  %v1671 = vunpack.c.h.b16 %v1361
  %v1672 = vunpack.c.l.b16 %v1362
  %v1673 = vunpack.c.h.b16 %v1362
  %v1674 = vunpack.c.l.b16 %v1363
  %v1675 = vunpack.c.h.b16 %v1363
  %v1676 = vunpack.c.l.b16 %v1364
  %v1677 = vunpack.c.h.b16 %v1364
  %v1678 = vunpack.c.l.b16 %v1365
  %v1679 = vunpack.c.h.b16 %v1365
  %v1680 = vunpack.c.l.b16 %v1366
  %v1681 = vunpack.c.h.b16 %v1366
  %v1682 = vunpack.c.l.b16 %v1367
  %v1683 = vunpack.c.h.b16 %v1367
  %v1684 = vunpack.c.l.b16 %v1368
  %v1685 = vunpack.c.h.b16 %v1368
  %v1686 = vunpack.c.l.b16 %v1369
  %v1687 = vunpack.c.h.b16 %v1369
  %v1688 = vunpack.c.l.b16 %v1370
  %v1689 = vunpack.c.h.b16 %v1370
  %v1690 = vunpack.c.l.b16 %v1371
  %v1691 = vunpack.c.h.b16 %v1371
  %v1692 = vunpack.c.l.b16 %v1372
  %v1693 = vunpack.c.h.b16 %v1372
  %v1694 = vunpack.c.l.b16 %v1373
  %v1695 = vunpack.c.h.b16 %v1373
  %v1696 = vunpack.c.l.b16 %v1374
  %v1697 = vunpack.c.h.b16 %v1374
  %v1698 = vunpack.c.l.b16 %v1375
  %v1699 = vunpack.c.h.b16 %v1375
  %v1700 = vunpack.c.l.b16 %v1376
  %v1701 = vunpack.c.h.b16 %v1376
  %v1702 = vunpack.c.l.b16 %v1377
  %v1703 = vunpack.c.h.b16 %v1377
  %v1704 = vunpack.c.l.b16 %v1378
  %v1705 = vunpack.c.h.b16 %v1378
  %v1706 = vunpack.c.l.b16 %v1379
  %v1707 = vunpack.c.h.b16 %v1379
  %v1708 = vunpack.c.l.b16 %v1380
  %v1709 = vunpack.c.h.b16 %v1380
  %v1710 = vunpack.c.l.b16 %v1381
  %v1711 = vunpack.c.h.b16 %v1381
  %v1712 = vunpack.c.l.b16 %v1382
  %v1713 = vunpack.c.h.b16 %v1382
  %v1714 = vunpack.c.l.b16 %v1383
  %v1715 = vunpack.c.h.b16 %v1383
  %v1716 = vunpack.c.l.b16 %v1384
  %v1717 = vunpack.c.h.b16 %v1384
  %v1718 = vunpack.c.l.b16 %v1385
  %v1719 = vunpack.c.h.b16 %v1385
  %v1720 = vunpack.c.l.b16 %v1386
  %v1721 = vunpack.c.h.b16 %v1386
  %v1722 = vunpack.c.l.b16 %v1387
  %v1723 = vunpack.c.h.b16 %v1387
  %v1724 = vunpack.c.l.b16 %v1388
  %v1725 = vunpack.c.h.b16 %v1388
  %v1726 = vunpack.c.l.b16 %v1389
  %v1727 = vunpack.c.h.b16 %v1389
  %v1728 = vunpack.c.l.b16 %v1390
  %v1729 = vunpack.c.h.b16 %v1390
  %v1730 = vunpack.c.l.b16 %v1391
  %v1731 = vunpack.c.h.b16 %v1391
  %v1732 = vunpack.c.l.b16 %v1392
  %v1733 = vunpack.c.h.b16 %v1392
  %v1734 = vunpack.c.l.b16 %v1393
  %v1735 = vunpack.c.h.b16 %v1393
  %v1736 = vunpack.c.l.b16 %v1394
  %v1737 = vunpack.c.h.b16 %v1394
  %v1738 = vunpack.c.l.b16 %v1395
  %v1739 = vunpack.c.h.b16 %v1395
  %v1740 = vunpack.c.l.b16 %v1396
  %v1741 = vunpack.c.h.b16 %v1396
  %v1742 = vunpack.c.l.b16 %v1397
  %v1743 = vunpack.c.h.b16 %v1397
  %v1744 = vunpack.c.l.b16 %v1398
  %v1745 = vunpack.c.h.b16 %v1398
  %v1746 = vunpack.c.l.b16 %v1399
  %v1747 = vunpack.c.h.b16 %v1399
  %v1748 = vunpack.c.l.b16 %v1400
  %v1749 = vunpack.c.h.b16 %v1400
  %v1750 = vunpack.c.l.b16 %v1401
  %v1751 = vunpack.c.h.b16 %v1401
  %v1752 = vunpack.c.l.b16 %v1402
  %v1753 = vunpack.c.h.b16 %v1402
  %v1754 = vunpack.c.l.b16 %v1403
  %v1755 = vunpack.c.h.b16 %v1403
  %v1756 = vunpack.c.l.b16 %v1404
  %v1757 = vunpack.c.h.b16 %v1404
  %v1758 = vunpack.c.l.b16 %v1405
  %v1759 = vunpack.c.h.b16 %v1405
  %v1760 = vunpack.c.l.b16 %v1406
  %v1761 = vunpack.c.h.b16 %v1406
  %v1762 = vunpack.c.l.b16 %v1407
  %v1763 = vunpack.c.h.b16 %v1407
  %v1764 = vunpack.c.l.b16 %v1408
  %v1765 = vunpack.c.h.b16 %v1408
  %v1766 = vunpack.c.l.b16 %v1409
  %v1767 = vunpack.c.h.b16 %v1409
  %v1768 = vunpack.c.l.b16 %v1410
  %v1769 = vunpack.c.h.b16 %v1410
  %v1770 = vunpack.c.l.b16 %v1411
  %v1771 = vunpack.c.h.b16 %v1411
  %v1772 = vunpack.c.l.b16 %v1412
  %v1773 = vunpack.c.h.b16 %v1412
  %v1774 = vunpack.c.l.b16 %v1413
  %v1775 = vunpack.c.h.b16 %v1413
  %v1776 = vunpack.c.l.b16 %v1414
  %v1777 = vunpack.c.h.b16 %v1414
  %v1778 = vunpack.c.l.b16 %v1415
  %v1779 = vunpack.c.h.b16 %v1415
  %v1780 = vunpack.c.l.b16 %v1416
  %v1781 = vunpack.c.h.b16 %v1416
  %v1782 = vunpack.c.l.b16 %v1417
  %v1783 = vunpack.c.h.b16 %v1417
  %v1784 = vunpack.c.l.b16 %v1418
  %v1785 = vunpack.c.h.b16 %v1418
  %v1786 = vunpack.c.l.b16 %v1419
  %v1787 = vunpack.c.h.b16 %v1419
  %v1788 = vunpack.c.l.b16 %v1420
  %v1789 = vunpack.c.h.b16 %v1420
  %v1790 = vunpack.c.l.b16 %v1421
  %v1791 = vunpack.c.h.b16 %v1421
  %v1792 = vunpack.c.l.b16 %v1422
  %v1793 = vunpack.c.h.b16 %v1422
  %v1794 = vunpack.c.l.b16 %v1423
  %v1795 = vunpack.c.h.b16 %v1423
  %v1796 = vunpack.c.l.b16 %v1424
  %v1797 = vunpack.c.h.b16 %v1424
  %v1798 = vunpack.c.l.b16 %v1425
  %v1799 = vunpack.c.h.b16 %v1425
  %v1800 = vunpack.c.l.b16 %v1426
  %v1801 = vunpack.c.h.b16 %v1426
  %v1802 = vunpack.c.l.b16 %v1427
  %v1803 = vunpack.c.h.b16 %v1427
  %v1804 = vunpack.c.l.b16 %v1428
  %v1805 = vunpack.c.h.b16 %v1428
  %v1806 = vunpack.c.l.b16 %v1429
  %v1807 = vunpack.c.h.b16 %v1429
  %v1808 = vunpack.c.l.b16 %v1430
  %v1809 = vunpack.c.h.b16 %v1430
  %v1810 = vunpack.c.l.b16 %v1431
  %v1811 = vunpack.c.h.b16 %v1431
  %v1812 = vunpack.c.l.b16 %v1432
  %v1813 = vunpack.c.h.b16 %v1432
  %v1814 = vunpack.c.l.b16 %v1433
  %v1815 = vunpack.c.h.b16 %v1433
  %v1816 = vunpack.c.l.b16 %v1434
  %v1817 = vunpack.c.h.b16 %v1434
  %v1818 = vunpack.c.l.b16 %v1435
  %v1819 = vunpack.c.h.b16 %v1435
  %v1820 = vpack.c.b16 %v1564, %v1564
  %v1821 = vpack.c.b16 %v1565, %v1565
  %v1822 = vpack.c.b16 %v1566, %v1566
  %v1823 = vpack.c.b16 %v1567, %v1567
  %v1824 = vpack.c.b16 %v1568, %v1568
  %v1825 = vpack.c.b16 %v1569, %v1569
  %v1826 = vpack.c.b16 %v1570, %v1570
  %v1827 = vpack.c.b16 %v1571, %v1571
  %v1828 = vpack.c.b16 %v1572, %v1572
  %v1829 = vpack.c.b16 %v1573, %v1573
  %v1830 = vpack.c.b16 %v1574, %v1574
  %v1831 = vpack.c.b16 %v1575, %v1575
  %v1832 = vpack.c.b16 %v1576, %v1576
  %v1833 = vpack.c.b16 %v1577, %v1577
  %v1834 = vpack.c.b16 %v1578, %v1578
  %v1835 = vpack.c.b16 %v1579, %v1579
  %v1836 = vpack.c.b16 %v1580, %v1580
  %v1837 = vpack.c.b16 %v1581, %v1581
  %v1838 = vpack.c.b16 %v1582, %v1582
  %v1839 = vpack.c.b16 %v1583, %v1583
  %v1840 = vpack.c.b16 %v1584, %v1584
  %v1841 = vpack.c.b16 %v1585, %v1585
  %v1842 = vpack.c.b16 %v1586, %v1586
  %v1843 = vpack.c.b16 %v1587, %v1587
  %v1844 = vpack.c.b16 %v1588, %v1588
  %v1845 = vpack.c.b16 %v1589, %v1589
  %v1846 = vpack.c.b16 %v1590, %v1590
  %v1847 = vpack.c.b16 %v1591, %v1591
  %v1848 = vpack.c.b16 %v1592, %v1592
  %v1849 = vpack.c.b16 %v1593, %v1593
  %v1850 = vpack.c.b16 %v1594, %v1594
  %v1851 = vpack.c.b16 %v1595, %v1595
  %v1852 = vpack.c.b16 %v1596, %v1596
  %v1853 = vpack.c.b16 %v1597, %v1597
  %v1854 = vpack.c.b16 %v1598, %v1598
  %v1855 = vpack.c.b16 %v1599, %v1599
  %v1856 = vpack.c.b16 %v1600, %v1600
  %v1857 = vpack.c.b16 %v1601, %v1601
  %v1858 = vpack.c.b16 %v1602, %v1602
  %v1859 = vpack.c.b16 %v1603, %v1603
  %v1860 = vpack.c.b16 %v1604, %v1604
  %v1861 = vpack.c.b16 %v1605, %v1605
  %v1862 = vpack.c.b16 %v1606, %v1606
  %v1863 = vpack.c.b16 %v1607, %v1607
  %v1864 = vpack.c.b16 %v1608, %v1608
  %v1865 = vpack.c.b16 %v1609, %v1609
  %v1866 = vpack.c.b16 %v1610, %v1610
  %v1867 = vpack.c.b16 %v1611, %v1611
  %v1868 = vpack.c.b16 %v1612, %v1612
  %v1869 = vpack.c.b16 %v1613, %v1613
  %v1870 = vpack.c.b16 %v1614, %v1614
  %v1871 = vpack.c.b16 %v1615, %v1615
  %v1872 = vpack.c.b16 %v1616, %v1616
  %v1873 = vpack.c.b16 %v1617, %v1617
  %v1874 = vpack.c.b16 %v1618, %v1618
  %v1875 = vpack.c.b16 %v1619, %v1619
  %v1876 = vpack.c.b16 %v1620, %v1620
  %v1877 = vpack.c.b16 %v1621, %v1621
  %v1878 = vpack.c.b16 %v1622, %v1622
  %v1879 = vpack.c.b16 %v1623, %v1623
  %v1880 = vpack.c.b16 %v1624, %v1624
  %v1881 = vpack.c.b16 %v1625, %v1625
  %v1882 = vpack.c.b16 %v1626, %v1626
  %v1883 = vpack.c.b16 %v1627, %v1627
  %v1884 = vpack.c.b16 %v1628, %v1628
  %v1885 = vpack.c.b16 %v1629, %v1629
  %v1886 = vpack.c.b16 %v1630, %v1630
  %v1887 = vpack.c.b16 %v1631, %v1631
  %v1888 = vpack.c.b16 %v1632, %v1632
  %v1889 = vpack.c.b16 %v1633, %v1633
  %v1890 = vpack.c.b16 %v1634, %v1634
  %v1891 = vpack.c.b16 %v1635, %v1635
  %v1892 = vpack.c.b16 %v1636, %v1636
  %v1893 = vpack.c.b16 %v1637, %v1637
  %v1894 = vpack.c.b16 %v1638, %v1638
  %v1895 = vpack.c.b16 %v1639, %v1639
  %v1896 = vpack.c.b16 %v1640, %v1640
  %v1897 = vpack.c.b16 %v1641, %v1641
  %v1898 = vpack.c.b16 %v1642, %v1642
  %v1899 = vpack.c.b16 %v1643, %v1643
  %v1900 = vpack.c.b16 %v1644, %v1644
  %v1901 = vpack.c.b16 %v1645, %v1645
  %v1902 = vpack.c.b16 %v1646, %v1646
  %v1903 = vpack.c.b16 %v1647, %v1647
  %v1904 = vpack.c.b16 %v1648, %v1648
  %v1905 = vpack.c.b16 %v1649, %v1649
  %v1906 = vpack.c.b16 %v1650, %v1650
  %v1907 = vpack.c.b16 %v1651, %v1651
  %v1908 = vpack.c.b16 %v1652, %v1652
  %v1909 = vpack.c.b16 %v1653, %v1653
  %v1910 = vpack.c.b16 %v1654, %v1654
  %v1911 = vpack.c.b16 %v1655, %v1655
  %v1912 = vpack.c.b16 %v1656, %v1656
  %v1913 = vpack.c.b16 %v1657, %v1657
  %v1914 = vpack.c.b16 %v1658, %v1658
  %v1915 = vpack.c.b16 %v1659, %v1659
  %v1916 = vpack.c.b16 %v1660, %v1660
  %v1917 = vpack.c.b16 %v1661, %v1661
  %v1918 = vpack.c.b16 %v1662, %v1662
  %v1919 = vpack.c.b16 %v1663, %v1663
  %v1920 = vpack.c.b16 %v1664, %v1664
  %v1921 = vpack.c.b16 %v1665, %v1665
  %v1922 = vpack.c.b16 %v1666, %v1666
  %v1923 = vpack.c.b16 %v1667, %v1667
  %v1924 = vpack.c.b16 %v1668, %v1668
  %v1925 = vpack.c.b16 %v1669, %v1669
  %v1926 = vpack.c.b16 %v1670, %v1670
  %v1927 = vpack.c.b16 %v1671, %v1671
  %v1928 = vpack.c.b16 %v1672, %v1672
  %v1929 = vpack.c.b16 %v1673, %v1673
  %v1930 = vpack.c.b16 %v1674, %v1674
  %v1931 = vpack.c.b16 %v1675, %v1675
  %v1932 = vpack.c.b16 %v1676, %v1676
  %v1933 = vpack.c.b16 %v1677, %v1677
  %v1934 = vpack.c.b16 %v1678, %v1678
  %v1935 = vpack.c.b16 %v1679, %v1679
  %v1936 = vpack.c.b16 %v1680, %v1680
  %v1937 = vpack.c.b16 %v1681, %v1681
  %v1938 = vpack.c.b16 %v1682, %v1682
  %v1939 = vpack.c.b16 %v1683, %v1683
  %v1940 = vpack.c.b16 %v1684, %v1684
  %v1941 = vpack.c.b16 %v1685, %v1685
  %v1942 = vpack.c.b16 %v1686, %v1686
  %v1943 = vpack.c.b16 %v1687, %v1687
  %v1944 = vpack.c.b16 %v1688, %v1688
  %v1945 = vpack.c.b16 %v1689, %v1689
  %v1946 = vpack.c.b16 %v1690, %v1690
  %v1947 = vpack.c.b16 %v1691, %v1691
  %v1948 = vpack.c.b16 %v1692, %v1692
  %v1949 = vpack.c.b16 %v1693, %v1693
  %v1950 = vpack.c.b16 %v1694, %v1694
  %v1951 = vpack.c.b16 %v1695, %v1695
  %v1952 = vpack.c.b16 %v1696, %v1696
  %v1953 = vpack.c.b16 %v1697, %v1697
  %v1954 = vpack.c.b16 %v1698, %v1698
  %v1955 = vpack.c.b16 %v1699, %v1699
  %v1956 = vpack.c.b16 %v1700, %v1700
  %v1957 = vpack.c.b16 %v1701, %v1701
  %v1958 = vpack.c.b16 %v1702, %v1702
  %v1959 = vpack.c.b16 %v1703, %v1703
  %v1960 = vpack.c.b16 %v1704, %v1704
  %v1961 = vpack.c.b16 %v1705, %v1705
  %v1962 = vpack.c.b16 %v1706, %v1706
  %v1963 = vpack.c.b16 %v1707, %v1707
  %v1964 = vpack.c.b16 %v1708, %v1708
  %v1965 = vpack.c.b16 %v1709, %v1709
  %v1966 = vpack.c.b16 %v1710, %v1710
  %v1967 = vpack.c.b16 %v1711, %v1711
  %v1968 = vpack.c.b16 %v1712, %v1712
  %v1969 = vpack.c.b16 %v1713, %v1713
  %v1970 = vpack.c.b16 %v1714, %v1714
  %v1971 = vpack.c.b16 %v1715, %v1715
  %v1972 = vpack.c.b16 %v1716, %v1716
  %v1973 = vpack.c.b16 %v1717, %v1717
  %v1974 = vpack.c.b16 %v1718, %v1718
  %v1975 = vpack.c.b16 %v1719, %v1719
  %v1976 = vpack.c.b16 %v1720, %v1720
  %v1977 = vpack.c.b16 %v1721, %v1721
  %v1978 = vpack.c.b16 %v1722, %v1722
  %v1979 = vpack.c.b16 %v1723, %v1723
  %v1980 = vpack.c.b16 %v1724, %v1724
  %v1981 = vpack.c.b16 %v1725, %v1725
  %v1982 = vpack.c.b16 %v1726, %v1726
  %v1983 = vpack.c.b16 %v1727, %v1727
  %v1984 = vpack.c.b16 %v1728, %v1728
  %v1985 = vpack.c.b16 %v1729, %v1729
  %v1986 = vpack.c.b16 %v1730, %v1730
  %v1987 = vpack.c.b16 %v1731, %v1731
  %v1988 = vpack.c.b16 %v1732, %v1732
  %v1989 = vpack.c.b16 %v1733, %v1733
  %v1990 = vpack.c.b16 %v1734, %v1734
  %v1991 = vpack.c.b16 %v1735, %v1735
  %v1992 = vpack.c.b16 %v1736, %v1736
  %v1993 = vpack.c.b16 %v1737, %v1737
  %v1994 = vpack.c.b16 %v1738, %v1738
  %v1995 = vpack.c.b16 %v1739, %v1739
  %v1996 = vpack.c.b16 %v1740, %v1740
  %v1997 = vpack.c.b16 %v1741, %v1741
  %v1998 = vpack.c.b16 %v1742, %v1742
  %v1999 = vpack.c.b16 %v1743, %v1743
  %v2000 = vpack.c.b16 %v1744, %v1744
  %v2001 = vpack.c.b16 %v1745, %v1745
  %v2002 = vpack.c.b16 %v1746, %v1746
  %v2003 = vpack.c.b16 %v1747, %v1747
  %v2004 = vpack.c.b16 %v1748, %v1748
  %v2005 = vpack.c.b16 %v1749, %v1749
  %v2006 = vpack.c.b16 %v1750, %v1750
  %v2007 = vpack.c.b16 %v1751, %v1751
  %v2008 = vpack.c.b16 %v1752, %v1752
  %v2009 = vpack.c.b16 %v1753, %v1753
  %v2010 = vpack.c.b16 %v1754, %v1754
  %v2011 = vpack.c.b16 %v1755, %v1755
  %v2012 = vpack.c.b16 %v1756, %v1756
  %v2013 = vpack.c.b16 %v1757, %v1757
  %v2014 = vpack.c.b16 %v1758, %v1758
  %v2015 = vpack.c.b16 %v1759, %v1759
  %v2016 = vpack.c.b16 %v1760, %v1760
  %v2017 = vpack.c.b16 %v1761, %v1761
  %v2018 = vpack.c.b16 %v1762, %v1762
  %v2019 = vpack.c.b16 %v1763, %v1763
  %v2020 = vpack.c.b16 %v1764, %v1764
  %v2021 = vpack.c.b16 %v1765, %v1765
  %v2022 = vpack.c.b16 %v1766, %v1766
  %v2023 = vpack.c.b16 %v1767, %v1767
  %v2024 = vpack.c.b16 %v1768, %v1768
  %v2025 = vpack.c.b16 %v1769, %v1769
  %v2026 = vpack.c.b16 %v1770, %v1770
  %v2027 = vpack.c.b16 %v1771, %v1771
  %v2028 = vpack.c.b16 %v1772, %v1772
  %v2029 = vpack.c.b16 %v1773, %v1773
  %v2030 = vpack.c.b16 %v1774, %v1774
  %v2031 = vpack.c.b16 %v1775, %v1775
  %v2032 = vpack.c.b16 %v1776, %v1776
  %v2033 = vpack.c.b16 %v1777, %v1777
  %v2034 = vpack.c.b16 %v1778, %v1778
  %v2035 = vpack.c.b16 %v1779, %v1779
  %v2036 = vpack.c.b16 %v1780, %v1780
  %v2037 = vpack.c.b16 %v1781, %v1781
  %v2038 = vpack.c.b16 %v1782, %v1782
  %v2039 = vpack.c.b16 %v1783, %v1783
  %v2040 = vpack.c.b16 %v1784, %v1784
  %v2041 = vpack.c.b16 %v1785, %v1785
  %v2042 = vpack.c.b16 %v1786, %v1786
  %v2043 = vpack.c.b16 %v1787, %v1787
  %v2044 = vpack.c.b16 %v1788, %v1788
  %v2045 = vpack.c.b16 %v1789, %v1789
  %v2046 = vpack.c.b16 %v1790, %v1790
  %v2047 = vpack.c.b16 %v1791, %v1791
  %v2048 = vpack.c.b16 %v1792, %v1792
  %v2049 = vpack.c.b16 %v1793, %v1793
  %v2050 = vpack.c.b16 %v1794, %v1794
  %v2051 = vpack.c.b16 %v1795, %v1795
  %v2052 = vpack.c.b16 %v1796, %v1796
  %v2053 = vpack.c.b16 %v1797, %v1797
  %v2054 = vpack.c.b16 %v1798, %v1798
  %v2055 = vpack.c.b16 %v1799, %v1799
  %v2056 = vpack.c.b16 %v1800, %v1800
  %v2057 = vpack.c.b16 %v1801, %v1801
  %v2058 = vpack.c.b16 %v1802, %v1802
  %v2059 = vpack.c.b16 %v1803, %v1803
  %v2060 = vpack.c.b16 %v1804, %v1804
  %v2061 = vpack.c.b16 %v1805, %v1805
  %v2062 = vpack.c.b16 %v1806, %v1806
  %v2063 = vpack.c.b16 %v1807, %v1807
  %v2064 = vpack.c.b16 %v1808, %v1808
  %v2065 = vpack.c.b16 %v1809, %v1809
  %v2066 = vpack.c.b16 %v1810, %v1810
  %v2067 = vpack.c.b16 %v1811, %v1811
  %v2068 = vpack.c.b16 %v1812, %v1812
  %v2069 = vpack.c.b16 %v1813, %v1813
  %v2070 = vpack.c.b16 %v1814, %v1814
  %v2071 = vpack.c.b16 %v1815, %v1815
  %v2072 = vpack.c.b16 %v1816, %v1816
  %v2073 = vpack.c.b16 %v1817, %v1817
  %v2074 = vpack.c.b16 %v1818, %v1818
  %v2075 = vpack.c.b16 %v1819, %v1819
  %2332 = vst [vmem:[%s3] sm:$0xf] %v1820
  %2333 = vst [vmem:[%s3 + $0x4] sm:$0xf] %v1821
  %2334 = vst [vmem:[%s3 + $0x8] sm:$0xf] %v1822
  %2335 = vst [vmem:[%s3 + $0xc] sm:$0xf] %v1823
  %2336 = vst [vmem:[%s3 + $0x10] sm:$0xf] %v1824
  %2337 = vst [vmem:[%s3 + $0x14] sm:$0xf] %v1825
  %2338 = vst [vmem:[%s3 + $0x18] sm:$0xf] %v1826
  %2339 = vst [vmem:[%s3 + $0x1c] sm:$0xf] %v1827
  %2340 = vst [vmem:[%s3 + $0x20] sm:$0xf] %v1828
  %2341 = vst [vmem:[%s3 + $0x24] sm:$0xf] %v1829
  %2342 = vst [vmem:[%s3 + $0x28] sm:$0xf] %v1830
  %2343 = vst [vmem:[%s3 + $0x2c] sm:$0xf] %v1831
  %2344 = vst [vmem:[%s3 + $0x30] sm:$0xf] %v1832
  %2345 = vst [vmem:[%s3 + $0x34] sm:$0xf] %v1833
  %2346 = vst [vmem:[%s3 + $0x38] sm:$0xf] %v1834
  %2347 = vst [vmem:[%s3 + $0x3c] sm:$0xf] %v1835
  %2348 = vst [vmem:[%s3 + $0x40] sm:$0xf] %v1836
  %2349 = vst [vmem:[%s3 + $0x44] sm:$0xf] %v1837
  %2350 = vst [vmem:[%s3 + $0x48] sm:$0xf] %v1838
  %2351 = vst [vmem:[%s3 + $0x4c] sm:$0xf] %v1839
  %2352 = vst [vmem:[%s3 + $0x50] sm:$0xf] %v1840
  %2353 = vst [vmem:[%s3 + $0x54] sm:$0xf] %v1841
  %2354 = vst [vmem:[%s3 + $0x58] sm:$0xf] %v1842
  %2355 = vst [vmem:[%s3 + $0x5c] sm:$0xf] %v1843
  %2356 = vst [vmem:[%s3 + $0x60] sm:$0xf] %v1844
  %2357 = vst [vmem:[%s3 + $0x64] sm:$0xf] %v1845
  %2358 = vst [vmem:[%s3 + $0x68] sm:$0xf] %v1846
  %2359 = vst [vmem:[%s3 + $0x6c] sm:$0xf] %v1847
  %2360 = vst [vmem:[%s3 + $0x70] sm:$0xf] %v1848
  %2361 = vst [vmem:[%s3 + $0x74] sm:$0xf] %v1849
  %2362 = vst [vmem:[%s3 + $0x78] sm:$0xf] %v1850
  %2363 = vst [vmem:[%s3 + $0x7c] sm:$0xf] %v1851
  %2364 = vst [vmem:[%s3 + $0x80] sm:$0xf] %v1852
  %2365 = vst [vmem:[%s3 + $0x84] sm:$0xf] %v1853
  %2366 = vst [vmem:[%s3 + $0x88] sm:$0xf] %v1854
  %2367 = vst [vmem:[%s3 + $0x8c] sm:$0xf] %v1855
  %2368 = vst [vmem:[%s3 + $0x90] sm:$0xf] %v1856
  %2369 = vst [vmem:[%s3 + $0x94] sm:$0xf] %v1857
  %2370 = vst [vmem:[%s3 + $0x98] sm:$0xf] %v1858
  %2371 = vst [vmem:[%s3 + $0x9c] sm:$0xf] %v1859
  %2372 = vst [vmem:[%s3 + $0xa0] sm:$0xf] %v1860
  %2373 = vst [vmem:[%s3 + $0xa4] sm:$0xf] %v1861
  %2374 = vst [vmem:[%s3 + $0xa8] sm:$0xf] %v1862
  %2375 = vst [vmem:[%s3 + $0xac] sm:$0xf] %v1863
  %2376 = vst [vmem:[%s3 + $0xb0] sm:$0xf] %v1864
  %2377 = vst [vmem:[%s3 + $0xb4] sm:$0xf] %v1865
  %2378 = vst [vmem:[%s3 + $0xb8] sm:$0xf] %v1866
  %2379 = vst [vmem:[%s3 + $0xbc] sm:$0xf] %v1867
  %2380 = vst [vmem:[%s3 + $0xc0] sm:$0xf] %v1868
  %2381 = vst [vmem:[%s3 + $0xc4] sm:$0xf] %v1869
  %2382 = vst [vmem:[%s3 + $0xc8] sm:$0xf] %v1870
  %2383 = vst [vmem:[%s3 + $0xcc] sm:$0xf] %v1871
  %2384 = vst [vmem:[%s3 + $0xd0] sm:$0xf] %v1872
  %2385 = vst [vmem:[%s3 + $0xd4] sm:$0xf] %v1873
  %2386 = vst [vmem:[%s3 + $0xd8] sm:$0xf] %v1874
  %2387 = vst [vmem:[%s3 + $0xdc] sm:$0xf] %v1875
  %2388 = vst [vmem:[%s3 + $0xe0] sm:$0xf] %v1876
  %2389 = vst [vmem:[%s3 + $0xe4] sm:$0xf] %v1877
  %2390 = vst [vmem:[%s3 + $0xe8] sm:$0xf] %v1878
  %2391 = vst [vmem:[%s3 + $0xec] sm:$0xf] %v1879
  %2392 = vst [vmem:[%s3 + $0xf0] sm:$0xf] %v1880
  %2393 = vst [vmem:[%s3 + $0xf4] sm:$0xf] %v1881
  %2394 = vst [vmem:[%s3 + $0xf8] sm:$0xf] %v1882
  %2395 = vst [vmem:[%s3 + $0xfc] sm:$0xf] %v1883
  %2396 = vst [vmem:[%s3 + $0x100] sm:$0xf] %v1884
  %2397 = vst [vmem:[%s3 + $0x104] sm:$0xf] %v1885
  %2398 = vst [vmem:[%s3 + $0x108] sm:$0xf] %v1886
  %2399 = vst [vmem:[%s3 + $0x10c] sm:$0xf] %v1887
  %2400 = vst [vmem:[%s3 + $0x110] sm:$0xf] %v1888
  %2401 = vst [vmem:[%s3 + $0x114] sm:$0xf] %v1889
  %2402 = vst [vmem:[%s3 + $0x118] sm:$0xf] %v1890
  %2403 = vst [vmem:[%s3 + $0x11c] sm:$0xf] %v1891
  %2404 = vst [vmem:[%s3 + $0x120] sm:$0xf] %v1892
  %2405 = vst [vmem:[%s3 + $0x124] sm:$0xf] %v1893
  %2406 = vst [vmem:[%s3 + $0x128] sm:$0xf] %v1894
  %2407 = vst [vmem:[%s3 + $0x12c] sm:$0xf] %v1895
  %2408 = vst [vmem:[%s3 + $0x130] sm:$0xf] %v1896
  %2409 = vst [vmem:[%s3 + $0x134] sm:$0xf] %v1897
  %2410 = vst [vmem:[%s3 + $0x138] sm:$0xf] %v1898
  %2411 = vst [vmem:[%s3 + $0x13c] sm:$0xf] %v1899
  %2412 = vst [vmem:[%s3 + $0x140] sm:$0xf] %v1900
  %2413 = vst [vmem:[%s3 + $0x144] sm:$0xf] %v1901
  %2414 = vst [vmem:[%s3 + $0x148] sm:$0xf] %v1902
  %2415 = vst [vmem:[%s3 + $0x14c] sm:$0xf] %v1903
  %2416 = vst [vmem:[%s3 + $0x150] sm:$0xf] %v1904
  %2417 = vst [vmem:[%s3 + $0x154] sm:$0xf] %v1905
  %2418 = vst [vmem:[%s3 + $0x158] sm:$0xf] %v1906
  %2419 = vst [vmem:[%s3 + $0x15c] sm:$0xf] %v1907
  %2420 = vst [vmem:[%s3 + $0x160] sm:$0xf] %v1908
  %2421 = vst [vmem:[%s3 + $0x164] sm:$0xf] %v1909
  %2422 = vst [vmem:[%s3 + $0x168] sm:$0xf] %v1910
  %2423 = vst [vmem:[%s3 + $0x16c] sm:$0xf] %v1911
  %2424 = vst [vmem:[%s3 + $0x170] sm:$0xf] %v1912
  %2425 = vst [vmem:[%s3 + $0x174] sm:$0xf] %v1913
  %2426 = vst [vmem:[%s3 + $0x178] sm:$0xf] %v1914
  %2427 = vst [vmem:[%s3 + $0x17c] sm:$0xf] %v1915
  %2428 = vst [vmem:[%s3 + $0x180] sm:$0xf] %v1916
  %2429 = vst [vmem:[%s3 + $0x184] sm:$0xf] %v1917
  %2430 = vst [vmem:[%s3 + $0x188] sm:$0xf] %v1918
  %2431 = vst [vmem:[%s3 + $0x18c] sm:$0xf] %v1919
  %2432 = vst [vmem:[%s3 + $0x190] sm:$0xf] %v1920
  %2433 = vst [vmem:[%s3 + $0x194] sm:$0xf] %v1921
  %2434 = vst [vmem:[%s3 + $0x198] sm:$0xf] %v1922
  %2435 = vst [vmem:[%s3 + $0x19c] sm:$0xf] %v1923
  %2436 = vst [vmem:[%s3 + $0x1a0] sm:$0xf] %v1924
  %2437 = vst [vmem:[%s3 + $0x1a4] sm:$0xf] %v1925
  %2438 = vst [vmem:[%s3 + $0x1a8] sm:$0xf] %v1926
  %2439 = vst [vmem:[%s3 + $0x1ac] sm:$0xf] %v1927
  %2440 = vst [vmem:[%s3 + $0x1b0] sm:$0xf] %v1928
  %2441 = vst [vmem:[%s3 + $0x1b4] sm:$0xf] %v1929
  %2442 = vst [vmem:[%s3 + $0x1b8] sm:$0xf] %v1930
  %2443 = vst [vmem:[%s3 + $0x1bc] sm:$0xf] %v1931
  %2444 = vst [vmem:[%s3 + $0x1c0] sm:$0xf] %v1932
  %2445 = vst [vmem:[%s3 + $0x1c4] sm:$0xf] %v1933
  %2446 = vst [vmem:[%s3 + $0x1c8] sm:$0xf] %v1934
  %2447 = vst [vmem:[%s3 + $0x1cc] sm:$0xf] %v1935
  %2448 = vst [vmem:[%s3 + $0x1d0] sm:$0xf] %v1936
  %2449 = vst [vmem:[%s3 + $0x1d4] sm:$0xf] %v1937
  %2450 = vst [vmem:[%s3 + $0x1d8] sm:$0xf] %v1938
  %2451 = vst [vmem:[%s3 + $0x1dc] sm:$0xf] %v1939
  %2452 = vst [vmem:[%s3 + $0x1e0] sm:$0xf] %v1940
  %2453 = vst [vmem:[%s3 + $0x1e4] sm:$0xf] %v1941
  %2454 = vst [vmem:[%s3 + $0x1e8] sm:$0xf] %v1942
  %2455 = vst [vmem:[%s3 + $0x1ec] sm:$0xf] %v1943
  %2456 = vst [vmem:[%s3 + $0x1f0] sm:$0xf] %v1944
  %2457 = vst [vmem:[%s3 + $0x1f4] sm:$0xf] %v1945
  %2458 = vst [vmem:[%s3 + $0x1f8] sm:$0xf] %v1946
  %2459 = vst [vmem:[%s3 + $0x1fc] sm:$0xf] %v1947
  %2460 = vst [vmem:[%s3 + $0x200] sm:$0xf] %v1948
  %2461 = vst [vmem:[%s3 + $0x204] sm:$0xf] %v1949
  %2462 = vst [vmem:[%s3 + $0x208] sm:$0xf] %v1950
  %2463 = vst [vmem:[%s3 + $0x20c] sm:$0xf] %v1951
  %2464 = vst [vmem:[%s3 + $0x210] sm:$0xf] %v1952
  %2465 = vst [vmem:[%s3 + $0x214] sm:$0xf] %v1953
  %2466 = vst [vmem:[%s3 + $0x218] sm:$0xf] %v1954
  %2467 = vst [vmem:[%s3 + $0x21c] sm:$0xf] %v1955
  %2468 = vst [vmem:[%s3 + $0x220] sm:$0xf] %v1956
  %2469 = vst [vmem:[%s3 + $0x224] sm:$0xf] %v1957
  %2470 = vst [vmem:[%s3 + $0x228] sm:$0xf] %v1958
  %2471 = vst [vmem:[%s3 + $0x22c] sm:$0xf] %v1959
  %2472 = vst [vmem:[%s3 + $0x230] sm:$0xf] %v1960
  %2473 = vst [vmem:[%s3 + $0x234] sm:$0xf] %v1961
  %2474 = vst [vmem:[%s3 + $0x238] sm:$0xf] %v1962
  %2475 = vst [vmem:[%s3 + $0x23c] sm:$0xf] %v1963
  %2476 = vst [vmem:[%s3 + $0x240] sm:$0xf] %v1964
  %2477 = vst [vmem:[%s3 + $0x244] sm:$0xf] %v1965
  %2478 = vst [vmem:[%s3 + $0x248] sm:$0xf] %v1966
  %2479 = vst [vmem:[%s3 + $0x24c] sm:$0xf] %v1967
  %2480 = vst [vmem:[%s3 + $0x250] sm:$0xf] %v1968
  %2481 = vst [vmem:[%s3 + $0x254] sm:$0xf] %v1969
  %2482 = vst [vmem:[%s3 + $0x258] sm:$0xf] %v1970
  %2483 = vst [vmem:[%s3 + $0x25c] sm:$0xf] %v1971
  %2484 = vst [vmem:[%s3 + $0x260] sm:$0xf] %v1972
  %2485 = vst [vmem:[%s3 + $0x264] sm:$0xf] %v1973
  %2486 = vst [vmem:[%s3 + $0x268] sm:$0xf] %v1974
  %2487 = vst [vmem:[%s3 + $0x26c] sm:$0xf] %v1975
  %2488 = vst [vmem:[%s3 + $0x270] sm:$0xf] %v1976
  %2489 = vst [vmem:[%s3 + $0x274] sm:$0xf] %v1977
  %2490 = vst [vmem:[%s3 + $0x278] sm:$0xf] %v1978
  %2491 = vst [vmem:[%s3 + $0x27c] sm:$0xf] %v1979
  %2492 = vst [vmem:[%s3 + $0x280] sm:$0xf] %v1980
  %2493 = vst [vmem:[%s3 + $0x284] sm:$0xf] %v1981
  %2494 = vst [vmem:[%s3 + $0x288] sm:$0xf] %v1982
  %2495 = vst [vmem:[%s3 + $0x28c] sm:$0xf] %v1983
  %2496 = vst [vmem:[%s3 + $0x290] sm:$0xf] %v1984
  %2497 = vst [vmem:[%s3 + $0x294] sm:$0xf] %v1985
  %2498 = vst [vmem:[%s3 + $0x298] sm:$0xf] %v1986
  %2499 = vst [vmem:[%s3 + $0x29c] sm:$0xf] %v1987
  %2500 = vst [vmem:[%s3 + $0x2a0] sm:$0xf] %v1988
  %2501 = vst [vmem:[%s3 + $0x2a4] sm:$0xf] %v1989
  %2502 = vst [vmem:[%s3 + $0x2a8] sm:$0xf] %v1990
  %2503 = vst [vmem:[%s3 + $0x2ac] sm:$0xf] %v1991
  %2504 = vst [vmem:[%s3 + $0x2b0] sm:$0xf] %v1992
  %2505 = vst [vmem:[%s3 + $0x2b4] sm:$0xf] %v1993
  %2506 = vst [vmem:[%s3 + $0x2b8] sm:$0xf] %v1994
  %2507 = vst [vmem:[%s3 + $0x2bc] sm:$0xf] %v1995
  %2508 = vst [vmem:[%s3 + $0x2c0] sm:$0xf] %v1996
  %2509 = vst [vmem:[%s3 + $0x2c4] sm:$0xf] %v1997
  %2510 = vst [vmem:[%s3 + $0x2c8] sm:$0xf] %v1998
  %2511 = vst [vmem:[%s3 + $0x2cc] sm:$0xf] %v1999
  %2512 = vst [vmem:[%s3 + $0x2d0] sm:$0xf] %v2000
  %2513 = vst [vmem:[%s3 + $0x2d4] sm:$0xf] %v2001
  %2514 = vst [vmem:[%s3 + $0x2d8] sm:$0xf] %v2002
  %2515 = vst [vmem:[%s3 + $0x2dc] sm:$0xf] %v2003
  %2516 = vst [vmem:[%s3 + $0x2e0] sm:$0xf] %v2004
  %2517 = vst [vmem:[%s3 + $0x2e4] sm:$0xf] %v2005
  %2518 = vst [vmem:[%s3 + $0x2e8] sm:$0xf] %v2006
  %2519 = vst [vmem:[%s3 + $0x2ec] sm:$0xf] %v2007
  %2520 = vst [vmem:[%s3 + $0x2f0] sm:$0xf] %v2008
  %2521 = vst [vmem:[%s3 + $0x2f4] sm:$0xf] %v2009
  %2522 = vst [vmem:[%s3 + $0x2f8] sm:$0xf] %v2010
  %2523 = vst [vmem:[%s3 + $0x2fc] sm:$0xf] %v2011
  %2524 = vst [vmem:[%s3 + $0x300] sm:$0xf] %v2012
  %2525 = vst [vmem:[%s3 + $0x304] sm:$0xf] %v2013
  %2526 = vst [vmem:[%s3 + $0x308] sm:$0xf] %v2014
  %2527 = vst [vmem:[%s3 + $0x30c] sm:$0xf] %v2015
  %2528 = vst [vmem:[%s3 + $0x310] sm:$0xf] %v2016
  %2529 = vst [vmem:[%s3 + $0x314] sm:$0xf] %v2017
  %2530 = vst [vmem:[%s3 + $0x318] sm:$0xf] %v2018
  %2531 = vst [vmem:[%s3 + $0x31c] sm:$0xf] %v2019
  %2532 = vst [vmem:[%s3 + $0x320] sm:$0xf] %v2020
  %2533 = vst [vmem:[%s3 + $0x324] sm:$0xf] %v2021
  %2534 = vst [vmem:[%s3 + $0x328] sm:$0xf] %v2022
  %2535 = vst [vmem:[%s3 + $0x32c] sm:$0xf] %v2023
  %2536 = vst [vmem:[%s3 + $0x330] sm:$0xf] %v2024
  %2537 = vst [vmem:[%s3 + $0x334] sm:$0xf] %v2025
  %2538 = vst [vmem:[%s3 + $0x338] sm:$0xf] %v2026
  %2539 = vst [vmem:[%s3 + $0x33c] sm:$0xf] %v2027
  %2540 = vst [vmem:[%s3 + $0x340] sm:$0xf] %v2028
  %2541 = vst [vmem:[%s3 + $0x344] sm:$0xf] %v2029
  %2542 = vst [vmem:[%s3 + $0x348] sm:$0xf] %v2030
  %2543 = vst [vmem:[%s3 + $0x34c] sm:$0xf] %v2031
  %2544 = vst [vmem:[%s3 + $0x350] sm:$0xf] %v2032
  %2545 = vst [vmem:[%s3 + $0x354] sm:$0xf] %v2033
  %2546 = vst [vmem:[%s3 + $0x358] sm:$0xf] %v2034
  %2547 = vst [vmem:[%s3 + $0x35c] sm:$0xf] %v2035
  %2548 = vst [vmem:[%s3 + $0x360] sm:$0xf] %v2036
  %2549 = vst [vmem:[%s3 + $0x364] sm:$0xf] %v2037
  %2550 = vst [vmem:[%s3 + $0x368] sm:$0xf] %v2038
  %2551 = vst [vmem:[%s3 + $0x36c] sm:$0xf] %v2039
  %2552 = vst [vmem:[%s3 + $0x370] sm:$0xf] %v2040
  %2553 = vst [vmem:[%s3 + $0x374] sm:$0xf] %v2041
  %2554 = vst [vmem:[%s3 + $0x378] sm:$0xf] %v2042
  %2555 = vst [vmem:[%s3 + $0x37c] sm:$0xf] %v2043
  %2556 = vst [vmem:[%s3 + $0x380] sm:$0xf] %v2044
  %2557 = vst [vmem:[%s3 + $0x384] sm:$0xf] %v2045
  %2558 = vst [vmem:[%s3 + $0x388] sm:$0xf] %v2046
  %2559 = vst [vmem:[%s3 + $0x38c] sm:$0xf] %v2047
  %2560 = vst [vmem:[%s3 + $0x390] sm:$0xf] %v2048
  %2561 = vst [vmem:[%s3 + $0x394] sm:$0xf] %v2049
  %2562 = vst [vmem:[%s3 + $0x398] sm:$0xf] %v2050
  %2563 = vst [vmem:[%s3 + $0x39c] sm:$0xf] %v2051
  %2564 = vst [vmem:[%s3 + $0x3a0] sm:$0xf] %v2052
  %2565 = vst [vmem:[%s3 + $0x3a4] sm:$0xf] %v2053
  %2566 = vst [vmem:[%s3 + $0x3a8] sm:$0xf] %v2054
  %2567 = vst [vmem:[%s3 + $0x3ac] sm:$0xf] %v2055
  %2568 = vst [vmem:[%s3 + $0x3b0] sm:$0xf] %v2056
  %2569 = vst [vmem:[%s3 + $0x3b4] sm:$0xf] %v2057
  %2570 = vst [vmem:[%s3 + $0x3b8] sm:$0xf] %v2058
  %2571 = vst [vmem:[%s3 + $0x3bc] sm:$0xf] %v2059
  %2572 = vst [vmem:[%s3 + $0x3c0] sm:$0xf] %v2060
  %2573 = vst [vmem:[%s3 + $0x3c4] sm:$0xf] %v2061
  %2574 = vst [vmem:[%s3 + $0x3c8] sm:$0xf] %v2062
  %2575 = vst [vmem:[%s3 + $0x3cc] sm:$0xf] %v2063
  %2576 = vst [vmem:[%s3 + $0x3d0] sm:$0xf] %v2064
  %2577 = vst [vmem:[%s3 + $0x3d4] sm:$0xf] %v2065
  %2578 = vst [vmem:[%s3 + $0x3d8] sm:$0xf] %v2066
  %2579 = vst [vmem:[%s3 + $0x3dc] sm:$0xf] %v2067
  %2580 = vst [vmem:[%s3 + $0x3e0] sm:$0xf] %v2068
  %2581 = vst [vmem:[%s3 + $0x3e4] sm:$0xf] %v2069
  %2582 = vst [vmem:[%s3 + $0x3e8] sm:$0xf] %v2070
  %2583 = vst [vmem:[%s3 + $0x3ec] sm:$0xf] %v2071
  %2584 = vst [vmem:[%s3 + $0x3f0] sm:$0xf] %v2072
  %2585 = vst [vmem:[%s3 + $0x3f4] sm:$0xf] %v2073
  %2586 = vst [vmem:[%s3 + $0x3f8] sm:$0xf] %v2074
  %2587 = vst [vmem:[%s3 + $0x3fc] sm:$0xf] %v2075
  // Predicated region
  $region14: #{generator_forward.16} parent=0 // pred_check
    _
  $region15: #{generator_forward.16} parent=0 // pred_check_branch
    %2589 = sbr.rel (0) target = $region17
  $region16: #{generator_forward.16} parent=0 // pred_region
    _
  $region17: #{generator_forward.16} parent=0 // pred_fallthru
    _
  // Predicated region
  $region18: #{generator_forward.16} parent=0 // pred_check
    _
  $region19: #{generator_forward.16} parent=0 // pred_check_branch
    %2591 = sbr.rel (0) target = $region21
  $region20: #{generator_forward.16} parent=0 // pred_region
    _
  $region21: #{generator_forward.16} parent=0 // pred_fallthru
    _

// kernel: generator_forward.17
$region0: #{generator_forward.17}
  #allocation0 [shape = 'u32[]', space=smem, size = 0x4, offset = 0x4, fixed_abs, tag = 'smem constant byte address 0x4 - core index']
  #allocation1 [shape = 'u32[144,128]{1,0:T(1,128)}', space=vmem, size = 0x12000, scoped, tag = 'internal scratch']
  %s0 = inlined_call_operand.vmem [shape: bf16[4,2048,128], index: 0, kind: input, shape index: {}]
  %s1 = inlined_call_operand.vmem [shape: bf16[4,128,128], index: 1, kind: input, shape index: {}]
  %s2 = inlined_call_operand.vmem [shape: f32[4,2048,128], index: 2, kind: output, shape index: {}]
  %s3 = sld [smem:[#allocation0]]
  $region41: #{generator_forward.17} parent=0
    _
  %s5 = ssub.s32 1, %s3
  %s6 = scalar_select 0, %s5, %s3
  loop: start=0, step=1, limit=10
  $region2: #{generator_forward.17} parent=0 // loop_pre_header
    _
  $region3: #{generator_forward.17} parent=0 // loop_header
    %s8 = sphi 0, %s12
    %p9 = scmp.ge.s32.totalorder %s8, 10
    %s15 = sphi 0, %s27
    %s16 = sphi 0, %s23
    %s17 = sphi 0, %s15
    %s18 = sphi 0, %s16
    %s19 = sphi 0, %s17
    %s20 = sphi 0, %s18
    %s32 = sphi 0, %s34
    %s35 = sphi 0, %s32
    %s36 = sphi 0, %s35
    %s52 = sphi 0, %s36
    %s58 = sphi 0, %s60
    %s61 = sphi 0, %s58
    %s62 = sphi 0, %s61
    %s78 = sphi 0, %s62
    %s86 = sphi 0, %s88
    %s89 = sphi 0, %s86
    %s90 = sphi 0, %s89
    %s106 = sphi 0, %s90
  $region4: #{generator_forward.17} parent=0 // loop_header_branch
    %11 = sbr.rel (%p9) target = $region8
  $region5: #{generator_forward.17} parent=0 // loop_body
    %s13 = ssub.s32 %s8, 1
    %s14 = ssub.s32 %s8, 2
    %s21 = sadd.s32 1, %s16
    %p22 = scmp.ge.s32.totalorder %s21, 2
    %s23 = scalar_select %p22, 0, %s21
    %s24 = sadd.s32 1, %s15
    %s25 = scalar_select %p22, %s24, %s15
    %p26 = scmp.ge.s32.totalorder %s25, 4
    %s27 = scalar_select %p26, 0, %s25
    %s28 = ssub.s32 %s15, %s27
    %s29 = ssub.s32 %s16, %s23
    %s30 = sor.u32 %s28, %s29
    %p31 = scmp.eq.s32.totalorder %s30, 0
    %s33 = sadd.s32 %s32, 1
    %s34 = scalar_select %p31, %s32, %s33
    %p37 = pneg %p31
    %p38 = scmp.eq.s32.totalorder %s8, 7
    %p39 = por %p37, %p38
    %p40 = scmp.ne.s32.totalorder %s32, %s35
    %p41 = scmp.eq.s32.totalorder %s8, 0
    %p42 = por %p40, %p41
    %p43 = scmp.ne.s32.totalorder %s32, %s35
    %p44 = scmp.eq.s32.totalorder %s13, 7
    %p45 = por %p43, %p44
    %p46 = scmp.ne.s32.totalorder %s35, %s36
    %p47 = scmp.eq.s32.totalorder %s13, 0
    %p48 = por %p46, %p47
    %p49 = scmp.ne.s32.totalorder %s35, %s36
    %p50 = scmp.eq.s32.totalorder %s14, 7
    %p51 = por %p49, %p50
    %p53 = scmp.ne.s32.totalorder %s36, %s52
    %p54 = scmp.eq.s32.totalorder %s14, 0
    %p55 = por %p53, %p54
    %s56 = ssub.s32 %s15, %s27
    %p57 = scmp.eq.s32.totalorder %s56, 0
    %s59 = sadd.s32 %s58, 1
    %s60 = scalar_select %p57, %s58, %s59
    %p63 = pneg %p57
    %p64 = scmp.eq.s32.totalorder %s8, 7
    %p65 = por %p63, %p64
    %p66 = scmp.ne.s32.totalorder %s58, %s61
    %p67 = scmp.eq.s32.totalorder %s8, 0
    %p68 = por %p66, %p67
    %p69 = scmp.ne.s32.totalorder %s58, %s61
    %p70 = scmp.eq.s32.totalorder %s13, 7
    %p71 = por %p69, %p70
    %p72 = scmp.ne.s32.totalorder %s61, %s62
    %p73 = scmp.eq.s32.totalorder %s13, 0
    %p74 = por %p72, %p73
    %p75 = scmp.ne.s32.totalorder %s61, %s62
    %p76 = scmp.eq.s32.totalorder %s14, 7
    %p77 = por %p75, %p76
    %p79 = scmp.ne.s32.totalorder %s62, %s78
    %p80 = scmp.eq.s32.totalorder %s14, 0
    %p81 = por %p79, %p80
    %s82 = ssub.s32 %s15, %s27
    %s83 = ssub.s32 %s16, %s23
    %s84 = sor.u32 %s82, %s83
    %p85 = scmp.eq.s32.totalorder %s84, 0
    %s87 = sadd.s32 %s86, 1
    %s88 = scalar_select %p85, %s86, %s87
    %p91 = pneg %p85
    %p92 = scmp.eq.s32.totalorder %s8, 7
    %p93 = por %p91, %p92
    %p94 = scmp.ne.s32.totalorder %s86, %s89
    %p95 = scmp.eq.s32.totalorder %s8, 0
    %p96 = por %p94, %p95
    %p97 = scmp.ne.s32.totalorder %s86, %s89
    %p98 = scmp.eq.s32.totalorder %s13, 7
    %p99 = por %p97, %p98
    %p100 = scmp.ne.s32.totalorder %s89, %s90
    %p101 = scmp.eq.s32.totalorder %s13, 0
    %p102 = por %p100, %p101
    %p103 = scmp.ne.s32.totalorder %s89, %s90
    %p104 = scmp.eq.s32.totalorder %s14, 7
    %p105 = por %p103, %p104
    %p107 = scmp.ne.s32.totalorder %s90, %s106
    %p108 = scmp.eq.s32.totalorder %s14, 0
    %p109 = por %p107, %p108
    %p110 = scmp.le.s32.totalorder 1, %s8
    %p111 = scmp.lt.s32.totalorder %s8, 9
    %p112 = pnand %p110, %p111
    %p113 = pneg %p112
    // Predicated region
    $region9: #{generator_forward.17} parent=5 // pred_check
      _
    $region10: #{generator_forward.17} parent=5 // pred_check_branch
      %115 = sbr.rel (%p112) target = $region12
    $region11: #{generator_forward.17} parent=5 // pred_region
      %s116 = ssub.s32 %s8, 1
    $region12: #{generator_forward.17} parent=5 // pred_fallthru
      _
    %p117 = scmp.lt.s32.totalorder %s8, 8
    // Predicated region
    $region13: #{generator_forward.17} parent=5 // pred_check
      %p118 = pneg %p117
    $region14: #{generator_forward.17} parent=5 // pred_check_branch
      %120 = sbr.rel (%p118) target = $region16
    $region15: #{generator_forward.17} parent=5 // pred_region
      // Predicated region
      $region17: #{generator_forward.17} parent=15 // pred_check
        %p121 = pneg %p42
      $region18: #{generator_forward.17} parent=15 // pred_check_branch
        %123 = sbr.rel (%p121) target = $region20
      $region19: #{generator_forward.17} parent=15 // pred_region
        %s124 = smul.u32 128, %s16
        %p125 = scmp.lt.s32.totalorder %s15, 3
        %s126 = scalar_select %p125, %s15, 3
        %p127 = scmp.lt.s32.totalorder %s124, 255
        %s128 = scalar_select %p127, %s124, 255
        %s129 = smul.addr %s126, 256
        %s130 = sadd.s32 %s128, %s129
        %s131 = smul.addr %s130, 4
        %s132 = scalar_lea.vmem %s0, %s131
        %s133 = smul.u32 128, %s16
      $region20: #{generator_forward.17} parent=15 // pred_fallthru
        _
      // Predicated region
      $region21: #{generator_forward.17} parent=15 // pred_check
        %p134 = pneg %p68
      $region22: #{generator_forward.17} parent=15 // pred_check_branch
        %136 = sbr.rel (%p134) target = $region24
      $region23: #{generator_forward.17} parent=15 // pred_region
        %p137 = scmp.lt.s32.totalorder %s15, 3
        %s138 = scalar_select %p137, %s15, 3
        %s139 = smul.addr %s138, 16
        %s140 = smul.addr %s139, 4
        %s141 = scalar_lea.vmem %s1, %s140
      $region24: #{generator_forward.17} parent=15 // pred_fallthru
        _
    $region16: #{generator_forward.17} parent=5 // pred_fallthru
      _
    %p142 = scmp.le.s32.totalorder 1, %s8
    %p143 = scmp.lt.s32.totalorder %s8, 9
    %p144 = pnand %p142, %p143
    %p145 = pneg %p144
    // Predicated region
    $region25: #{generator_forward.17} parent=5 // pred_check
      _
    $region26: #{generator_forward.17} parent=5 // pred_check_branch
      %147 = sbr.rel (%p144) target = $region28
    $region27: #{generator_forward.17} parent=5 // pred_region
      %s148 = ssub.s32 %s8, 1
      %s149 = smul.u32 128, %s18
      %p150 = scmp.lt.s32.totalorder %s17, 3
      %s151 = scalar_select %p150, %s17, 3
      %p152 = scmp.lt.s32.totalorder %s149, 255
      %s153 = scalar_select %p152, %s149, 255
      %s154 = smul.addr %s151, 256
      %s155 = sadd.s32 %s153, %s154
      %s156 = smul.addr %s155, 4
      %s157 = scalar_lea.vmem %s0, %s156
      %p158 = pneg %p48
      %p159 = pneg %p45
      %p160 = scmp.lt.s32.totalorder %s17, 3
      %s161 = scalar_select %p160, %s17, 3
      %s162 = smul.addr %s161, 16
      %s163 = smul.addr %s162, 4
      %s164 = scalar_lea.vmem %s1, %s163
      %p165 = pneg %p74
      %p166 = pneg %p71
      %p167 = pneg %p102
      %p168 = pneg %p99
      %s169 = smul.u32 128, %s18
      %p170 = scmp.lt.s32.totalorder %s17, 3
      %s171 = scalar_select %p170, %s17, 3
      %p172 = scmp.lt.s32.totalorder %s169, 255
      %s173 = scalar_select %p172, %s169, 255
      %s174 = smul.addr %s171, 256
      %s175 = sadd.s32 %s173, %s174
      %s176 = smul.addr %s175, 8
      %s177 = scalar_lea.vmem %s2, %s176
      %s178 = smul.u32 128, %s18
      %p179 = scmp.lt.s32.totalorder %s17, 3
      %s180 = scalar_select %p179, %s17, 3
      %p181 = scmp.lt.s32.totalorder %s178, 255
      %s182 = scalar_select %p181, %s178, 255
      %s183 = smul.addr %s180, 256
      %s184 = sadd.s32 %s182, %s183
      %s185 = smul.addr %s184, 4
      %s186 = scalar_lea.vmem %s0, %s185
      %s187 = smul.u32 128, %s18
      %p188 = scmp.lt.s32.totalorder %s17, 3
      %s189 = scalar_select %p188, %s17, 3
      %s190 = smul.addr %s189, 16
      %s191 = smul.addr %s190, 4
      %s192 = scalar_lea.vmem %s1, %s191
      %s193 = smul.u32 128, %s18
      %p194 = scmp.lt.s32.totalorder %s17, 3
      %s195 = scalar_select %p194, %s17, 3
      %p196 = scmp.lt.s32.totalorder %s193, 255
      %s197 = scalar_select %p196, %s193, 255
      %s198 = smul.addr %s195, 256
      %s199 = sadd.s32 %s197, %s198
      %s200 = smul.addr %s199, 8
      %s201 = scalar_lea.vmem %s2, %s200
      %s202 = smul.u32 128, %s18
      %v204 = vld [vmem:[%s186] sm:$0xf]
      %v205 = vld [vmem:[%s186 + $0x4] sm:$0xf]
      %v206 = vld [vmem:[%s186 + $0x8] sm:$0xf]
      %v207 = vld [vmem:[%s186 + $0xc] sm:$0xf]
      %v208 = vld [vmem:[%s186 + $0x10] sm:$0xf]
      %v209 = vld [vmem:[%s186 + $0x14] sm:$0xf]
      %v210 = vld [vmem:[%s186 + $0x18] sm:$0xf]
      %v211 = vld [vmem:[%s186 + $0x1c] sm:$0xf]
      %v212 = vld [vmem:[%s186 + $0x20] sm:$0xf]
      %v213 = vld [vmem:[%s186 + $0x24] sm:$0xf]
      %v214 = vld [vmem:[%s186 + $0x28] sm:$0xf]
      %v215 = vld [vmem:[%s186 + $0x2c] sm:$0xf]
      %v216 = vld [vmem:[%s186 + $0x30] sm:$0xf]
      %v217 = vld [vmem:[%s186 + $0x34] sm:$0xf]
      %v218 = vld [vmem:[%s186 + $0x38] sm:$0xf]
      %v219 = vld [vmem:[%s186 + $0x3c] sm:$0xf]
      %v220 = vld [vmem:[%s186 + $0x40] sm:$0xf]
      %v221 = vld [vmem:[%s186 + $0x44] sm:$0xf]
      %v222 = vld [vmem:[%s186 + $0x48] sm:$0xf]
      %v223 = vld [vmem:[%s186 + $0x4c] sm:$0xf]
      %v224 = vld [vmem:[%s186 + $0x50] sm:$0xf]
      %v225 = vld [vmem:[%s186 + $0x54] sm:$0xf]
      %v226 = vld [vmem:[%s186 + $0x58] sm:$0xf]
      %v227 = vld [vmem:[%s186 + $0x5c] sm:$0xf]
      %v228 = vld [vmem:[%s186 + $0x60] sm:$0xf]
      %v229 = vld [vmem:[%s186 + $0x64] sm:$0xf]
      %v230 = vld [vmem:[%s186 + $0x68] sm:$0xf]
      %v231 = vld [vmem:[%s186 + $0x6c] sm:$0xf]
      %v232 = vld [vmem:[%s186 + $0x70] sm:$0xf]
      %v233 = vld [vmem:[%s186 + $0x74] sm:$0xf]
      %v234 = vld [vmem:[%s186 + $0x78] sm:$0xf]
      %v235 = vld [vmem:[%s186 + $0x7c] sm:$0xf]
      %v236 = vld [vmem:[%s186 + $0x80] sm:$0xf]
      %v237 = vld [vmem:[%s186 + $0x84] sm:$0xf]
      %v238 = vld [vmem:[%s186 + $0x88] sm:$0xf]
      %v239 = vld [vmem:[%s186 + $0x8c] sm:$0xf]
      %v240 = vld [vmem:[%s186 + $0x90] sm:$0xf]
      %v241 = vld [vmem:[%s186 + $0x94] sm:$0xf]
      %v242 = vld [vmem:[%s186 + $0x98] sm:$0xf]
      %v243 = vld [vmem:[%s186 + $0x9c] sm:$0xf]
      %v244 = vld [vmem:[%s186 + $0xa0] sm:$0xf]
      %v245 = vld [vmem:[%s186 + $0xa4] sm:$0xf]
      %v246 = vld [vmem:[%s186 + $0xa8] sm:$0xf]
      %v247 = vld [vmem:[%s186 + $0xac] sm:$0xf]
      %v248 = vld [vmem:[%s186 + $0xb0] sm:$0xf]
      %v249 = vld [vmem:[%s186 + $0xb4] sm:$0xf]
      %v250 = vld [vmem:[%s186 + $0xb8] sm:$0xf]
      %v251 = vld [vmem:[%s186 + $0xbc] sm:$0xf]
      %v252 = vld [vmem:[%s186 + $0xc0] sm:$0xf]
      %v253 = vld [vmem:[%s186 + $0xc4] sm:$0xf]
      %v254 = vld [vmem:[%s186 + $0xc8] sm:$0xf]
      %v255 = vld [vmem:[%s186 + $0xcc] sm:$0xf]
      %v256 = vld [vmem:[%s186 + $0xd0] sm:$0xf]
      %v257 = vld [vmem:[%s186 + $0xd4] sm:$0xf]
      %v258 = vld [vmem:[%s186 + $0xd8] sm:$0xf]
      %v259 = vld [vmem:[%s186 + $0xdc] sm:$0xf]
      %v260 = vld [vmem:[%s186 + $0xe0] sm:$0xf]
      %v261 = vld [vmem:[%s186 + $0xe4] sm:$0xf]
      %v262 = vld [vmem:[%s186 + $0xe8] sm:$0xf]
      %v263 = vld [vmem:[%s186 + $0xec] sm:$0xf]
      %v264 = vld [vmem:[%s186 + $0xf0] sm:$0xf]
      %v265 = vld [vmem:[%s186 + $0xf4] sm:$0xf]
      %v266 = vld [vmem:[%s186 + $0xf8] sm:$0xf]
      %v267 = vld [vmem:[%s186 + $0xfc] sm:$0xf]
      %v268 = vld [vmem:[%s186 + $0x100] sm:$0xf]
      %v269 = vld [vmem:[%s186 + $0x104] sm:$0xf]
      %v270 = vld [vmem:[%s186 + $0x108] sm:$0xf]
      %v271 = vld [vmem:[%s186 + $0x10c] sm:$0xf]
      %v272 = vld [vmem:[%s186 + $0x110] sm:$0xf]
      %v273 = vld [vmem:[%s186 + $0x114] sm:$0xf]
      %v274 = vld [vmem:[%s186 + $0x118] sm:$0xf]
      %v275 = vld [vmem:[%s186 + $0x11c] sm:$0xf]
      %v276 = vld [vmem:[%s186 + $0x120] sm:$0xf]
      %v277 = vld [vmem:[%s186 + $0x124] sm:$0xf]
      %v278 = vld [vmem:[%s186 + $0x128] sm:$0xf]
      %v279 = vld [vmem:[%s186 + $0x12c] sm:$0xf]
      %v280 = vld [vmem:[%s186 + $0x130] sm:$0xf]
      %v281 = vld [vmem:[%s186 + $0x134] sm:$0xf]
      %v282 = vld [vmem:[%s186 + $0x138] sm:$0xf]
      %v283 = vld [vmem:[%s186 + $0x13c] sm:$0xf]
      %v284 = vld [vmem:[%s186 + $0x140] sm:$0xf]
      %v285 = vld [vmem:[%s186 + $0x144] sm:$0xf]
      %v286 = vld [vmem:[%s186 + $0x148] sm:$0xf]
      %v287 = vld [vmem:[%s186 + $0x14c] sm:$0xf]
      %v288 = vld [vmem:[%s186 + $0x150] sm:$0xf]
      %v289 = vld [vmem:[%s186 + $0x154] sm:$0xf]
      %v290 = vld [vmem:[%s186 + $0x158] sm:$0xf]
      %v291 = vld [vmem:[%s186 + $0x15c] sm:$0xf]
      %v292 = vld [vmem:[%s186 + $0x160] sm:$0xf]
      %v293 = vld [vmem:[%s186 + $0x164] sm:$0xf]
      %v294 = vld [vmem:[%s186 + $0x168] sm:$0xf]
      %v295 = vld [vmem:[%s186 + $0x16c] sm:$0xf]
      %v296 = vld [vmem:[%s186 + $0x170] sm:$0xf]
      %v297 = vld [vmem:[%s186 + $0x174] sm:$0xf]
      %v298 = vld [vmem:[%s186 + $0x178] sm:$0xf]
      %v299 = vld [vmem:[%s186 + $0x17c] sm:$0xf]
      %v300 = vld [vmem:[%s186 + $0x180] sm:$0xf]
      %v301 = vld [vmem:[%s186 + $0x184] sm:$0xf]
      %v302 = vld [vmem:[%s186 + $0x188] sm:$0xf]
      %v303 = vld [vmem:[%s186 + $0x18c] sm:$0xf]
      %v304 = vld [vmem:[%s186 + $0x190] sm:$0xf]
      %v305 = vld [vmem:[%s186 + $0x194] sm:$0xf]
      %v306 = vld [vmem:[%s186 + $0x198] sm:$0xf]
      %v307 = vld [vmem:[%s186 + $0x19c] sm:$0xf]
      %v308 = vld [vmem:[%s186 + $0x1a0] sm:$0xf]
      %v309 = vld [vmem:[%s186 + $0x1a4] sm:$0xf]
      %v310 = vld [vmem:[%s186 + $0x1a8] sm:$0xf]
      %v311 = vld [vmem:[%s186 + $0x1ac] sm:$0xf]
      %v312 = vld [vmem:[%s186 + $0x1b0] sm:$0xf]
      %v313 = vld [vmem:[%s186 + $0x1b4] sm:$0xf]
      %v314 = vld [vmem:[%s186 + $0x1b8] sm:$0xf]
      %v315 = vld [vmem:[%s186 + $0x1bc] sm:$0xf]
      %v316 = vld [vmem:[%s186 + $0x1c0] sm:$0xf]
      %v317 = vld [vmem:[%s186 + $0x1c4] sm:$0xf]
      %v318 = vld [vmem:[%s186 + $0x1c8] sm:$0xf]
      %v319 = vld [vmem:[%s186 + $0x1cc] sm:$0xf]
      %v320 = vld [vmem:[%s186 + $0x1d0] sm:$0xf]
      %v321 = vld [vmem:[%s186 + $0x1d4] sm:$0xf]
      %v322 = vld [vmem:[%s186 + $0x1d8] sm:$0xf]
      %v323 = vld [vmem:[%s186 + $0x1dc] sm:$0xf]
      %v324 = vld [vmem:[%s186 + $0x1e0] sm:$0xf]
      %v325 = vld [vmem:[%s186 + $0x1e4] sm:$0xf]
      %v326 = vld [vmem:[%s186 + $0x1e8] sm:$0xf]
      %v327 = vld [vmem:[%s186 + $0x1ec] sm:$0xf]
      %v328 = vld [vmem:[%s186 + $0x1f0] sm:$0xf]
      %v329 = vld [vmem:[%s186 + $0x1f4] sm:$0xf]
      %v330 = vld [vmem:[%s186 + $0x1f8] sm:$0xf]
      %v331 = vld [vmem:[%s186 + $0x1fc] sm:$0xf]
      %v332 = vld [vmem:[%s192] sm:$0xf]
      %v333 = vld [vmem:[%s192 + $0x4] sm:$0xf]
      %v334 = vld [vmem:[%s192 + $0x8] sm:$0xf]
      %v335 = vld [vmem:[%s192 + $0xc] sm:$0xf]
      %v336 = vld [vmem:[%s192 + $0x10] sm:$0xf]
      %v337 = vld [vmem:[%s192 + $0x14] sm:$0xf]
      %v338 = vld [vmem:[%s192 + $0x18] sm:$0xf]
      %v339 = vld [vmem:[%s192 + $0x1c] sm:$0xf]
      %v340 = vld [vmem:[%s192 + $0x20] sm:$0xf]
      %v341 = vld [vmem:[%s192 + $0x24] sm:$0xf]
      %v342 = vld [vmem:[%s192 + $0x28] sm:$0xf]
      %v343 = vld [vmem:[%s192 + $0x2c] sm:$0xf]
      %v344 = vld [vmem:[%s192 + $0x30] sm:$0xf]
      %v345 = vld [vmem:[%s192 + $0x34] sm:$0xf]
      %v346 = vld [vmem:[%s192 + $0x38] sm:$0xf]
      %v347 = vld [vmem:[%s192 + $0x3c] sm:$0xf]
      %v476 = vunpack.c.l.b16 %v204
      %v477 = vunpack.c.l.b16 %v205
      %v478 = vunpack.c.l.b16 %v206
      %v479 = vunpack.c.l.b16 %v207
      %v480 = vunpack.c.l.b16 %v208
      %v481 = vunpack.c.l.b16 %v209
      %v482 = vunpack.c.l.b16 %v210
      %v483 = vunpack.c.l.b16 %v211
      %v484 = vunpack.c.l.b16 %v212
      %v485 = vunpack.c.l.b16 %v213
      %v486 = vunpack.c.l.b16 %v214
      %v487 = vunpack.c.l.b16 %v215
      %v488 = vunpack.c.l.b16 %v216
      %v489 = vunpack.c.l.b16 %v217
      %v490 = vunpack.c.l.b16 %v218
      %v491 = vunpack.c.l.b16 %v219
      %v492 = vunpack.c.l.b16 %v220
      %v493 = vunpack.c.l.b16 %v221
      %v494 = vunpack.c.l.b16 %v222
      %v495 = vunpack.c.l.b16 %v223
      %v496 = vunpack.c.l.b16 %v224
      %v497 = vunpack.c.l.b16 %v225
      %v498 = vunpack.c.l.b16 %v226
      %v499 = vunpack.c.l.b16 %v227
      %v500 = vunpack.c.l.b16 %v228
      %v501 = vunpack.c.l.b16 %v229
      %v502 = vunpack.c.l.b16 %v230
      %v503 = vunpack.c.l.b16 %v231
      %v504 = vunpack.c.l.b16 %v232
      %v505 = vunpack.c.l.b16 %v233
      %v506 = vunpack.c.l.b16 %v234
      %v507 = vunpack.c.l.b16 %v235
      %v508 = vunpack.c.l.b16 %v236
      %v509 = vunpack.c.l.b16 %v237
      %v510 = vunpack.c.l.b16 %v238
      %v511 = vunpack.c.l.b16 %v239
      %v512 = vunpack.c.l.b16 %v240
      %v513 = vunpack.c.l.b16 %v241
      %v514 = vunpack.c.l.b16 %v242
      %v515 = vunpack.c.l.b16 %v243
      %v516 = vunpack.c.l.b16 %v244
      %v517 = vunpack.c.l.b16 %v245
      %v518 = vunpack.c.l.b16 %v246
      %v519 = vunpack.c.l.b16 %v247
      %v520 = vunpack.c.l.b16 %v248
      %v521 = vunpack.c.l.b16 %v249
      %v522 = vunpack.c.l.b16 %v250
      %v523 = vunpack.c.l.b16 %v251
      %v524 = vunpack.c.l.b16 %v252
      %v525 = vunpack.c.l.b16 %v253
      %v526 = vunpack.c.l.b16 %v254
      %v527 = vunpack.c.l.b16 %v255
      %v528 = vunpack.c.l.b16 %v256
      %v529 = vunpack.c.l.b16 %v257
      %v530 = vunpack.c.l.b16 %v258
      %v531 = vunpack.c.l.b16 %v259
      %v532 = vunpack.c.l.b16 %v260
      %v533 = vunpack.c.l.b16 %v261
      %v534 = vunpack.c.l.b16 %v262
      %v535 = vunpack.c.l.b16 %v263
      %v536 = vunpack.c.l.b16 %v264
      %v537 = vunpack.c.l.b16 %v265
      %v538 = vunpack.c.l.b16 %v266
      %v539 = vunpack.c.l.b16 %v267
      %v540 = vunpack.c.l.b16 %v268
      %v541 = vunpack.c.l.b16 %v269
      %v542 = vunpack.c.l.b16 %v270
      %v543 = vunpack.c.l.b16 %v271
      %v544 = vunpack.c.l.b16 %v272
      %v545 = vunpack.c.l.b16 %v273
      %v546 = vunpack.c.l.b16 %v274
      %v547 = vunpack.c.l.b16 %v275
      %v548 = vunpack.c.l.b16 %v276
      %v549 = vunpack.c.l.b16 %v277
      %v550 = vunpack.c.l.b16 %v278
      %v551 = vunpack.c.l.b16 %v279
      %v552 = vunpack.c.l.b16 %v280
      %v553 = vunpack.c.l.b16 %v281
      %v554 = vunpack.c.l.b16 %v282
      %v555 = vunpack.c.l.b16 %v283
      %v556 = vunpack.c.l.b16 %v284
      %v557 = vunpack.c.l.b16 %v285
      %v558 = vunpack.c.l.b16 %v286
      %v559 = vunpack.c.l.b16 %v287
      %v560 = vunpack.c.l.b16 %v288
      %v561 = vunpack.c.l.b16 %v289
      %v562 = vunpack.c.l.b16 %v290
      %v563 = vunpack.c.l.b16 %v291
      %v564 = vunpack.c.l.b16 %v292
      %v565 = vunpack.c.l.b16 %v293
      %v566 = vunpack.c.l.b16 %v294
      %v567 = vunpack.c.l.b16 %v295
      %v568 = vunpack.c.l.b16 %v296
      %v569 = vunpack.c.l.b16 %v297
      %v570 = vunpack.c.l.b16 %v298
      %v571 = vunpack.c.l.b16 %v299
      %v572 = vunpack.c.l.b16 %v300
      %v573 = vunpack.c.l.b16 %v301
      %v574 = vunpack.c.l.b16 %v302
      %v575 = vunpack.c.l.b16 %v303
      %v576 = vunpack.c.l.b16 %v304
      %v577 = vunpack.c.l.b16 %v305
      %v578 = vunpack.c.l.b16 %v306
      %v579 = vunpack.c.l.b16 %v307
      %v580 = vunpack.c.l.b16 %v308
      %v581 = vunpack.c.l.b16 %v309
      %v582 = vunpack.c.l.b16 %v310
      %v583 = vunpack.c.l.b16 %v311
      %v584 = vunpack.c.l.b16 %v312
      %v585 = vunpack.c.l.b16 %v313
      %v586 = vunpack.c.l.b16 %v314
      %v587 = vunpack.c.l.b16 %v315
      %v588 = vunpack.c.l.b16 %v316
      %v589 = vunpack.c.l.b16 %v317
      %v590 = vunpack.c.l.b16 %v318
      %v591 = vunpack.c.l.b16 %v319
      %v592 = vunpack.c.l.b16 %v320
      %v593 = vunpack.c.l.b16 %v321
      %v594 = vunpack.c.l.b16 %v322
      %v595 = vunpack.c.l.b16 %v323
      %v596 = vunpack.c.l.b16 %v324
      %v597 = vunpack.c.l.b16 %v325
      %v598 = vunpack.c.l.b16 %v326
      %v599 = vunpack.c.l.b16 %v327
      %v600 = vunpack.c.l.b16 %v328
      %v601 = vunpack.c.l.b16 %v329
      %v602 = vunpack.c.l.b16 %v330
      %v603 = vunpack.c.l.b16 %v331
      %v604 = vpack.c.b16 %v477, %v476
      %v605 = vpack.c.b16 %v479, %v478
      %v606 = vpack.c.b16 %v481, %v480
      %v607 = vpack.c.b16 %v483, %v482
      %v608 = vpack.c.b16 %v485, %v484
      %v609 = vpack.c.b16 %v487, %v486
      %v610 = vpack.c.b16 %v489, %v488
      %v611 = vpack.c.b16 %v491, %v490
      %v612 = vpack.c.b16 %v493, %v492
      %v613 = vpack.c.b16 %v495, %v494
      %v614 = vpack.c.b16 %v497, %v496
      %v615 = vpack.c.b16 %v499, %v498
      %v616 = vpack.c.b16 %v501, %v500
      %v617 = vpack.c.b16 %v503, %v502
      %v618 = vpack.c.b16 %v505, %v504
      %v619 = vpack.c.b16 %v507, %v506
      %v620 = vpack.c.b16 %v509, %v508
      %v621 = vpack.c.b16 %v511, %v510
      %v622 = vpack.c.b16 %v513, %v512
      %v623 = vpack.c.b16 %v515, %v514
      %v624 = vpack.c.b16 %v517, %v516
      %v625 = vpack.c.b16 %v519, %v518
      %v626 = vpack.c.b16 %v521, %v520
      %v627 = vpack.c.b16 %v523, %v522
      %v628 = vpack.c.b16 %v525, %v524
      %v629 = vpack.c.b16 %v527, %v526
      %v630 = vpack.c.b16 %v529, %v528
      %v631 = vpack.c.b16 %v531, %v530
      %v632 = vpack.c.b16 %v533, %v532
      %v633 = vpack.c.b16 %v535, %v534
      %v634 = vpack.c.b16 %v537, %v536
      %v635 = vpack.c.b16 %v539, %v538
      %v636 = vpack.c.b16 %v541, %v540
      %v637 = vpack.c.b16 %v543, %v542
      %v638 = vpack.c.b16 %v545, %v544
      %v639 = vpack.c.b16 %v547, %v546
      %v640 = vpack.c.b16 %v549, %v548
      %v641 = vpack.c.b16 %v551, %v550
      %v642 = vpack.c.b16 %v553, %v552
      %v643 = vpack.c.b16 %v555, %v554
      %v644 = vpack.c.b16 %v557, %v556
      %v645 = vpack.c.b16 %v559, %v558
      %v646 = vpack.c.b16 %v561, %v560
      %v647 = vpack.c.b16 %v563, %v562
      %v648 = vpack.c.b16 %v565, %v564
      %v649 = vpack.c.b16 %v567, %v566
      %v650 = vpack.c.b16 %v569, %v568
      %v651 = vpack.c.b16 %v571, %v570
      %v652 = vpack.c.b16 %v573, %v572
      %v653 = vpack.c.b16 %v575, %v574
      %v654 = vpack.c.b16 %v577, %v576
      %v655 = vpack.c.b16 %v579, %v578
      %v656 = vpack.c.b16 %v581, %v580
      %v657 = vpack.c.b16 %v583, %v582
      %v658 = vpack.c.b16 %v585, %v584
      %v659 = vpack.c.b16 %v587, %v586
      %v660 = vpack.c.b16 %v589, %v588
      %v661 = vpack.c.b16 %v591, %v590
      %v662 = vpack.c.b16 %v593, %v592
      %v663 = vpack.c.b16 %v595, %v594
      %v664 = vpack.c.b16 %v597, %v596
      %v665 = vpack.c.b16 %v599, %v598
      %v666 = vpack.c.b16 %v601, %v600
      %v667 = vpack.c.b16 %v603, %v602
      %v748 = vunpack.c.l.b16 %v332
      %v749 = vunpack.c.l.b16 %v333
      %v750 = vunpack.c.l.b16 %v334
      %v751 = vunpack.c.l.b16 %v335
      %v752 = vunpack.c.l.b16 %v336
      %v753 = vunpack.c.l.b16 %v337
      %v754 = vunpack.c.l.b16 %v338
      %v755 = vunpack.c.l.b16 %v339
      %v756 = vunpack.c.l.b16 %v340
      %v757 = vunpack.c.l.b16 %v341
      %v758 = vunpack.c.l.b16 %v342
      %v759 = vunpack.c.l.b16 %v343
      %v760 = vunpack.c.l.b16 %v344
      %v761 = vunpack.c.l.b16 %v345
      %v762 = vunpack.c.l.b16 %v346
      %v763 = vunpack.c.l.b16 %v347
      %v764 = vpack.c.b16 %v749, %v748
      %v765 = vpack.c.b16 %v751, %v750
      %v766 = vpack.c.b16 %v753, %v752
      %v767 = vpack.c.b16 %v755, %v754
      %v768 = vpack.c.b16 %v757, %v756
      %v769 = vpack.c.b16 %v759, %v758
      %v770 = vpack.c.b16 %v761, %v760
      %v771 = vpack.c.b16 %v763, %v762
      %780 = vmatprep.subr.bf16.mxu0 0
      %781 = vmatpush1.bf16.msra.mxu0 %v771
      %782 = vmatprep.subr.bf16.mxu0 0
      %783 = vmatpush1.bf16.msra.mxu0 %v770
      %784 = vmatprep.subr.bf16.mxu0 0
      %785 = vmatpush1.bf16.msra.mxu0 %v769
      %786 = vmatprep.subr.bf16.mxu0 0
      %787 = vmatpush1.bf16.msra.mxu0 %v768
      %788 = vmatprep.subr.bf16.mxu0 0
      %789 = vmatpush1.bf16.msra.mxu0 %v767
      %790 = vmatprep.subr.bf16.mxu0 0
      %791 = vmatpush1.bf16.msra.mxu0 %v766
      %792 = vmatprep.subr.bf16.mxu0 0
      %793 = vmatpush1.bf16.msra.mxu0 %v765
      %794 = vmatprep.subr.bf16.mxu0 0
      %795 = vmatpush1.bf16.msra.mxu0 %v764
      %796 = vmatprep.subr.bf16.mxu0 0
      %797 = vmatpush2.bf16.msra.mxu0 0
      %798 = vmatprep.subr.bf16.mxu0 0
      %799 = vmatpush2.bf16.msra.mxu0 0
      %800 = vmatprep.subr.bf16.mxu0 0
      %801 = vmatpush2.bf16.msra.mxu0 0
      %802 = vmatprep.subr.bf16.mxu0 0
      %803 = vmatpush2.bf16.msra.mxu0 0
      %804 = vmatprep.subr.bf16.mxu0 0
      %805 = vmatpush2.bf16.msra.mxu0 0
      %806 = vmatprep.subr.bf16.mxu0 0
      %807 = vmatpush2.bf16.msra.mxu0 0
      %808 = vmatprep.subr.bf16.mxu0 0
      %809 = vmatpush2.bf16.msra.mxu0 0
      %810 = vmatprep.subr.bf16.mxu0 0
      %811 = vmatpush2.bf16.msra.mxu0 0
      %812 = vmatprep.mubr.bf16.mxu0 0
      %813 = vmatmul.mubr.bf16.gmra.mxu0 %v604
      %v814 = vpop.f32.mrf.mxu0
      %v815 = vadd.f32 0.0, %v814
      %v816 = vpop.f32.mrf.mxu0
      %v817 = vpop.f32.mrf.mxu0
      %v818 = vadd.f32 0.0, %v817
      %v819 = vpop.f32.mrf.mxu0
      %820 = vmatprep.mubr.bf16.mxu0 0
      %821 = vmatmul.mubr.bf16.gmra.mxu0 %v605
      %v822 = vpop.f32.mrf.mxu0
      %v823 = vadd.f32 0.0, %v822
      %v824 = vpop.f32.mrf.mxu0
      %v825 = vpop.f32.mrf.mxu0
      %v826 = vadd.f32 0.0, %v825
      %v827 = vpop.f32.mrf.mxu0
      %828 = vmatprep.mubr.bf16.mxu0 0
      %829 = vmatmul.mubr.bf16.gmra.mxu0 %v606
      %v830 = vpop.f32.mrf.mxu0
      %v831 = vadd.f32 0.0, %v830
      %v832 = vpop.f32.mrf.mxu0
      %v833 = vpop.f32.mrf.mxu0
      %v834 = vadd.f32 0.0, %v833
      %v835 = vpop.f32.mrf.mxu0
      %836 = vmatprep.mubr.bf16.mxu0 0
      %837 = vmatmul.mubr.bf16.gmra.mxu0 %v607
      %v838 = vpop.f32.mrf.mxu0
      %v839 = vadd.f32 0.0, %v838
      %v840 = vpop.f32.mrf.mxu0
      %v841 = vpop.f32.mrf.mxu0
      %v842 = vadd.f32 0.0, %v841
      %v843 = vpop.f32.mrf.mxu0
      %844 = vmatprep.mubr.bf16.mxu0 0
      %845 = vmatmul.mubr.bf16.gmra.mxu0 %v608
      %v846 = vpop.f32.mrf.mxu0
      %v847 = vadd.f32 0.0, %v846
      %v848 = vpop.f32.mrf.mxu0
      %v849 = vpop.f32.mrf.mxu0
      %v850 = vadd.f32 0.0, %v849
      %v851 = vpop.f32.mrf.mxu0
      %852 = vmatprep.mubr.bf16.mxu0 0
      %853 = vmatmul.mubr.bf16.gmra.mxu0 %v609
      %v854 = vpop.f32.mrf.mxu0
      %v855 = vadd.f32 0.0, %v854
      %v856 = vpop.f32.mrf.mxu0
      %v857 = vpop.f32.mrf.mxu0
      %v858 = vadd.f32 0.0, %v857
      %v859 = vpop.f32.mrf.mxu0
      %860 = vmatprep.mubr.bf16.mxu0 0
      %861 = vmatmul.mubr.bf16.gmra.mxu0 %v610
      %v862 = vpop.f32.mrf.mxu0
      %v863 = vadd.f32 0.0, %v862
      %v864 = vpop.f32.mrf.mxu0
      %v865 = vpop.f32.mrf.mxu0
      %v866 = vadd.f32 0.0, %v865
      %v867 = vpop.f32.mrf.mxu0
      %868 = vmatprep.mubr.bf16.mxu0 0
      %869 = vmatmul.mubr.bf16.gmra.mxu0 %v611
      %v870 = vpop.f32.mrf.mxu0
      %v871 = vadd.f32 0.0, %v870
      %v872 = vpop.f32.mrf.mxu0
      %v873 = vpop.f32.mrf.mxu0
      %v874 = vadd.f32 0.0, %v873
      %v875 = vpop.f32.mrf.mxu0
      %876 = vmatprep.mubr.bf16.mxu0 0
      %877 = vmatmul.mubr.bf16.gmra.mxu0 %v612
      %v878 = vpop.f32.mrf.mxu0
      %v879 = vadd.f32 0.0, %v878
      %v880 = vpop.f32.mrf.mxu0
      %v881 = vpop.f32.mrf.mxu0
      %v882 = vadd.f32 0.0, %v881
      %v883 = vpop.f32.mrf.mxu0
      %884 = vmatprep.mubr.bf16.mxu0 0
      %885 = vmatmul.mubr.bf16.gmra.mxu0 %v613
      %v886 = vpop.f32.mrf.mxu0
      %v887 = vadd.f32 0.0, %v886
      %v888 = vpop.f32.mrf.mxu0
      %v889 = vpop.f32.mrf.mxu0
      %v890 = vadd.f32 0.0, %v889
      %v891 = vpop.f32.mrf.mxu0
      %892 = vmatprep.mubr.bf16.mxu0 0
      %893 = vmatmul.mubr.bf16.gmra.mxu0 %v614
      %v894 = vpop.f32.mrf.mxu0
      %v895 = vadd.f32 0.0, %v894
      %v896 = vpop.f32.mrf.mxu0
      %v897 = vpop.f32.mrf.mxu0
      %v898 = vadd.f32 0.0, %v897
      %v899 = vpop.f32.mrf.mxu0
      %900 = vmatprep.mubr.bf16.mxu0 0
      %901 = vmatmul.mubr.bf16.gmra.mxu0 %v615
      %v902 = vpop.f32.mrf.mxu0
      %v903 = vadd.f32 0.0, %v902
      %v904 = vpop.f32.mrf.mxu0
      %v905 = vpop.f32.mrf.mxu0
      %v906 = vadd.f32 0.0, %v905
      %v907 = vpop.f32.mrf.mxu0
      %908 = vmatprep.mubr.bf16.mxu0 0
      %909 = vmatmul.mubr.bf16.gmra.mxu0 %v616
      %v910 = vpop.f32.mrf.mxu0
      %v911 = vadd.f32 0.0, %v910
      %v912 = vpop.f32.mrf.mxu0
      %v913 = vpop.f32.mrf.mxu0
      %v914 = vadd.f32 0.0, %v913
      %v915 = vpop.f32.mrf.mxu0
      %916 = vmatprep.mubr.bf16.mxu0 0
      %917 = vmatmul.mubr.bf16.gmra.mxu0 %v617
      %v918 = vpop.f32.mrf.mxu0
      %v919 = vadd.f32 0.0, %v918
      %v920 = vpop.f32.mrf.mxu0
      %v921 = vpop.f32.mrf.mxu0
      %v922 = vadd.f32 0.0, %v921
      %v923 = vpop.f32.mrf.mxu0
      %924 = vmatprep.mubr.bf16.mxu0 0
      %925 = vmatmul.mubr.bf16.gmra.mxu0 %v618
      %v926 = vpop.f32.mrf.mxu0
      %v927 = vadd.f32 0.0, %v926
      %v928 = vpop.f32.mrf.mxu0
      %v929 = vpop.f32.mrf.mxu0
      %v930 = vadd.f32 0.0, %v929
      %v931 = vpop.f32.mrf.mxu0
      %932 = vmatprep.mubr.bf16.mxu0 0
      %933 = vmatmul.mubr.bf16.gmra.mxu0 %v619
      %v934 = vpop.f32.mrf.mxu0
      %v935 = vadd.f32 0.0, %v934
      %v936 = vpop.f32.mrf.mxu0
      %v937 = vpop.f32.mrf.mxu0
      %v938 = vadd.f32 0.0, %v937
      %v939 = vpop.f32.mrf.mxu0
      %940 = vmatprep.mubr.bf16.mxu0 0
      %941 = vmatmul.mubr.bf16.gmra.mxu0 %v620
      %v942 = vpop.f32.mrf.mxu0
      %v943 = vadd.f32 0.0, %v942
      %v944 = vpop.f32.mrf.mxu0
      %v945 = vpop.f32.mrf.mxu0
      %v946 = vadd.f32 0.0, %v945
      %v947 = vpop.f32.mrf.mxu0
      %948 = vmatprep.mubr.bf16.mxu0 0
      %949 = vmatmul.mubr.bf16.gmra.mxu0 %v621
      %v950 = vpop.f32.mrf.mxu0
      %v951 = vadd.f32 0.0, %v950
      %v952 = vpop.f32.mrf.mxu0
      %v953 = vpop.f32.mrf.mxu0
      %v954 = vadd.f32 0.0, %v953
      %v955 = vpop.f32.mrf.mxu0
      %956 = vmatprep.mubr.bf16.mxu0 0
      %957 = vmatmul.mubr.bf16.gmra.mxu0 %v622
      %v958 = vpop.f32.mrf.mxu0
      %v959 = vadd.f32 0.0, %v958
      %v960 = vpop.f32.mrf.mxu0
      %v961 = vpop.f32.mrf.mxu0
      %v962 = vadd.f32 0.0, %v961
      %v963 = vpop.f32.mrf.mxu0
      %964 = vmatprep.mubr.bf16.mxu0 0
      %965 = vmatmul.mubr.bf16.gmra.mxu0 %v623
      %v966 = vpop.f32.mrf.mxu0
      %v967 = vadd.f32 0.0, %v966
      %v968 = vpop.f32.mrf.mxu0
      %v969 = vpop.f32.mrf.mxu0
      %v970 = vadd.f32 0.0, %v969
      %v971 = vpop.f32.mrf.mxu0
      %972 = vmatprep.mubr.bf16.mxu0 0
      %973 = vmatmul.mubr.bf16.gmra.mxu0 %v624
      %v974 = vpop.f32.mrf.mxu0
      %v975 = vadd.f32 0.0, %v974
      %v976 = vpop.f32.mrf.mxu0
      %v977 = vpop.f32.mrf.mxu0
      %v978 = vadd.f32 0.0, %v977
      %v979 = vpop.f32.mrf.mxu0
      %980 = vmatprep.mubr.bf16.mxu0 0
      %981 = vmatmul.mubr.bf16.gmra.mxu0 %v625
      %v982 = vpop.f32.mrf.mxu0
      %v983 = vadd.f32 0.0, %v982
      %v984 = vpop.f32.mrf.mxu0
      %v985 = vpop.f32.mrf.mxu0
      %v986 = vadd.f32 0.0, %v985
      %v987 = vpop.f32.mrf.mxu0
      %988 = vmatprep.mubr.bf16.mxu0 0
      %989 = vmatmul.mubr.bf16.gmra.mxu0 %v626
      %v990 = vpop.f32.mrf.mxu0
      %v991 = vadd.f32 0.0, %v990
      %v992 = vpop.f32.mrf.mxu0
      %v993 = vpop.f32.mrf.mxu0
      %v994 = vadd.f32 0.0, %v993
      %v995 = vpop.f32.mrf.mxu0
      %996 = vmatprep.mubr.bf16.mxu0 0
      %997 = vmatmul.mubr.bf16.gmra.mxu0 %v627
      %v998 = vpop.f32.mrf.mxu0
      %v999 = vadd.f32 0.0, %v998
      %v1000 = vpop.f32.mrf.mxu0
      %v1001 = vpop.f32.mrf.mxu0
      %v1002 = vadd.f32 0.0, %v1001
      %v1003 = vpop.f32.mrf.mxu0
      %1004 = vmatprep.mubr.bf16.mxu0 0
      %1005 = vmatmul.mubr.bf16.gmra.mxu0 %v628
      %v1006 = vpop.f32.mrf.mxu0
      %v1007 = vadd.f32 0.0, %v1006
      %v1008 = vpop.f32.mrf.mxu0
      %v1009 = vpop.f32.mrf.mxu0
      %v1010 = vadd.f32 0.0, %v1009
      %v1011 = vpop.f32.mrf.mxu0
      %1012 = vmatprep.mubr.bf16.mxu0 0
      %1013 = vmatmul.mubr.bf16.gmra.mxu0 %v629
      %v1014 = vpop.f32.mrf.mxu0
      %v1015 = vadd.f32 0.0, %v1014
      %v1016 = vpop.f32.mrf.mxu0
      %v1017 = vpop.f32.mrf.mxu0
      %v1018 = vadd.f32 0.0, %v1017
      %v1019 = vpop.f32.mrf.mxu0
      %1020 = vmatprep.mubr.bf16.mxu0 0
      %1021 = vmatmul.mubr.bf16.gmra.mxu0 %v630
      %v1022 = vpop.f32.mrf.mxu0
      %v1023 = vadd.f32 0.0, %v1022
      %v1024 = vpop.f32.mrf.mxu0
      %v1025 = vpop.f32.mrf.mxu0
      %v1026 = vadd.f32 0.0, %v1025
      %v1027 = vpop.f32.mrf.mxu0
      %1028 = vmatprep.mubr.bf16.mxu0 0
      %1029 = vmatmul.mubr.bf16.gmra.mxu0 %v631
      %v1030 = vpop.f32.mrf.mxu0
      %v1031 = vadd.f32 0.0, %v1030
      %v1032 = vpop.f32.mrf.mxu0
      %v1033 = vpop.f32.mrf.mxu0
      %v1034 = vadd.f32 0.0, %v1033
      %v1035 = vpop.f32.mrf.mxu0
      %1036 = vmatprep.mubr.bf16.mxu0 0
      %1037 = vmatmul.mubr.bf16.gmra.mxu0 %v632
      %v1038 = vpop.f32.mrf.mxu0
      %v1039 = vadd.f32 0.0, %v1038
      %v1040 = vpop.f32.mrf.mxu0
      %v1041 = vpop.f32.mrf.mxu0
      %v1042 = vadd.f32 0.0, %v1041
      %v1043 = vpop.f32.mrf.mxu0
      %1044 = vmatprep.mubr.bf16.mxu0 0
      %1045 = vmatmul.mubr.bf16.gmra.mxu0 %v633
      %v1046 = vpop.f32.mrf.mxu0
      %v1047 = vadd.f32 0.0, %v1046
      %v1048 = vpop.f32.mrf.mxu0
      %v1049 = vpop.f32.mrf.mxu0
      %v1050 = vadd.f32 0.0, %v1049
      %v1051 = vpop.f32.mrf.mxu0
      %1052 = vmatprep.mubr.bf16.mxu0 0
      %1053 = vmatmul.mubr.bf16.gmra.mxu0 %v634
      %v1054 = vpop.f32.mrf.mxu0
      %v1055 = vadd.f32 0.0, %v1054
      %v1056 = vpop.f32.mrf.mxu0
      %v1057 = vpop.f32.mrf.mxu0
      %v1058 = vadd.f32 0.0, %v1057
      %v1059 = vpop.f32.mrf.mxu0
      %1060 = vmatprep.mubr.bf16.mxu0 0
      %1061 = vmatmul.mubr.bf16.gmra.mxu0 %v635
      %v1062 = vpop.f32.mrf.mxu0
      %v1063 = vadd.f32 0.0, %v1062
      %v1064 = vpop.f32.mrf.mxu0
      %v1065 = vpop.f32.mrf.mxu0
      %v1066 = vadd.f32 0.0, %v1065
      %v1067 = vpop.f32.mrf.mxu0
      %1068 = vmatprep.mubr.bf16.mxu0 0
      %1069 = vmatmul.mubr.bf16.gmra.mxu0 %v636
      %v1070 = vpop.f32.mrf.mxu0
      %v1071 = vadd.f32 0.0, %v1070
      %v1072 = vpop.f32.mrf.mxu0
      %v1073 = vpop.f32.mrf.mxu0
      %v1074 = vadd.f32 0.0, %v1073
      %v1075 = vpop.f32.mrf.mxu0
      %1076 = vmatprep.mubr.bf16.mxu0 0
      %1077 = vmatmul.mubr.bf16.gmra.mxu0 %v637
      %v1078 = vpop.f32.mrf.mxu0
      %v1079 = vadd.f32 0.0, %v1078
      %v1080 = vpop.f32.mrf.mxu0
      %v1081 = vpop.f32.mrf.mxu0
      %v1082 = vadd.f32 0.0, %v1081
      %v1083 = vpop.f32.mrf.mxu0
      %1084 = vmatprep.mubr.bf16.mxu0 0
      %1085 = vmatmul.mubr.bf16.gmra.mxu0 %v638
      %v1086 = vpop.f32.mrf.mxu0
      %v1087 = vadd.f32 0.0, %v1086
      %v1088 = vpop.f32.mrf.mxu0
      %v1089 = vpop.f32.mrf.mxu0
      %v1090 = vadd.f32 0.0, %v1089
      %v1091 = vpop.f32.mrf.mxu0
      %1092 = vmatprep.mubr.bf16.mxu0 0
      %1093 = vmatmul.mubr.bf16.gmra.mxu0 %v639
      %v1094 = vpop.f32.mrf.mxu0
      %v1095 = vadd.f32 0.0, %v1094
      %v1096 = vpop.f32.mrf.mxu0
      %v1097 = vpop.f32.mrf.mxu0
      %v1098 = vadd.f32 0.0, %v1097
      %v1099 = vpop.f32.mrf.mxu0
      %1100 = vmatprep.mubr.bf16.mxu0 0
      %1101 = vmatmul.mubr.bf16.gmra.mxu0 %v640
      %v1102 = vpop.f32.mrf.mxu0
      %v1103 = vadd.f32 0.0, %v1102
      %v1104 = vpop.f32.mrf.mxu0
      %v1105 = vpop.f32.mrf.mxu0
      %v1106 = vadd.f32 0.0, %v1105
      %v1107 = vpop.f32.mrf.mxu0
      %1108 = vmatprep.mubr.bf16.mxu0 0
      %1109 = vmatmul.mubr.bf16.gmra.mxu0 %v641
      %v1110 = vpop.f32.mrf.mxu0
      %v1111 = vadd.f32 0.0, %v1110
      %v1112 = vpop.f32.mrf.mxu0
      %v1113 = vpop.f32.mrf.mxu0
      %v1114 = vadd.f32 0.0, %v1113
      %v1115 = vpop.f32.mrf.mxu0
      %1116 = vmatprep.mubr.bf16.mxu0 0
      %1117 = vmatmul.mubr.bf16.gmra.mxu0 %v642
      %v1118 = vpop.f32.mrf.mxu0
      %v1119 = vadd.f32 0.0, %v1118
      %v1120 = vpop.f32.mrf.mxu0
      %v1121 = vpop.f32.mrf.mxu0
      %v1122 = vadd.f32 0.0, %v1121
      %v1123 = vpop.f32.mrf.mxu0
      %1124 = vmatprep.mubr.bf16.mxu0 0
      %1125 = vmatmul.mubr.bf16.gmra.mxu0 %v643
      %v1126 = vpop.f32.mrf.mxu0
      %v1127 = vadd.f32 0.0, %v1126
      %v1128 = vpop.f32.mrf.mxu0
      %v1129 = vpop.f32.mrf.mxu0
      %v1130 = vadd.f32 0.0, %v1129
      %v1131 = vpop.f32.mrf.mxu0
      %1132 = vmatprep.mubr.bf16.mxu0 0
      %1133 = vmatmul.mubr.bf16.gmra.mxu0 %v644
      %v1134 = vpop.f32.mrf.mxu0
      %v1135 = vadd.f32 0.0, %v1134
      %v1136 = vpop.f32.mrf.mxu0
      %v1137 = vpop.f32.mrf.mxu0
      %v1138 = vadd.f32 0.0, %v1137
      %v1139 = vpop.f32.mrf.mxu0
      %1140 = vmatprep.mubr.bf16.mxu0 0
      %1141 = vmatmul.mubr.bf16.gmra.mxu0 %v645
      %v1142 = vpop.f32.mrf.mxu0
      %v1143 = vadd.f32 0.0, %v1142
      %v1144 = vpop.f32.mrf.mxu0
      %v1145 = vpop.f32.mrf.mxu0
      %v1146 = vadd.f32 0.0, %v1145
      %v1147 = vpop.f32.mrf.mxu0
      %1148 = vmatprep.mubr.bf16.mxu0 0
      %1149 = vmatmul.mubr.bf16.gmra.mxu0 %v646
      %v1150 = vpop.f32.mrf.mxu0
      %v1151 = vadd.f32 0.0, %v1150
      %v1152 = vpop.f32.mrf.mxu0
      %v1153 = vpop.f32.mrf.mxu0
      %v1154 = vadd.f32 0.0, %v1153
      %v1155 = vpop.f32.mrf.mxu0
      %1156 = vmatprep.mubr.bf16.mxu0 0
      %1157 = vmatmul.mubr.bf16.gmra.mxu0 %v647
      %v1158 = vpop.f32.mrf.mxu0
      %v1159 = vadd.f32 0.0, %v1158
      %v1160 = vpop.f32.mrf.mxu0
      %v1161 = vpop.f32.mrf.mxu0
      %v1162 = vadd.f32 0.0, %v1161
      %v1163 = vpop.f32.mrf.mxu0
      %1164 = vmatprep.mubr.bf16.mxu0 0
      %1165 = vmatmul.mubr.bf16.gmra.mxu0 %v648
      %v1166 = vpop.f32.mrf.mxu0
      %v1167 = vadd.f32 0.0, %v1166
      %v1168 = vpop.f32.mrf.mxu0
      %v1169 = vpop.f32.mrf.mxu0
      %v1170 = vadd.f32 0.0, %v1169
      %v1171 = vpop.f32.mrf.mxu0
      %1172 = vmatprep.mubr.bf16.mxu0 0
      %1173 = vmatmul.mubr.bf16.gmra.mxu0 %v649
      %v1174 = vpop.f32.mrf.mxu0
      %v1175 = vadd.f32 0.0, %v1174
      %v1176 = vpop.f32.mrf.mxu0
      %v1177 = vpop.f32.mrf.mxu0
      %v1178 = vadd.f32 0.0, %v1177
      %v1179 = vpop.f32.mrf.mxu0
      %1180 = vmatprep.mubr.bf16.mxu0 0
      %1181 = vmatmul.mubr.bf16.gmra.mxu0 %v650
      %v1182 = vpop.f32.mrf.mxu0
      %v1183 = vadd.f32 0.0, %v1182
      %v1184 = vpop.f32.mrf.mxu0
      %v1185 = vpop.f32.mrf.mxu0
      %v1186 = vadd.f32 0.0, %v1185
      %v1187 = vpop.f32.mrf.mxu0
      %1188 = vmatprep.mubr.bf16.mxu0 0
      %1189 = vmatmul.mubr.bf16.gmra.mxu0 %v651
      %v1190 = vpop.f32.mrf.mxu0
      %v1191 = vadd.f32 0.0, %v1190
      %v1192 = vpop.f32.mrf.mxu0
      %v1193 = vpop.f32.mrf.mxu0
      %v1194 = vadd.f32 0.0, %v1193
      %v1195 = vpop.f32.mrf.mxu0
      %1196 = vmatprep.mubr.bf16.mxu0 0
      %1197 = vmatmul.mubr.bf16.gmra.mxu0 %v652
      %v1198 = vpop.f32.mrf.mxu0
      %v1199 = vadd.f32 0.0, %v1198
      %v1200 = vpop.f32.mrf.mxu0
      %v1201 = vpop.f32.mrf.mxu0
      %v1202 = vadd.f32 0.0, %v1201
      %v1203 = vpop.f32.mrf.mxu0
      %1204 = vmatprep.mubr.bf16.mxu0 0
      %1205 = vmatmul.mubr.bf16.gmra.mxu0 %v653
      %v1206 = vpop.f32.mrf.mxu0
      %v1207 = vadd.f32 0.0, %v1206
      %v1208 = vpop.f32.mrf.mxu0
      %v1209 = vpop.f32.mrf.mxu0
      %v1210 = vadd.f32 0.0, %v1209
      %v1211 = vpop.f32.mrf.mxu0
      %1212 = vmatprep.mubr.bf16.mxu0 0
      %1213 = vmatmul.mubr.bf16.gmra.mxu0 %v654
      %v1214 = vpop.f32.mrf.mxu0
      %v1215 = vadd.f32 0.0, %v1214
      %v1216 = vpop.f32.mrf.mxu0
      %v1217 = vpop.f32.mrf.mxu0
      %v1218 = vadd.f32 0.0, %v1217
      %v1219 = vpop.f32.mrf.mxu0
      %1220 = vmatprep.mubr.bf16.mxu0 0
      %1221 = vmatmul.mubr.bf16.gmra.mxu0 %v655
      %v1222 = vpop.f32.mrf.mxu0
      %v1223 = vadd.f32 0.0, %v1222
      %v1224 = vpop.f32.mrf.mxu0
      %v1225 = vpop.f32.mrf.mxu0
      %v1226 = vadd.f32 0.0, %v1225
      %v1227 = vpop.f32.mrf.mxu0
      %1228 = vmatprep.mubr.bf16.mxu0 0
      %1229 = vmatmul.mubr.bf16.gmra.mxu0 %v656
      %v1230 = vpop.f32.mrf.mxu0
      %v1231 = vadd.f32 0.0, %v1230
      %v1232 = vpop.f32.mrf.mxu0
      %v1233 = vpop.f32.mrf.mxu0
      %v1234 = vadd.f32 0.0, %v1233
      %v1235 = vpop.f32.mrf.mxu0
      %1236 = vmatprep.mubr.bf16.mxu0 0
      %1237 = vmatmul.mubr.bf16.gmra.mxu0 %v657
      %v1238 = vpop.f32.mrf.mxu0
      %v1239 = vadd.f32 0.0, %v1238
      %v1240 = vpop.f32.mrf.mxu0
      %v1241 = vpop.f32.mrf.mxu0
      %v1242 = vadd.f32 0.0, %v1241
      %v1243 = vpop.f32.mrf.mxu0
      %1244 = vmatprep.mubr.bf16.mxu0 0
      %1245 = vmatmul.mubr.bf16.gmra.mxu0 %v658
      %v1246 = vpop.f32.mrf.mxu0
      %v1247 = vadd.f32 0.0, %v1246
      %v1248 = vpop.f32.mrf.mxu0
      %v1249 = vpop.f32.mrf.mxu0
      %v1250 = vadd.f32 0.0, %v1249
      %v1251 = vpop.f32.mrf.mxu0
      %1252 = vmatprep.mubr.bf16.mxu0 0
      %1253 = vmatmul.mubr.bf16.gmra.mxu0 %v659
      %v1254 = vpop.f32.mrf.mxu0
      %v1255 = vadd.f32 0.0, %v1254
      %v1256 = vpop.f32.mrf.mxu0
      %v1257 = vpop.f32.mrf.mxu0
      %v1258 = vadd.f32 0.0, %v1257
      %v1259 = vpop.f32.mrf.mxu0
      %1260 = vmatprep.mubr.bf16.mxu0 0
      %1261 = vmatmul.mubr.bf16.gmra.mxu0 %v660
      %v1262 = vpop.f32.mrf.mxu0
      %v1263 = vadd.f32 0.0, %v1262
      %v1264 = vpop.f32.mrf.mxu0
      %v1265 = vpop.f32.mrf.mxu0
      %v1266 = vadd.f32 0.0, %v1265
      %v1267 = vpop.f32.mrf.mxu0
      %1268 = vmatprep.mubr.bf16.mxu0 0
      %1269 = vmatmul.mubr.bf16.gmra.mxu0 %v661
      %v1270 = vpop.f32.mrf.mxu0
      %v1271 = vadd.f32 0.0, %v1270
      %v1272 = vpop.f32.mrf.mxu0
      %v1273 = vpop.f32.mrf.mxu0
      %v1274 = vadd.f32 0.0, %v1273
      %v1275 = vpop.f32.mrf.mxu0
      %1276 = vmatprep.mubr.bf16.mxu0 0
      %1277 = vmatmul.mubr.bf16.gmra.mxu0 %v662
      %v1278 = vpop.f32.mrf.mxu0
      %v1279 = vadd.f32 0.0, %v1278
      %v1280 = vpop.f32.mrf.mxu0
      %v1281 = vpop.f32.mrf.mxu0
      %v1282 = vadd.f32 0.0, %v1281
      %v1283 = vpop.f32.mrf.mxu0
      %1284 = vmatprep.mubr.bf16.mxu0 0
      %1285 = vmatmul.mubr.bf16.gmra.mxu0 %v663
      %v1286 = vpop.f32.mrf.mxu0
      %v1287 = vadd.f32 0.0, %v1286
      %v1288 = vpop.f32.mrf.mxu0
      %v1289 = vpop.f32.mrf.mxu0
      %v1290 = vadd.f32 0.0, %v1289
      %v1291 = vpop.f32.mrf.mxu0
      %1292 = vmatprep.mubr.bf16.mxu0 0
      %1293 = vmatmul.mubr.bf16.gmra.mxu0 %v664
      %v1294 = vpop.f32.mrf.mxu0
      %v1295 = vadd.f32 0.0, %v1294
      %v1296 = vpop.f32.mrf.mxu0
      %v1297 = vpop.f32.mrf.mxu0
      %v1298 = vadd.f32 0.0, %v1297
      %v1299 = vpop.f32.mrf.mxu0
      %1300 = vmatprep.mubr.bf16.mxu0 0
      %1301 = vmatmul.mubr.bf16.gmra.mxu0 %v665
      %v1302 = vpop.f32.mrf.mxu0
      %v1303 = vadd.f32 0.0, %v1302
      %v1304 = vpop.f32.mrf.mxu0
      %v1305 = vpop.f32.mrf.mxu0
      %v1306 = vadd.f32 0.0, %v1305
      %v1307 = vpop.f32.mrf.mxu0
      %1308 = vmatprep.mubr.bf16.mxu0 0
      %1309 = vmatmul.mubr.bf16.gmra.mxu0 %v666
      %v1310 = vpop.f32.mrf.mxu0
      %v1311 = vadd.f32 0.0, %v1310
      %v1312 = vpop.f32.mrf.mxu0
      %v1313 = vpop.f32.mrf.mxu0
      %v1314 = vadd.f32 0.0, %v1313
      %v1315 = vpop.f32.mrf.mxu0
      %1316 = vmatprep.mubr.bf16.mxu0 0
      %1317 = vmatmul.mubr.bf16.gmra.mxu0 %v667
      %v1318 = vpop.f32.mrf.mxu0
      %v1319 = vadd.f32 0.0, %v1318
      %v1320 = vpop.f32.mrf.mxu0
      %v1321 = vpop.f32.mrf.mxu0
      %v1322 = vadd.f32 0.0, %v1321
      %v1323 = vpop.f32.mrf.mxu0
      %1324 = vdwg.mxu0
      %v1325 = vtanh.pop %v815
      %v1326 = vtanh.pop %v818
      %v1327 = vtanh.pop %v823
      %v1328 = vtanh.pop %v826
      %v1329 = vtanh.pop %v831
      %v1330 = vtanh.pop %v834
      %v1331 = vtanh.pop %v839
      %v1332 = vtanh.pop %v842
      %v1333 = vtanh.pop %v847
      %v1334 = vtanh.pop %v850
      %v1335 = vtanh.pop %v855
      %v1336 = vtanh.pop %v858
      %v1337 = vtanh.pop %v863
      %v1338 = vtanh.pop %v866
      %v1339 = vtanh.pop %v871
      %v1340 = vtanh.pop %v874
      %v1341 = vtanh.pop %v879
      %v1342 = vtanh.pop %v882
      %v1343 = vtanh.pop %v887
      %v1344 = vtanh.pop %v890
      %v1345 = vtanh.pop %v895
      %v1346 = vtanh.pop %v898
      %v1347 = vtanh.pop %v903
      %v1348 = vtanh.pop %v906
      %v1349 = vtanh.pop %v911
      %v1350 = vtanh.pop %v914
      %v1351 = vtanh.pop %v919
      %v1352 = vtanh.pop %v922
      %v1353 = vtanh.pop %v927
      %v1354 = vtanh.pop %v930
      %v1355 = vtanh.pop %v935
      %v1356 = vtanh.pop %v938
      %v1357 = vtanh.pop %v943
      %v1358 = vtanh.pop %v946
      %v1359 = vtanh.pop %v951
      %v1360 = vtanh.pop %v954
      %v1361 = vtanh.pop %v959
      %v1362 = vtanh.pop %v962
      %v1363 = vtanh.pop %v967
      %v1364 = vtanh.pop %v970
      %v1365 = vtanh.pop %v975
      %v1366 = vtanh.pop %v978
      %v1367 = vtanh.pop %v983
      %v1368 = vtanh.pop %v986
      %v1369 = vtanh.pop %v991
      %v1370 = vtanh.pop %v994
      %v1371 = vtanh.pop %v999
      %v1372 = vtanh.pop %v1002
      %v1373 = vtanh.pop %v1007
      %v1374 = vtanh.pop %v1010
      %v1375 = vtanh.pop %v1015
      %v1376 = vtanh.pop %v1018
      %v1377 = vtanh.pop %v1023
      %v1378 = vtanh.pop %v1026
      %v1379 = vtanh.pop %v1031
      %v1380 = vtanh.pop %v1034
      %v1381 = vtanh.pop %v1039
      %v1382 = vtanh.pop %v1042
      %v1383 = vtanh.pop %v1047
      %v1384 = vtanh.pop %v1050
      %v1385 = vtanh.pop %v1055
      %v1386 = vtanh.pop %v1058
      %v1387 = vtanh.pop %v1063
      %v1388 = vtanh.pop %v1066
      %v1389 = vtanh.pop %v1071
      %v1390 = vtanh.pop %v1074
      %v1391 = vtanh.pop %v1079
      %v1392 = vtanh.pop %v1082
      %v1393 = vtanh.pop %v1087
      %v1394 = vtanh.pop %v1090
      %v1395 = vtanh.pop %v1095
      %v1396 = vtanh.pop %v1098
      %v1397 = vtanh.pop %v1103
      %v1398 = vtanh.pop %v1106
      %v1399 = vtanh.pop %v1111
      %v1400 = vtanh.pop %v1114
      %v1401 = vtanh.pop %v1119
      %v1402 = vtanh.pop %v1122
      %v1403 = vtanh.pop %v1127
      %v1404 = vtanh.pop %v1130
      %v1405 = vtanh.pop %v1135
      %v1406 = vtanh.pop %v1138
      %v1407 = vtanh.pop %v1143
      %v1408 = vtanh.pop %v1146
      %v1409 = vtanh.pop %v1151
      %v1410 = vtanh.pop %v1154
      %v1411 = vtanh.pop %v1159
      %v1412 = vtanh.pop %v1162
      %v1413 = vtanh.pop %v1167
      %v1414 = vtanh.pop %v1170
      %v1415 = vtanh.pop %v1175
      %v1416 = vtanh.pop %v1178
      %v1417 = vtanh.pop %v1183
      %v1418 = vtanh.pop %v1186
      %v1419 = vtanh.pop %v1191
      %v1420 = vtanh.pop %v1194
      %v1421 = vtanh.pop %v1199
      %v1422 = vtanh.pop %v1202
      %v1423 = vtanh.pop %v1207
      %v1424 = vtanh.pop %v1210
      %v1425 = vtanh.pop %v1215
      %v1426 = vtanh.pop %v1218
      %v1427 = vtanh.pop %v1223
      %v1428 = vtanh.pop %v1226
      %v1429 = vtanh.pop %v1231
      %v1430 = vtanh.pop %v1234
      %v1431 = vtanh.pop %v1239
      %v1432 = vtanh.pop %v1242
      %v1433 = vtanh.pop %v1247
      %v1434 = vtanh.pop %v1250
      %v1435 = vtanh.pop %v1255
      %v1436 = vtanh.pop %v1258
      %v1437 = vtanh.pop %v1263
      %v1438 = vtanh.pop %v1266
      %v1439 = vtanh.pop %v1271
      %v1440 = vtanh.pop %v1274
      %v1441 = vtanh.pop %v1279
      %v1442 = vtanh.pop %v1282
      %v1443 = vtanh.pop %v1287
      %v1444 = vtanh.pop %v1290
      %v1445 = vtanh.pop %v1295
      %v1446 = vtanh.pop %v1298
      %v1447 = vtanh.pop %v1303
      %v1448 = vtanh.pop %v1306
      %v1449 = vtanh.pop %v1311
      %v1450 = vtanh.pop %v1314
      %v1451 = vtanh.pop %v1319
      %v1452 = vtanh.pop %v1322
      %1453 = vst [vmem:[%s201] sm:$0xff] %v1325
      %1454 = vst [vmem:[%s201 + $0x8] sm:$0xff] %v1326
      %1455 = vst [vmem:[%s201 + $0x10] sm:$0xff] %v1327
      %1456 = vst [vmem:[%s201 + $0x18] sm:$0xff] %v1328
      %1457 = vst [vmem:[%s201 + $0x20] sm:$0xff] %v1329
      %1458 = vst [vmem:[%s201 + $0x28] sm:$0xff] %v1330
      %1459 = vst [vmem:[%s201 + $0x30] sm:$0xff] %v1331
      %1460 = vst [vmem:[%s201 + $0x38] sm:$0xff] %v1332
      %1461 = vst [vmem:[%s201 + $0x40] sm:$0xff] %v1333
      %1462 = vst [vmem:[%s201 + $0x48] sm:$0xff] %v1334
      %1463 = vst [vmem:[%s201 + $0x50] sm:$0xff] %v1335
      %1464 = vst [vmem:[%s201 + $0x58] sm:$0xff] %v1336
      %1465 = vst [vmem:[%s201 + $0x60] sm:$0xff] %v1337
      %1466 = vst [vmem:[%s201 + $0x68] sm:$0xff] %v1338
      %1467 = vst [vmem:[%s201 + $0x70] sm:$0xff] %v1339
      %1468 = vst [vmem:[%s201 + $0x78] sm:$0xff] %v1340
      %1469 = vst [vmem:[%s201 + $0x80] sm:$0xff] %v1341
      %1470 = vst [vmem:[%s201 + $0x88] sm:$0xff] %v1342
      %1471 = vst [vmem:[%s201 + $0x90] sm:$0xff] %v1343
      %1472 = vst [vmem:[%s201 + $0x98] sm:$0xff] %v1344
      %1473 = vst [vmem:[%s201 + $0xa0] sm:$0xff] %v1345
      %1474 = vst [vmem:[%s201 + $0xa8] sm:$0xff] %v1346
      %1475 = vst [vmem:[%s201 + $0xb0] sm:$0xff] %v1347
      %1476 = vst [vmem:[%s201 + $0xb8] sm:$0xff] %v1348
      %1477 = vst [vmem:[%s201 + $0xc0] sm:$0xff] %v1349
      %1478 = vst [vmem:[%s201 + $0xc8] sm:$0xff] %v1350
      %1479 = vst [vmem:[%s201 + $0xd0] sm:$0xff] %v1351
      %1480 = vst [vmem:[%s201 + $0xd8] sm:$0xff] %v1352
      %1481 = vst [vmem:[%s201 + $0xe0] sm:$0xff] %v1353
      %1482 = vst [vmem:[%s201 + $0xe8] sm:$0xff] %v1354
      %1483 = vst [vmem:[%s201 + $0xf0] sm:$0xff] %v1355
      %1484 = vst [vmem:[%s201 + $0xf8] sm:$0xff] %v1356
      %1485 = vst [vmem:[%s201 + $0x100] sm:$0xff] %v1357
      %1486 = vst [vmem:[%s201 + $0x108] sm:$0xff] %v1358
      %1487 = vst [vmem:[%s201 + $0x110] sm:$0xff] %v1359
      %1488 = vst [vmem:[%s201 + $0x118] sm:$0xff] %v1360
      %1489 = vst [vmem:[%s201 + $0x120] sm:$0xff] %v1361
      %1490 = vst [vmem:[%s201 + $0x128] sm:$0xff] %v1362
      %1491 = vst [vmem:[%s201 + $0x130] sm:$0xff] %v1363
      %1492 = vst [vmem:[%s201 + $0x138] sm:$0xff] %v1364
      %1493 = vst [vmem:[%s201 + $0x140] sm:$0xff] %v1365
      %1494 = vst [vmem:[%s201 + $0x148] sm:$0xff] %v1366
      %1495 = vst [vmem:[%s201 + $0x150] sm:$0xff] %v1367
      %1496 = vst [vmem:[%s201 + $0x158] sm:$0xff] %v1368
      %1497 = vst [vmem:[%s201 + $0x160] sm:$0xff] %v1369
      %1498 = vst [vmem:[%s201 + $0x168] sm:$0xff] %v1370
      %1499 = vst [vmem:[%s201 + $0x170] sm:$0xff] %v1371
      %1500 = vst [vmem:[%s201 + $0x178] sm:$0xff] %v1372
      %1501 = vst [vmem:[%s201 + $0x180] sm:$0xff] %v1373
      %1502 = vst [vmem:[%s201 + $0x188] sm:$0xff] %v1374
      %1503 = vst [vmem:[%s201 + $0x190] sm:$0xff] %v1375
      %1504 = vst [vmem:[%s201 + $0x198] sm:$0xff] %v1376
      %1505 = vst [vmem:[%s201 + $0x1a0] sm:$0xff] %v1377
      %1506 = vst [vmem:[%s201 + $0x1a8] sm:$0xff] %v1378
      %1507 = vst [vmem:[%s201 + $0x1b0] sm:$0xff] %v1379
      %1508 = vst [vmem:[%s201 + $0x1b8] sm:$0xff] %v1380
      %1509 = vst [vmem:[%s201 + $0x1c0] sm:$0xff] %v1381
      %1510 = vst [vmem:[%s201 + $0x1c8] sm:$0xff] %v1382
      %1511 = vst [vmem:[%s201 + $0x1d0] sm:$0xff] %v1383
      %1512 = vst [vmem:[%s201 + $0x1d8] sm:$0xff] %v1384
      %1513 = vst [vmem:[%s201 + $0x1e0] sm:$0xff] %v1385
      %1514 = vst [vmem:[%s201 + $0x1e8] sm:$0xff] %v1386
      %1515 = vst [vmem:[%s201 + $0x1f0] sm:$0xff] %v1387
      %1516 = vst [vmem:[%s201 + $0x1f8] sm:$0xff] %v1388
      %1517 = vst [vmem:[%s201 + $0x200] sm:$0xff] %v1389
      %1518 = vst [vmem:[%s201 + $0x208] sm:$0xff] %v1390
      %1519 = vst [vmem:[%s201 + $0x210] sm:$0xff] %v1391
      %1520 = vst [vmem:[%s201 + $0x218] sm:$0xff] %v1392
      %1521 = vst [vmem:[%s201 + $0x220] sm:$0xff] %v1393
      %1522 = vst [vmem:[%s201 + $0x228] sm:$0xff] %v1394
      %1523 = vst [vmem:[%s201 + $0x230] sm:$0xff] %v1395
      %1524 = vst [vmem:[%s201 + $0x238] sm:$0xff] %v1396
      %1525 = vst [vmem:[%s201 + $0x240] sm:$0xff] %v1397
      %1526 = vst [vmem:[%s201 + $0x248] sm:$0xff] %v1398
      %1527 = vst [vmem:[%s201 + $0x250] sm:$0xff] %v1399
      %1528 = vst [vmem:[%s201 + $0x258] sm:$0xff] %v1400
      %1529 = vst [vmem:[%s201 + $0x260] sm:$0xff] %v1401
      %1530 = vst [vmem:[%s201 + $0x268] sm:$0xff] %v1402
      %1531 = vst [vmem:[%s201 + $0x270] sm:$0xff] %v1403
      %1532 = vst [vmem:[%s201 + $0x278] sm:$0xff] %v1404
      %1533 = vst [vmem:[%s201 + $0x280] sm:$0xff] %v1405
      %1534 = vst [vmem:[%s201 + $0x288] sm:$0xff] %v1406
      %1535 = vst [vmem:[%s201 + $0x290] sm:$0xff] %v1407
      %1536 = vst [vmem:[%s201 + $0x298] sm:$0xff] %v1408
      %1537 = vst [vmem:[%s201 + $0x2a0] sm:$0xff] %v1409
      %1538 = vst [vmem:[%s201 + $0x2a8] sm:$0xff] %v1410
      %1539 = vst [vmem:[%s201 + $0x2b0] sm:$0xff] %v1411
      %1540 = vst [vmem:[%s201 + $0x2b8] sm:$0xff] %v1412
      %1541 = vst [vmem:[%s201 + $0x2c0] sm:$0xff] %v1413
      %1542 = vst [vmem:[%s201 + $0x2c8] sm:$0xff] %v1414
      %1543 = vst [vmem:[%s201 + $0x2d0] sm:$0xff] %v1415
      %1544 = vst [vmem:[%s201 + $0x2d8] sm:$0xff] %v1416
      %1545 = vst [vmem:[%s201 + $0x2e0] sm:$0xff] %v1417
      %1546 = vst [vmem:[%s201 + $0x2e8] sm:$0xff] %v1418
      %1547 = vst [vmem:[%s201 + $0x2f0] sm:$0xff] %v1419
      %1548 = vst [vmem:[%s201 + $0x2f8] sm:$0xff] %v1420
      %1549 = vst [vmem:[%s201 + $0x300] sm:$0xff] %v1421
      %1550 = vst [vmem:[%s201 + $0x308] sm:$0xff] %v1422
      %1551 = vst [vmem:[%s201 + $0x310] sm:$0xff] %v1423
      %1552 = vst [vmem:[%s201 + $0x318] sm:$0xff] %v1424
      %1553 = vst [vmem:[%s201 + $0x320] sm:$0xff] %v1425
      %1554 = vst [vmem:[%s201 + $0x328] sm:$0xff] %v1426
      %1555 = vst [vmem:[%s201 + $0x330] sm:$0xff] %v1427
      %1556 = vst [vmem:[%s201 + $0x338] sm:$0xff] %v1428
      %1557 = vst [vmem:[%s201 + $0x340] sm:$0xff] %v1429
      %1558 = vst [vmem:[%s201 + $0x348] sm:$0xff] %v1430
      %1559 = vst [vmem:[%s201 + $0x350] sm:$0xff] %v1431
      %1560 = vst [vmem:[%s201 + $0x358] sm:$0xff] %v1432
      %1561 = vst [vmem:[%s201 + $0x360] sm:$0xff] %v1433
      %1562 = vst [vmem:[%s201 + $0x368] sm:$0xff] %v1434
      %1563 = vst [vmem:[%s201 + $0x370] sm:$0xff] %v1435
      %1564 = vst [vmem:[%s201 + $0x378] sm:$0xff] %v1436
      %1565 = vst [vmem:[%s201 + $0x380] sm:$0xff] %v1437
      %1566 = vst [vmem:[%s201 + $0x388] sm:$0xff] %v1438
      %1567 = vst [vmem:[%s201 + $0x390] sm:$0xff] %v1439
      %1568 = vst [vmem:[%s201 + $0x398] sm:$0xff] %v1440
      %1569 = vst [vmem:[%s201 + $0x3a0] sm:$0xff] %v1441
      %1570 = vst [vmem:[%s201 + $0x3a8] sm:$0xff] %v1442
      %1571 = vst [vmem:[%s201 + $0x3b0] sm:$0xff] %v1443
      %1572 = vst [vmem:[%s201 + $0x3b8] sm:$0xff] %v1444
      %1573 = vst [vmem:[%s201 + $0x3c0] sm:$0xff] %v1445
      %1574 = vst [vmem:[%s201 + $0x3c8] sm:$0xff] %v1446
      %1575 = vst [vmem:[%s201 + $0x3d0] sm:$0xff] %v1447
      %1576 = vst [vmem:[%s201 + $0x3d8] sm:$0xff] %v1448
      %1577 = vst [vmem:[%s201 + $0x3e0] sm:$0xff] %v1449
      %1578 = vst [vmem:[%s201 + $0x3e8] sm:$0xff] %v1450
      %1579 = vst [vmem:[%s201 + $0x3f0] sm:$0xff] %v1451
      %1580 = vst [vmem:[%s201 + $0x3f8] sm:$0xff] %v1452
      %s1581 = smul.u32 128, %s18
      %p1582 = scmp.lt.s32.totalorder %s17, 3
      %s1583 = scalar_select %p1582, %s17, 3
      %p1584 = scmp.lt.s32.totalorder %s1581, 255
      %s1585 = scalar_select %p1584, %s1581, 255
      %s1586 = smul.addr %s1583, 256
      %s1587 = sadd.s32 %s1585, %s1586
      %s1588 = smul.addr %s1587, 8
      %s1589 = scalar_lea.vmem %s2, %s1588
      // Predicated region
      $region29: #{generator_forward.17} parent=27 // pred_check
        %p1590 = pneg %p99
      $region30: #{generator_forward.17} parent=27 // pred_check_branch
        %1592 = sbr.rel (%p1590) target = $region32
      $region31: #{generator_forward.17} parent=27 // pred_region
        %s1593 = smul.u32 128, %s18
      $region32: #{generator_forward.17} parent=27 // pred_fallthru
        _
    $region28: #{generator_forward.17} parent=5 // pred_fallthru
      _
    %p1594 = scmp.le.s32.totalorder 2, %s8
    // Predicated region
    $region33: #{generator_forward.17} parent=5 // pred_check
      %p1595 = pneg %p1594
    $region34: #{generator_forward.17} parent=5 // pred_check_branch
      %1597 = sbr.rel (%p1595) target = $region36
    $region35: #{generator_forward.17} parent=5 // pred_region
      %s1598 = ssub.s32 %s8, 2
      // Predicated region
      $region37: #{generator_forward.17} parent=35 // pred_check
        %p1599 = pneg %p105
      $region38: #{generator_forward.17} parent=35 // pred_check_branch
        %1601 = sbr.rel (%p1599) target = $region40
      $region39: #{generator_forward.17} parent=35 // pred_region
        %s1602 = smul.u32 128, %s20
        %p1603 = scmp.lt.s32.totalorder %s19, 3
        %s1604 = scalar_select %p1603, %s19, 3
        %p1605 = scmp.lt.s32.totalorder %s1602, 255
        %s1606 = scalar_select %p1605, %s1602, 255
        %s1607 = smul.addr %s1604, 256
        %s1608 = sadd.s32 %s1606, %s1607
        %s1609 = smul.addr %s1608, 8
        %s1610 = scalar_lea.vmem %s2, %s1609
      $region40: #{generator_forward.17} parent=35 // pred_fallthru
        _
    $region36: #{generator_forward.17} parent=5 // pred_fallthru
      _
  $region6: #{generator_forward.17} parent=0 // loop_footer
    %s12 = sadd.s32 1, %s8
  $region7: #{generator_forward.17} parent=0 // loop_footer_branch
    %7 = sbr.rel target = $region3
  $region8: #{generator_forward.17} parent=0 // loop_exit
    _

</llo_original>
